<compile_context>
chip_gen: v6e
topology: v6e:2x2x1
jax: 0.10.0
libtpu: 0.0.40
codegen_flags: <defaults>
</compile_context>

<pallas_src>
import numpy as np
import jax
import jax.numpy as jnp
from jax.experimental import pallas as pl
from jax.experimental.pallas import tpu as pltpu

HIGHEST = jax.lax.Precision.HIGHEST


# ----------------------------------------------------------------------------
# Tiling helpers
# ----------------------------------------------------------------------------
def _round_up(x, m):
    return ((x + m - 1) // m) * m


def _choose_tiling(n, max_tile=1024):
    """Pick a row tile (multiple of 128) and padded row count."""
    num_tiles = max(1, -(-n // max_tile))
    # Prefer >= 2 grid steps when there is enough work (v7x has 2 TensorCores).
    if num_tiles == 1 and n > max_tile // 2:
        num_tiles = 2
    tile_n = _round_up(-(-n // num_tiles), 128)
    return tile_n, tile_n * num_tiles


# ----------------------------------------------------------------------------
# Pallas kernel
# ----------------------------------------------------------------------------
def _make_kernel(n_out, eps, compute_dtype):
    f32 = jnp.float32
    cd = compute_dtype

    def kernel(x_ref,        # (tile_n, 2*c_in)  compute dtype: concat(s, s_init)
               w_cat_ref,    # (2*c_in, c_hidden) compute dtype: [w_in; w_init]
               bias_ref,     # (5, c_hidden) f32: [b_in+b_init, b1a, b2a, b1b, b2b]
               w_blk_ref,    # (4, c_hidden, c_hidden) compute dtype: w1a,w2a,w1b,w2b
               w_out_t_ref,  # (n_out, c_hidden) compute dtype: w_out^T
               b_out_t_ref,  # (n_out, 1) f32
               pair_ref,     # (n_out, n_out) f32 pairing matrix
               out_ref):     # (2*n_out, tile_n) f32: [unnorm^T ; norm^T]
        # Fused input projection:
        #   relu(s) @ w_in + relu(s_init) @ w_init + (b_in + b_init)
        # (ReLU is elementwise, so it commutes with the concatenation.)
        x = jnp.maximum(x_ref[...], 0)
        a = jnp.dot(x, w_cat_ref[...],
                    preferred_element_type=f32, precision=HIGHEST)
        a = a + bias_ref[0:1, :]

        # Two resnet blocks: relu -> linear -> relu -> linear -> + residual.
        # Elementwise work stays in f32; operands are cast to the compute
        # dtype only at the MXU boundary (no-op when compute_dtype=f32).
        for k in range(2):
            t = jnp.maximum(a, 0.0)
            t = jnp.dot(t.astype(cd), w_blk_ref[2 * k],
                        preferred_element_type=f32, precision=HIGHEST)
            t = t + bias_ref[2 * k + 1:2 * k + 2, :]
            t = jnp.maximum(t, 0.0)
            t = jnp.dot(t.astype(cd), w_blk_ref[2 * k + 1],
                        preferred_element_type=f32, precision=HIGHEST)
            t = t + bias_ref[2 * k + 2:2 * k + 3, :]
            a = a + t

        # Output projection, computed transposed so the kernel output is
        # lane-dense:  out_t = w_out^T @ relu(a)^T + b_out^T.
        a = jnp.maximum(a, 0.0)
        a_t = a.T.astype(cd)                                    # (c_hidden, tile_n)
        out_t = jnp.dot(w_out_t_ref[...].astype(cd), a_t,
                        preferred_element_type=f32,
                        precision=HIGHEST)                       # (n_out, tile_n)
        out_t = out_t + b_out_t_ref[...]

        # Per-angle L2 normalization: pairs of adjacent output channels
        # (rows, in transposed layout) are summed via a tiny pairing matmul.
        sq = out_t * out_t
        pair_sum = jnp.dot(pair_ref[...], sq,
                           preferred_element_type=f32, precision=HIGHEST)
        norm_t = out_t * jax.lax.rsqrt(jnp.maximum(pair_sum, eps))

        out_ref[0:n_out, :] = out_t
        out_ref[n_out:2 * n_out, :] = norm_t

    return kernel


# ----------------------------------------------------------------------------
# Wrapper
# ----------------------------------------------------------------------------
def angle_resnet_forward(s, s_initial, params, *, no_angles=7, eps=1e-12,
                         compute_dtype=jnp.float32, max_tile_n=1024):
    """Returns (unnormalized_angles, angles), each shaped [*leading, no_angles, 2]."""
    lead = s.shape[:-1]
    c_in = s.shape[-1]
    n = int(np.prod(lead)) if lead else 1
    c_hidden = params["w_in"].shape[1]
    n_out = no_angles * 2
    cd = compute_dtype

    # --- packed / fused parameters -------------------------------------------------
    w_cat = jnp.concatenate([params["w_in"], params["w_init"]], axis=0).astype(cd)
    bias_slab = jnp.stack([
        params["b_in"] + params["b_init"],
        params["b1a"], params["b2a"], params["b1b"], params["b2b"],
    ], axis=0).astype(jnp.float32)                                   # (5, c_hidden)
    w_blk = jnp.stack([params["w1a"], params["w2a"],
                       params["w1b"], params["w2b"]], axis=0).astype(cd)
    w_out_t = params["w_out"].T.astype(cd)                           # (n_out, c_hidden)
    b_out_t = params["b_out"].reshape(n_out, 1).astype(jnp.float32)
    rr = np.arange(n_out)
    pair_mat = jnp.asarray((rr[:, None] // 2 == rr[None, :] // 2).astype(np.float32))

    # --- activations: concat + pad to the row tiling --------------------------------
    tile_n, n_pad = _choose_tiling(n, max_tile_n)
    x = jnp.concatenate([s.reshape(n, c_in), s_initial.reshape(n, c_in)],
                        axis=-1).astype(cd)                          # (n, 2*c_in)
    if n_pad != n:
        x = jnp.pad(x, ((0, n_pad - n), (0, 0)))

    grid = (n_pad // tile_n,)
    full2 = lambda shape: pl.BlockSpec(shape, lambda i: (0, 0))

    in_specs = [
        pl.BlockSpec((tile_n, 2 * c_in), lambda i: (i, 0)),          # x
        full2((2 * c_in, c_hidden)),                                 # w_cat
        full2((5, c_hidden)),                                        # bias slab
        pl.BlockSpec((4, c_hidden, c_hidden), lambda i: (0, 0, 0)),  # hidden weights
        full2((n_out, c_hidden)),                                    # w_out^T
        full2((n_out, 1)),                                           # b_out^T
        full2((n_out, n_out)),                                       # pairing matrix
    ]
    out_specs = pl.BlockSpec((2 * n_out, tile_n), lambda i: (0, i))
    out_shape = jax.ShapeDtypeStruct((2 * n_out, n_pad), jnp.float32)

    kernel = _make_kernel(n_out, eps, cd)
    slab = pl.pallas_call(
        kernel,
        grid=grid,
        in_specs=in_specs,
        out_specs=out_specs,
        out_shape=out_shape,
        compiler_params=pltpu.CompilerParams(dimension_semantics=("parallel",)),
    )(x, w_cat, bias_slab, w_blk, w_out_t, b_out_t, pair_mat)

    new_shape = lead + (no_angles, 2)
    unnorm = slab[:n_out, :n].T.reshape(new_shape)
    norm = slab[n_out:, :n].T.reshape(new_shape)
    return unnorm, norm


# ----------------------------------------------------------------------------
# Deterministic parameter construction (synthetic; matches module shapes)
# ----------------------------------------------------------------------------
def init_params(key, c_in, c_hidden, no_angles):
    # PyTorch Linear weight is (out_dim, in_dim); we store transposed (in, out).
    # TODO(synk): truncated-normal / He / final initializers from the original
    # module are not reproduced bit-for-bit; deterministic scaled normals are
    # used instead (forward-pass semantics are unaffected).
    n_out = no_angles * 2
    keys = jax.random.split(key, 14)

    def w(k, fi, fo):
        return jax.random.normal(k, (fi, fo), jnp.float32) / jnp.sqrt(jnp.float32(fi))

    def b(k, d):
        return 0.1 * jax.random.normal(k, (d,), jnp.float32)

    return {
        "w_init": w(keys[0], c_in, c_hidden),     "b_init": b(keys[7], c_hidden),
        "w_in":   w(keys[1], c_in, c_hidden),     "b_in":   b(keys[8], c_hidden),
        "w1a":    w(keys[2], c_hidden, c_hidden), "b1a":    b(keys[9], c_hidden),
        "w2a":    w(keys[3], c_hidden, c_hidden), "b2a":    b(keys[10], c_hidden),
        "w1b":    w(keys[4], c_hidden, c_hidden), "b1b":    b(keys[11], c_hidden),
        "w2b":    w(keys[5], c_hidden, c_hidden), "b2b":    b(keys[12], c_hidden),
        "w_out":  w(keys[6], c_hidden, n_out),    "b_out":  b(keys[13], n_out),
    }


# ----------------------------------------------------------------------------
# Pure-JAX reference (for correctness check); uses HIGHEST matmul precision so
# it matches the module's f32 semantics on TPU.
# ----------------------------------------------------------------------------
def reference_forward(s, s_initial, p, no_angles=7, eps=1e-12):
    relu = lambda x: jnp.maximum(x, 0.0)
    dot = lambda a, b: jnp.dot(a, b, precision=HIGHEST)
    si = dot(relu(s_initial), p["w_init"]) + p["b_init"]
    a = dot(relu(s), p["w_in"]) + p["b_in"]
    a = a + si
    for w1, b1, w2, b2 in (("w1a", "b1a", "w2a", "b2a"), ("w1b", "b1b", "w2b", "b2b")):
        t = dot(relu(a), p[w1]) + p[b1]
        t = dot(relu(t), p[w2]) + p[b2]
        a = a + t
    out = dot(relu(a), p["w_out"]) + p["b_out"]
    out = out.reshape(out.shape[:-1] + (no_angles, 2))
    denom = jnp.sqrt(jnp.maximum(jnp.sum(out * out, axis=-1, keepdims=True), eps))
    return out, out / denom


# ----------------------------------------------------------------------------
if __name__ == "__main__":
    # Small shapes: batch=2, seq=8 residues, c_in=32, c_hidden=128 (module default)
    batch, seq, c_in, c_hidden, no_angles = 2, 8, 32, 128, 7

    key = jax.random.PRNGKey(0)
    k_s, k_si, k_p = jax.random.split(key, 3)
    s = jax.random.normal(k_s, (batch, seq, c_in), jnp.float32)
    s_initial = jax.random.normal(k_si, (batch, seq, c_in), jnp.float32)
    params = init_params(k_p, c_in, c_hidden, no_angles)

    unnorm, norm = angle_resnet_forward(s, s_initial, params,
                                        no_angles=no_angles, eps=1e-12)
    jax.block_until_ready((unnorm, norm))

    # correctness check against the f32 pure-JAX reference
    ref_unnorm, ref_norm = reference_forward(s, s_initial, params,
                                             no_angles=no_angles, eps=1e-12)
    assert unnorm.shape == (batch, seq, no_angles, 2)
    assert norm.shape == (batch, seq, no_angles, 2)
    np.testing.assert_allclose(np.asarray(unnorm), np.asarray(ref_unnorm),
                               rtol=1e-3, atol=1e-3)
    np.testing.assert_allclose(np.asarray(norm), np.asarray(ref_norm),
                               rtol=1e-3, atol=1e-3)

    print("KERNEL_OK")
</pallas_src>

<mosaic_0001>
module attributes {stable_mosaic.version = 11 : i64} {
  func.func @kernel(%arg0: i32, %arg1: memref<128x64xf32, #tpu.memory_space<vmem>>, %arg2: memref<64x128xf32, #tpu.memory_space<vmem>>, %arg3: memref<5x128xf32, #tpu.memory_space<vmem>>, %arg4: memref<4x128x128xf32, #tpu.memory_space<vmem>>, %arg5: memref<14x128xf32, #tpu.memory_space<vmem>>, %arg6: memref<14x1xf32, #tpu.memory_space<vmem>>, %arg7: memref<14x14xf32, #tpu.memory_space<vmem>>, %arg8: memref<28x128xf32, #tpu.memory_space<vmem>>) attributes {dimension_semantics = [#tpu.dimension_semantics<parallel>], iteration_bounds = array<i64: 1>, scalar_prefetch = 0 : i64, scratch_operands = 0 : i64, tpu.core_type = #tpu.core_type<tc>, window_params = [{transform_indices = @transform_0, window_bounds = array<i64: 128, 64>}, {pipeline_mode = #tpu.pipeline_mode<synchronous>, transform_indices = @transform_1, window_bounds = array<i64: 64, 128>}, {pipeline_mode = #tpu.pipeline_mode<synchronous>, transform_indices = @transform_2, window_bounds = array<i64: 5, 128>}, {pipeline_mode = #tpu.pipeline_mode<synchronous>, transform_indices = @transform_3, window_bounds = array<i64: 4, 128, 128>}, {pipeline_mode = #tpu.pipeline_mode<synchronous>, transform_indices = @transform_4, window_bounds = array<i64: 14, 128>}, {pipeline_mode = #tpu.pipeline_mode<synchronous>, transform_indices = @transform_5, window_bounds = array<i64: 14, 1>}, {pipeline_mode = #tpu.pipeline_mode<synchronous>, transform_indices = @transform_6, window_bounds = array<i64: 14, 14>}, {transform_indices = @transform_7, window_bounds = array<i64: 28, 128>}]} {
    %c0 = arith.constant 0 : index
    %c0_0 = arith.constant 0 : index
    %0 = vector.load %arg1[%c0, %c0_0] : memref<128x64xf32, #tpu.memory_space<vmem>>, vector<128x64xf32>
    %cst = arith.constant 0.000000e+00 : f32
    %1 = vector.broadcast %cst : f32 to vector<128x64xf32>
    %2 = arith.maximumf %0, %1 : vector<128x64xf32>
    %c0_1 = arith.constant 0 : index
    %c0_2 = arith.constant 0 : index
    %3 = vector.load %arg2[%c0_1, %c0_2] : memref<64x128xf32, #tpu.memory_space<vmem>>, vector<64x128xf32>
    %cst_3 = arith.constant dense<0.000000e+00> : vector<128x128xf32>
    %4 = tpu.matmul %2, %3, %cst_3 {dimension_numbers = #tpu.dot_dimension_numbers<[1], [0], [0], [1], [0, 0, 1, 1], [], []>, precision = #tpu.contract_precision<fp32>} : vector<128x64xf32>, vector<64x128xf32>, vector<128x128xf32> -> vector<128x128xf32>
    %c0_4 = arith.constant 0 : index
    %c0_5 = arith.constant 0 : index
    %5 = vector.load %arg3[%c0_4, %c0_5] : memref<5x128xf32, #tpu.memory_space<vmem>>, vector<1x128xf32>
    %6 = vector.broadcast %5 : vector<1x128xf32> to vector<128x128xf32>
    %7 = arith.addf %4, %6 : vector<128x128xf32>
    %cst_6 = arith.constant 0.000000e+00 : f32
    %8 = vector.broadcast %cst_6 : f32 to vector<128x128xf32>
    %9 = arith.maximumf %7, %8 : vector<128x128xf32>
    %c0_7 = arith.constant 0 : index
    %c0_8 = arith.constant 0 : index
    %c0_9 = arith.constant 0 : index
    %10 = vector.load %arg4[%c0_7, %c0_8, %c0_9] : memref<4x128x128xf32, #tpu.memory_space<vmem>>, vector<1x128x128xf32>
    %11 = vector.shape_cast %10 : vector<1x128x128xf32> to vector<128x128xf32>
    %cst_10 = arith.constant dense<0.000000e+00> : vector<128x128xf32>
    %12 = tpu.matmul %9, %11, %cst_10 {dimension_numbers = #tpu.dot_dimension_numbers<[1], [0], [0], [1], [0, 0, 1, 1], [], []>, precision = #tpu.contract_precision<fp32>} : vector<128x128xf32>, vector<128x128xf32>, vector<128x128xf32> -> vector<128x128xf32>
    %c1 = arith.constant 1 : index
    %c0_11 = arith.constant 0 : index
    %13 = vector.load %arg3[%c1, %c0_11] : memref<5x128xf32, #tpu.memory_space<vmem>>, vector<1x128xf32>
    %14 = vector.broadcast %13 : vector<1x128xf32> to vector<128x128xf32>
    %15 = arith.addf %12, %14 : vector<128x128xf32>
    %cst_12 = arith.constant 0.000000e+00 : f32
    %16 = vector.broadcast %cst_12 : f32 to vector<128x128xf32>
    %17 = arith.maximumf %15, %16 : vector<128x128xf32>
    %c1_13 = arith.constant 1 : index
    %c0_14 = arith.constant 0 : index
    %c0_15 = arith.constant 0 : index
    %18 = vector.load %arg4[%c1_13, %c0_14, %c0_15] : memref<4x128x128xf32, #tpu.memory_space<vmem>>, vector<1x128x128xf32>
    %19 = vector.shape_cast %18 : vector<1x128x128xf32> to vector<128x128xf32>
    %cst_16 = arith.constant dense<0.000000e+00> : vector<128x128xf32>
    %20 = tpu.matmul %17, %19, %cst_16 {dimension_numbers = #tpu.dot_dimension_numbers<[1], [0], [0], [1], [0, 0, 1, 1], [], []>, precision = #tpu.contract_precision<fp32>} : vector<128x128xf32>, vector<128x128xf32>, vector<128x128xf32> -> vector<128x128xf32>
    %c2 = arith.constant 2 : index
    %c0_17 = arith.constant 0 : index
    %21 = vector.load %arg3[%c2, %c0_17] : memref<5x128xf32, #tpu.memory_space<vmem>>, vector<1x128xf32>
    %22 = vector.broadcast %21 : vector<1x128xf32> to vector<128x128xf32>
    %23 = arith.addf %20, %22 : vector<128x128xf32>
    %24 = arith.addf %7, %23 : vector<128x128xf32>
    %cst_18 = arith.constant 0.000000e+00 : f32
    %25 = vector.broadcast %cst_18 : f32 to vector<128x128xf32>
    %26 = arith.maximumf %24, %25 : vector<128x128xf32>
    %c2_19 = arith.constant 2 : index
    %c0_20 = arith.constant 0 : index
    %c0_21 = arith.constant 0 : index
    %27 = vector.load %arg4[%c2_19, %c0_20, %c0_21] : memref<4x128x128xf32, #tpu.memory_space<vmem>>, vector<1x128x128xf32>
    %28 = vector.shape_cast %27 : vector<1x128x128xf32> to vector<128x128xf32>
    %cst_22 = arith.constant dense<0.000000e+00> : vector<128x128xf32>
    %29 = tpu.matmul %26, %28, %cst_22 {dimension_numbers = #tpu.dot_dimension_numbers<[1], [0], [0], [1], [0, 0, 1, 1], [], []>, precision = #tpu.contract_precision<fp32>} : vector<128x128xf32>, vector<128x128xf32>, vector<128x128xf32> -> vector<128x128xf32>
    %c3 = arith.constant 3 : index
    %c0_23 = arith.constant 0 : index
    %30 = vector.load %arg3[%c3, %c0_23] : memref<5x128xf32, #tpu.memory_space<vmem>>, vector<1x128xf32>
    %31 = vector.broadcast %30 : vector<1x128xf32> to vector<128x128xf32>
    %32 = arith.addf %29, %31 : vector<128x128xf32>
    %cst_24 = arith.constant 0.000000e+00 : f32
    %33 = vector.broadcast %cst_24 : f32 to vector<128x128xf32>
    %34 = arith.maximumf %32, %33 : vector<128x128xf32>
    %c3_25 = arith.constant 3 : index
    %c0_26 = arith.constant 0 : index
    %c0_27 = arith.constant 0 : index
    %35 = vector.load %arg4[%c3_25, %c0_26, %c0_27] : memref<4x128x128xf32, #tpu.memory_space<vmem>>, vector<1x128x128xf32>
    %36 = vector.shape_cast %35 : vector<1x128x128xf32> to vector<128x128xf32>
    %cst_28 = arith.constant dense<0.000000e+00> : vector<128x128xf32>
    %37 = tpu.matmul %34, %36, %cst_28 {dimension_numbers = #tpu.dot_dimension_numbers<[1], [0], [0], [1], [0, 0, 1, 1], [], []>, precision = #tpu.contract_precision<fp32>} : vector<128x128xf32>, vector<128x128xf32>, vector<128x128xf32> -> vector<128x128xf32>
    %c4 = arith.constant 4 : index
    %c0_29 = arith.constant 0 : index
    %38 = vector.load %arg3[%c4, %c0_29] : memref<5x128xf32, #tpu.memory_space<vmem>>, vector<1x128xf32>
    %39 = vector.broadcast %38 : vector<1x128xf32> to vector<128x128xf32>
    %40 = arith.addf %37, %39 : vector<128x128xf32>
    %41 = arith.addf %24, %40 : vector<128x128xf32>
    %cst_30 = arith.constant 0.000000e+00 : f32
    %42 = vector.broadcast %cst_30 : f32 to vector<128x128xf32>
    %43 = arith.maximumf %41, %42 : vector<128x128xf32>
    %44 = tpu.transpose %43, [1, 0] : vector<128x128xf32> -> vector<128x128xf32>
    %c0_31 = arith.constant 0 : index
    %c0_32 = arith.constant 0 : index
    %45 = vector.load %arg5[%c0_31, %c0_32] : memref<14x128xf32, #tpu.memory_space<vmem>>, vector<14x128xf32>
    %cst_33 = arith.constant dense<0.000000e+00> : vector<14x128xf32>
    %46 = tpu.matmul %45, %44, %cst_33 {dimension_numbers = #tpu.dot_dimension_numbers<[1], [0], [0], [1], [0, 0, 1, 1], [], []>, precision = #tpu.contract_precision<fp32>} : vector<14x128xf32>, vector<128x128xf32>, vector<14x128xf32> -> vector<14x128xf32>
    %c0_34 = arith.constant 0 : index
    %c0_35 = arith.constant 0 : index
    %47 = vector.load %arg6[%c0_34, %c0_35] : memref<14x1xf32, #tpu.memory_space<vmem>>, vector<14x1xf32>
    %48 = vector.broadcast %47 : vector<14x1xf32> to vector<14x128xf32>
    %49 = arith.addf %46, %48 : vector<14x128xf32>
    %50 = arith.mulf %49, %49 : vector<14x128xf32>
    %c0_36 = arith.constant 0 : index
    %c0_37 = arith.constant 0 : index
    %51 = vector.load %arg7[%c0_36, %c0_37] : memref<14x14xf32, #tpu.memory_space<vmem>>, vector<14x14xf32>
    %cst_38 = arith.constant dense<0.000000e+00> : vector<14x128xf32>
    %52 = tpu.matmul %51, %50, %cst_38 {dimension_numbers = #tpu.dot_dimension_numbers<[1], [0], [0], [1], [0, 0, 1, 1], [], []>, precision = #tpu.contract_precision<fp32>} : vector<14x14xf32>, vector<14x128xf32>, vector<14x128xf32> -> vector<14x128xf32>
    %cst_39 = arith.constant 9.99999996E-13 : f32
    %53 = vector.broadcast %cst_39 : f32 to vector<14x128xf32>
    %54 = arith.maximumf %52, %53 : vector<14x128xf32>
    %55 = math.rsqrt %54 : vector<14x128xf32>
    %56 = arith.mulf %49, %55 : vector<14x128xf32>
    %c0_40 = arith.constant 0 : index
    %c0_41 = arith.constant 0 : index
    %57 = vector.load %arg8[%c0_40, %c0_41] : memref<28x128xf32, #tpu.memory_space<vmem>>, vector<14x128xf32>
    tpu.vector_store %arg8[%c0_40, %c0_41], %49 {strides = array<i32>} : memref<28x128xf32, #tpu.memory_space<vmem>>, vector<14x128xf32>,
    %c14 = arith.constant 14 : index
    %c0_42 = arith.constant 0 : index
    %58 = vector.load %arg8[%c14, %c0_42] : memref<28x128xf32, #tpu.memory_space<vmem>>, vector<14x128xf32>
    tpu.vector_store %arg8[%c14, %c0_42], %56 {strides = array<i32>} : memref<28x128xf32, #tpu.memory_space<vmem>>, vector<14x128xf32>,
    return
  }
  func.func @transform_0(%arg0: i32) -> (i32, i32) {
    %c0_i32 = arith.constant 0 : i32
    %c0_i32_0 = arith.constant 0 : i32
    return %arg0, %c0_i32 : i32, i32
  }
  func.func @transform_1(%arg0: i32) -> (i32, i32) {
    %c0_i32 = arith.constant 0 : i32
    %c0_i32_0 = arith.constant 0 : i32
    %c0_i32_1 = arith.constant 0 : i32
    return %c0_i32, %c0_i32_0 : i32, i32
  }
  func.func @transform_2(%arg0: i32) -> (i32, i32) {
    %c0_i32 = arith.constant 0 : i32
    %c0_i32_0 = arith.constant 0 : i32
    %c0_i32_1 = arith.constant 0 : i32
    return %c0_i32, %c0_i32_0 : i32, i32
  }
  func.func @transform_3(%arg0: i32) -> (i32, i32, i32) {
    %c0_i32 = arith.constant 0 : i32
    %c0_i32_0 = arith.constant 0 : i32
    %c0_i32_1 = arith.constant 0 : i32
    %c0_i32_2 = arith.constant 0 : i32
    return %c0_i32, %c0_i32_0, %c0_i32_1 : i32, i32, i32
  }
  func.func @transform_4(%arg0: i32) -> (i32, i32) {
    %c0_i32 = arith.constant 0 : i32
    %c0_i32_0 = arith.constant 0 : i32
    %c0_i32_1 = arith.constant 0 : i32
    return %c0_i32, %c0_i32_0 : i32, i32
  }
  func.func @transform_5(%arg0: i32) -> (i32, i32) {
    %c0_i32 = arith.constant 0 : i32
    %c0_i32_0 = arith.constant 0 : i32
    %c0_i32_1 = arith.constant 0 : i32
    return %c0_i32, %c0_i32_0 : i32, i32
  }
  func.func @transform_6(%arg0: i32) -> (i32, i32) {
    %c0_i32 = arith.constant 0 : i32
    %c0_i32_0 = arith.constant 0 : i32
    %c0_i32_1 = arith.constant 0 : i32
    return %c0_i32, %c0_i32_0 : i32, i32
  }
  func.func @transform_7(%arg0: i32) -> (i32, i32) {
    %c0_i32 = arith.constant 0 : i32
    %c0_i32_0 = arith.constant 0 : i32
    return %c0_i32, %arg0 : i32, i32
  }
}

</mosaic_0001>

<llo_original>
// kernel: tpu_custom_call.1
$region0: #{tpu_custom_call.1}
  #allocation0 [shape = 'u32[]', space=smem, size = 0x4, offset = 0x4, fixed_abs, tag = 'smem constant byte address 0x4 - core index']
  #allocation1 [shape = 'u32[144,128]{1,0:T(1,128)}', space=vmem, size = 0x12000, scoped, tag = 'internal scratch']
  %s0 = inlined_call_operand.vmem [shape: f32[128,64], index: 0, kind: input, shape index: {}]
  %s1 = inlined_call_operand.vmem [shape: f32[64,128], index: 1, kind: input, shape index: {}]
  %s2 = inlined_call_operand.vmem [shape: f32[5,128], index: 2, kind: input, shape index: {}]
  %s3 = inlined_call_operand.hbm [shape: f32[4,128,128], index: 3, kind: input, shape index: {}]
  %s4 = inlined_call_operand.vmem [shape: f32[14,128], index: 4, kind: input, shape index: {}]
  %s5 = inlined_call_operand.vmem [shape: f32[14,1], index: 5, kind: input, shape index: {}]
  %s6 = inlined_call_operand.vmem [shape: f32[14,14], index: 6, kind: input, shape index: {}]
  %s7 = inlined_call_operand.hbm [shape: f32[28,128], index: 7, kind: output, shape index: {}]
  %s8 = sld [smem:[#allocation0]]
  $region42: #{tpu_custom_call.1} parent=0
    _
  %s10 = ssub.s32 1, %s8
  %s11 = scalar_select 0, %s10, %s8
  $region1: #{tpu_custom_call.1} parent=0
    #allocation2 [shape = 'u8[262144]{0}', space=vmem, size = 0x40000, scoped, tag = 'input window, operand 3, single buffered']
    #allocation3 [shape = 's32[1]{0}', space=sflag, size = 0x4, scoped, tag = 'scoped memory for tpu_custom_call.1']
    #allocation4 [shape = 's32[1]{0}', space=sflag, size = 0x4, scoped, tag = 'scoped memory for tpu_custom_call.1']
    #allocation5 [shape = 'u8[16384]{0}', space=vmem, size = 0x4000, scoped, tag = 'output window, operand 0, single buffered']
    %12 = vsyncpa [#allocation3], 0
    %13 = vsyncpa [#allocation4], 0
    // Predicated region
    $region2: #{tpu_custom_call.1} parent=1 // pred_check
      _
    $region3: #{tpu_custom_call.1} parent=1 // pred_check_branch
      %15 = sbr.rel (0) target = $region5
    $region4: #{tpu_custom_call.1} parent=1 // pred_region
      _
    $region5: #{tpu_custom_call.1} parent=1 // pred_fallthru
      _
    // Predicated region
    $region6: #{tpu_custom_call.1} parent=1 // pred_check
      _
    $region7: #{tpu_custom_call.1} parent=1 // pred_check_branch
      %17 = sbr.rel (0) target = $region9
    $region8: #{tpu_custom_call.1} parent=1 // pred_region
      _
    $region9: #{tpu_custom_call.1} parent=1 // pred_fallthru
      _
    // Predicated region
    $region10: #{tpu_custom_call.1} parent=1 // pred_check
      _
    $region11: #{tpu_custom_call.1} parent=1 // pred_check_branch
      %19 = sbr.rel (0) target = $region13
    $region12: #{tpu_custom_call.1} parent=1 // pred_region
      _
    $region13: #{tpu_custom_call.1} parent=1 // pred_fallthru
      _
    // Predicated region
    $region14: #{tpu_custom_call.1} parent=1 // pred_check
      _
    $region15: #{tpu_custom_call.1} parent=1 // pred_check_branch
      %21 = sbr.rel (0) target = $region17
    $region16: #{tpu_custom_call.1} parent=1 // pred_region
      %s23 = ssub.s32 8192, 8192
      %24 = vsyncadd [#allocation3], %s23
      %s25 = sshll.u32 [#allocation2], 4
      %s26 = int_to_ptr.vmem [resolvable:$true] %s25
      %31 = dma.hbm_to_vmem [thread:$0]  %s3, 8192, %s26, [#allocation3], 128, 128, 8
    $region17: #{tpu_custom_call.1} parent=1 // pred_fallthru
      _
    // Predicated region
    $region18: #{tpu_custom_call.1} parent=1 // pred_check
      _
    $region19: #{tpu_custom_call.1} parent=1 // pred_check_branch
      %33 = sbr.rel (0) target = $region21
    $region20: #{tpu_custom_call.1} parent=1 // pred_region
      _
    $region21: #{tpu_custom_call.1} parent=1 // pred_fallthru
      _
    // Predicated region
    $region22: #{tpu_custom_call.1} parent=1 // pred_check
      _
    $region23: #{tpu_custom_call.1} parent=1 // pred_check_branch
      %35 = sbr.rel (0) target = $region25
    $region24: #{tpu_custom_call.1} parent=1 // pred_region
      _
    $region25: #{tpu_custom_call.1} parent=1 // pred_fallthru
      _
    // Predicated region
    $region26: #{tpu_custom_call.1} parent=1 // pred_check
      _
    $region27: #{tpu_custom_call.1} parent=1 // pred_check_branch
      %37 = sbr.rel (0) target = $region29
    $region28: #{tpu_custom_call.1} parent=1 // pred_region
      _
    $region29: #{tpu_custom_call.1} parent=1 // pred_fallthru
      _
    // Predicated region
    $region30: #{tpu_custom_call.1} parent=1 // pred_check
      _
    $region31: #{tpu_custom_call.1} parent=1 // pred_check_branch
      %39 = sbr.rel (0) target = $region33
    $region32: #{tpu_custom_call.1} parent=1 // pred_region
      %40 = dma.done [#allocation3], 8192
    $region33: #{tpu_custom_call.1} parent=1 // pred_fallthru
      _
    %v41 = vld [vmem:[%s0] sm:$0xff]
    %v42 = vld [vmem:[%s0 + $0x8] sm:$0xff]
    %v43 = vld [vmem:[%s0 + $0x10] sm:$0xff]
    %v44 = vld [vmem:[%s0 + $0x18] sm:$0xff]
    %v45 = vld [vmem:[%s0 + $0x20] sm:$0xff]
    %v46 = vld [vmem:[%s0 + $0x28] sm:$0xff]
    %v47 = vld [vmem:[%s0 + $0x30] sm:$0xff]
    %v48 = vld [vmem:[%s0 + $0x38] sm:$0xff]
    %v49 = vld [vmem:[%s0 + $0x40] sm:$0xff]
    %v50 = vld [vmem:[%s0 + $0x48] sm:$0xff]
    %v51 = vld [vmem:[%s0 + $0x50] sm:$0xff]
    %v52 = vld [vmem:[%s0 + $0x58] sm:$0xff]
    %v53 = vld [vmem:[%s0 + $0x60] sm:$0xff]
    %v54 = vld [vmem:[%s0 + $0x68] sm:$0xff]
    %v55 = vld [vmem:[%s0 + $0x70] sm:$0xff]
    %v56 = vld [vmem:[%s0 + $0x78] sm:$0xff]
    %v57 = vmax.f32 %v41, 0.0
    %v58 = vmax.f32 %v42, 0.0
    %v59 = vmax.f32 %v43, 0.0
    %v60 = vmax.f32 %v44, 0.0
    %v61 = vmax.f32 %v45, 0.0
    %v62 = vmax.f32 %v46, 0.0
    %v63 = vmax.f32 %v47, 0.0
    %v64 = vmax.f32 %v48, 0.0
    %v65 = vmax.f32 %v49, 0.0
    %v66 = vmax.f32 %v50, 0.0
    %v67 = vmax.f32 %v51, 0.0
    %v68 = vmax.f32 %v52, 0.0
    %v69 = vmax.f32 %v53, 0.0
    %v70 = vmax.f32 %v54, 0.0
    %v71 = vmax.f32 %v55, 0.0
    %v72 = vmax.f32 %v56, 0.0
    %v73 = vld [vmem:[%s1] sm:$0xff]
    %v74 = vld [vmem:[%s1 + $0x8] sm:$0xff]
    %v75 = vld [vmem:[%s1 + $0x10] sm:$0xff]
    %v76 = vld [vmem:[%s1 + $0x18] sm:$0xff]
    %v77 = vld [vmem:[%s1 + $0x20] sm:$0xff]
    %v78 = vld [vmem:[%s1 + $0x28] sm:$0xff]
    %v79 = vld [vmem:[%s1 + $0x30] sm:$0xff]
    %v80 = vld [vmem:[%s1 + $0x38] sm:$0xff]
    %v81 = vld [vmem:[%s2] sm:$0x1]
    %v82 = vlaneseq
    %v83 = vshrl.u32 %v82, 7
    %v84 = vsub.s32 0, %v83
    %v85 = vrot.slane %v81, %v84
    %vm86 = vcmask 523264
    %v88 = vsel %vm86, %v57, 0
    %v91 = vsel %vm86, %v58, 0
    %v94 = vsel %vm86, %v59, 0
    %v97 = vsel %vm86, %v60, 0
    %v100 = vsel %vm86, %v61, 0
    %v103 = vsel %vm86, %v62, 0
    %v106 = vsel %vm86, %v63, 0
    %v109 = vsel %vm86, %v64, 0
    %v112 = vsel %vm86, %v65, 0
    %v115 = vsel %vm86, %v66, 0
    %v118 = vsel %vm86, %v67, 0
    %v121 = vsel %vm86, %v68, 0
    %v124 = vsel %vm86, %v69, 0
    %v127 = vsel %vm86, %v70, 0
    %v130 = vsel %vm86, %v71, 0
    %v133 = vsel %vm86, %v72, 0
    %135 = vmatprep.subr.mxu0 0.0
    %136 = vmatpush1.msra.mxu0 0.0
    %137 = vmatprep.subr.mxu0 0.0
    %138 = vmatpush1.msra.mxu0 0.0
    %139 = vmatprep.subr.mxu0 0.0
    %140 = vmatpush1.msra.mxu0 0.0
    %141 = vmatprep.subr.mxu0 0.0
    %142 = vmatpush1.msra.mxu0 0.0
    %143 = vmatprep.subr.mxu0 0.0
    %144 = vmatpush1.msra.mxu0 0.0
    %145 = vmatprep.subr.mxu0 0.0
    %146 = vmatpush1.msra.mxu0 0.0
    %147 = vmatprep.subr.mxu0 0.0
    %148 = vmatpush1.msra.mxu0 0.0
    %149 = vmatprep.subr.mxu0 0.0
    %150 = vmatpush1.msra.mxu0 0.0
    %151 = vmatprep.subr.mxu0 0.0
    %v152 = vand.u32 %v80, 4294901760
    %153 = vmatpush1.msra.mxu0 %v152
    %154 = vmatprep.subr.mxu0 0.0
    %v155 = vand.u32 %v79, 4294901760
    %156 = vmatpush1.msra.mxu0 %v155
    %157 = vmatprep.subr.mxu0 0.0
    %v158 = vand.u32 %v78, 4294901760
    %159 = vmatpush1.msra.mxu0 %v158
    %160 = vmatprep.subr.mxu0 0.0
    %v161 = vand.u32 %v77, 4294901760
    %162 = vmatpush1.msra.mxu0 %v161
    %163 = vmatprep.subr.mxu0 0.0
    %v164 = vand.u32 %v76, 4294901760
    %165 = vmatpush1.msra.mxu0 %v164
    %166 = vmatprep.subr.mxu0 0.0
    %v167 = vand.u32 %v75, 4294901760
    %168 = vmatpush1.msra.mxu0 %v167
    %169 = vmatprep.subr.mxu0 0.0
    %v170 = vand.u32 %v74, 4294901760
    %171 = vmatpush1.msra.mxu0 %v170
    %172 = vmatprep.subr.mxu0 0.0
    %v173 = vand.u32 %v73, 4294901760
    %174 = vmatpush1.msra.mxu0 %v173
    %175 = vmatprep.subr.mxu0 0.0
    %176 = vmatpush2.msra.mxu0 0.0
    %177 = vmatprep.subr.mxu0 0.0
    %178 = vmatpush2.msra.mxu0 0.0
    %179 = vmatprep.subr.mxu0 0.0
    %180 = vmatpush2.msra.mxu0 0.0
    %181 = vmatprep.subr.mxu0 0.0
    %182 = vmatpush2.msra.mxu0 0.0
    %183 = vmatprep.subr.mxu0 0.0
    %184 = vmatpush2.msra.mxu0 0.0
    %185 = vmatprep.subr.mxu0 0.0
    %186 = vmatpush2.msra.mxu0 0.0
    %187 = vmatprep.subr.mxu0 0.0
    %188 = vmatpush2.msra.mxu0 0.0
    %189 = vmatprep.subr.mxu0 0.0
    %190 = vmatpush2.msra.mxu0 0.0
    %191 = vmatprep.subr.mxu0 0.0
    %192 = vmatpush2.msra.mxu0 0.0
    %193 = vmatprep.subr.mxu0 0.0
    %194 = vmatpush2.msra.mxu0 0.0
    %195 = vmatprep.subr.mxu0 0.0
    %196 = vmatpush2.msra.mxu0 0.0
    %197 = vmatprep.subr.mxu0 0.0
    %198 = vmatpush2.msra.mxu0 0.0
    %199 = vmatprep.subr.mxu0 0.0
    %200 = vmatpush2.msra.mxu0 0.0
    %201 = vmatprep.subr.mxu0 0.0
    %202 = vmatpush2.msra.mxu0 0.0
    %203 = vmatprep.subr.mxu0 0.0
    %204 = vmatpush2.msra.mxu0 0.0
    %205 = vmatprep.subr.mxu0 0.0
    %206 = vmatpush2.msra.mxu0 0.0
    %207 = vmatprep.mubr.f32.mxu0 0.0
    %v208 = vand.u32 %v88, 4294901760
    %v209 = vsub.f32 %v88, %v208
    %v210 = vand.u32 %v209, 4294901760
    %v211 = vsub.f32 %v209, %v210
    %v212 = vand.u32 %v211, 4294901760
    %213 = vmatmul.mubr.f32.gmra.mxu0 %v212
    %v214 = vpop.f32.mrf.mxu0
    %v215 = vadd.f32 %v85, %v214
    %v216 = vpop.f32.mrf.mxu0
    %217 = vmatprep.mubr.f32.mxu0 0.0
    %v218 = vand.u32 %v91, 4294901760
    %v219 = vsub.f32 %v91, %v218
    %v220 = vand.u32 %v219, 4294901760
    %v221 = vsub.f32 %v219, %v220
    %v222 = vand.u32 %v221, 4294901760
    %223 = vmatmul.mubr.f32.gmra.mxu0 %v222
    %v224 = vpop.f32.mrf.mxu0
    %v225 = vadd.f32 %v85, %v224
    %v226 = vpop.f32.mrf.mxu0
    %227 = vmatprep.mubr.f32.mxu0 0.0
    %v228 = vand.u32 %v94, 4294901760
    %v229 = vsub.f32 %v94, %v228
    %v230 = vand.u32 %v229, 4294901760
    %v231 = vsub.f32 %v229, %v230
    %v232 = vand.u32 %v231, 4294901760
    %233 = vmatmul.mubr.f32.gmra.mxu0 %v232
    %v234 = vpop.f32.mrf.mxu0
    %v235 = vadd.f32 %v85, %v234
    %v236 = vpop.f32.mrf.mxu0
    %237 = vmatprep.mubr.f32.mxu0 0.0
    %v238 = vand.u32 %v97, 4294901760
    %v239 = vsub.f32 %v97, %v238
    %v240 = vand.u32 %v239, 4294901760
    %v241 = vsub.f32 %v239, %v240
    %v242 = vand.u32 %v241, 4294901760
    %243 = vmatmul.mubr.f32.gmra.mxu0 %v242
    %v244 = vpop.f32.mrf.mxu0
    %v245 = vadd.f32 %v85, %v244
    %v246 = vpop.f32.mrf.mxu0
    %247 = vmatprep.mubr.f32.mxu0 0.0
    %v248 = vand.u32 %v100, 4294901760
    %v249 = vsub.f32 %v100, %v248
    %v250 = vand.u32 %v249, 4294901760
    %v251 = vsub.f32 %v249, %v250
    %v252 = vand.u32 %v251, 4294901760
    %253 = vmatmul.mubr.f32.gmra.mxu0 %v252
    %v254 = vpop.f32.mrf.mxu0
    %v255 = vadd.f32 %v85, %v254
    %v256 = vpop.f32.mrf.mxu0
    %257 = vmatprep.mubr.f32.mxu0 0.0
    %v258 = vand.u32 %v103, 4294901760
    %v259 = vsub.f32 %v103, %v258
    %v260 = vand.u32 %v259, 4294901760
    %v261 = vsub.f32 %v259, %v260
    %v262 = vand.u32 %v261, 4294901760
    %263 = vmatmul.mubr.f32.gmra.mxu0 %v262
    %v264 = vpop.f32.mrf.mxu0
    %v265 = vadd.f32 %v85, %v264
    %v266 = vpop.f32.mrf.mxu0
    %267 = vmatprep.mubr.f32.mxu0 0.0
    %v268 = vand.u32 %v106, 4294901760
    %v269 = vsub.f32 %v106, %v268
    %v270 = vand.u32 %v269, 4294901760
    %v271 = vsub.f32 %v269, %v270
    %v272 = vand.u32 %v271, 4294901760
    %273 = vmatmul.mubr.f32.gmra.mxu0 %v272
    %v274 = vpop.f32.mrf.mxu0
    %v275 = vadd.f32 %v85, %v274
    %v276 = vpop.f32.mrf.mxu0
    %277 = vmatprep.mubr.f32.mxu0 0.0
    %v278 = vand.u32 %v109, 4294901760
    %v279 = vsub.f32 %v109, %v278
    %v280 = vand.u32 %v279, 4294901760
    %v281 = vsub.f32 %v279, %v280
    %v282 = vand.u32 %v281, 4294901760
    %283 = vmatmul.mubr.f32.gmra.mxu0 %v282
    %v284 = vpop.f32.mrf.mxu0
    %v285 = vadd.f32 %v85, %v284
    %v286 = vpop.f32.mrf.mxu0
    %287 = vmatprep.mubr.f32.mxu0 0.0
    %v288 = vand.u32 %v112, 4294901760
    %v289 = vsub.f32 %v112, %v288
    %v290 = vand.u32 %v289, 4294901760
    %v291 = vsub.f32 %v289, %v290
    %v292 = vand.u32 %v291, 4294901760
    %293 = vmatmul.mubr.f32.gmra.mxu0 %v292
    %v294 = vpop.f32.mrf.mxu0
    %v295 = vadd.f32 %v85, %v294
    %v296 = vpop.f32.mrf.mxu0
    %297 = vmatprep.mubr.f32.mxu0 0.0
    %v298 = vand.u32 %v115, 4294901760
    %v299 = vsub.f32 %v115, %v298
    %v300 = vand.u32 %v299, 4294901760
    %v301 = vsub.f32 %v299, %v300
    %v302 = vand.u32 %v301, 4294901760
    %303 = vmatmul.mubr.f32.gmra.mxu0 %v302
    %v304 = vpop.f32.mrf.mxu0
    %v305 = vadd.f32 %v85, %v304
    %v306 = vpop.f32.mrf.mxu0
    %307 = vmatprep.mubr.f32.mxu0 0.0
    %v308 = vand.u32 %v118, 4294901760
    %v309 = vsub.f32 %v118, %v308
    %v310 = vand.u32 %v309, 4294901760
    %v311 = vsub.f32 %v309, %v310
    %v312 = vand.u32 %v311, 4294901760
    %313 = vmatmul.mubr.f32.gmra.mxu0 %v312
    %v314 = vpop.f32.mrf.mxu0
    %v315 = vadd.f32 %v85, %v314
    %v316 = vpop.f32.mrf.mxu0
    %317 = vmatprep.mubr.f32.mxu0 0.0
    %v318 = vand.u32 %v121, 4294901760
    %v319 = vsub.f32 %v121, %v318
    %v320 = vand.u32 %v319, 4294901760
    %v321 = vsub.f32 %v319, %v320
    %v322 = vand.u32 %v321, 4294901760
    %323 = vmatmul.mubr.f32.gmra.mxu0 %v322
    %v324 = vpop.f32.mrf.mxu0
    %v325 = vadd.f32 %v85, %v324
    %v326 = vpop.f32.mrf.mxu0
    %327 = vmatprep.mubr.f32.mxu0 0.0
    %v328 = vand.u32 %v124, 4294901760
    %v329 = vsub.f32 %v124, %v328
    %v330 = vand.u32 %v329, 4294901760
    %v331 = vsub.f32 %v329, %v330
    %v332 = vand.u32 %v331, 4294901760
    %333 = vmatmul.mubr.f32.gmra.mxu0 %v332
    %v334 = vpop.f32.mrf.mxu0
    %v335 = vadd.f32 %v85, %v334
    %v336 = vpop.f32.mrf.mxu0
    %337 = vmatprep.mubr.f32.mxu0 0.0
    %v338 = vand.u32 %v127, 4294901760
    %v339 = vsub.f32 %v127, %v338
    %v340 = vand.u32 %v339, 4294901760
    %v341 = vsub.f32 %v339, %v340
    %v342 = vand.u32 %v341, 4294901760
    %343 = vmatmul.mubr.f32.gmra.mxu0 %v342
    %v344 = vpop.f32.mrf.mxu0
    %v345 = vadd.f32 %v85, %v344
    %v346 = vpop.f32.mrf.mxu0
    %347 = vmatprep.mubr.f32.mxu0 0.0
    %v348 = vand.u32 %v130, 4294901760
    %v349 = vsub.f32 %v130, %v348
    %v350 = vand.u32 %v349, 4294901760
    %v351 = vsub.f32 %v349, %v350
    %v352 = vand.u32 %v351, 4294901760
    %353 = vmatmul.mubr.f32.gmra.mxu0 %v352
    %v354 = vpop.f32.mrf.mxu0
    %v355 = vadd.f32 %v85, %v354
    %v356 = vpop.f32.mrf.mxu0
    %357 = vmatprep.mubr.f32.mxu0 0.0
    %v358 = vand.u32 %v133, 4294901760
    %v359 = vsub.f32 %v133, %v358
    %v360 = vand.u32 %v359, 4294901760
    %v361 = vsub.f32 %v359, %v360
    %v362 = vand.u32 %v361, 4294901760
    %363 = vmatmul.mubr.f32.gmra.mxu0 %v362
    %v364 = vpop.f32.mrf.mxu0
    %v365 = vadd.f32 %v85, %v364
    %v366 = vpop.f32.mrf.mxu0
    %367 = vdwg.mxu0
    %368 = vmatprep.subr.mxu0 0.0
    %369 = vmatpush1.msra.mxu0 0.0
    %370 = vmatprep.subr.mxu0 0.0
    %371 = vmatpush1.msra.mxu0 0.0
    %372 = vmatprep.subr.mxu0 0.0
    %373 = vmatpush1.msra.mxu0 0.0
    %374 = vmatprep.subr.mxu0 0.0
    %375 = vmatpush1.msra.mxu0 0.0
    %376 = vmatprep.subr.mxu0 0.0
    %377 = vmatpush1.msra.mxu0 0.0
    %378 = vmatprep.subr.mxu0 0.0
    %379 = vmatpush1.msra.mxu0 0.0
    %380 = vmatprep.subr.mxu0 0.0
    %381 = vmatpush1.msra.mxu0 0.0
    %382 = vmatprep.subr.mxu0 0.0
    %383 = vmatpush1.msra.mxu0 0.0
    %384 = vmatprep.subr.mxu0 0.0
    %v385 = vand.u32 %v80, 4294901760
    %v386 = vsub.f32 %v80, %v385
    %v387 = vand.u32 %v386, 4294901760
    %v388 = vsub.f32 %v386, %v387
    %v389 = vand.u32 %v388, 4294901760
    %390 = vmatpush1.msra.mxu0 %v389
    %391 = vmatprep.subr.mxu0 0.0
    %v392 = vand.u32 %v79, 4294901760
    %v393 = vsub.f32 %v79, %v392
    %v394 = vand.u32 %v393, 4294901760
    %v395 = vsub.f32 %v393, %v394
    %v396 = vand.u32 %v395, 4294901760
    %397 = vmatpush1.msra.mxu0 %v396
    %398 = vmatprep.subr.mxu0 0.0
    %v399 = vand.u32 %v78, 4294901760
    %v400 = vsub.f32 %v78, %v399
    %v401 = vand.u32 %v400, 4294901760
    %v402 = vsub.f32 %v400, %v401
    %v403 = vand.u32 %v402, 4294901760
    %404 = vmatpush1.msra.mxu0 %v403
    %405 = vmatprep.subr.mxu0 0.0
    %v406 = vand.u32 %v77, 4294901760
    %v407 = vsub.f32 %v77, %v406
    %v408 = vand.u32 %v407, 4294901760
    %v409 = vsub.f32 %v407, %v408
    %v410 = vand.u32 %v409, 4294901760
    %411 = vmatpush1.msra.mxu0 %v410
    %412 = vmatprep.subr.mxu0 0.0
    %v413 = vand.u32 %v76, 4294901760
    %v414 = vsub.f32 %v76, %v413
    %v415 = vand.u32 %v414, 4294901760
    %v416 = vsub.f32 %v414, %v415
    %v417 = vand.u32 %v416, 4294901760
    %418 = vmatpush1.msra.mxu0 %v417
    %419 = vmatprep.subr.mxu0 0.0
    %v420 = vand.u32 %v75, 4294901760
    %v421 = vsub.f32 %v75, %v420
    %v422 = vand.u32 %v421, 4294901760
    %v423 = vsub.f32 %v421, %v422
    %v424 = vand.u32 %v423, 4294901760
    %425 = vmatpush1.msra.mxu0 %v424
    %426 = vmatprep.subr.mxu0 0.0
    %v427 = vand.u32 %v74, 4294901760
    %v428 = vsub.f32 %v74, %v427
    %v429 = vand.u32 %v428, 4294901760
    %v430 = vsub.f32 %v428, %v429
    %v431 = vand.u32 %v430, 4294901760
    %432 = vmatpush1.msra.mxu0 %v431
    %433 = vmatprep.subr.mxu0 0.0
    %v434 = vand.u32 %v73, 4294901760
    %v435 = vsub.f32 %v73, %v434
    %v436 = vand.u32 %v435, 4294901760
    %v437 = vsub.f32 %v435, %v436
    %v438 = vand.u32 %v437, 4294901760
    %439 = vmatpush1.msra.mxu0 %v438
    %440 = vmatprep.subr.mxu0 0.0
    %441 = vmatpush2.msra.mxu0 0.0
    %442 = vmatprep.subr.mxu0 0.0
    %443 = vmatpush2.msra.mxu0 0.0
    %444 = vmatprep.subr.mxu0 0.0
    %445 = vmatpush2.msra.mxu0 0.0
    %446 = vmatprep.subr.mxu0 0.0
    %447 = vmatpush2.msra.mxu0 0.0
    %448 = vmatprep.subr.mxu0 0.0
    %449 = vmatpush2.msra.mxu0 0.0
    %450 = vmatprep.subr.mxu0 0.0
    %451 = vmatpush2.msra.mxu0 0.0
    %452 = vmatprep.subr.mxu0 0.0
    %453 = vmatpush2.msra.mxu0 0.0
    %454 = vmatprep.subr.mxu0 0.0
    %455 = vmatpush2.msra.mxu0 0.0
    %456 = vmatprep.subr.mxu0 0.0
    %457 = vmatpush2.msra.mxu0 0.0
    %458 = vmatprep.subr.mxu0 0.0
    %459 = vmatpush2.msra.mxu0 0.0
    %460 = vmatprep.subr.mxu0 0.0
    %461 = vmatpush2.msra.mxu0 0.0
    %462 = vmatprep.subr.mxu0 0.0
    %463 = vmatpush2.msra.mxu0 0.0
    %464 = vmatprep.subr.mxu0 0.0
    %465 = vmatpush2.msra.mxu0 0.0
    %466 = vmatprep.subr.mxu0 0.0
    %467 = vmatpush2.msra.mxu0 0.0
    %468 = vmatprep.subr.mxu0 0.0
    %469 = vmatpush2.msra.mxu0 0.0
    %470 = vmatprep.subr.mxu0 0.0
    %471 = vmatpush2.msra.mxu0 0.0
    %472 = vmatprep.mubr.f32.mxu0 0.0
    %v473 = vand.u32 %v88, 4294901760
    %474 = vmatmul.mubr.f32.gmra.mxu0 %v473
    %v475 = vpop.f32.mrf.mxu0
    %v476 = vadd.f32 %v215, %v475
    %v477 = vpop.f32.mrf.mxu0
    %478 = vmatprep.mubr.f32.mxu0 0.0
    %v479 = vand.u32 %v91, 4294901760
    %480 = vmatmul.mubr.f32.gmra.mxu0 %v479
    %v481 = vpop.f32.mrf.mxu0
    %v482 = vadd.f32 %v225, %v481
    %v483 = vpop.f32.mrf.mxu0
    %484 = vmatprep.mubr.f32.mxu0 0.0
    %v485 = vand.u32 %v94, 4294901760
    %486 = vmatmul.mubr.f32.gmra.mxu0 %v485
    %v487 = vpop.f32.mrf.mxu0
    %v488 = vadd.f32 %v235, %v487
    %v489 = vpop.f32.mrf.mxu0
    %490 = vmatprep.mubr.f32.mxu0 0.0
    %v491 = vand.u32 %v97, 4294901760
    %492 = vmatmul.mubr.f32.gmra.mxu0 %v491
    %v493 = vpop.f32.mrf.mxu0
    %v494 = vadd.f32 %v245, %v493
    %v495 = vpop.f32.mrf.mxu0
    %496 = vmatprep.mubr.f32.mxu0 0.0
    %v497 = vand.u32 %v100, 4294901760
    %498 = vmatmul.mubr.f32.gmra.mxu0 %v497
    %v499 = vpop.f32.mrf.mxu0
    %v500 = vadd.f32 %v255, %v499
    %v501 = vpop.f32.mrf.mxu0
    %502 = vmatprep.mubr.f32.mxu0 0.0
    %v503 = vand.u32 %v103, 4294901760
    %504 = vmatmul.mubr.f32.gmra.mxu0 %v503
    %v505 = vpop.f32.mrf.mxu0
    %v506 = vadd.f32 %v265, %v505
    %v507 = vpop.f32.mrf.mxu0
    %508 = vmatprep.mubr.f32.mxu0 0.0
    %v509 = vand.u32 %v106, 4294901760
    %510 = vmatmul.mubr.f32.gmra.mxu0 %v509
    %v511 = vpop.f32.mrf.mxu0
    %v512 = vadd.f32 %v275, %v511
    %v513 = vpop.f32.mrf.mxu0
    %514 = vmatprep.mubr.f32.mxu0 0.0
    %v515 = vand.u32 %v109, 4294901760
    %516 = vmatmul.mubr.f32.gmra.mxu0 %v515
    %v517 = vpop.f32.mrf.mxu0
    %v518 = vadd.f32 %v285, %v517
    %v519 = vpop.f32.mrf.mxu0
    %520 = vmatprep.mubr.f32.mxu0 0.0
    %v521 = vand.u32 %v112, 4294901760
    %522 = vmatmul.mubr.f32.gmra.mxu0 %v521
    %v523 = vpop.f32.mrf.mxu0
    %v524 = vadd.f32 %v295, %v523
    %v525 = vpop.f32.mrf.mxu0
    %526 = vmatprep.mubr.f32.mxu0 0.0
    %v527 = vand.u32 %v115, 4294901760
    %528 = vmatmul.mubr.f32.gmra.mxu0 %v527
    %v529 = vpop.f32.mrf.mxu0
    %v530 = vadd.f32 %v305, %v529
    %v531 = vpop.f32.mrf.mxu0
    %532 = vmatprep.mubr.f32.mxu0 0.0
    %v533 = vand.u32 %v118, 4294901760
    %534 = vmatmul.mubr.f32.gmra.mxu0 %v533
    %v535 = vpop.f32.mrf.mxu0
    %v536 = vadd.f32 %v315, %v535
    %v537 = vpop.f32.mrf.mxu0
    %538 = vmatprep.mubr.f32.mxu0 0.0
    %v539 = vand.u32 %v121, 4294901760
    %540 = vmatmul.mubr.f32.gmra.mxu0 %v539
    %v541 = vpop.f32.mrf.mxu0
    %v542 = vadd.f32 %v325, %v541
    %v543 = vpop.f32.mrf.mxu0
    %544 = vmatprep.mubr.f32.mxu0 0.0
    %v545 = vand.u32 %v124, 4294901760
    %546 = vmatmul.mubr.f32.gmra.mxu0 %v545
    %v547 = vpop.f32.mrf.mxu0
    %v548 = vadd.f32 %v335, %v547
    %v549 = vpop.f32.mrf.mxu0
    %550 = vmatprep.mubr.f32.mxu0 0.0
    %v551 = vand.u32 %v127, 4294901760
    %552 = vmatmul.mubr.f32.gmra.mxu0 %v551
    %v553 = vpop.f32.mrf.mxu0
    %v554 = vadd.f32 %v345, %v553
    %v555 = vpop.f32.mrf.mxu0
    %556 = vmatprep.mubr.f32.mxu0 0.0
    %v557 = vand.u32 %v130, 4294901760
    %558 = vmatmul.mubr.f32.gmra.mxu0 %v557
    %v559 = vpop.f32.mrf.mxu0
    %v560 = vadd.f32 %v355, %v559
    %v561 = vpop.f32.mrf.mxu0
    %562 = vmatprep.mubr.f32.mxu0 0.0
    %v563 = vand.u32 %v133, 4294901760
    %564 = vmatmul.mubr.f32.gmra.mxu0 %v563
    %v565 = vpop.f32.mrf.mxu0
    %v566 = vadd.f32 %v365, %v565
    %v567 = vpop.f32.mrf.mxu0
    %568 = vdwg.mxu0
    %569 = vmatprep.subr.mxu0 0.0
    %570 = vmatpush1.msra.mxu0 0.0
    %571 = vmatprep.subr.mxu0 0.0
    %572 = vmatpush1.msra.mxu0 0.0
    %573 = vmatprep.subr.mxu0 0.0
    %574 = vmatpush1.msra.mxu0 0.0
    %575 = vmatprep.subr.mxu0 0.0
    %576 = vmatpush1.msra.mxu0 0.0
    %577 = vmatprep.subr.mxu0 0.0
    %578 = vmatpush1.msra.mxu0 0.0
    %579 = vmatprep.subr.mxu0 0.0
    %580 = vmatpush1.msra.mxu0 0.0
    %581 = vmatprep.subr.mxu0 0.0
    %582 = vmatpush1.msra.mxu0 0.0
    %583 = vmatprep.subr.mxu0 0.0
    %584 = vmatpush1.msra.mxu0 0.0
    %585 = vmatprep.subr.mxu0 0.0
    %v586 = vand.u32 %v80, 4294901760
    %v587 = vsub.f32 %v80, %v586
    %588 = vmatpush1.msra.mxu0 %v587
    %589 = vmatprep.subr.mxu0 0.0
    %v590 = vand.u32 %v79, 4294901760
    %v591 = vsub.f32 %v79, %v590
    %592 = vmatpush1.msra.mxu0 %v591
    %593 = vmatprep.subr.mxu0 0.0
    %v594 = vand.u32 %v78, 4294901760
    %v595 = vsub.f32 %v78, %v594
    %596 = vmatpush1.msra.mxu0 %v595
    %597 = vmatprep.subr.mxu0 0.0
    %v598 = vand.u32 %v77, 4294901760
    %v599 = vsub.f32 %v77, %v598
    %600 = vmatpush1.msra.mxu0 %v599
    %601 = vmatprep.subr.mxu0 0.0
    %v602 = vand.u32 %v76, 4294901760
    %v603 = vsub.f32 %v76, %v602
    %604 = vmatpush1.msra.mxu0 %v603
    %605 = vmatprep.subr.mxu0 0.0
    %v606 = vand.u32 %v75, 4294901760
    %v607 = vsub.f32 %v75, %v606
    %608 = vmatpush1.msra.mxu0 %v607
    %609 = vmatprep.subr.mxu0 0.0
    %v610 = vand.u32 %v74, 4294901760
    %v611 = vsub.f32 %v74, %v610
    %612 = vmatpush1.msra.mxu0 %v611
    %613 = vmatprep.subr.mxu0 0.0
    %v614 = vand.u32 %v73, 4294901760
    %v615 = vsub.f32 %v73, %v614
    %616 = vmatpush1.msra.mxu0 %v615
    %617 = vmatprep.subr.mxu0 0.0
    %618 = vmatpush2.msra.mxu0 0.0
    %619 = vmatprep.subr.mxu0 0.0
    %620 = vmatpush2.msra.mxu0 0.0
    %621 = vmatprep.subr.mxu0 0.0
    %622 = vmatpush2.msra.mxu0 0.0
    %623 = vmatprep.subr.mxu0 0.0
    %624 = vmatpush2.msra.mxu0 0.0
    %625 = vmatprep.subr.mxu0 0.0
    %626 = vmatpush2.msra.mxu0 0.0
    %627 = vmatprep.subr.mxu0 0.0
    %628 = vmatpush2.msra.mxu0 0.0
    %629 = vmatprep.subr.mxu0 0.0
    %630 = vmatpush2.msra.mxu0 0.0
    %631 = vmatprep.subr.mxu0 0.0
    %632 = vmatpush2.msra.mxu0 0.0
    %633 = vmatprep.subr.mxu0 0.0
    %634 = vmatpush2.msra.mxu0 0.0
    %635 = vmatprep.subr.mxu0 0.0
    %636 = vmatpush2.msra.mxu0 0.0
    %637 = vmatprep.subr.mxu0 0.0
    %638 = vmatpush2.msra.mxu0 0.0
    %639 = vmatprep.subr.mxu0 0.0
    %640 = vmatpush2.msra.mxu0 0.0
    %641 = vmatprep.subr.mxu0 0.0
    %642 = vmatpush2.msra.mxu0 0.0
    %643 = vmatprep.subr.mxu0 0.0
    %644 = vmatpush2.msra.mxu0 0.0
    %645 = vmatprep.subr.mxu0 0.0
    %646 = vmatpush2.msra.mxu0 0.0
    %647 = vmatprep.subr.mxu0 0.0
    %648 = vmatpush2.msra.mxu0 0.0
    %649 = vmatprep.mubr.f32.mxu0 0.0
    %v650 = vand.u32 %v88, 4294901760
    %v651 = vsub.f32 %v88, %v650
    %652 = vmatmul.mubr.f32.gmra.mxu0 %v651
    %v653 = vpop.f32.mrf.mxu0
    %v654 = vadd.f32 %v476, %v653
    %v655 = vpop.f32.mrf.mxu0
    %656 = vmatprep.mubr.f32.mxu0 0.0
    %v657 = vand.u32 %v91, 4294901760
    %v658 = vsub.f32 %v91, %v657
    %659 = vmatmul.mubr.f32.gmra.mxu0 %v658
    %v660 = vpop.f32.mrf.mxu0
    %v661 = vadd.f32 %v482, %v660
    %v662 = vpop.f32.mrf.mxu0
    %663 = vmatprep.mubr.f32.mxu0 0.0
    %v664 = vand.u32 %v94, 4294901760
    %v665 = vsub.f32 %v94, %v664
    %666 = vmatmul.mubr.f32.gmra.mxu0 %v665
    %v667 = vpop.f32.mrf.mxu0
    %v668 = vadd.f32 %v488, %v667
    %v669 = vpop.f32.mrf.mxu0
    %670 = vmatprep.mubr.f32.mxu0 0.0
    %v671 = vand.u32 %v97, 4294901760
    %v672 = vsub.f32 %v97, %v671
    %673 = vmatmul.mubr.f32.gmra.mxu0 %v672
    %v674 = vpop.f32.mrf.mxu0
    %v675 = vadd.f32 %v494, %v674
    %v676 = vpop.f32.mrf.mxu0
    %677 = vmatprep.mubr.f32.mxu0 0.0
    %v678 = vand.u32 %v100, 4294901760
    %v679 = vsub.f32 %v100, %v678
    %680 = vmatmul.mubr.f32.gmra.mxu0 %v679
    %v681 = vpop.f32.mrf.mxu0
    %v682 = vadd.f32 %v500, %v681
    %v683 = vpop.f32.mrf.mxu0
    %684 = vmatprep.mubr.f32.mxu0 0.0
    %v685 = vand.u32 %v103, 4294901760
    %v686 = vsub.f32 %v103, %v685
    %687 = vmatmul.mubr.f32.gmra.mxu0 %v686
    %v688 = vpop.f32.mrf.mxu0
    %v689 = vadd.f32 %v506, %v688
    %v690 = vpop.f32.mrf.mxu0
    %691 = vmatprep.mubr.f32.mxu0 0.0
    %v692 = vand.u32 %v106, 4294901760
    %v693 = vsub.f32 %v106, %v692
    %694 = vmatmul.mubr.f32.gmra.mxu0 %v693
    %v695 = vpop.f32.mrf.mxu0
    %v696 = vadd.f32 %v512, %v695
    %v697 = vpop.f32.mrf.mxu0
    %698 = vmatprep.mubr.f32.mxu0 0.0
    %v699 = vand.u32 %v109, 4294901760
    %v700 = vsub.f32 %v109, %v699
    %701 = vmatmul.mubr.f32.gmra.mxu0 %v700
    %v702 = vpop.f32.mrf.mxu0
    %v703 = vadd.f32 %v518, %v702
    %v704 = vpop.f32.mrf.mxu0
    %705 = vmatprep.mubr.f32.mxu0 0.0
    %v706 = vand.u32 %v112, 4294901760
    %v707 = vsub.f32 %v112, %v706
    %708 = vmatmul.mubr.f32.gmra.mxu0 %v707
    %v709 = vpop.f32.mrf.mxu0
    %v710 = vadd.f32 %v524, %v709
    %v711 = vpop.f32.mrf.mxu0
    %712 = vmatprep.mubr.f32.mxu0 0.0
    %v713 = vand.u32 %v115, 4294901760
    %v714 = vsub.f32 %v115, %v713
    %715 = vmatmul.mubr.f32.gmra.mxu0 %v714
    %v716 = vpop.f32.mrf.mxu0
    %v717 = vadd.f32 %v530, %v716
    %v718 = vpop.f32.mrf.mxu0
    %719 = vmatprep.mubr.f32.mxu0 0.0
    %v720 = vand.u32 %v118, 4294901760
    %v721 = vsub.f32 %v118, %v720
    %722 = vmatmul.mubr.f32.gmra.mxu0 %v721
    %v723 = vpop.f32.mrf.mxu0
    %v724 = vadd.f32 %v536, %v723
    %v725 = vpop.f32.mrf.mxu0
    %726 = vmatprep.mubr.f32.mxu0 0.0
    %v727 = vand.u32 %v121, 4294901760
    %v728 = vsub.f32 %v121, %v727
    %729 = vmatmul.mubr.f32.gmra.mxu0 %v728
    %v730 = vpop.f32.mrf.mxu0
    %v731 = vadd.f32 %v542, %v730
    %v732 = vpop.f32.mrf.mxu0
    %733 = vmatprep.mubr.f32.mxu0 0.0
    %v734 = vand.u32 %v124, 4294901760
    %v735 = vsub.f32 %v124, %v734
    %736 = vmatmul.mubr.f32.gmra.mxu0 %v735
    %v737 = vpop.f32.mrf.mxu0
    %v738 = vadd.f32 %v548, %v737
    %v739 = vpop.f32.mrf.mxu0
    %740 = vmatprep.mubr.f32.mxu0 0.0
    %v741 = vand.u32 %v127, 4294901760
    %v742 = vsub.f32 %v127, %v741
    %743 = vmatmul.mubr.f32.gmra.mxu0 %v742
    %v744 = vpop.f32.mrf.mxu0
    %v745 = vadd.f32 %v554, %v744
    %v746 = vpop.f32.mrf.mxu0
    %747 = vmatprep.mubr.f32.mxu0 0.0
    %v748 = vand.u32 %v130, 4294901760
    %v749 = vsub.f32 %v130, %v748
    %750 = vmatmul.mubr.f32.gmra.mxu0 %v749
    %v751 = vpop.f32.mrf.mxu0
    %v752 = vadd.f32 %v560, %v751
    %v753 = vpop.f32.mrf.mxu0
    %754 = vmatprep.mubr.f32.mxu0 0.0
    %v755 = vand.u32 %v133, 4294901760
    %v756 = vsub.f32 %v133, %v755
    %757 = vmatmul.mubr.f32.gmra.mxu0 %v756
    %v758 = vpop.f32.mrf.mxu0
    %v759 = vadd.f32 %v566, %v758
    %v760 = vpop.f32.mrf.mxu0
    %761 = vdwg.mxu0
    %762 = vmatprep.subr.mxu0 0.0
    %763 = vmatpush1.msra.mxu0 0.0
    %764 = vmatprep.subr.mxu0 0.0
    %765 = vmatpush1.msra.mxu0 0.0
    %766 = vmatprep.subr.mxu0 0.0
    %767 = vmatpush1.msra.mxu0 0.0
    %768 = vmatprep.subr.mxu0 0.0
    %769 = vmatpush1.msra.mxu0 0.0
    %770 = vmatprep.subr.mxu0 0.0
    %771 = vmatpush1.msra.mxu0 0.0
    %772 = vmatprep.subr.mxu0 0.0
    %773 = vmatpush1.msra.mxu0 0.0
    %774 = vmatprep.subr.mxu0 0.0
    %775 = vmatpush1.msra.mxu0 0.0
    %776 = vmatprep.subr.mxu0 0.0
    %777 = vmatpush1.msra.mxu0 0.0
    %778 = vmatprep.subr.mxu0 0.0
    %v779 = vand.u32 %v80, 4294901760
    %780 = vmatpush1.msra.mxu0 %v779
    %781 = vmatprep.subr.mxu0 0.0
    %v782 = vand.u32 %v79, 4294901760
    %783 = vmatpush1.msra.mxu0 %v782
    %784 = vmatprep.subr.mxu0 0.0
    %v785 = vand.u32 %v78, 4294901760
    %786 = vmatpush1.msra.mxu0 %v785
    %787 = vmatprep.subr.mxu0 0.0
    %v788 = vand.u32 %v77, 4294901760
    %789 = vmatpush1.msra.mxu0 %v788
    %790 = vmatprep.subr.mxu0 0.0
    %v791 = vand.u32 %v76, 4294901760
    %792 = vmatpush1.msra.mxu0 %v791
    %793 = vmatprep.subr.mxu0 0.0
    %v794 = vand.u32 %v75, 4294901760
    %795 = vmatpush1.msra.mxu0 %v794
    %796 = vmatprep.subr.mxu0 0.0
    %v797 = vand.u32 %v74, 4294901760
    %798 = vmatpush1.msra.mxu0 %v797
    %799 = vmatprep.subr.mxu0 0.0
    %v800 = vand.u32 %v73, 4294901760
    %801 = vmatpush1.msra.mxu0 %v800
    %802 = vmatprep.subr.mxu0 0.0
    %803 = vmatpush2.msra.mxu0 0.0
    %804 = vmatprep.subr.mxu0 0.0
    %805 = vmatpush2.msra.mxu0 0.0
    %806 = vmatprep.subr.mxu0 0.0
    %807 = vmatpush2.msra.mxu0 0.0
    %808 = vmatprep.subr.mxu0 0.0
    %809 = vmatpush2.msra.mxu0 0.0
    %810 = vmatprep.subr.mxu0 0.0
    %811 = vmatpush2.msra.mxu0 0.0
    %812 = vmatprep.subr.mxu0 0.0
    %813 = vmatpush2.msra.mxu0 0.0
    %814 = vmatprep.subr.mxu0 0.0
    %815 = vmatpush2.msra.mxu0 0.0
    %816 = vmatprep.subr.mxu0 0.0
    %817 = vmatpush2.msra.mxu0 0.0
    %818 = vmatprep.subr.mxu0 0.0
    %819 = vmatpush2.msra.mxu0 0.0
    %820 = vmatprep.subr.mxu0 0.0
    %821 = vmatpush2.msra.mxu0 0.0
    %822 = vmatprep.subr.mxu0 0.0
    %823 = vmatpush2.msra.mxu0 0.0
    %824 = vmatprep.subr.mxu0 0.0
    %825 = vmatpush2.msra.mxu0 0.0
    %826 = vmatprep.subr.mxu0 0.0
    %827 = vmatpush2.msra.mxu0 0.0
    %828 = vmatprep.subr.mxu0 0.0
    %829 = vmatpush2.msra.mxu0 0.0
    %830 = vmatprep.subr.mxu0 0.0
    %831 = vmatpush2.msra.mxu0 0.0
    %832 = vmatprep.subr.mxu0 0.0
    %833 = vmatpush2.msra.mxu0 0.0
    %834 = vmatprep.mubr.f32.mxu0 0.0
    %v835 = vand.u32 %v88, 4294901760
    %v836 = vsub.f32 %v88, %v835
    %v837 = vand.u32 %v836, 4294901760
    %838 = vmatmul.mubr.f32.gmra.mxu0 %v837
    %v839 = vpop.f32.mrf.mxu0
    %v840 = vadd.f32 %v654, %v839
    %v841 = vpop.f32.mrf.mxu0
    %842 = vmatprep.mubr.f32.mxu0 0.0
    %v843 = vand.u32 %v91, 4294901760
    %v844 = vsub.f32 %v91, %v843
    %v845 = vand.u32 %v844, 4294901760
    %846 = vmatmul.mubr.f32.gmra.mxu0 %v845
    %v847 = vpop.f32.mrf.mxu0
    %v848 = vadd.f32 %v661, %v847
    %v849 = vpop.f32.mrf.mxu0
    %850 = vmatprep.mubr.f32.mxu0 0.0
    %v851 = vand.u32 %v94, 4294901760
    %v852 = vsub.f32 %v94, %v851
    %v853 = vand.u32 %v852, 4294901760
    %854 = vmatmul.mubr.f32.gmra.mxu0 %v853
    %v855 = vpop.f32.mrf.mxu0
    %v856 = vadd.f32 %v668, %v855
    %v857 = vpop.f32.mrf.mxu0
    %858 = vmatprep.mubr.f32.mxu0 0.0
    %v859 = vand.u32 %v97, 4294901760
    %v860 = vsub.f32 %v97, %v859
    %v861 = vand.u32 %v860, 4294901760
    %862 = vmatmul.mubr.f32.gmra.mxu0 %v861
    %v863 = vpop.f32.mrf.mxu0
    %v864 = vadd.f32 %v675, %v863
    %v865 = vpop.f32.mrf.mxu0
    %866 = vmatprep.mubr.f32.mxu0 0.0
    %v867 = vand.u32 %v100, 4294901760
    %v868 = vsub.f32 %v100, %v867
    %v869 = vand.u32 %v868, 4294901760
    %870 = vmatmul.mubr.f32.gmra.mxu0 %v869
    %v871 = vpop.f32.mrf.mxu0
    %v872 = vadd.f32 %v682, %v871
    %v873 = vpop.f32.mrf.mxu0
    %874 = vmatprep.mubr.f32.mxu0 0.0
    %v875 = vand.u32 %v103, 4294901760
    %v876 = vsub.f32 %v103, %v875
    %v877 = vand.u32 %v876, 4294901760
    %878 = vmatmul.mubr.f32.gmra.mxu0 %v877
    %v879 = vpop.f32.mrf.mxu0
    %v880 = vadd.f32 %v689, %v879
    %v881 = vpop.f32.mrf.mxu0
    %882 = vmatprep.mubr.f32.mxu0 0.0
    %v883 = vand.u32 %v106, 4294901760
    %v884 = vsub.f32 %v106, %v883
    %v885 = vand.u32 %v884, 4294901760
    %886 = vmatmul.mubr.f32.gmra.mxu0 %v885
    %v887 = vpop.f32.mrf.mxu0
    %v888 = vadd.f32 %v696, %v887
    %v889 = vpop.f32.mrf.mxu0
    %890 = vmatprep.mubr.f32.mxu0 0.0
    %v891 = vand.u32 %v109, 4294901760
    %v892 = vsub.f32 %v109, %v891
    %v893 = vand.u32 %v892, 4294901760
    %894 = vmatmul.mubr.f32.gmra.mxu0 %v893
    %v895 = vpop.f32.mrf.mxu0
    %v896 = vadd.f32 %v703, %v895
    %v897 = vpop.f32.mrf.mxu0
    %898 = vmatprep.mubr.f32.mxu0 0.0
    %v899 = vand.u32 %v112, 4294901760
    %v900 = vsub.f32 %v112, %v899
    %v901 = vand.u32 %v900, 4294901760
    %902 = vmatmul.mubr.f32.gmra.mxu0 %v901
    %v903 = vpop.f32.mrf.mxu0
    %v904 = vadd.f32 %v710, %v903
    %v905 = vpop.f32.mrf.mxu0
    %906 = vmatprep.mubr.f32.mxu0 0.0
    %v907 = vand.u32 %v115, 4294901760
    %v908 = vsub.f32 %v115, %v907
    %v909 = vand.u32 %v908, 4294901760
    %910 = vmatmul.mubr.f32.gmra.mxu0 %v909
    %v911 = vpop.f32.mrf.mxu0
    %v912 = vadd.f32 %v717, %v911
    %v913 = vpop.f32.mrf.mxu0
    %914 = vmatprep.mubr.f32.mxu0 0.0
    %v915 = vand.u32 %v118, 4294901760
    %v916 = vsub.f32 %v118, %v915
    %v917 = vand.u32 %v916, 4294901760
    %918 = vmatmul.mubr.f32.gmra.mxu0 %v917
    %v919 = vpop.f32.mrf.mxu0
    %v920 = vadd.f32 %v724, %v919
    %v921 = vpop.f32.mrf.mxu0
    %922 = vmatprep.mubr.f32.mxu0 0.0
    %v923 = vand.u32 %v121, 4294901760
    %v924 = vsub.f32 %v121, %v923
    %v925 = vand.u32 %v924, 4294901760
    %926 = vmatmul.mubr.f32.gmra.mxu0 %v925
    %v927 = vpop.f32.mrf.mxu0
    %v928 = vadd.f32 %v731, %v927
    %v929 = vpop.f32.mrf.mxu0
    %930 = vmatprep.mubr.f32.mxu0 0.0
    %v931 = vand.u32 %v124, 4294901760
    %v932 = vsub.f32 %v124, %v931
    %v933 = vand.u32 %v932, 4294901760
    %934 = vmatmul.mubr.f32.gmra.mxu0 %v933
    %v935 = vpop.f32.mrf.mxu0
    %v936 = vadd.f32 %v738, %v935
    %v937 = vpop.f32.mrf.mxu0
    %938 = vmatprep.mubr.f32.mxu0 0.0
    %v939 = vand.u32 %v127, 4294901760
    %v940 = vsub.f32 %v127, %v939
    %v941 = vand.u32 %v940, 4294901760
    %942 = vmatmul.mubr.f32.gmra.mxu0 %v941
    %v943 = vpop.f32.mrf.mxu0
    %v944 = vadd.f32 %v745, %v943
    %v945 = vpop.f32.mrf.mxu0
    %946 = vmatprep.mubr.f32.mxu0 0.0
    %v947 = vand.u32 %v130, 4294901760
    %v948 = vsub.f32 %v130, %v947
    %v949 = vand.u32 %v948, 4294901760
    %950 = vmatmul.mubr.f32.gmra.mxu0 %v949
    %v951 = vpop.f32.mrf.mxu0
    %v952 = vadd.f32 %v752, %v951
    %v953 = vpop.f32.mrf.mxu0
    %954 = vmatprep.mubr.f32.mxu0 0.0
    %v955 = vand.u32 %v133, 4294901760
    %v956 = vsub.f32 %v133, %v955
    %v957 = vand.u32 %v956, 4294901760
    %958 = vmatmul.mubr.f32.gmra.mxu0 %v957
    %v959 = vpop.f32.mrf.mxu0
    %v960 = vadd.f32 %v759, %v959
    %v961 = vpop.f32.mrf.mxu0
    %962 = vdwg.mxu0
    %963 = vmatprep.subr.mxu0 0.0
    %964 = vmatpush1.msra.mxu0 0.0
    %965 = vmatprep.subr.mxu0 0.0
    %966 = vmatpush1.msra.mxu0 0.0
    %967 = vmatprep.subr.mxu0 0.0
    %968 = vmatpush1.msra.mxu0 0.0
    %969 = vmatprep.subr.mxu0 0.0
    %970 = vmatpush1.msra.mxu0 0.0
    %971 = vmatprep.subr.mxu0 0.0
    %972 = vmatpush1.msra.mxu0 0.0
    %973 = vmatprep.subr.mxu0 0.0
    %974 = vmatpush1.msra.mxu0 0.0
    %975 = vmatprep.subr.mxu0 0.0
    %976 = vmatpush1.msra.mxu0 0.0
    %977 = vmatprep.subr.mxu0 0.0
    %978 = vmatpush1.msra.mxu0 0.0
    %979 = vmatprep.subr.mxu0 0.0
    %v980 = vand.u32 %v80, 4294901760
    %v981 = vsub.f32 %v80, %v980
    %v982 = vand.u32 %v981, 4294901760
    %983 = vmatpush1.msra.mxu0 %v982
    %984 = vmatprep.subr.mxu0 0.0
    %v985 = vand.u32 %v79, 4294901760
    %v986 = vsub.f32 %v79, %v985
    %v987 = vand.u32 %v986, 4294901760
    %988 = vmatpush1.msra.mxu0 %v987
    %989 = vmatprep.subr.mxu0 0.0
    %v990 = vand.u32 %v78, 4294901760
    %v991 = vsub.f32 %v78, %v990
    %v992 = vand.u32 %v991, 4294901760
    %993 = vmatpush1.msra.mxu0 %v992
    %994 = vmatprep.subr.mxu0 0.0
    %v995 = vand.u32 %v77, 4294901760
    %v996 = vsub.f32 %v77, %v995
    %v997 = vand.u32 %v996, 4294901760
    %998 = vmatpush1.msra.mxu0 %v997
    %999 = vmatprep.subr.mxu0 0.0
    %v1000 = vand.u32 %v76, 4294901760
    %v1001 = vsub.f32 %v76, %v1000
    %v1002 = vand.u32 %v1001, 4294901760
    %1003 = vmatpush1.msra.mxu0 %v1002
    %1004 = vmatprep.subr.mxu0 0.0
    %v1005 = vand.u32 %v75, 4294901760
    %v1006 = vsub.f32 %v75, %v1005
    %v1007 = vand.u32 %v1006, 4294901760
    %1008 = vmatpush1.msra.mxu0 %v1007
    %1009 = vmatprep.subr.mxu0 0.0
    %v1010 = vand.u32 %v74, 4294901760
    %v1011 = vsub.f32 %v74, %v1010
    %v1012 = vand.u32 %v1011, 4294901760
    %1013 = vmatpush1.msra.mxu0 %v1012
    %1014 = vmatprep.subr.mxu0 0.0
    %v1015 = vand.u32 %v73, 4294901760
    %v1016 = vsub.f32 %v73, %v1015
    %v1017 = vand.u32 %v1016, 4294901760
    %1018 = vmatpush1.msra.mxu0 %v1017
    %1019 = vmatprep.subr.mxu0 0.0
    %1020 = vmatpush2.msra.mxu0 0.0
    %1021 = vmatprep.subr.mxu0 0.0
    %1022 = vmatpush2.msra.mxu0 0.0
    %1023 = vmatprep.subr.mxu0 0.0
    %1024 = vmatpush2.msra.mxu0 0.0
    %1025 = vmatprep.subr.mxu0 0.0
    %1026 = vmatpush2.msra.mxu0 0.0
    %1027 = vmatprep.subr.mxu0 0.0
    %1028 = vmatpush2.msra.mxu0 0.0
    %1029 = vmatprep.subr.mxu0 0.0
    %1030 = vmatpush2.msra.mxu0 0.0
    %1031 = vmatprep.subr.mxu0 0.0
    %1032 = vmatpush2.msra.mxu0 0.0
    %1033 = vmatprep.subr.mxu0 0.0
    %1034 = vmatpush2.msra.mxu0 0.0
    %1035 = vmatprep.subr.mxu0 0.0
    %1036 = vmatpush2.msra.mxu0 0.0
    %1037 = vmatprep.subr.mxu0 0.0
    %1038 = vmatpush2.msra.mxu0 0.0
    %1039 = vmatprep.subr.mxu0 0.0
    %1040 = vmatpush2.msra.mxu0 0.0
    %1041 = vmatprep.subr.mxu0 0.0
    %1042 = vmatpush2.msra.mxu0 0.0
    %1043 = vmatprep.subr.mxu0 0.0
    %1044 = vmatpush2.msra.mxu0 0.0
    %1045 = vmatprep.subr.mxu0 0.0
    %1046 = vmatpush2.msra.mxu0 0.0
    %1047 = vmatprep.subr.mxu0 0.0
    %1048 = vmatpush2.msra.mxu0 0.0
    %1049 = vmatprep.subr.mxu0 0.0
    %1050 = vmatpush2.msra.mxu0 0.0
    %1051 = vmatprep.mubr.f32.mxu0 0.0
    %v1052 = vand.u32 %v88, 4294901760
    %1053 = vmatmul.mubr.f32.gmra.mxu0 %v1052
    %v1054 = vpop.f32.mrf.mxu0
    %v1055 = vadd.f32 %v840, %v1054
    %v1056 = vpop.f32.mrf.mxu0
    %1057 = vmatprep.mubr.f32.mxu0 0.0
    %v1058 = vand.u32 %v91, 4294901760
    %1059 = vmatmul.mubr.f32.gmra.mxu0 %v1058
    %v1060 = vpop.f32.mrf.mxu0
    %v1061 = vadd.f32 %v848, %v1060
    %v1062 = vpop.f32.mrf.mxu0
    %1063 = vmatprep.mubr.f32.mxu0 0.0
    %v1064 = vand.u32 %v94, 4294901760
    %1065 = vmatmul.mubr.f32.gmra.mxu0 %v1064
    %v1066 = vpop.f32.mrf.mxu0
    %v1067 = vadd.f32 %v856, %v1066
    %v1068 = vpop.f32.mrf.mxu0
    %1069 = vmatprep.mubr.f32.mxu0 0.0
    %v1070 = vand.u32 %v97, 4294901760
    %1071 = vmatmul.mubr.f32.gmra.mxu0 %v1070
    %v1072 = vpop.f32.mrf.mxu0
    %v1073 = vadd.f32 %v864, %v1072
    %v1074 = vpop.f32.mrf.mxu0
    %1075 = vmatprep.mubr.f32.mxu0 0.0
    %v1076 = vand.u32 %v100, 4294901760
    %1077 = vmatmul.mubr.f32.gmra.mxu0 %v1076
    %v1078 = vpop.f32.mrf.mxu0
    %v1079 = vadd.f32 %v872, %v1078
    %v1080 = vpop.f32.mrf.mxu0
    %1081 = vmatprep.mubr.f32.mxu0 0.0
    %v1082 = vand.u32 %v103, 4294901760
    %1083 = vmatmul.mubr.f32.gmra.mxu0 %v1082
    %v1084 = vpop.f32.mrf.mxu0
    %v1085 = vadd.f32 %v880, %v1084
    %v1086 = vpop.f32.mrf.mxu0
    %1087 = vmatprep.mubr.f32.mxu0 0.0
    %v1088 = vand.u32 %v106, 4294901760
    %1089 = vmatmul.mubr.f32.gmra.mxu0 %v1088
    %v1090 = vpop.f32.mrf.mxu0
    %v1091 = vadd.f32 %v888, %v1090
    %v1092 = vpop.f32.mrf.mxu0
    %1093 = vmatprep.mubr.f32.mxu0 0.0
    %v1094 = vand.u32 %v109, 4294901760
    %1095 = vmatmul.mubr.f32.gmra.mxu0 %v1094
    %v1096 = vpop.f32.mrf.mxu0
    %v1097 = vadd.f32 %v896, %v1096
    %v1098 = vpop.f32.mrf.mxu0
    %1099 = vmatprep.mubr.f32.mxu0 0.0
    %v1100 = vand.u32 %v112, 4294901760
    %1101 = vmatmul.mubr.f32.gmra.mxu0 %v1100
    %v1102 = vpop.f32.mrf.mxu0
    %v1103 = vadd.f32 %v904, %v1102
    %v1104 = vpop.f32.mrf.mxu0
    %1105 = vmatprep.mubr.f32.mxu0 0.0
    %v1106 = vand.u32 %v115, 4294901760
    %1107 = vmatmul.mubr.f32.gmra.mxu0 %v1106
    %v1108 = vpop.f32.mrf.mxu0
    %v1109 = vadd.f32 %v912, %v1108
    %v1110 = vpop.f32.mrf.mxu0
    %1111 = vmatprep.mubr.f32.mxu0 0.0
    %v1112 = vand.u32 %v118, 4294901760
    %1113 = vmatmul.mubr.f32.gmra.mxu0 %v1112
    %v1114 = vpop.f32.mrf.mxu0
    %v1115 = vadd.f32 %v920, %v1114
    %v1116 = vpop.f32.mrf.mxu0
    %1117 = vmatprep.mubr.f32.mxu0 0.0
    %v1118 = vand.u32 %v121, 4294901760
    %1119 = vmatmul.mubr.f32.gmra.mxu0 %v1118
    %v1120 = vpop.f32.mrf.mxu0
    %v1121 = vadd.f32 %v928, %v1120
    %v1122 = vpop.f32.mrf.mxu0
    %1123 = vmatprep.mubr.f32.mxu0 0.0
    %v1124 = vand.u32 %v124, 4294901760
    %1125 = vmatmul.mubr.f32.gmra.mxu0 %v1124
    %v1126 = vpop.f32.mrf.mxu0
    %v1127 = vadd.f32 %v936, %v1126
    %v1128 = vpop.f32.mrf.mxu0
    %1129 = vmatprep.mubr.f32.mxu0 0.0
    %v1130 = vand.u32 %v127, 4294901760
    %1131 = vmatmul.mubr.f32.gmra.mxu0 %v1130
    %v1132 = vpop.f32.mrf.mxu0
    %v1133 = vadd.f32 %v944, %v1132
    %v1134 = vpop.f32.mrf.mxu0
    %1135 = vmatprep.mubr.f32.mxu0 0.0
    %v1136 = vand.u32 %v130, 4294901760
    %1137 = vmatmul.mubr.f32.gmra.mxu0 %v1136
    %v1138 = vpop.f32.mrf.mxu0
    %v1139 = vadd.f32 %v952, %v1138
    %v1140 = vpop.f32.mrf.mxu0
    %1141 = vmatprep.mubr.f32.mxu0 0.0
    %v1142 = vand.u32 %v133, 4294901760
    %1143 = vmatmul.mubr.f32.gmra.mxu0 %v1142
    %v1144 = vpop.f32.mrf.mxu0
    %v1145 = vadd.f32 %v960, %v1144
    %v1146 = vpop.f32.mrf.mxu0
    %1147 = vdwg.mxu0
    %1148 = vmatprep.subr.mxu0 0.0
    %1149 = vmatpush1.msra.mxu0 0.0
    %1150 = vmatprep.subr.mxu0 0.0
    %1151 = vmatpush1.msra.mxu0 0.0
    %1152 = vmatprep.subr.mxu0 0.0
    %1153 = vmatpush1.msra.mxu0 0.0
    %1154 = vmatprep.subr.mxu0 0.0
    %1155 = vmatpush1.msra.mxu0 0.0
    %1156 = vmatprep.subr.mxu0 0.0
    %1157 = vmatpush1.msra.mxu0 0.0
    %1158 = vmatprep.subr.mxu0 0.0
    %1159 = vmatpush1.msra.mxu0 0.0
    %1160 = vmatprep.subr.mxu0 0.0
    %1161 = vmatpush1.msra.mxu0 0.0
    %1162 = vmatprep.subr.mxu0 0.0
    %1163 = vmatpush1.msra.mxu0 0.0
    %1164 = vmatprep.subr.mxu0 0.0
    %v1165 = vand.u32 %v80, 4294901760
    %1166 = vmatpush1.msra.mxu0 %v1165
    %1167 = vmatprep.subr.mxu0 0.0
    %v1168 = vand.u32 %v79, 4294901760
    %1169 = vmatpush1.msra.mxu0 %v1168
    %1170 = vmatprep.subr.mxu0 0.0
    %v1171 = vand.u32 %v78, 4294901760
    %1172 = vmatpush1.msra.mxu0 %v1171
    %1173 = vmatprep.subr.mxu0 0.0
    %v1174 = vand.u32 %v77, 4294901760
    %1175 = vmatpush1.msra.mxu0 %v1174
    %1176 = vmatprep.subr.mxu0 0.0
    %v1177 = vand.u32 %v76, 4294901760
    %1178 = vmatpush1.msra.mxu0 %v1177
    %1179 = vmatprep.subr.mxu0 0.0
    %v1180 = vand.u32 %v75, 4294901760
    %1181 = vmatpush1.msra.mxu0 %v1180
    %1182 = vmatprep.subr.mxu0 0.0
    %v1183 = vand.u32 %v74, 4294901760
    %1184 = vmatpush1.msra.mxu0 %v1183
    %1185 = vmatprep.subr.mxu0 0.0
    %v1186 = vand.u32 %v73, 4294901760
    %1187 = vmatpush1.msra.mxu0 %v1186
    %1188 = vmatprep.subr.mxu0 0.0
    %1189 = vmatpush2.msra.mxu0 0.0
    %1190 = vmatprep.subr.mxu0 0.0
    %1191 = vmatpush2.msra.mxu0 0.0
    %1192 = vmatprep.subr.mxu0 0.0
    %1193 = vmatpush2.msra.mxu0 0.0
    %1194 = vmatprep.subr.mxu0 0.0
    %1195 = vmatpush2.msra.mxu0 0.0
    %1196 = vmatprep.subr.mxu0 0.0
    %1197 = vmatpush2.msra.mxu0 0.0
    %1198 = vmatprep.subr.mxu0 0.0
    %1199 = vmatpush2.msra.mxu0 0.0
    %1200 = vmatprep.subr.mxu0 0.0
    %1201 = vmatpush2.msra.mxu0 0.0
    %1202 = vmatprep.subr.mxu0 0.0
    %1203 = vmatpush2.msra.mxu0 0.0
    %1204 = vmatprep.subr.mxu0 0.0
    %1205 = vmatpush2.msra.mxu0 0.0
    %1206 = vmatprep.subr.mxu0 0.0
    %1207 = vmatpush2.msra.mxu0 0.0
    %1208 = vmatprep.subr.mxu0 0.0
    %1209 = vmatpush2.msra.mxu0 0.0
    %1210 = vmatprep.subr.mxu0 0.0
    %1211 = vmatpush2.msra.mxu0 0.0
    %1212 = vmatprep.subr.mxu0 0.0
    %1213 = vmatpush2.msra.mxu0 0.0
    %1214 = vmatprep.subr.mxu0 0.0
    %1215 = vmatpush2.msra.mxu0 0.0
    %1216 = vmatprep.subr.mxu0 0.0
    %1217 = vmatpush2.msra.mxu0 0.0
    %1218 = vmatprep.subr.mxu0 0.0
    %1219 = vmatpush2.msra.mxu0 0.0
    %1220 = vmatprep.mubr.f32.mxu0 0.0
    %v1221 = vand.u32 %v88, 4294901760
    %1222 = vmatmul.mubr.f32.gmra.mxu0 %v1221
    %v1223 = vpop.f32.mrf.mxu0
    %v1224 = vadd.f32 %v1055, %v1223
    %v1225 = vpop.f32.mrf.mxu0
    %1226 = vmatprep.mubr.f32.mxu0 0.0
    %v1227 = vand.u32 %v91, 4294901760
    %1228 = vmatmul.mubr.f32.gmra.mxu0 %v1227
    %v1229 = vpop.f32.mrf.mxu0
    %v1230 = vadd.f32 %v1061, %v1229
    %v1231 = vpop.f32.mrf.mxu0
    %1232 = vmatprep.mubr.f32.mxu0 0.0
    %v1233 = vand.u32 %v94, 4294901760
    %1234 = vmatmul.mubr.f32.gmra.mxu0 %v1233
    %v1235 = vpop.f32.mrf.mxu0
    %v1236 = vadd.f32 %v1067, %v1235
    %v1237 = vpop.f32.mrf.mxu0
    %1238 = vmatprep.mubr.f32.mxu0 0.0
    %v1239 = vand.u32 %v97, 4294901760
    %1240 = vmatmul.mubr.f32.gmra.mxu0 %v1239
    %v1241 = vpop.f32.mrf.mxu0
    %v1242 = vadd.f32 %v1073, %v1241
    %v1243 = vpop.f32.mrf.mxu0
    %1244 = vmatprep.mubr.f32.mxu0 0.0
    %v1245 = vand.u32 %v100, 4294901760
    %1246 = vmatmul.mubr.f32.gmra.mxu0 %v1245
    %v1247 = vpop.f32.mrf.mxu0
    %v1248 = vadd.f32 %v1079, %v1247
    %v1249 = vpop.f32.mrf.mxu0
    %1250 = vmatprep.mubr.f32.mxu0 0.0
    %v1251 = vand.u32 %v103, 4294901760
    %1252 = vmatmul.mubr.f32.gmra.mxu0 %v1251
    %v1253 = vpop.f32.mrf.mxu0
    %v1254 = vadd.f32 %v1085, %v1253
    %v1255 = vpop.f32.mrf.mxu0
    %1256 = vmatprep.mubr.f32.mxu0 0.0
    %v1257 = vand.u32 %v106, 4294901760
    %1258 = vmatmul.mubr.f32.gmra.mxu0 %v1257
    %v1259 = vpop.f32.mrf.mxu0
    %v1260 = vadd.f32 %v1091, %v1259
    %v1261 = vpop.f32.mrf.mxu0
    %1262 = vmatprep.mubr.f32.mxu0 0.0
    %v1263 = vand.u32 %v109, 4294901760
    %1264 = vmatmul.mubr.f32.gmra.mxu0 %v1263
    %v1265 = vpop.f32.mrf.mxu0
    %v1266 = vadd.f32 %v1097, %v1265
    %v1267 = vpop.f32.mrf.mxu0
    %1268 = vmatprep.mubr.f32.mxu0 0.0
    %v1269 = vand.u32 %v112, 4294901760
    %1270 = vmatmul.mubr.f32.gmra.mxu0 %v1269
    %v1271 = vpop.f32.mrf.mxu0
    %v1272 = vadd.f32 %v1103, %v1271
    %v1273 = vpop.f32.mrf.mxu0
    %1274 = vmatprep.mubr.f32.mxu0 0.0
    %v1275 = vand.u32 %v115, 4294901760
    %1276 = vmatmul.mubr.f32.gmra.mxu0 %v1275
    %v1277 = vpop.f32.mrf.mxu0
    %v1278 = vadd.f32 %v1109, %v1277
    %v1279 = vpop.f32.mrf.mxu0
    %1280 = vmatprep.mubr.f32.mxu0 0.0
    %v1281 = vand.u32 %v118, 4294901760
    %1282 = vmatmul.mubr.f32.gmra.mxu0 %v1281
    %v1283 = vpop.f32.mrf.mxu0
    %v1284 = vadd.f32 %v1115, %v1283
    %v1285 = vpop.f32.mrf.mxu0
    %1286 = vmatprep.mubr.f32.mxu0 0.0
    %v1287 = vand.u32 %v121, 4294901760
    %1288 = vmatmul.mubr.f32.gmra.mxu0 %v1287
    %v1289 = vpop.f32.mrf.mxu0
    %v1290 = vadd.f32 %v1121, %v1289
    %v1291 = vpop.f32.mrf.mxu0
    %1292 = vmatprep.mubr.f32.mxu0 0.0
    %v1293 = vand.u32 %v124, 4294901760
    %1294 = vmatmul.mubr.f32.gmra.mxu0 %v1293
    %v1295 = vpop.f32.mrf.mxu0
    %v1296 = vadd.f32 %v1127, %v1295
    %v1297 = vpop.f32.mrf.mxu0
    %1298 = vmatprep.mubr.f32.mxu0 0.0
    %v1299 = vand.u32 %v127, 4294901760
    %1300 = vmatmul.mubr.f32.gmra.mxu0 %v1299
    %v1301 = vpop.f32.mrf.mxu0
    %v1302 = vadd.f32 %v1133, %v1301
    %v1303 = vpop.f32.mrf.mxu0
    %1304 = vmatprep.mubr.f32.mxu0 0.0
    %v1305 = vand.u32 %v130, 4294901760
    %1306 = vmatmul.mubr.f32.gmra.mxu0 %v1305
    %v1307 = vpop.f32.mrf.mxu0
    %v1308 = vadd.f32 %v1139, %v1307
    %v1309 = vpop.f32.mrf.mxu0
    %1310 = vmatprep.mubr.f32.mxu0 0.0
    %v1311 = vand.u32 %v133, 4294901760
    %1312 = vmatmul.mubr.f32.gmra.mxu0 %v1311
    %v1313 = vpop.f32.mrf.mxu0
    %v1314 = vadd.f32 %v1145, %v1313
    %v1315 = vpop.f32.mrf.mxu0
    %1316 = vdwg.mxu0
    %v1317 = vmax.f32 %v1224, 0.0
    %v1318 = vmax.f32 %v1230, 0.0
    %v1319 = vmax.f32 %v1236, 0.0
    %v1320 = vmax.f32 %v1242, 0.0
    %v1321 = vmax.f32 %v1248, 0.0
    %v1322 = vmax.f32 %v1254, 0.0
    %v1323 = vmax.f32 %v1260, 0.0
    %v1324 = vmax.f32 %v1266, 0.0
    %v1325 = vmax.f32 %v1272, 0.0
    %v1326 = vmax.f32 %v1278, 0.0
    %v1327 = vmax.f32 %v1284, 0.0
    %v1328 = vmax.f32 %v1290, 0.0
    %v1329 = vmax.f32 %v1296, 0.0
    %v1330 = vmax.f32 %v1302, 0.0
    %v1331 = vmax.f32 %v1308, 0.0
    %v1332 = vmax.f32 %v1314, 0.0
    %v1333 = vld [vmem:[#allocation2] sm:$0xff]
    %v1334 = vld [vmem:[#allocation2 + $0x8] sm:$0xff]
    %v1335 = vld [vmem:[#allocation2 + $0x10] sm:$0xff]
    %v1336 = vld [vmem:[#allocation2 + $0x18] sm:$0xff]
    %v1337 = vld [vmem:[#allocation2 + $0x20] sm:$0xff]
    %v1338 = vld [vmem:[#allocation2 + $0x28] sm:$0xff]
    %v1339 = vld [vmem:[#allocation2 + $0x30] sm:$0xff]
    %v1340 = vld [vmem:[#allocation2 + $0x38] sm:$0xff]
    %v1341 = vld [vmem:[#allocation2 + $0x40] sm:$0xff]
    %v1342 = vld [vmem:[#allocation2 + $0x48] sm:$0xff]
    %v1343 = vld [vmem:[#allocation2 + $0x50] sm:$0xff]
    %v1344 = vld [vmem:[#allocation2 + $0x58] sm:$0xff]
    %v1345 = vld [vmem:[#allocation2 + $0x60] sm:$0xff]
    %v1346 = vld [vmem:[#allocation2 + $0x68] sm:$0xff]
    %v1347 = vld [vmem:[#allocation2 + $0x70] sm:$0xff]
    %v1348 = vld [vmem:[#allocation2 + $0x78] sm:$0xff]
    %v1349 = vld [vmem:[%s2 + $0x1] sm:$0x1]
    %v1350 = vlaneseq
    %v1351 = vshrl.u32 %v1350, 7
    %v1352 = vsub.s32 0, %v1351
    %v1353 = vrot.slane %v1349, %v1352
    %1354 = vmatprep.subr.mxu0 0.0
    %v1355 = vand.u32 %v1348, 4294901760
    %1356 = vmatpush1.msra.mxu0 %v1355
    %1357 = vmatprep.subr.mxu0 0.0
    %v1358 = vand.u32 %v1347, 4294901760
    %1359 = vmatpush1.msra.mxu0 %v1358
    %1360 = vmatprep.subr.mxu0 0.0
    %v1361 = vand.u32 %v1346, 4294901760
    %1362 = vmatpush1.msra.mxu0 %v1361
    %1363 = vmatprep.subr.mxu0 0.0
    %v1364 = vand.u32 %v1345, 4294901760
    %1365 = vmatpush1.msra.mxu0 %v1364
    %1366 = vmatprep.subr.mxu0 0.0
    %v1367 = vand.u32 %v1344, 4294901760
    %1368 = vmatpush1.msra.mxu0 %v1367
    %1369 = vmatprep.subr.mxu0 0.0
    %v1370 = vand.u32 %v1343, 4294901760
    %1371 = vmatpush1.msra.mxu0 %v1370
    %1372 = vmatprep.subr.mxu0 0.0
    %v1373 = vand.u32 %v1342, 4294901760
    %1374 = vmatpush1.msra.mxu0 %v1373
    %1375 = vmatprep.subr.mxu0 0.0
    %v1376 = vand.u32 %v1341, 4294901760
    %1377 = vmatpush1.msra.mxu0 %v1376
    %1378 = vmatprep.subr.mxu0 0.0
    %v1379 = vand.u32 %v1340, 4294901760
    %1380 = vmatpush1.msra.mxu0 %v1379
    %1381 = vmatprep.subr.mxu0 0.0
    %v1382 = vand.u32 %v1339, 4294901760
    %1383 = vmatpush1.msra.mxu0 %v1382
    %1384 = vmatprep.subr.mxu0 0.0
    %v1385 = vand.u32 %v1338, 4294901760
    %1386 = vmatpush1.msra.mxu0 %v1385
    %1387 = vmatprep.subr.mxu0 0.0
    %v1388 = vand.u32 %v1337, 4294901760
    %1389 = vmatpush1.msra.mxu0 %v1388
    %1390 = vmatprep.subr.mxu0 0.0
    %v1391 = vand.u32 %v1336, 4294901760
    %1392 = vmatpush1.msra.mxu0 %v1391
    %1393 = vmatprep.subr.mxu0 0.0
    %v1394 = vand.u32 %v1335, 4294901760
    %1395 = vmatpush1.msra.mxu0 %v1394
    %1396 = vmatprep.subr.mxu0 0.0
    %v1397 = vand.u32 %v1334, 4294901760
    %1398 = vmatpush1.msra.mxu0 %v1397
    %1399 = vmatprep.subr.mxu0 0.0
    %v1400 = vand.u32 %v1333, 4294901760
    %1401 = vmatpush1.msra.mxu0 %v1400
    %1402 = vmatprep.subr.mxu0 0.0
    %1403 = vmatpush2.msra.mxu0 0.0
    %1404 = vmatprep.subr.mxu0 0.0
    %1405 = vmatpush2.msra.mxu0 0.0
    %1406 = vmatprep.subr.mxu0 0.0
    %1407 = vmatpush2.msra.mxu0 0.0
    %1408 = vmatprep.subr.mxu0 0.0
    %1409 = vmatpush2.msra.mxu0 0.0
    %1410 = vmatprep.subr.mxu0 0.0
    %1411 = vmatpush2.msra.mxu0 0.0
    %1412 = vmatprep.subr.mxu0 0.0
    %1413 = vmatpush2.msra.mxu0 0.0
    %1414 = vmatprep.subr.mxu0 0.0
    %1415 = vmatpush2.msra.mxu0 0.0
    %1416 = vmatprep.subr.mxu0 0.0
    %1417 = vmatpush2.msra.mxu0 0.0
    %1418 = vmatprep.subr.mxu0 0.0
    %1419 = vmatpush2.msra.mxu0 0.0
    %1420 = vmatprep.subr.mxu0 0.0
    %1421 = vmatpush2.msra.mxu0 0.0
    %1422 = vmatprep.subr.mxu0 0.0
    %1423 = vmatpush2.msra.mxu0 0.0
    %1424 = vmatprep.subr.mxu0 0.0
    %1425 = vmatpush2.msra.mxu0 0.0
    %1426 = vmatprep.subr.mxu0 0.0
    %1427 = vmatpush2.msra.mxu0 0.0
    %1428 = vmatprep.subr.mxu0 0.0
    %1429 = vmatpush2.msra.mxu0 0.0
    %1430 = vmatprep.subr.mxu0 0.0
    %1431 = vmatpush2.msra.mxu0 0.0
    %1432 = vmatprep.subr.mxu0 0.0
    %1433 = vmatpush2.msra.mxu0 0.0
    %1434 = vmatprep.mubr.f32.mxu0 0.0
    %v1435 = vand.u32 %v1317, 4294901760
    %v1436 = vsub.f32 %v1317, %v1435
    %v1437 = vand.u32 %v1436, 4294901760
    %v1438 = vsub.f32 %v1436, %v1437
    %v1439 = vand.u32 %v1438, 4294901760
    %1440 = vmatmul.mubr.f32.gmra.mxu0 %v1439
    %v1441 = vpop.f32.mrf.mxu0
    %v1442 = vadd.f32 %v1353, %v1441
    %v1443 = vpop.f32.mrf.mxu0
    %1444 = vmatprep.mubr.f32.mxu0 0.0
    %v1445 = vand.u32 %v1318, 4294901760
    %v1446 = vsub.f32 %v1318, %v1445
    %v1447 = vand.u32 %v1446, 4294901760
    %v1448 = vsub.f32 %v1446, %v1447
    %v1449 = vand.u32 %v1448, 4294901760
    %1450 = vmatmul.mubr.f32.gmra.mxu0 %v1449
    %v1451 = vpop.f32.mrf.mxu0
    %v1452 = vadd.f32 %v1353, %v1451
    %v1453 = vpop.f32.mrf.mxu0
    %1454 = vmatprep.mubr.f32.mxu0 0.0
    %v1455 = vand.u32 %v1319, 4294901760
    %v1456 = vsub.f32 %v1319, %v1455
    %v1457 = vand.u32 %v1456, 4294901760
    %v1458 = vsub.f32 %v1456, %v1457
    %v1459 = vand.u32 %v1458, 4294901760
    %1460 = vmatmul.mubr.f32.gmra.mxu0 %v1459
    %v1461 = vpop.f32.mrf.mxu0
    %v1462 = vadd.f32 %v1353, %v1461
    %v1463 = vpop.f32.mrf.mxu0
    %1464 = vmatprep.mubr.f32.mxu0 0.0
    %v1465 = vand.u32 %v1320, 4294901760
    %v1466 = vsub.f32 %v1320, %v1465
    %v1467 = vand.u32 %v1466, 4294901760
    %v1468 = vsub.f32 %v1466, %v1467
    %v1469 = vand.u32 %v1468, 4294901760
    %1470 = vmatmul.mubr.f32.gmra.mxu0 %v1469
    %v1471 = vpop.f32.mrf.mxu0
    %v1472 = vadd.f32 %v1353, %v1471
    %v1473 = vpop.f32.mrf.mxu0
    %1474 = vmatprep.mubr.f32.mxu0 0.0
    %v1475 = vand.u32 %v1321, 4294901760
    %v1476 = vsub.f32 %v1321, %v1475
    %v1477 = vand.u32 %v1476, 4294901760
    %v1478 = vsub.f32 %v1476, %v1477
    %v1479 = vand.u32 %v1478, 4294901760
    %1480 = vmatmul.mubr.f32.gmra.mxu0 %v1479
    %v1481 = vpop.f32.mrf.mxu0
    %v1482 = vadd.f32 %v1353, %v1481
    %v1483 = vpop.f32.mrf.mxu0
    %1484 = vmatprep.mubr.f32.mxu0 0.0
    %v1485 = vand.u32 %v1322, 4294901760
    %v1486 = vsub.f32 %v1322, %v1485
    %v1487 = vand.u32 %v1486, 4294901760
    %v1488 = vsub.f32 %v1486, %v1487
    %v1489 = vand.u32 %v1488, 4294901760
    %1490 = vmatmul.mubr.f32.gmra.mxu0 %v1489
    %v1491 = vpop.f32.mrf.mxu0
    %v1492 = vadd.f32 %v1353, %v1491
    %v1493 = vpop.f32.mrf.mxu0
    %1494 = vmatprep.mubr.f32.mxu0 0.0
    %v1495 = vand.u32 %v1323, 4294901760
    %v1496 = vsub.f32 %v1323, %v1495
    %v1497 = vand.u32 %v1496, 4294901760
    %v1498 = vsub.f32 %v1496, %v1497
    %v1499 = vand.u32 %v1498, 4294901760
    %1500 = vmatmul.mubr.f32.gmra.mxu0 %v1499
    %v1501 = vpop.f32.mrf.mxu0
    %v1502 = vadd.f32 %v1353, %v1501
    %v1503 = vpop.f32.mrf.mxu0
    %1504 = vmatprep.mubr.f32.mxu0 0.0
    %v1505 = vand.u32 %v1324, 4294901760
    %v1506 = vsub.f32 %v1324, %v1505
    %v1507 = vand.u32 %v1506, 4294901760
    %v1508 = vsub.f32 %v1506, %v1507
    %v1509 = vand.u32 %v1508, 4294901760
    %1510 = vmatmul.mubr.f32.gmra.mxu0 %v1509
    %v1511 = vpop.f32.mrf.mxu0
    %v1512 = vadd.f32 %v1353, %v1511
    %v1513 = vpop.f32.mrf.mxu0
    %1514 = vmatprep.mubr.f32.mxu0 0.0
    %v1515 = vand.u32 %v1325, 4294901760
    %v1516 = vsub.f32 %v1325, %v1515
    %v1517 = vand.u32 %v1516, 4294901760
    %v1518 = vsub.f32 %v1516, %v1517
    %v1519 = vand.u32 %v1518, 4294901760
    %1520 = vmatmul.mubr.f32.gmra.mxu0 %v1519
    %v1521 = vpop.f32.mrf.mxu0
    %v1522 = vadd.f32 %v1353, %v1521
    %v1523 = vpop.f32.mrf.mxu0
    %1524 = vmatprep.mubr.f32.mxu0 0.0
    %v1525 = vand.u32 %v1326, 4294901760
    %v1526 = vsub.f32 %v1326, %v1525
    %v1527 = vand.u32 %v1526, 4294901760
    %v1528 = vsub.f32 %v1526, %v1527
    %v1529 = vand.u32 %v1528, 4294901760
    %1530 = vmatmul.mubr.f32.gmra.mxu0 %v1529
    %v1531 = vpop.f32.mrf.mxu0
    %v1532 = vadd.f32 %v1353, %v1531
    %v1533 = vpop.f32.mrf.mxu0
    %1534 = vmatprep.mubr.f32.mxu0 0.0
    %v1535 = vand.u32 %v1327, 4294901760
    %v1536 = vsub.f32 %v1327, %v1535
    %v1537 = vand.u32 %v1536, 4294901760
    %v1538 = vsub.f32 %v1536, %v1537
    %v1539 = vand.u32 %v1538, 4294901760
    %1540 = vmatmul.mubr.f32.gmra.mxu0 %v1539
    %v1541 = vpop.f32.mrf.mxu0
    %v1542 = vadd.f32 %v1353, %v1541
    %v1543 = vpop.f32.mrf.mxu0
    %1544 = vmatprep.mubr.f32.mxu0 0.0
    %v1545 = vand.u32 %v1328, 4294901760
    %v1546 = vsub.f32 %v1328, %v1545
    %v1547 = vand.u32 %v1546, 4294901760
    %v1548 = vsub.f32 %v1546, %v1547
    %v1549 = vand.u32 %v1548, 4294901760
    %1550 = vmatmul.mubr.f32.gmra.mxu0 %v1549
    %v1551 = vpop.f32.mrf.mxu0
    %v1552 = vadd.f32 %v1353, %v1551
    %v1553 = vpop.f32.mrf.mxu0
    %1554 = vmatprep.mubr.f32.mxu0 0.0
    %v1555 = vand.u32 %v1329, 4294901760
    %v1556 = vsub.f32 %v1329, %v1555
    %v1557 = vand.u32 %v1556, 4294901760
    %v1558 = vsub.f32 %v1556, %v1557
    %v1559 = vand.u32 %v1558, 4294901760
    %1560 = vmatmul.mubr.f32.gmra.mxu0 %v1559
    %v1561 = vpop.f32.mrf.mxu0
    %v1562 = vadd.f32 %v1353, %v1561
    %v1563 = vpop.f32.mrf.mxu0
    %1564 = vmatprep.mubr.f32.mxu0 0.0
    %v1565 = vand.u32 %v1330, 4294901760
    %v1566 = vsub.f32 %v1330, %v1565
    %v1567 = vand.u32 %v1566, 4294901760
    %v1568 = vsub.f32 %v1566, %v1567
    %v1569 = vand.u32 %v1568, 4294901760
    %1570 = vmatmul.mubr.f32.gmra.mxu0 %v1569
    %v1571 = vpop.f32.mrf.mxu0
    %v1572 = vadd.f32 %v1353, %v1571
    %v1573 = vpop.f32.mrf.mxu0
    %1574 = vmatprep.mubr.f32.mxu0 0.0
    %v1575 = vand.u32 %v1331, 4294901760
    %v1576 = vsub.f32 %v1331, %v1575
    %v1577 = vand.u32 %v1576, 4294901760
    %v1578 = vsub.f32 %v1576, %v1577
    %v1579 = vand.u32 %v1578, 4294901760
    %1580 = vmatmul.mubr.f32.gmra.mxu0 %v1579
    %v1581 = vpop.f32.mrf.mxu0
    %v1582 = vadd.f32 %v1353, %v1581
    %v1583 = vpop.f32.mrf.mxu0
    %1584 = vmatprep.mubr.f32.mxu0 0.0
    %v1585 = vand.u32 %v1332, 4294901760
    %v1586 = vsub.f32 %v1332, %v1585
    %v1587 = vand.u32 %v1586, 4294901760
    %v1588 = vsub.f32 %v1586, %v1587
    %v1589 = vand.u32 %v1588, 4294901760
    %1590 = vmatmul.mubr.f32.gmra.mxu0 %v1589
    %v1591 = vpop.f32.mrf.mxu0
    %v1592 = vadd.f32 %v1353, %v1591
    %v1593 = vpop.f32.mrf.mxu0
    %1594 = vdwg.mxu0
    %1595 = vmatprep.subr.mxu0 0.0
    %v1596 = vand.u32 %v1348, 4294901760
    %v1597 = vsub.f32 %v1348, %v1596
    %v1598 = vand.u32 %v1597, 4294901760
    %v1599 = vsub.f32 %v1597, %v1598
    %v1600 = vand.u32 %v1599, 4294901760
    %1601 = vmatpush1.msra.mxu0 %v1600
    %1602 = vmatprep.subr.mxu0 0.0
    %v1603 = vand.u32 %v1347, 4294901760
    %v1604 = vsub.f32 %v1347, %v1603
    %v1605 = vand.u32 %v1604, 4294901760
    %v1606 = vsub.f32 %v1604, %v1605
    %v1607 = vand.u32 %v1606, 4294901760
    %1608 = vmatpush1.msra.mxu0 %v1607
    %1609 = vmatprep.subr.mxu0 0.0
    %v1610 = vand.u32 %v1346, 4294901760
    %v1611 = vsub.f32 %v1346, %v1610
    %v1612 = vand.u32 %v1611, 4294901760
    %v1613 = vsub.f32 %v1611, %v1612
    %v1614 = vand.u32 %v1613, 4294901760
    %1615 = vmatpush1.msra.mxu0 %v1614
    %1616 = vmatprep.subr.mxu0 0.0
    %v1617 = vand.u32 %v1345, 4294901760
    %v1618 = vsub.f32 %v1345, %v1617
    %v1619 = vand.u32 %v1618, 4294901760
    %v1620 = vsub.f32 %v1618, %v1619
    %v1621 = vand.u32 %v1620, 4294901760
    %1622 = vmatpush1.msra.mxu0 %v1621
    %1623 = vmatprep.subr.mxu0 0.0
    %v1624 = vand.u32 %v1344, 4294901760
    %v1625 = vsub.f32 %v1344, %v1624
    %v1626 = vand.u32 %v1625, 4294901760
    %v1627 = vsub.f32 %v1625, %v1626
    %v1628 = vand.u32 %v1627, 4294901760
    %1629 = vmatpush1.msra.mxu0 %v1628
    %1630 = vmatprep.subr.mxu0 0.0
    %v1631 = vand.u32 %v1343, 4294901760
    %v1632 = vsub.f32 %v1343, %v1631
    %v1633 = vand.u32 %v1632, 4294901760
    %v1634 = vsub.f32 %v1632, %v1633
    %v1635 = vand.u32 %v1634, 4294901760
    %1636 = vmatpush1.msra.mxu0 %v1635
    %1637 = vmatprep.subr.mxu0 0.0
    %v1638 = vand.u32 %v1342, 4294901760
    %v1639 = vsub.f32 %v1342, %v1638
    %v1640 = vand.u32 %v1639, 4294901760
    %v1641 = vsub.f32 %v1639, %v1640
    %v1642 = vand.u32 %v1641, 4294901760
    %1643 = vmatpush1.msra.mxu0 %v1642
    %1644 = vmatprep.subr.mxu0 0.0
    %v1645 = vand.u32 %v1341, 4294901760
    %v1646 = vsub.f32 %v1341, %v1645
    %v1647 = vand.u32 %v1646, 4294901760
    %v1648 = vsub.f32 %v1646, %v1647
    %v1649 = vand.u32 %v1648, 4294901760
    %1650 = vmatpush1.msra.mxu0 %v1649
    %1651 = vmatprep.subr.mxu0 0.0
    %v1652 = vand.u32 %v1340, 4294901760
    %v1653 = vsub.f32 %v1340, %v1652
    %v1654 = vand.u32 %v1653, 4294901760
    %v1655 = vsub.f32 %v1653, %v1654
    %v1656 = vand.u32 %v1655, 4294901760
    %1657 = vmatpush1.msra.mxu0 %v1656
    %1658 = vmatprep.subr.mxu0 0.0
    %v1659 = vand.u32 %v1339, 4294901760
    %v1660 = vsub.f32 %v1339, %v1659
    %v1661 = vand.u32 %v1660, 4294901760
    %v1662 = vsub.f32 %v1660, %v1661
    %v1663 = vand.u32 %v1662, 4294901760
    %1664 = vmatpush1.msra.mxu0 %v1663
    %1665 = vmatprep.subr.mxu0 0.0
    %v1666 = vand.u32 %v1338, 4294901760
    %v1667 = vsub.f32 %v1338, %v1666
    %v1668 = vand.u32 %v1667, 4294901760
    %v1669 = vsub.f32 %v1667, %v1668
    %v1670 = vand.u32 %v1669, 4294901760
    %1671 = vmatpush1.msra.mxu0 %v1670
    %1672 = vmatprep.subr.mxu0 0.0
    %v1673 = vand.u32 %v1337, 4294901760
    %v1674 = vsub.f32 %v1337, %v1673
    %v1675 = vand.u32 %v1674, 4294901760
    %v1676 = vsub.f32 %v1674, %v1675
    %v1677 = vand.u32 %v1676, 4294901760
    %1678 = vmatpush1.msra.mxu0 %v1677
    %1679 = vmatprep.subr.mxu0 0.0
    %v1680 = vand.u32 %v1336, 4294901760
    %v1681 = vsub.f32 %v1336, %v1680
    %v1682 = vand.u32 %v1681, 4294901760
    %v1683 = vsub.f32 %v1681, %v1682
    %v1684 = vand.u32 %v1683, 4294901760
    %1685 = vmatpush1.msra.mxu0 %v1684
    %1686 = vmatprep.subr.mxu0 0.0
    %v1687 = vand.u32 %v1335, 4294901760
    %v1688 = vsub.f32 %v1335, %v1687
    %v1689 = vand.u32 %v1688, 4294901760
    %v1690 = vsub.f32 %v1688, %v1689
    %v1691 = vand.u32 %v1690, 4294901760
    %1692 = vmatpush1.msra.mxu0 %v1691
    %1693 = vmatprep.subr.mxu0 0.0
    %v1694 = vand.u32 %v1334, 4294901760
    %v1695 = vsub.f32 %v1334, %v1694
    %v1696 = vand.u32 %v1695, 4294901760
    %v1697 = vsub.f32 %v1695, %v1696
    %v1698 = vand.u32 %v1697, 4294901760
    %1699 = vmatpush1.msra.mxu0 %v1698
    %1700 = vmatprep.subr.mxu0 0.0
    %v1701 = vand.u32 %v1333, 4294901760
    %v1702 = vsub.f32 %v1333, %v1701
    %v1703 = vand.u32 %v1702, 4294901760
    %v1704 = vsub.f32 %v1702, %v1703
    %v1705 = vand.u32 %v1704, 4294901760
    %1706 = vmatpush1.msra.mxu0 %v1705
    %1707 = vmatprep.subr.mxu0 0.0
    %1708 = vmatpush2.msra.mxu0 0.0
    %1709 = vmatprep.subr.mxu0 0.0
    %1710 = vmatpush2.msra.mxu0 0.0
    %1711 = vmatprep.subr.mxu0 0.0
    %1712 = vmatpush2.msra.mxu0 0.0
    %1713 = vmatprep.subr.mxu0 0.0
    %1714 = vmatpush2.msra.mxu0 0.0
    %1715 = vmatprep.subr.mxu0 0.0
    %1716 = vmatpush2.msra.mxu0 0.0
    %1717 = vmatprep.subr.mxu0 0.0
    %1718 = vmatpush2.msra.mxu0 0.0
    %1719 = vmatprep.subr.mxu0 0.0
    %1720 = vmatpush2.msra.mxu0 0.0
    %1721 = vmatprep.subr.mxu0 0.0
    %1722 = vmatpush2.msra.mxu0 0.0
    %1723 = vmatprep.subr.mxu0 0.0
    %1724 = vmatpush2.msra.mxu0 0.0
    %1725 = vmatprep.subr.mxu0 0.0
    %1726 = vmatpush2.msra.mxu0 0.0
    %1727 = vmatprep.subr.mxu0 0.0
    %1728 = vmatpush2.msra.mxu0 0.0
    %1729 = vmatprep.subr.mxu0 0.0
    %1730 = vmatpush2.msra.mxu0 0.0
    %1731 = vmatprep.subr.mxu0 0.0
    %1732 = vmatpush2.msra.mxu0 0.0
    %1733 = vmatprep.subr.mxu0 0.0
    %1734 = vmatpush2.msra.mxu0 0.0
    %1735 = vmatprep.subr.mxu0 0.0
    %1736 = vmatpush2.msra.mxu0 0.0
    %1737 = vmatprep.subr.mxu0 0.0
    %1738 = vmatpush2.msra.mxu0 0.0
    %1739 = vmatprep.mubr.f32.mxu0 0.0
    %v1740 = vand.u32 %v1317, 4294901760
    %1741 = vmatmul.mubr.f32.gmra.mxu0 %v1740
    %v1742 = vpop.f32.mrf.mxu0
    %v1743 = vadd.f32 %v1442, %v1742
    %v1744 = vpop.f32.mrf.mxu0
    %1745 = vmatprep.mubr.f32.mxu0 0.0
    %v1746 = vand.u32 %v1318, 4294901760
    %1747 = vmatmul.mubr.f32.gmra.mxu0 %v1746
    %v1748 = vpop.f32.mrf.mxu0
    %v1749 = vadd.f32 %v1452, %v1748
    %v1750 = vpop.f32.mrf.mxu0
    %1751 = vmatprep.mubr.f32.mxu0 0.0
    %v1752 = vand.u32 %v1319, 4294901760
    %1753 = vmatmul.mubr.f32.gmra.mxu0 %v1752
    %v1754 = vpop.f32.mrf.mxu0
    %v1755 = vadd.f32 %v1462, %v1754
    %v1756 = vpop.f32.mrf.mxu0
    %1757 = vmatprep.mubr.f32.mxu0 0.0
    %v1758 = vand.u32 %v1320, 4294901760
    %1759 = vmatmul.mubr.f32.gmra.mxu0 %v1758
    %v1760 = vpop.f32.mrf.mxu0
    %v1761 = vadd.f32 %v1472, %v1760
    %v1762 = vpop.f32.mrf.mxu0
    %1763 = vmatprep.mubr.f32.mxu0 0.0
    %v1764 = vand.u32 %v1321, 4294901760
    %1765 = vmatmul.mubr.f32.gmra.mxu0 %v1764
    %v1766 = vpop.f32.mrf.mxu0
    %v1767 = vadd.f32 %v1482, %v1766
    %v1768 = vpop.f32.mrf.mxu0
    %1769 = vmatprep.mubr.f32.mxu0 0.0
    %v1770 = vand.u32 %v1322, 4294901760
    %1771 = vmatmul.mubr.f32.gmra.mxu0 %v1770
    %v1772 = vpop.f32.mrf.mxu0
    %v1773 = vadd.f32 %v1492, %v1772
    %v1774 = vpop.f32.mrf.mxu0
    %1775 = vmatprep.mubr.f32.mxu0 0.0
    %v1776 = vand.u32 %v1323, 4294901760
    %1777 = vmatmul.mubr.f32.gmra.mxu0 %v1776
    %v1778 = vpop.f32.mrf.mxu0
    %v1779 = vadd.f32 %v1502, %v1778
    %v1780 = vpop.f32.mrf.mxu0
    %1781 = vmatprep.mubr.f32.mxu0 0.0
    %v1782 = vand.u32 %v1324, 4294901760
    %1783 = vmatmul.mubr.f32.gmra.mxu0 %v1782
    %v1784 = vpop.f32.mrf.mxu0
    %v1785 = vadd.f32 %v1512, %v1784
    %v1786 = vpop.f32.mrf.mxu0
    %1787 = vmatprep.mubr.f32.mxu0 0.0
    %v1788 = vand.u32 %v1325, 4294901760
    %1789 = vmatmul.mubr.f32.gmra.mxu0 %v1788
    %v1790 = vpop.f32.mrf.mxu0
    %v1791 = vadd.f32 %v1522, %v1790
    %v1792 = vpop.f32.mrf.mxu0
    %1793 = vmatprep.mubr.f32.mxu0 0.0
    %v1794 = vand.u32 %v1326, 4294901760
    %1795 = vmatmul.mubr.f32.gmra.mxu0 %v1794
    %v1796 = vpop.f32.mrf.mxu0
    %v1797 = vadd.f32 %v1532, %v1796
    %v1798 = vpop.f32.mrf.mxu0
    %1799 = vmatprep.mubr.f32.mxu0 0.0
    %v1800 = vand.u32 %v1327, 4294901760
    %1801 = vmatmul.mubr.f32.gmra.mxu0 %v1800
    %v1802 = vpop.f32.mrf.mxu0
    %v1803 = vadd.f32 %v1542, %v1802
    %v1804 = vpop.f32.mrf.mxu0
    %1805 = vmatprep.mubr.f32.mxu0 0.0
    %v1806 = vand.u32 %v1328, 4294901760
    %1807 = vmatmul.mubr.f32.gmra.mxu0 %v1806
    %v1808 = vpop.f32.mrf.mxu0
    %v1809 = vadd.f32 %v1552, %v1808
    %v1810 = vpop.f32.mrf.mxu0
    %1811 = vmatprep.mubr.f32.mxu0 0.0
    %v1812 = vand.u32 %v1329, 4294901760
    %1813 = vmatmul.mubr.f32.gmra.mxu0 %v1812
    %v1814 = vpop.f32.mrf.mxu0
    %v1815 = vadd.f32 %v1562, %v1814
    %v1816 = vpop.f32.mrf.mxu0
    %1817 = vmatprep.mubr.f32.mxu0 0.0
    %v1818 = vand.u32 %v1330, 4294901760
    %1819 = vmatmul.mubr.f32.gmra.mxu0 %v1818
    %v1820 = vpop.f32.mrf.mxu0
    %v1821 = vadd.f32 %v1572, %v1820
    %v1822 = vpop.f32.mrf.mxu0
    %1823 = vmatprep.mubr.f32.mxu0 0.0
    %v1824 = vand.u32 %v1331, 4294901760
    %1825 = vmatmul.mubr.f32.gmra.mxu0 %v1824
    %v1826 = vpop.f32.mrf.mxu0
    %v1827 = vadd.f32 %v1582, %v1826
    %v1828 = vpop.f32.mrf.mxu0
    %1829 = vmatprep.mubr.f32.mxu0 0.0
    %v1830 = vand.u32 %v1332, 4294901760
    %1831 = vmatmul.mubr.f32.gmra.mxu0 %v1830
    %v1832 = vpop.f32.mrf.mxu0
    %v1833 = vadd.f32 %v1592, %v1832
    %v1834 = vpop.f32.mrf.mxu0
    %1835 = vdwg.mxu0
    %1836 = vmatprep.subr.mxu0 0.0
    %v1837 = vand.u32 %v1348, 4294901760
    %v1838 = vsub.f32 %v1348, %v1837
    %1839 = vmatpush1.msra.mxu0 %v1838
    %1840 = vmatprep.subr.mxu0 0.0
    %v1841 = vand.u32 %v1347, 4294901760
    %v1842 = vsub.f32 %v1347, %v1841
    %1843 = vmatpush1.msra.mxu0 %v1842
    %1844 = vmatprep.subr.mxu0 0.0
    %v1845 = vand.u32 %v1346, 4294901760
    %v1846 = vsub.f32 %v1346, %v1845
    %1847 = vmatpush1.msra.mxu0 %v1846
    %1848 = vmatprep.subr.mxu0 0.0
    %v1849 = vand.u32 %v1345, 4294901760
    %v1850 = vsub.f32 %v1345, %v1849
    %1851 = vmatpush1.msra.mxu0 %v1850
    %1852 = vmatprep.subr.mxu0 0.0
    %v1853 = vand.u32 %v1344, 4294901760
    %v1854 = vsub.f32 %v1344, %v1853
    %1855 = vmatpush1.msra.mxu0 %v1854
    %1856 = vmatprep.subr.mxu0 0.0
    %v1857 = vand.u32 %v1343, 4294901760
    %v1858 = vsub.f32 %v1343, %v1857
    %1859 = vmatpush1.msra.mxu0 %v1858
    %1860 = vmatprep.subr.mxu0 0.0
    %v1861 = vand.u32 %v1342, 4294901760
    %v1862 = vsub.f32 %v1342, %v1861
    %1863 = vmatpush1.msra.mxu0 %v1862
    %1864 = vmatprep.subr.mxu0 0.0
    %v1865 = vand.u32 %v1341, 4294901760
    %v1866 = vsub.f32 %v1341, %v1865
    %1867 = vmatpush1.msra.mxu0 %v1866
    %1868 = vmatprep.subr.mxu0 0.0
    %v1869 = vand.u32 %v1340, 4294901760
    %v1870 = vsub.f32 %v1340, %v1869
    %1871 = vmatpush1.msra.mxu0 %v1870
    %1872 = vmatprep.subr.mxu0 0.0
    %v1873 = vand.u32 %v1339, 4294901760
    %v1874 = vsub.f32 %v1339, %v1873
    %1875 = vmatpush1.msra.mxu0 %v1874
    %1876 = vmatprep.subr.mxu0 0.0
    %v1877 = vand.u32 %v1338, 4294901760
    %v1878 = vsub.f32 %v1338, %v1877
    %1879 = vmatpush1.msra.mxu0 %v1878
    %1880 = vmatprep.subr.mxu0 0.0
    %v1881 = vand.u32 %v1337, 4294901760
    %v1882 = vsub.f32 %v1337, %v1881
    %1883 = vmatpush1.msra.mxu0 %v1882
    %1884 = vmatprep.subr.mxu0 0.0
    %v1885 = vand.u32 %v1336, 4294901760
    %v1886 = vsub.f32 %v1336, %v1885
    %1887 = vmatpush1.msra.mxu0 %v1886
    %1888 = vmatprep.subr.mxu0 0.0
    %v1889 = vand.u32 %v1335, 4294901760
    %v1890 = vsub.f32 %v1335, %v1889
    %1891 = vmatpush1.msra.mxu0 %v1890
    %1892 = vmatprep.subr.mxu0 0.0
    %v1893 = vand.u32 %v1334, 4294901760
    %v1894 = vsub.f32 %v1334, %v1893
    %1895 = vmatpush1.msra.mxu0 %v1894
    %1896 = vmatprep.subr.mxu0 0.0
    %v1897 = vand.u32 %v1333, 4294901760
    %v1898 = vsub.f32 %v1333, %v1897
    %1899 = vmatpush1.msra.mxu0 %v1898
    %1900 = vmatprep.subr.mxu0 0.0
    %1901 = vmatpush2.msra.mxu0 0.0
    %1902 = vmatprep.subr.mxu0 0.0
    %1903 = vmatpush2.msra.mxu0 0.0
    %1904 = vmatprep.subr.mxu0 0.0
    %1905 = vmatpush2.msra.mxu0 0.0
    %1906 = vmatprep.subr.mxu0 0.0
    %1907 = vmatpush2.msra.mxu0 0.0
    %1908 = vmatprep.subr.mxu0 0.0
    %1909 = vmatpush2.msra.mxu0 0.0
    %1910 = vmatprep.subr.mxu0 0.0
    %1911 = vmatpush2.msra.mxu0 0.0
    %1912 = vmatprep.subr.mxu0 0.0
    %1913 = vmatpush2.msra.mxu0 0.0
    %1914 = vmatprep.subr.mxu0 0.0
    %1915 = vmatpush2.msra.mxu0 0.0
    %1916 = vmatprep.subr.mxu0 0.0
    %1917 = vmatpush2.msra.mxu0 0.0
    %1918 = vmatprep.subr.mxu0 0.0
    %1919 = vmatpush2.msra.mxu0 0.0
    %1920 = vmatprep.subr.mxu0 0.0
    %1921 = vmatpush2.msra.mxu0 0.0
    %1922 = vmatprep.subr.mxu0 0.0
    %1923 = vmatpush2.msra.mxu0 0.0
    %1924 = vmatprep.subr.mxu0 0.0
    %1925 = vmatpush2.msra.mxu0 0.0
    %1926 = vmatprep.subr.mxu0 0.0
    %1927 = vmatpush2.msra.mxu0 0.0
    %1928 = vmatprep.subr.mxu0 0.0
    %1929 = vmatpush2.msra.mxu0 0.0
    %1930 = vmatprep.subr.mxu0 0.0
    %1931 = vmatpush2.msra.mxu0 0.0
    %1932 = vmatprep.mubr.f32.mxu0 0.0
    %v1933 = vand.u32 %v1317, 4294901760
    %v1934 = vsub.f32 %v1317, %v1933
    %1935 = vmatmul.mubr.f32.gmra.mxu0 %v1934
    %v1936 = vpop.f32.mrf.mxu0
    %v1937 = vadd.f32 %v1743, %v1936
    %v1938 = vpop.f32.mrf.mxu0
    %1939 = vmatprep.mubr.f32.mxu0 0.0
    %v1940 = vand.u32 %v1318, 4294901760
    %v1941 = vsub.f32 %v1318, %v1940
    %1942 = vmatmul.mubr.f32.gmra.mxu0 %v1941
    %v1943 = vpop.f32.mrf.mxu0
    %v1944 = vadd.f32 %v1749, %v1943
    %v1945 = vpop.f32.mrf.mxu0
    %1946 = vmatprep.mubr.f32.mxu0 0.0
    %v1947 = vand.u32 %v1319, 4294901760
    %v1948 = vsub.f32 %v1319, %v1947
    %1949 = vmatmul.mubr.f32.gmra.mxu0 %v1948
    %v1950 = vpop.f32.mrf.mxu0
    %v1951 = vadd.f32 %v1755, %v1950
    %v1952 = vpop.f32.mrf.mxu0
    %1953 = vmatprep.mubr.f32.mxu0 0.0
    %v1954 = vand.u32 %v1320, 4294901760
    %v1955 = vsub.f32 %v1320, %v1954
    %1956 = vmatmul.mubr.f32.gmra.mxu0 %v1955
    %v1957 = vpop.f32.mrf.mxu0
    %v1958 = vadd.f32 %v1761, %v1957
    %v1959 = vpop.f32.mrf.mxu0
    %1960 = vmatprep.mubr.f32.mxu0 0.0
    %v1961 = vand.u32 %v1321, 4294901760
    %v1962 = vsub.f32 %v1321, %v1961
    %1963 = vmatmul.mubr.f32.gmra.mxu0 %v1962
    %v1964 = vpop.f32.mrf.mxu0
    %v1965 = vadd.f32 %v1767, %v1964
    %v1966 = vpop.f32.mrf.mxu0
    %1967 = vmatprep.mubr.f32.mxu0 0.0
    %v1968 = vand.u32 %v1322, 4294901760
    %v1969 = vsub.f32 %v1322, %v1968
    %1970 = vmatmul.mubr.f32.gmra.mxu0 %v1969
    %v1971 = vpop.f32.mrf.mxu0
    %v1972 = vadd.f32 %v1773, %v1971
    %v1973 = vpop.f32.mrf.mxu0
    %1974 = vmatprep.mubr.f32.mxu0 0.0
    %v1975 = vand.u32 %v1323, 4294901760
    %v1976 = vsub.f32 %v1323, %v1975
    %1977 = vmatmul.mubr.f32.gmra.mxu0 %v1976
    %v1978 = vpop.f32.mrf.mxu0
    %v1979 = vadd.f32 %v1779, %v1978
    %v1980 = vpop.f32.mrf.mxu0
    %1981 = vmatprep.mubr.f32.mxu0 0.0
    %v1982 = vand.u32 %v1324, 4294901760
    %v1983 = vsub.f32 %v1324, %v1982
    %1984 = vmatmul.mubr.f32.gmra.mxu0 %v1983
    %v1985 = vpop.f32.mrf.mxu0
    %v1986 = vadd.f32 %v1785, %v1985
    %v1987 = vpop.f32.mrf.mxu0
    %1988 = vmatprep.mubr.f32.mxu0 0.0
    %v1989 = vand.u32 %v1325, 4294901760
    %v1990 = vsub.f32 %v1325, %v1989
    %1991 = vmatmul.mubr.f32.gmra.mxu0 %v1990
    %v1992 = vpop.f32.mrf.mxu0
    %v1993 = vadd.f32 %v1791, %v1992
    %v1994 = vpop.f32.mrf.mxu0
    %1995 = vmatprep.mubr.f32.mxu0 0.0
    %v1996 = vand.u32 %v1326, 4294901760
    %v1997 = vsub.f32 %v1326, %v1996
    %1998 = vmatmul.mubr.f32.gmra.mxu0 %v1997
    %v1999 = vpop.f32.mrf.mxu0
    %v2000 = vadd.f32 %v1797, %v1999
    %v2001 = vpop.f32.mrf.mxu0
    %2002 = vmatprep.mubr.f32.mxu0 0.0
    %v2003 = vand.u32 %v1327, 4294901760
    %v2004 = vsub.f32 %v1327, %v2003
    %2005 = vmatmul.mubr.f32.gmra.mxu0 %v2004
    %v2006 = vpop.f32.mrf.mxu0
    %v2007 = vadd.f32 %v1803, %v2006
    %v2008 = vpop.f32.mrf.mxu0
    %2009 = vmatprep.mubr.f32.mxu0 0.0
    %v2010 = vand.u32 %v1328, 4294901760
    %v2011 = vsub.f32 %v1328, %v2010
    %2012 = vmatmul.mubr.f32.gmra.mxu0 %v2011
    %v2013 = vpop.f32.mrf.mxu0
    %v2014 = vadd.f32 %v1809, %v2013
    %v2015 = vpop.f32.mrf.mxu0
    %2016 = vmatprep.mubr.f32.mxu0 0.0
    %v2017 = vand.u32 %v1329, 4294901760
    %v2018 = vsub.f32 %v1329, %v2017
    %2019 = vmatmul.mubr.f32.gmra.mxu0 %v2018
    %v2020 = vpop.f32.mrf.mxu0
    %v2021 = vadd.f32 %v1815, %v2020
    %v2022 = vpop.f32.mrf.mxu0
    %2023 = vmatprep.mubr.f32.mxu0 0.0
    %v2024 = vand.u32 %v1330, 4294901760
    %v2025 = vsub.f32 %v1330, %v2024
    %2026 = vmatmul.mubr.f32.gmra.mxu0 %v2025
    %v2027 = vpop.f32.mrf.mxu0
    %v2028 = vadd.f32 %v1821, %v2027
    %v2029 = vpop.f32.mrf.mxu0
    %2030 = vmatprep.mubr.f32.mxu0 0.0
    %v2031 = vand.u32 %v1331, 4294901760
    %v2032 = vsub.f32 %v1331, %v2031
    %2033 = vmatmul.mubr.f32.gmra.mxu0 %v2032
    %v2034 = vpop.f32.mrf.mxu0
    %v2035 = vadd.f32 %v1827, %v2034
    %v2036 = vpop.f32.mrf.mxu0
    %2037 = vmatprep.mubr.f32.mxu0 0.0
    %v2038 = vand.u32 %v1332, 4294901760
    %v2039 = vsub.f32 %v1332, %v2038
    %2040 = vmatmul.mubr.f32.gmra.mxu0 %v2039
    %v2041 = vpop.f32.mrf.mxu0
    %v2042 = vadd.f32 %v1833, %v2041
    %v2043 = vpop.f32.mrf.mxu0
    %2044 = vdwg.mxu0
    %2045 = vmatprep.subr.mxu0 0.0
    %v2046 = vand.u32 %v1348, 4294901760
    %2047 = vmatpush1.msra.mxu0 %v2046
    %2048 = vmatprep.subr.mxu0 0.0
    %v2049 = vand.u32 %v1347, 4294901760
    %2050 = vmatpush1.msra.mxu0 %v2049
    %2051 = vmatprep.subr.mxu0 0.0
    %v2052 = vand.u32 %v1346, 4294901760
    %2053 = vmatpush1.msra.mxu0 %v2052
    %2054 = vmatprep.subr.mxu0 0.0
    %v2055 = vand.u32 %v1345, 4294901760
    %2056 = vmatpush1.msra.mxu0 %v2055
    %2057 = vmatprep.subr.mxu0 0.0
    %v2058 = vand.u32 %v1344, 4294901760
    %2059 = vmatpush1.msra.mxu0 %v2058
    %2060 = vmatprep.subr.mxu0 0.0
    %v2061 = vand.u32 %v1343, 4294901760
    %2062 = vmatpush1.msra.mxu0 %v2061
    %2063 = vmatprep.subr.mxu0 0.0
    %v2064 = vand.u32 %v1342, 4294901760
    %2065 = vmatpush1.msra.mxu0 %v2064
    %2066 = vmatprep.subr.mxu0 0.0
    %v2067 = vand.u32 %v1341, 4294901760
    %2068 = vmatpush1.msra.mxu0 %v2067
    %2069 = vmatprep.subr.mxu0 0.0
    %v2070 = vand.u32 %v1340, 4294901760
    %2071 = vmatpush1.msra.mxu0 %v2070
    %2072 = vmatprep.subr.mxu0 0.0
    %v2073 = vand.u32 %v1339, 4294901760
    %2074 = vmatpush1.msra.mxu0 %v2073
    %2075 = vmatprep.subr.mxu0 0.0
    %v2076 = vand.u32 %v1338, 4294901760
    %2077 = vmatpush1.msra.mxu0 %v2076
    %2078 = vmatprep.subr.mxu0 0.0
    %v2079 = vand.u32 %v1337, 4294901760
    %2080 = vmatpush1.msra.mxu0 %v2079
    %2081 = vmatprep.subr.mxu0 0.0
    %v2082 = vand.u32 %v1336, 4294901760
    %2083 = vmatpush1.msra.mxu0 %v2082
    %2084 = vmatprep.subr.mxu0 0.0
    %v2085 = vand.u32 %v1335, 4294901760
    %2086 = vmatpush1.msra.mxu0 %v2085
    %2087 = vmatprep.subr.mxu0 0.0
    %v2088 = vand.u32 %v1334, 4294901760
    %2089 = vmatpush1.msra.mxu0 %v2088
    %2090 = vmatprep.subr.mxu0 0.0
    %v2091 = vand.u32 %v1333, 4294901760
    %2092 = vmatpush1.msra.mxu0 %v2091
    %2093 = vmatprep.subr.mxu0 0.0
    %2094 = vmatpush2.msra.mxu0 0.0
    %2095 = vmatprep.subr.mxu0 0.0
    %2096 = vmatpush2.msra.mxu0 0.0
    %2097 = vmatprep.subr.mxu0 0.0
    %2098 = vmatpush2.msra.mxu0 0.0
    %2099 = vmatprep.subr.mxu0 0.0
    %2100 = vmatpush2.msra.mxu0 0.0
    %2101 = vmatprep.subr.mxu0 0.0
    %2102 = vmatpush2.msra.mxu0 0.0
    %2103 = vmatprep.subr.mxu0 0.0
    %2104 = vmatpush2.msra.mxu0 0.0
    %2105 = vmatprep.subr.mxu0 0.0
    %2106 = vmatpush2.msra.mxu0 0.0
    %2107 = vmatprep.subr.mxu0 0.0
    %2108 = vmatpush2.msra.mxu0 0.0
    %2109 = vmatprep.subr.mxu0 0.0
    %2110 = vmatpush2.msra.mxu0 0.0
    %2111 = vmatprep.subr.mxu0 0.0
    %2112 = vmatpush2.msra.mxu0 0.0
    %2113 = vmatprep.subr.mxu0 0.0
    %2114 = vmatpush2.msra.mxu0 0.0
    %2115 = vmatprep.subr.mxu0 0.0
    %2116 = vmatpush2.msra.mxu0 0.0
    %2117 = vmatprep.subr.mxu0 0.0
    %2118 = vmatpush2.msra.mxu0 0.0
    %2119 = vmatprep.subr.mxu0 0.0
    %2120 = vmatpush2.msra.mxu0 0.0
    %2121 = vmatprep.subr.mxu0 0.0
    %2122 = vmatpush2.msra.mxu0 0.0
    %2123 = vmatprep.subr.mxu0 0.0
    %2124 = vmatpush2.msra.mxu0 0.0
    %2125 = vmatprep.mubr.f32.mxu0 0.0
    %v2126 = vand.u32 %v1317, 4294901760
    %v2127 = vsub.f32 %v1317, %v2126
    %v2128 = vand.u32 %v2127, 4294901760
    %2129 = vmatmul.mubr.f32.gmra.mxu0 %v2128
    %v2130 = vpop.f32.mrf.mxu0
    %v2131 = vadd.f32 %v1937, %v2130
    %v2132 = vpop.f32.mrf.mxu0
    %2133 = vmatprep.mubr.f32.mxu0 0.0
    %v2134 = vand.u32 %v1318, 4294901760
    %v2135 = vsub.f32 %v1318, %v2134
    %v2136 = vand.u32 %v2135, 4294901760
    %2137 = vmatmul.mubr.f32.gmra.mxu0 %v2136
    %v2138 = vpop.f32.mrf.mxu0
    %v2139 = vadd.f32 %v1944, %v2138
    %v2140 = vpop.f32.mrf.mxu0
    %2141 = vmatprep.mubr.f32.mxu0 0.0
    %v2142 = vand.u32 %v1319, 4294901760
    %v2143 = vsub.f32 %v1319, %v2142
    %v2144 = vand.u32 %v2143, 4294901760
    %2145 = vmatmul.mubr.f32.gmra.mxu0 %v2144
    %v2146 = vpop.f32.mrf.mxu0
    %v2147 = vadd.f32 %v1951, %v2146
    %v2148 = vpop.f32.mrf.mxu0
    %2149 = vmatprep.mubr.f32.mxu0 0.0
    %v2150 = vand.u32 %v1320, 4294901760
    %v2151 = vsub.f32 %v1320, %v2150
    %v2152 = vand.u32 %v2151, 4294901760
    %2153 = vmatmul.mubr.f32.gmra.mxu0 %v2152
    %v2154 = vpop.f32.mrf.mxu0
    %v2155 = vadd.f32 %v1958, %v2154
    %v2156 = vpop.f32.mrf.mxu0
    %2157 = vmatprep.mubr.f32.mxu0 0.0
    %v2158 = vand.u32 %v1321, 4294901760
    %v2159 = vsub.f32 %v1321, %v2158
    %v2160 = vand.u32 %v2159, 4294901760
    %2161 = vmatmul.mubr.f32.gmra.mxu0 %v2160
    %v2162 = vpop.f32.mrf.mxu0
    %v2163 = vadd.f32 %v1965, %v2162
    %v2164 = vpop.f32.mrf.mxu0
    %2165 = vmatprep.mubr.f32.mxu0 0.0
    %v2166 = vand.u32 %v1322, 4294901760
    %v2167 = vsub.f32 %v1322, %v2166
    %v2168 = vand.u32 %v2167, 4294901760
    %2169 = vmatmul.mubr.f32.gmra.mxu0 %v2168
    %v2170 = vpop.f32.mrf.mxu0
    %v2171 = vadd.f32 %v1972, %v2170
    %v2172 = vpop.f32.mrf.mxu0
    %2173 = vmatprep.mubr.f32.mxu0 0.0
    %v2174 = vand.u32 %v1323, 4294901760
    %v2175 = vsub.f32 %v1323, %v2174
    %v2176 = vand.u32 %v2175, 4294901760
    %2177 = vmatmul.mubr.f32.gmra.mxu0 %v2176
    %v2178 = vpop.f32.mrf.mxu0
    %v2179 = vadd.f32 %v1979, %v2178
    %v2180 = vpop.f32.mrf.mxu0
    %2181 = vmatprep.mubr.f32.mxu0 0.0
    %v2182 = vand.u32 %v1324, 4294901760
    %v2183 = vsub.f32 %v1324, %v2182
    %v2184 = vand.u32 %v2183, 4294901760
    %2185 = vmatmul.mubr.f32.gmra.mxu0 %v2184
    %v2186 = vpop.f32.mrf.mxu0
    %v2187 = vadd.f32 %v1986, %v2186
    %v2188 = vpop.f32.mrf.mxu0
    %2189 = vmatprep.mubr.f32.mxu0 0.0
    %v2190 = vand.u32 %v1325, 4294901760
    %v2191 = vsub.f32 %v1325, %v2190
    %v2192 = vand.u32 %v2191, 4294901760
    %2193 = vmatmul.mubr.f32.gmra.mxu0 %v2192
    %v2194 = vpop.f32.mrf.mxu0
    %v2195 = vadd.f32 %v1993, %v2194
    %v2196 = vpop.f32.mrf.mxu0
    %2197 = vmatprep.mubr.f32.mxu0 0.0
    %v2198 = vand.u32 %v1326, 4294901760
    %v2199 = vsub.f32 %v1326, %v2198
    %v2200 = vand.u32 %v2199, 4294901760
    %2201 = vmatmul.mubr.f32.gmra.mxu0 %v2200
    %v2202 = vpop.f32.mrf.mxu0
    %v2203 = vadd.f32 %v2000, %v2202
    %v2204 = vpop.f32.mrf.mxu0
    %2205 = vmatprep.mubr.f32.mxu0 0.0
    %v2206 = vand.u32 %v1327, 4294901760
    %v2207 = vsub.f32 %v1327, %v2206
    %v2208 = vand.u32 %v2207, 4294901760
    %2209 = vmatmul.mubr.f32.gmra.mxu0 %v2208
    %v2210 = vpop.f32.mrf.mxu0
    %v2211 = vadd.f32 %v2007, %v2210
    %v2212 = vpop.f32.mrf.mxu0
    %2213 = vmatprep.mubr.f32.mxu0 0.0
    %v2214 = vand.u32 %v1328, 4294901760
    %v2215 = vsub.f32 %v1328, %v2214
    %v2216 = vand.u32 %v2215, 4294901760
    %2217 = vmatmul.mubr.f32.gmra.mxu0 %v2216
    %v2218 = vpop.f32.mrf.mxu0
    %v2219 = vadd.f32 %v2014, %v2218
    %v2220 = vpop.f32.mrf.mxu0
    %2221 = vmatprep.mubr.f32.mxu0 0.0
    %v2222 = vand.u32 %v1329, 4294901760
    %v2223 = vsub.f32 %v1329, %v2222
    %v2224 = vand.u32 %v2223, 4294901760
    %2225 = vmatmul.mubr.f32.gmra.mxu0 %v2224
    %v2226 = vpop.f32.mrf.mxu0
    %v2227 = vadd.f32 %v2021, %v2226
    %v2228 = vpop.f32.mrf.mxu0
    %2229 = vmatprep.mubr.f32.mxu0 0.0
    %v2230 = vand.u32 %v1330, 4294901760
    %v2231 = vsub.f32 %v1330, %v2230
    %v2232 = vand.u32 %v2231, 4294901760
    %2233 = vmatmul.mubr.f32.gmra.mxu0 %v2232
    %v2234 = vpop.f32.mrf.mxu0
    %v2235 = vadd.f32 %v2028, %v2234
    %v2236 = vpop.f32.mrf.mxu0
    %2237 = vmatprep.mubr.f32.mxu0 0.0
    %v2238 = vand.u32 %v1331, 4294901760
    %v2239 = vsub.f32 %v1331, %v2238
    %v2240 = vand.u32 %v2239, 4294901760
    %2241 = vmatmul.mubr.f32.gmra.mxu0 %v2240
    %v2242 = vpop.f32.mrf.mxu0
    %v2243 = vadd.f32 %v2035, %v2242
    %v2244 = vpop.f32.mrf.mxu0
    %2245 = vmatprep.mubr.f32.mxu0 0.0
    %v2246 = vand.u32 %v1332, 4294901760
    %v2247 = vsub.f32 %v1332, %v2246
    %v2248 = vand.u32 %v2247, 4294901760
    %2249 = vmatmul.mubr.f32.gmra.mxu0 %v2248
    %v2250 = vpop.f32.mrf.mxu0
    %v2251 = vadd.f32 %v2042, %v2250
    %v2252 = vpop.f32.mrf.mxu0
    %2253 = vdwg.mxu0
    %2254 = vmatprep.subr.mxu0 0.0
    %v2255 = vand.u32 %v1348, 4294901760
    %v2256 = vsub.f32 %v1348, %v2255
    %v2257 = vand.u32 %v2256, 4294901760
    %2258 = vmatpush1.msra.mxu0 %v2257
    %2259 = vmatprep.subr.mxu0 0.0
    %v2260 = vand.u32 %v1347, 4294901760
    %v2261 = vsub.f32 %v1347, %v2260
    %v2262 = vand.u32 %v2261, 4294901760
    %2263 = vmatpush1.msra.mxu0 %v2262
    %2264 = vmatprep.subr.mxu0 0.0
    %v2265 = vand.u32 %v1346, 4294901760
    %v2266 = vsub.f32 %v1346, %v2265
    %v2267 = vand.u32 %v2266, 4294901760
    %2268 = vmatpush1.msra.mxu0 %v2267
    %2269 = vmatprep.subr.mxu0 0.0
    %v2270 = vand.u32 %v1345, 4294901760
    %v2271 = vsub.f32 %v1345, %v2270
    %v2272 = vand.u32 %v2271, 4294901760
    %2273 = vmatpush1.msra.mxu0 %v2272
    %2274 = vmatprep.subr.mxu0 0.0
    %v2275 = vand.u32 %v1344, 4294901760
    %v2276 = vsub.f32 %v1344, %v2275
    %v2277 = vand.u32 %v2276, 4294901760
    %2278 = vmatpush1.msra.mxu0 %v2277
    %2279 = vmatprep.subr.mxu0 0.0
    %v2280 = vand.u32 %v1343, 4294901760
    %v2281 = vsub.f32 %v1343, %v2280
    %v2282 = vand.u32 %v2281, 4294901760
    %2283 = vmatpush1.msra.mxu0 %v2282
    %2284 = vmatprep.subr.mxu0 0.0
    %v2285 = vand.u32 %v1342, 4294901760
    %v2286 = vsub.f32 %v1342, %v2285
    %v2287 = vand.u32 %v2286, 4294901760
    %2288 = vmatpush1.msra.mxu0 %v2287
    %2289 = vmatprep.subr.mxu0 0.0
    %v2290 = vand.u32 %v1341, 4294901760
    %v2291 = vsub.f32 %v1341, %v2290
    %v2292 = vand.u32 %v2291, 4294901760
    %2293 = vmatpush1.msra.mxu0 %v2292
    %2294 = vmatprep.subr.mxu0 0.0
    %v2295 = vand.u32 %v1340, 4294901760
    %v2296 = vsub.f32 %v1340, %v2295
    %v2297 = vand.u32 %v2296, 4294901760
    %2298 = vmatpush1.msra.mxu0 %v2297
    %2299 = vmatprep.subr.mxu0 0.0
    %v2300 = vand.u32 %v1339, 4294901760
    %v2301 = vsub.f32 %v1339, %v2300
    %v2302 = vand.u32 %v2301, 4294901760
    %2303 = vmatpush1.msra.mxu0 %v2302
    %2304 = vmatprep.subr.mxu0 0.0
    %v2305 = vand.u32 %v1338, 4294901760
    %v2306 = vsub.f32 %v1338, %v2305
    %v2307 = vand.u32 %v2306, 4294901760
    %2308 = vmatpush1.msra.mxu0 %v2307
    %2309 = vmatprep.subr.mxu0 0.0
    %v2310 = vand.u32 %v1337, 4294901760
    %v2311 = vsub.f32 %v1337, %v2310
    %v2312 = vand.u32 %v2311, 4294901760
    %2313 = vmatpush1.msra.mxu0 %v2312
    %2314 = vmatprep.subr.mxu0 0.0
    %v2315 = vand.u32 %v1336, 4294901760
    %v2316 = vsub.f32 %v1336, %v2315
    %v2317 = vand.u32 %v2316, 4294901760
    %2318 = vmatpush1.msra.mxu0 %v2317
    %2319 = vmatprep.subr.mxu0 0.0
    %v2320 = vand.u32 %v1335, 4294901760
    %v2321 = vsub.f32 %v1335, %v2320
    %v2322 = vand.u32 %v2321, 4294901760
    %2323 = vmatpush1.msra.mxu0 %v2322
    %2324 = vmatprep.subr.mxu0 0.0
    %v2325 = vand.u32 %v1334, 4294901760
    %v2326 = vsub.f32 %v1334, %v2325
    %v2327 = vand.u32 %v2326, 4294901760
    %2328 = vmatpush1.msra.mxu0 %v2327
    %2329 = vmatprep.subr.mxu0 0.0
    %v2330 = vand.u32 %v1333, 4294901760
    %v2331 = vsub.f32 %v1333, %v2330
    %v2332 = vand.u32 %v2331, 4294901760
    %2333 = vmatpush1.msra.mxu0 %v2332
    %2334 = vmatprep.subr.mxu0 0.0
    %2335 = vmatpush2.msra.mxu0 0.0
    %2336 = vmatprep.subr.mxu0 0.0
    %2337 = vmatpush2.msra.mxu0 0.0
    %2338 = vmatprep.subr.mxu0 0.0
    %2339 = vmatpush2.msra.mxu0 0.0
    %2340 = vmatprep.subr.mxu0 0.0
    %2341 = vmatpush2.msra.mxu0 0.0
    %2342 = vmatprep.subr.mxu0 0.0
    %2343 = vmatpush2.msra.mxu0 0.0
    %2344 = vmatprep.subr.mxu0 0.0
    %2345 = vmatpush2.msra.mxu0 0.0
    %2346 = vmatprep.subr.mxu0 0.0
    %2347 = vmatpush2.msra.mxu0 0.0
    %2348 = vmatprep.subr.mxu0 0.0
    %2349 = vmatpush2.msra.mxu0 0.0
    %2350 = vmatprep.subr.mxu0 0.0
    %2351 = vmatpush2.msra.mxu0 0.0
    %2352 = vmatprep.subr.mxu0 0.0
    %2353 = vmatpush2.msra.mxu0 0.0
    %2354 = vmatprep.subr.mxu0 0.0
    %2355 = vmatpush2.msra.mxu0 0.0
    %2356 = vmatprep.subr.mxu0 0.0
    %2357 = vmatpush2.msra.mxu0 0.0
    %2358 = vmatprep.subr.mxu0 0.0
    %2359 = vmatpush2.msra.mxu0 0.0
    %2360 = vmatprep.subr.mxu0 0.0
    %2361 = vmatpush2.msra.mxu0 0.0
    %2362 = vmatprep.subr.mxu0 0.0
    %2363 = vmatpush2.msra.mxu0 0.0
    %2364 = vmatprep.subr.mxu0 0.0
    %2365 = vmatpush2.msra.mxu0 0.0
    %2366 = vmatprep.mubr.f32.mxu0 0.0
    %v2367 = vand.u32 %v1317, 4294901760
    %2368 = vmatmul.mubr.f32.gmra.mxu0 %v2367
    %v2369 = vpop.f32.mrf.mxu0
    %v2370 = vadd.f32 %v2131, %v2369
    %v2371 = vpop.f32.mrf.mxu0
    %2372 = vmatprep.mubr.f32.mxu0 0.0
    %v2373 = vand.u32 %v1318, 4294901760
    %2374 = vmatmul.mubr.f32.gmra.mxu0 %v2373
    %v2375 = vpop.f32.mrf.mxu0
    %v2376 = vadd.f32 %v2139, %v2375
    %v2377 = vpop.f32.mrf.mxu0
    %2378 = vmatprep.mubr.f32.mxu0 0.0
    %v2379 = vand.u32 %v1319, 4294901760
    %2380 = vmatmul.mubr.f32.gmra.mxu0 %v2379
    %v2381 = vpop.f32.mrf.mxu0
    %v2382 = vadd.f32 %v2147, %v2381
    %v2383 = vpop.f32.mrf.mxu0
    %2384 = vmatprep.mubr.f32.mxu0 0.0
    %v2385 = vand.u32 %v1320, 4294901760
    %2386 = vmatmul.mubr.f32.gmra.mxu0 %v2385
    %v2387 = vpop.f32.mrf.mxu0
    %v2388 = vadd.f32 %v2155, %v2387
    %v2389 = vpop.f32.mrf.mxu0
    %2390 = vmatprep.mubr.f32.mxu0 0.0
    %v2391 = vand.u32 %v1321, 4294901760
    %2392 = vmatmul.mubr.f32.gmra.mxu0 %v2391
    %v2393 = vpop.f32.mrf.mxu0
    %v2394 = vadd.f32 %v2163, %v2393
    %v2395 = vpop.f32.mrf.mxu0
    %2396 = vmatprep.mubr.f32.mxu0 0.0
    %v2397 = vand.u32 %v1322, 4294901760
    %2398 = vmatmul.mubr.f32.gmra.mxu0 %v2397
    %v2399 = vpop.f32.mrf.mxu0
    %v2400 = vadd.f32 %v2171, %v2399
    %v2401 = vpop.f32.mrf.mxu0
    %2402 = vmatprep.mubr.f32.mxu0 0.0
    %v2403 = vand.u32 %v1323, 4294901760
    %2404 = vmatmul.mubr.f32.gmra.mxu0 %v2403
    %v2405 = vpop.f32.mrf.mxu0
    %v2406 = vadd.f32 %v2179, %v2405
    %v2407 = vpop.f32.mrf.mxu0
    %2408 = vmatprep.mubr.f32.mxu0 0.0
    %v2409 = vand.u32 %v1324, 4294901760
    %2410 = vmatmul.mubr.f32.gmra.mxu0 %v2409
    %v2411 = vpop.f32.mrf.mxu0
    %v2412 = vadd.f32 %v2187, %v2411
    %v2413 = vpop.f32.mrf.mxu0
    %2414 = vmatprep.mubr.f32.mxu0 0.0
    %v2415 = vand.u32 %v1325, 4294901760
    %2416 = vmatmul.mubr.f32.gmra.mxu0 %v2415
    %v2417 = vpop.f32.mrf.mxu0
    %v2418 = vadd.f32 %v2195, %v2417
    %v2419 = vpop.f32.mrf.mxu0
    %2420 = vmatprep.mubr.f32.mxu0 0.0
    %v2421 = vand.u32 %v1326, 4294901760
    %2422 = vmatmul.mubr.f32.gmra.mxu0 %v2421
    %v2423 = vpop.f32.mrf.mxu0
    %v2424 = vadd.f32 %v2203, %v2423
    %v2425 = vpop.f32.mrf.mxu0
    %2426 = vmatprep.mubr.f32.mxu0 0.0
    %v2427 = vand.u32 %v1327, 4294901760
    %2428 = vmatmul.mubr.f32.gmra.mxu0 %v2427
    %v2429 = vpop.f32.mrf.mxu0
    %v2430 = vadd.f32 %v2211, %v2429
    %v2431 = vpop.f32.mrf.mxu0
    %2432 = vmatprep.mubr.f32.mxu0 0.0
    %v2433 = vand.u32 %v1328, 4294901760
    %2434 = vmatmul.mubr.f32.gmra.mxu0 %v2433
    %v2435 = vpop.f32.mrf.mxu0
    %v2436 = vadd.f32 %v2219, %v2435
    %v2437 = vpop.f32.mrf.mxu0
    %2438 = vmatprep.mubr.f32.mxu0 0.0
    %v2439 = vand.u32 %v1329, 4294901760
    %2440 = vmatmul.mubr.f32.gmra.mxu0 %v2439
    %v2441 = vpop.f32.mrf.mxu0
    %v2442 = vadd.f32 %v2227, %v2441
    %v2443 = vpop.f32.mrf.mxu0
    %2444 = vmatprep.mubr.f32.mxu0 0.0
    %v2445 = vand.u32 %v1330, 4294901760
    %2446 = vmatmul.mubr.f32.gmra.mxu0 %v2445
    %v2447 = vpop.f32.mrf.mxu0
    %v2448 = vadd.f32 %v2235, %v2447
    %v2449 = vpop.f32.mrf.mxu0
    %2450 = vmatprep.mubr.f32.mxu0 0.0
    %v2451 = vand.u32 %v1331, 4294901760
    %2452 = vmatmul.mubr.f32.gmra.mxu0 %v2451
    %v2453 = vpop.f32.mrf.mxu0
    %v2454 = vadd.f32 %v2243, %v2453
    %v2455 = vpop.f32.mrf.mxu0
    %2456 = vmatprep.mubr.f32.mxu0 0.0
    %v2457 = vand.u32 %v1332, 4294901760
    %2458 = vmatmul.mubr.f32.gmra.mxu0 %v2457
    %v2459 = vpop.f32.mrf.mxu0
    %v2460 = vadd.f32 %v2251, %v2459
    %v2461 = vpop.f32.mrf.mxu0
    %2462 = vdwg.mxu0
    %2463 = vmatprep.subr.mxu0 0.0
    %v2464 = vand.u32 %v1348, 4294901760
    %2465 = vmatpush1.msra.mxu0 %v2464
    %2466 = vmatprep.subr.mxu0 0.0
    %v2467 = vand.u32 %v1347, 4294901760
    %2468 = vmatpush1.msra.mxu0 %v2467
    %2469 = vmatprep.subr.mxu0 0.0
    %v2470 = vand.u32 %v1346, 4294901760
    %2471 = vmatpush1.msra.mxu0 %v2470
    %2472 = vmatprep.subr.mxu0 0.0
    %v2473 = vand.u32 %v1345, 4294901760
    %2474 = vmatpush1.msra.mxu0 %v2473
    %2475 = vmatprep.subr.mxu0 0.0
    %v2476 = vand.u32 %v1344, 4294901760
    %2477 = vmatpush1.msra.mxu0 %v2476
    %2478 = vmatprep.subr.mxu0 0.0
    %v2479 = vand.u32 %v1343, 4294901760
    %2480 = vmatpush1.msra.mxu0 %v2479
    %2481 = vmatprep.subr.mxu0 0.0
    %v2482 = vand.u32 %v1342, 4294901760
    %2483 = vmatpush1.msra.mxu0 %v2482
    %2484 = vmatprep.subr.mxu0 0.0
    %v2485 = vand.u32 %v1341, 4294901760
    %2486 = vmatpush1.msra.mxu0 %v2485
    %2487 = vmatprep.subr.mxu0 0.0
    %v2488 = vand.u32 %v1340, 4294901760
    %2489 = vmatpush1.msra.mxu0 %v2488
    %2490 = vmatprep.subr.mxu0 0.0
    %v2491 = vand.u32 %v1339, 4294901760
    %2492 = vmatpush1.msra.mxu0 %v2491
    %2493 = vmatprep.subr.mxu0 0.0
    %v2494 = vand.u32 %v1338, 4294901760
    %2495 = vmatpush1.msra.mxu0 %v2494
    %2496 = vmatprep.subr.mxu0 0.0
    %v2497 = vand.u32 %v1337, 4294901760
    %2498 = vmatpush1.msra.mxu0 %v2497
    %2499 = vmatprep.subr.mxu0 0.0
    %v2500 = vand.u32 %v1336, 4294901760
    %2501 = vmatpush1.msra.mxu0 %v2500
    %2502 = vmatprep.subr.mxu0 0.0
    %v2503 = vand.u32 %v1335, 4294901760
    %2504 = vmatpush1.msra.mxu0 %v2503
    %2505 = vmatprep.subr.mxu0 0.0
    %v2506 = vand.u32 %v1334, 4294901760
    %2507 = vmatpush1.msra.mxu0 %v2506
    %2508 = vmatprep.subr.mxu0 0.0
    %v2509 = vand.u32 %v1333, 4294901760
    %2510 = vmatpush1.msra.mxu0 %v2509
    %2511 = vmatprep.subr.mxu0 0.0
    %2512 = vmatpush2.msra.mxu0 0.0
    %2513 = vmatprep.subr.mxu0 0.0
    %2514 = vmatpush2.msra.mxu0 0.0
    %2515 = vmatprep.subr.mxu0 0.0
    %2516 = vmatpush2.msra.mxu0 0.0
    %2517 = vmatprep.subr.mxu0 0.0
    %2518 = vmatpush2.msra.mxu0 0.0
    %2519 = vmatprep.subr.mxu0 0.0
    %2520 = vmatpush2.msra.mxu0 0.0
    %2521 = vmatprep.subr.mxu0 0.0
    %2522 = vmatpush2.msra.mxu0 0.0
    %2523 = vmatprep.subr.mxu0 0.0
    %2524 = vmatpush2.msra.mxu0 0.0
    %2525 = vmatprep.subr.mxu0 0.0
    %2526 = vmatpush2.msra.mxu0 0.0
    %2527 = vmatprep.subr.mxu0 0.0
    %2528 = vmatpush2.msra.mxu0 0.0
    %2529 = vmatprep.subr.mxu0 0.0
    %2530 = vmatpush2.msra.mxu0 0.0
    %2531 = vmatprep.subr.mxu0 0.0
    %2532 = vmatpush2.msra.mxu0 0.0
    %2533 = vmatprep.subr.mxu0 0.0
    %2534 = vmatpush2.msra.mxu0 0.0
    %2535 = vmatprep.subr.mxu0 0.0
    %2536 = vmatpush2.msra.mxu0 0.0
    %2537 = vmatprep.subr.mxu0 0.0
    %2538 = vmatpush2.msra.mxu0 0.0
    %2539 = vmatprep.subr.mxu0 0.0
    %2540 = vmatpush2.msra.mxu0 0.0
    %2541 = vmatprep.subr.mxu0 0.0
    %2542 = vmatpush2.msra.mxu0 0.0
    %2543 = vmatprep.mubr.f32.mxu0 0.0
    %v2544 = vand.u32 %v1317, 4294901760
    %2545 = vmatmul.mubr.f32.gmra.mxu0 %v2544
    %v2546 = vpop.f32.mrf.mxu0
    %v2547 = vadd.f32 %v2370, %v2546
    %v2548 = vpop.f32.mrf.mxu0
    %2549 = vmatprep.mubr.f32.mxu0 0.0
    %v2550 = vand.u32 %v1318, 4294901760
    %2551 = vmatmul.mubr.f32.gmra.mxu0 %v2550
    %v2552 = vpop.f32.mrf.mxu0
    %v2553 = vadd.f32 %v2376, %v2552
    %v2554 = vpop.f32.mrf.mxu0
    %2555 = vmatprep.mubr.f32.mxu0 0.0
    %v2556 = vand.u32 %v1319, 4294901760
    %2557 = vmatmul.mubr.f32.gmra.mxu0 %v2556
    %v2558 = vpop.f32.mrf.mxu0
    %v2559 = vadd.f32 %v2382, %v2558
    %v2560 = vpop.f32.mrf.mxu0
    %2561 = vmatprep.mubr.f32.mxu0 0.0
    %v2562 = vand.u32 %v1320, 4294901760
    %2563 = vmatmul.mubr.f32.gmra.mxu0 %v2562
    %v2564 = vpop.f32.mrf.mxu0
    %v2565 = vadd.f32 %v2388, %v2564
    %v2566 = vpop.f32.mrf.mxu0
    %2567 = vmatprep.mubr.f32.mxu0 0.0
    %v2568 = vand.u32 %v1321, 4294901760
    %2569 = vmatmul.mubr.f32.gmra.mxu0 %v2568
    %v2570 = vpop.f32.mrf.mxu0
    %v2571 = vadd.f32 %v2394, %v2570
    %v2572 = vpop.f32.mrf.mxu0
    %2573 = vmatprep.mubr.f32.mxu0 0.0
    %v2574 = vand.u32 %v1322, 4294901760
    %2575 = vmatmul.mubr.f32.gmra.mxu0 %v2574
    %v2576 = vpop.f32.mrf.mxu0
    %v2577 = vadd.f32 %v2400, %v2576
    %v2578 = vpop.f32.mrf.mxu0
    %2579 = vmatprep.mubr.f32.mxu0 0.0
    %v2580 = vand.u32 %v1323, 4294901760
    %2581 = vmatmul.mubr.f32.gmra.mxu0 %v2580
    %v2582 = vpop.f32.mrf.mxu0
    %v2583 = vadd.f32 %v2406, %v2582
    %v2584 = vpop.f32.mrf.mxu0
    %2585 = vmatprep.mubr.f32.mxu0 0.0
    %v2586 = vand.u32 %v1324, 4294901760
    %2587 = vmatmul.mubr.f32.gmra.mxu0 %v2586
    %v2588 = vpop.f32.mrf.mxu0
    %v2589 = vadd.f32 %v2412, %v2588
    %v2590 = vpop.f32.mrf.mxu0
    %2591 = vmatprep.mubr.f32.mxu0 0.0
    %v2592 = vand.u32 %v1325, 4294901760
    %2593 = vmatmul.mubr.f32.gmra.mxu0 %v2592
    %v2594 = vpop.f32.mrf.mxu0
    %v2595 = vadd.f32 %v2418, %v2594
    %v2596 = vpop.f32.mrf.mxu0
    %2597 = vmatprep.mubr.f32.mxu0 0.0
    %v2598 = vand.u32 %v1326, 4294901760
    %2599 = vmatmul.mubr.f32.gmra.mxu0 %v2598
    %v2600 = vpop.f32.mrf.mxu0
    %v2601 = vadd.f32 %v2424, %v2600
    %v2602 = vpop.f32.mrf.mxu0
    %2603 = vmatprep.mubr.f32.mxu0 0.0
    %v2604 = vand.u32 %v1327, 4294901760
    %2605 = vmatmul.mubr.f32.gmra.mxu0 %v2604
    %v2606 = vpop.f32.mrf.mxu0
    %v2607 = vadd.f32 %v2430, %v2606
    %v2608 = vpop.f32.mrf.mxu0
    %2609 = vmatprep.mubr.f32.mxu0 0.0
    %v2610 = vand.u32 %v1328, 4294901760
    %2611 = vmatmul.mubr.f32.gmra.mxu0 %v2610
    %v2612 = vpop.f32.mrf.mxu0
    %v2613 = vadd.f32 %v2436, %v2612
    %v2614 = vpop.f32.mrf.mxu0
    %2615 = vmatprep.mubr.f32.mxu0 0.0
    %v2616 = vand.u32 %v1329, 4294901760
    %2617 = vmatmul.mubr.f32.gmra.mxu0 %v2616
    %v2618 = vpop.f32.mrf.mxu0
    %v2619 = vadd.f32 %v2442, %v2618
    %v2620 = vpop.f32.mrf.mxu0
    %2621 = vmatprep.mubr.f32.mxu0 0.0
    %v2622 = vand.u32 %v1330, 4294901760
    %2623 = vmatmul.mubr.f32.gmra.mxu0 %v2622
    %v2624 = vpop.f32.mrf.mxu0
    %v2625 = vadd.f32 %v2448, %v2624
    %v2626 = vpop.f32.mrf.mxu0
    %2627 = vmatprep.mubr.f32.mxu0 0.0
    %v2628 = vand.u32 %v1331, 4294901760
    %2629 = vmatmul.mubr.f32.gmra.mxu0 %v2628
    %v2630 = vpop.f32.mrf.mxu0
    %v2631 = vadd.f32 %v2454, %v2630
    %v2632 = vpop.f32.mrf.mxu0
    %2633 = vmatprep.mubr.f32.mxu0 0.0
    %v2634 = vand.u32 %v1332, 4294901760
    %2635 = vmatmul.mubr.f32.gmra.mxu0 %v2634
    %v2636 = vpop.f32.mrf.mxu0
    %v2637 = vadd.f32 %v2460, %v2636
    %v2638 = vpop.f32.mrf.mxu0
    %2639 = vdwg.mxu0
    %v2640 = vmax.f32 %v2547, 0.0
    %v2641 = vmax.f32 %v2553, 0.0
    %v2642 = vmax.f32 %v2559, 0.0
    %v2643 = vmax.f32 %v2565, 0.0
    %v2644 = vmax.f32 %v2571, 0.0
    %v2645 = vmax.f32 %v2577, 0.0
    %v2646 = vmax.f32 %v2583, 0.0
    %v2647 = vmax.f32 %v2589, 0.0
    %v2648 = vmax.f32 %v2595, 0.0
    %v2649 = vmax.f32 %v2601, 0.0
    %v2650 = vmax.f32 %v2607, 0.0
    %v2651 = vmax.f32 %v2613, 0.0
    %v2652 = vmax.f32 %v2619, 0.0
    %v2653 = vmax.f32 %v2625, 0.0
    %v2654 = vmax.f32 %v2631, 0.0
    %v2655 = vmax.f32 %v2637, 0.0
    %s2656 = scalar_lea.vmem [#allocation2], 128
    %v2657 = vld [vmem:[%s2656] sm:$0xff]
    %v2658 = vld [vmem:[%s2656 + $0x8] sm:$0xff]
    %v2659 = vld [vmem:[%s2656 + $0x10] sm:$0xff]
    %v2660 = vld [vmem:[%s2656 + $0x18] sm:$0xff]
    %v2661 = vld [vmem:[%s2656 + $0x20] sm:$0xff]
    %v2662 = vld [vmem:[%s2656 + $0x28] sm:$0xff]
    %v2663 = vld [vmem:[%s2656 + $0x30] sm:$0xff]
    %v2664 = vld [vmem:[%s2656 + $0x38] sm:$0xff]
    %v2665 = vld [vmem:[%s2656 + $0x40] sm:$0xff]
    %v2666 = vld [vmem:[%s2656 + $0x48] sm:$0xff]
    %v2667 = vld [vmem:[%s2656 + $0x50] sm:$0xff]
    %v2668 = vld [vmem:[%s2656 + $0x58] sm:$0xff]
    %v2669 = vld [vmem:[%s2656 + $0x60] sm:$0xff]
    %v2670 = vld [vmem:[%s2656 + $0x68] sm:$0xff]
    %v2671 = vld [vmem:[%s2656 + $0x70] sm:$0xff]
    %v2672 = vld [vmem:[%s2656 + $0x78] sm:$0xff]
    %v2673 = vld [vmem:[%s2 + $0x2] sm:$0x1]
    %v2674 = vlaneseq
    %v2675 = vshrl.u32 %v2674, 7
    %v2676 = vsub.s32 0, %v2675
    %v2677 = vrot.slane %v2673, %v2676
    %2678 = vmatprep.subr.mxu0 0.0
    %v2679 = vand.u32 %v2672, 4294901760
    %2680 = vmatpush1.msra.mxu0 %v2679
    %2681 = vmatprep.subr.mxu0 0.0
    %v2682 = vand.u32 %v2671, 4294901760
    %2683 = vmatpush1.msra.mxu0 %v2682
    %2684 = vmatprep.subr.mxu0 0.0
    %v2685 = vand.u32 %v2670, 4294901760
    %2686 = vmatpush1.msra.mxu0 %v2685
    %2687 = vmatprep.subr.mxu0 0.0
    %v2688 = vand.u32 %v2669, 4294901760
    %2689 = vmatpush1.msra.mxu0 %v2688
    %2690 = vmatprep.subr.mxu0 0.0
    %v2691 = vand.u32 %v2668, 4294901760
    %2692 = vmatpush1.msra.mxu0 %v2691
    %2693 = vmatprep.subr.mxu0 0.0
    %v2694 = vand.u32 %v2667, 4294901760
    %2695 = vmatpush1.msra.mxu0 %v2694
    %2696 = vmatprep.subr.mxu0 0.0
    %v2697 = vand.u32 %v2666, 4294901760
    %2698 = vmatpush1.msra.mxu0 %v2697
    %2699 = vmatprep.subr.mxu0 0.0
    %v2700 = vand.u32 %v2665, 4294901760
    %2701 = vmatpush1.msra.mxu0 %v2700
    %2702 = vmatprep.subr.mxu0 0.0
    %v2703 = vand.u32 %v2664, 4294901760
    %2704 = vmatpush1.msra.mxu0 %v2703
    %2705 = vmatprep.subr.mxu0 0.0
    %v2706 = vand.u32 %v2663, 4294901760
    %2707 = vmatpush1.msra.mxu0 %v2706
    %2708 = vmatprep.subr.mxu0 0.0
    %v2709 = vand.u32 %v2662, 4294901760
    %2710 = vmatpush1.msra.mxu0 %v2709
    %2711 = vmatprep.subr.mxu0 0.0
    %v2712 = vand.u32 %v2661, 4294901760
    %2713 = vmatpush1.msra.mxu0 %v2712
    %2714 = vmatprep.subr.mxu0 0.0
    %v2715 = vand.u32 %v2660, 4294901760
    %2716 = vmatpush1.msra.mxu0 %v2715
    %2717 = vmatprep.subr.mxu0 0.0
    %v2718 = vand.u32 %v2659, 4294901760
    %2719 = vmatpush1.msra.mxu0 %v2718
    %2720 = vmatprep.subr.mxu0 0.0
    %v2721 = vand.u32 %v2658, 4294901760
    %2722 = vmatpush1.msra.mxu0 %v2721
    %2723 = vmatprep.subr.mxu0 0.0
    %v2724 = vand.u32 %v2657, 4294901760
    %2725 = vmatpush1.msra.mxu0 %v2724
    %2726 = vmatprep.subr.mxu0 0.0
    %2727 = vmatpush2.msra.mxu0 0.0
    %2728 = vmatprep.subr.mxu0 0.0
    %2729 = vmatpush2.msra.mxu0 0.0
    %2730 = vmatprep.subr.mxu0 0.0
    %2731 = vmatpush2.msra.mxu0 0.0
    %2732 = vmatprep.subr.mxu0 0.0
    %2733 = vmatpush2.msra.mxu0 0.0
    %2734 = vmatprep.subr.mxu0 0.0
    %2735 = vmatpush2.msra.mxu0 0.0
    %2736 = vmatprep.subr.mxu0 0.0
    %2737 = vmatpush2.msra.mxu0 0.0
    %2738 = vmatprep.subr.mxu0 0.0
    %2739 = vmatpush2.msra.mxu0 0.0
    %2740 = vmatprep.subr.mxu0 0.0
    %2741 = vmatpush2.msra.mxu0 0.0
    %2742 = vmatprep.subr.mxu0 0.0
    %2743 = vmatpush2.msra.mxu0 0.0
    %2744 = vmatprep.subr.mxu0 0.0
    %2745 = vmatpush2.msra.mxu0 0.0
    %2746 = vmatprep.subr.mxu0 0.0
    %2747 = vmatpush2.msra.mxu0 0.0
    %2748 = vmatprep.subr.mxu0 0.0
    %2749 = vmatpush2.msra.mxu0 0.0
    %2750 = vmatprep.subr.mxu0 0.0
    %2751 = vmatpush2.msra.mxu0 0.0
    %2752 = vmatprep.subr.mxu0 0.0
    %2753 = vmatpush2.msra.mxu0 0.0
    %2754 = vmatprep.subr.mxu0 0.0
    %2755 = vmatpush2.msra.mxu0 0.0
    %2756 = vmatprep.subr.mxu0 0.0
    %2757 = vmatpush2.msra.mxu0 0.0
    %2758 = vmatprep.mubr.f32.mxu0 0.0
    %v2759 = vand.u32 %v2640, 4294901760
    %v2760 = vsub.f32 %v2640, %v2759
    %v2761 = vand.u32 %v2760, 4294901760
    %v2762 = vsub.f32 %v2760, %v2761
    %v2763 = vand.u32 %v2762, 4294901760
    %2764 = vmatmul.mubr.f32.gmra.mxu0 %v2763
    %v2765 = vpop.f32.mrf.mxu0
    %v2766 = vadd.f32 %v2677, %v2765
    %v2767 = vpop.f32.mrf.mxu0
    %2768 = vmatprep.mubr.f32.mxu0 0.0
    %v2769 = vand.u32 %v2641, 4294901760
    %v2770 = vsub.f32 %v2641, %v2769
    %v2771 = vand.u32 %v2770, 4294901760
    %v2772 = vsub.f32 %v2770, %v2771
    %v2773 = vand.u32 %v2772, 4294901760
    %2774 = vmatmul.mubr.f32.gmra.mxu0 %v2773
    %v2775 = vpop.f32.mrf.mxu0
    %v2776 = vadd.f32 %v2677, %v2775
    %v2777 = vpop.f32.mrf.mxu0
    %2778 = vmatprep.mubr.f32.mxu0 0.0
    %v2779 = vand.u32 %v2642, 4294901760
    %v2780 = vsub.f32 %v2642, %v2779
    %v2781 = vand.u32 %v2780, 4294901760
    %v2782 = vsub.f32 %v2780, %v2781
    %v2783 = vand.u32 %v2782, 4294901760
    %2784 = vmatmul.mubr.f32.gmra.mxu0 %v2783
    %v2785 = vpop.f32.mrf.mxu0
    %v2786 = vadd.f32 %v2677, %v2785
    %v2787 = vpop.f32.mrf.mxu0
    %2788 = vmatprep.mubr.f32.mxu0 0.0
    %v2789 = vand.u32 %v2643, 4294901760
    %v2790 = vsub.f32 %v2643, %v2789
    %v2791 = vand.u32 %v2790, 4294901760
    %v2792 = vsub.f32 %v2790, %v2791
    %v2793 = vand.u32 %v2792, 4294901760
    %2794 = vmatmul.mubr.f32.gmra.mxu0 %v2793
    %v2795 = vpop.f32.mrf.mxu0
    %v2796 = vadd.f32 %v2677, %v2795
    %v2797 = vpop.f32.mrf.mxu0
    %2798 = vmatprep.mubr.f32.mxu0 0.0
    %v2799 = vand.u32 %v2644, 4294901760
    %v2800 = vsub.f32 %v2644, %v2799
    %v2801 = vand.u32 %v2800, 4294901760
    %v2802 = vsub.f32 %v2800, %v2801
    %v2803 = vand.u32 %v2802, 4294901760
    %2804 = vmatmul.mubr.f32.gmra.mxu0 %v2803
    %v2805 = vpop.f32.mrf.mxu0
    %v2806 = vadd.f32 %v2677, %v2805
    %v2807 = vpop.f32.mrf.mxu0
    %2808 = vmatprep.mubr.f32.mxu0 0.0
    %v2809 = vand.u32 %v2645, 4294901760
    %v2810 = vsub.f32 %v2645, %v2809
    %v2811 = vand.u32 %v2810, 4294901760
    %v2812 = vsub.f32 %v2810, %v2811
    %v2813 = vand.u32 %v2812, 4294901760
    %2814 = vmatmul.mubr.f32.gmra.mxu0 %v2813
    %v2815 = vpop.f32.mrf.mxu0
    %v2816 = vadd.f32 %v2677, %v2815
    %v2817 = vpop.f32.mrf.mxu0
    %2818 = vmatprep.mubr.f32.mxu0 0.0
    %v2819 = vand.u32 %v2646, 4294901760
    %v2820 = vsub.f32 %v2646, %v2819
    %v2821 = vand.u32 %v2820, 4294901760
    %v2822 = vsub.f32 %v2820, %v2821
    %v2823 = vand.u32 %v2822, 4294901760
    %2824 = vmatmul.mubr.f32.gmra.mxu0 %v2823
    %v2825 = vpop.f32.mrf.mxu0
    %v2826 = vadd.f32 %v2677, %v2825
    %v2827 = vpop.f32.mrf.mxu0
    %2828 = vmatprep.mubr.f32.mxu0 0.0
    %v2829 = vand.u32 %v2647, 4294901760
    %v2830 = vsub.f32 %v2647, %v2829
    %v2831 = vand.u32 %v2830, 4294901760
    %v2832 = vsub.f32 %v2830, %v2831
    %v2833 = vand.u32 %v2832, 4294901760
    %2834 = vmatmul.mubr.f32.gmra.mxu0 %v2833
    %v2835 = vpop.f32.mrf.mxu0
    %v2836 = vadd.f32 %v2677, %v2835
    %v2837 = vpop.f32.mrf.mxu0
    %2838 = vmatprep.mubr.f32.mxu0 0.0
    %v2839 = vand.u32 %v2648, 4294901760
    %v2840 = vsub.f32 %v2648, %v2839
    %v2841 = vand.u32 %v2840, 4294901760
    %v2842 = vsub.f32 %v2840, %v2841
    %v2843 = vand.u32 %v2842, 4294901760
    %2844 = vmatmul.mubr.f32.gmra.mxu0 %v2843
    %v2845 = vpop.f32.mrf.mxu0
    %v2846 = vadd.f32 %v2677, %v2845
    %v2847 = vpop.f32.mrf.mxu0
    %2848 = vmatprep.mubr.f32.mxu0 0.0
    %v2849 = vand.u32 %v2649, 4294901760
    %v2850 = vsub.f32 %v2649, %v2849
    %v2851 = vand.u32 %v2850, 4294901760
    %v2852 = vsub.f32 %v2850, %v2851
    %v2853 = vand.u32 %v2852, 4294901760
    %2854 = vmatmul.mubr.f32.gmra.mxu0 %v2853
    %v2855 = vpop.f32.mrf.mxu0
    %v2856 = vadd.f32 %v2677, %v2855
    %v2857 = vpop.f32.mrf.mxu0
    %2858 = vmatprep.mubr.f32.mxu0 0.0
    %v2859 = vand.u32 %v2650, 4294901760
    %v2860 = vsub.f32 %v2650, %v2859
    %v2861 = vand.u32 %v2860, 4294901760
    %v2862 = vsub.f32 %v2860, %v2861
    %v2863 = vand.u32 %v2862, 4294901760
    %2864 = vmatmul.mubr.f32.gmra.mxu0 %v2863
    %v2865 = vpop.f32.mrf.mxu0
    %v2866 = vadd.f32 %v2677, %v2865
    %v2867 = vpop.f32.mrf.mxu0
    %2868 = vmatprep.mubr.f32.mxu0 0.0
    %v2869 = vand.u32 %v2651, 4294901760
    %v2870 = vsub.f32 %v2651, %v2869
    %v2871 = vand.u32 %v2870, 4294901760
    %v2872 = vsub.f32 %v2870, %v2871
    %v2873 = vand.u32 %v2872, 4294901760
    %2874 = vmatmul.mubr.f32.gmra.mxu0 %v2873
    %v2875 = vpop.f32.mrf.mxu0
    %v2876 = vadd.f32 %v2677, %v2875
    %v2877 = vpop.f32.mrf.mxu0
    %2878 = vmatprep.mubr.f32.mxu0 0.0
    %v2879 = vand.u32 %v2652, 4294901760
    %v2880 = vsub.f32 %v2652, %v2879
    %v2881 = vand.u32 %v2880, 4294901760
    %v2882 = vsub.f32 %v2880, %v2881
    %v2883 = vand.u32 %v2882, 4294901760
    %2884 = vmatmul.mubr.f32.gmra.mxu0 %v2883
    %v2885 = vpop.f32.mrf.mxu0
    %v2886 = vadd.f32 %v2677, %v2885
    %v2887 = vpop.f32.mrf.mxu0
    %2888 = vmatprep.mubr.f32.mxu0 0.0
    %v2889 = vand.u32 %v2653, 4294901760
    %v2890 = vsub.f32 %v2653, %v2889
    %v2891 = vand.u32 %v2890, 4294901760
    %v2892 = vsub.f32 %v2890, %v2891
    %v2893 = vand.u32 %v2892, 4294901760
    %2894 = vmatmul.mubr.f32.gmra.mxu0 %v2893
    %v2895 = vpop.f32.mrf.mxu0
    %v2896 = vadd.f32 %v2677, %v2895
    %v2897 = vpop.f32.mrf.mxu0
    %2898 = vmatprep.mubr.f32.mxu0 0.0
    %v2899 = vand.u32 %v2654, 4294901760
    %v2900 = vsub.f32 %v2654, %v2899
    %v2901 = vand.u32 %v2900, 4294901760
    %v2902 = vsub.f32 %v2900, %v2901
    %v2903 = vand.u32 %v2902, 4294901760
    %2904 = vmatmul.mubr.f32.gmra.mxu0 %v2903
    %v2905 = vpop.f32.mrf.mxu0
    %v2906 = vadd.f32 %v2677, %v2905
    %v2907 = vpop.f32.mrf.mxu0
    %2908 = vmatprep.mubr.f32.mxu0 0.0
    %v2909 = vand.u32 %v2655, 4294901760
    %v2910 = vsub.f32 %v2655, %v2909
    %v2911 = vand.u32 %v2910, 4294901760
    %v2912 = vsub.f32 %v2910, %v2911
    %v2913 = vand.u32 %v2912, 4294901760
    %2914 = vmatmul.mubr.f32.gmra.mxu0 %v2913
    %v2915 = vpop.f32.mrf.mxu0
    %v2916 = vadd.f32 %v2677, %v2915
    %v2917 = vpop.f32.mrf.mxu0
    %2918 = vdwg.mxu0
    %2919 = vmatprep.subr.mxu0 0.0
    %v2920 = vand.u32 %v2672, 4294901760
    %v2921 = vsub.f32 %v2672, %v2920
    %v2922 = vand.u32 %v2921, 4294901760
    %v2923 = vsub.f32 %v2921, %v2922
    %v2924 = vand.u32 %v2923, 4294901760
    %2925 = vmatpush1.msra.mxu0 %v2924
    %2926 = vmatprep.subr.mxu0 0.0
    %v2927 = vand.u32 %v2671, 4294901760
    %v2928 = vsub.f32 %v2671, %v2927
    %v2929 = vand.u32 %v2928, 4294901760
    %v2930 = vsub.f32 %v2928, %v2929
    %v2931 = vand.u32 %v2930, 4294901760
    %2932 = vmatpush1.msra.mxu0 %v2931
    %2933 = vmatprep.subr.mxu0 0.0
    %v2934 = vand.u32 %v2670, 4294901760
    %v2935 = vsub.f32 %v2670, %v2934
    %v2936 = vand.u32 %v2935, 4294901760
    %v2937 = vsub.f32 %v2935, %v2936
    %v2938 = vand.u32 %v2937, 4294901760
    %2939 = vmatpush1.msra.mxu0 %v2938
    %2940 = vmatprep.subr.mxu0 0.0
    %v2941 = vand.u32 %v2669, 4294901760
    %v2942 = vsub.f32 %v2669, %v2941
    %v2943 = vand.u32 %v2942, 4294901760
    %v2944 = vsub.f32 %v2942, %v2943
    %v2945 = vand.u32 %v2944, 4294901760
    %2946 = vmatpush1.msra.mxu0 %v2945
    %2947 = vmatprep.subr.mxu0 0.0
    %v2948 = vand.u32 %v2668, 4294901760
    %v2949 = vsub.f32 %v2668, %v2948
    %v2950 = vand.u32 %v2949, 4294901760
    %v2951 = vsub.f32 %v2949, %v2950
    %v2952 = vand.u32 %v2951, 4294901760
    %2953 = vmatpush1.msra.mxu0 %v2952
    %2954 = vmatprep.subr.mxu0 0.0
    %v2955 = vand.u32 %v2667, 4294901760
    %v2956 = vsub.f32 %v2667, %v2955
    %v2957 = vand.u32 %v2956, 4294901760
    %v2958 = vsub.f32 %v2956, %v2957
    %v2959 = vand.u32 %v2958, 4294901760
    %2960 = vmatpush1.msra.mxu0 %v2959
    %2961 = vmatprep.subr.mxu0 0.0
    %v2962 = vand.u32 %v2666, 4294901760
    %v2963 = vsub.f32 %v2666, %v2962
    %v2964 = vand.u32 %v2963, 4294901760
    %v2965 = vsub.f32 %v2963, %v2964
    %v2966 = vand.u32 %v2965, 4294901760
    %2967 = vmatpush1.msra.mxu0 %v2966
    %2968 = vmatprep.subr.mxu0 0.0
    %v2969 = vand.u32 %v2665, 4294901760
    %v2970 = vsub.f32 %v2665, %v2969
    %v2971 = vand.u32 %v2970, 4294901760
    %v2972 = vsub.f32 %v2970, %v2971
    %v2973 = vand.u32 %v2972, 4294901760
    %2974 = vmatpush1.msra.mxu0 %v2973
    %2975 = vmatprep.subr.mxu0 0.0
    %v2976 = vand.u32 %v2664, 4294901760
    %v2977 = vsub.f32 %v2664, %v2976
    %v2978 = vand.u32 %v2977, 4294901760
    %v2979 = vsub.f32 %v2977, %v2978
    %v2980 = vand.u32 %v2979, 4294901760
    %2981 = vmatpush1.msra.mxu0 %v2980
    %2982 = vmatprep.subr.mxu0 0.0
    %v2983 = vand.u32 %v2663, 4294901760
    %v2984 = vsub.f32 %v2663, %v2983
    %v2985 = vand.u32 %v2984, 4294901760
    %v2986 = vsub.f32 %v2984, %v2985
    %v2987 = vand.u32 %v2986, 4294901760
    %2988 = vmatpush1.msra.mxu0 %v2987
    %2989 = vmatprep.subr.mxu0 0.0
    %v2990 = vand.u32 %v2662, 4294901760
    %v2991 = vsub.f32 %v2662, %v2990
    %v2992 = vand.u32 %v2991, 4294901760
    %v2993 = vsub.f32 %v2991, %v2992
    %v2994 = vand.u32 %v2993, 4294901760
    %2995 = vmatpush1.msra.mxu0 %v2994
    %2996 = vmatprep.subr.mxu0 0.0
    %v2997 = vand.u32 %v2661, 4294901760
    %v2998 = vsub.f32 %v2661, %v2997
    %v2999 = vand.u32 %v2998, 4294901760
    %v3000 = vsub.f32 %v2998, %v2999
    %v3001 = vand.u32 %v3000, 4294901760
    %3002 = vmatpush1.msra.mxu0 %v3001
    %3003 = vmatprep.subr.mxu0 0.0
    %v3004 = vand.u32 %v2660, 4294901760
    %v3005 = vsub.f32 %v2660, %v3004
    %v3006 = vand.u32 %v3005, 4294901760
    %v3007 = vsub.f32 %v3005, %v3006
    %v3008 = vand.u32 %v3007, 4294901760
    %3009 = vmatpush1.msra.mxu0 %v3008
    %3010 = vmatprep.subr.mxu0 0.0
    %v3011 = vand.u32 %v2659, 4294901760
    %v3012 = vsub.f32 %v2659, %v3011
    %v3013 = vand.u32 %v3012, 4294901760
    %v3014 = vsub.f32 %v3012, %v3013
    %v3015 = vand.u32 %v3014, 4294901760
    %3016 = vmatpush1.msra.mxu0 %v3015
    %3017 = vmatprep.subr.mxu0 0.0
    %v3018 = vand.u32 %v2658, 4294901760
    %v3019 = vsub.f32 %v2658, %v3018
    %v3020 = vand.u32 %v3019, 4294901760
    %v3021 = vsub.f32 %v3019, %v3020
    %v3022 = vand.u32 %v3021, 4294901760
    %3023 = vmatpush1.msra.mxu0 %v3022
    %3024 = vmatprep.subr.mxu0 0.0
    %v3025 = vand.u32 %v2657, 4294901760
    %v3026 = vsub.f32 %v2657, %v3025
    %v3027 = vand.u32 %v3026, 4294901760
    %v3028 = vsub.f32 %v3026, %v3027
    %v3029 = vand.u32 %v3028, 4294901760
    %3030 = vmatpush1.msra.mxu0 %v3029
    %3031 = vmatprep.subr.mxu0 0.0
    %3032 = vmatpush2.msra.mxu0 0.0
    %3033 = vmatprep.subr.mxu0 0.0
    %3034 = vmatpush2.msra.mxu0 0.0
    %3035 = vmatprep.subr.mxu0 0.0
    %3036 = vmatpush2.msra.mxu0 0.0
    %3037 = vmatprep.subr.mxu0 0.0
    %3038 = vmatpush2.msra.mxu0 0.0
    %3039 = vmatprep.subr.mxu0 0.0
    %3040 = vmatpush2.msra.mxu0 0.0
    %3041 = vmatprep.subr.mxu0 0.0
    %3042 = vmatpush2.msra.mxu0 0.0
    %3043 = vmatprep.subr.mxu0 0.0
    %3044 = vmatpush2.msra.mxu0 0.0
    %3045 = vmatprep.subr.mxu0 0.0
    %3046 = vmatpush2.msra.mxu0 0.0
    %3047 = vmatprep.subr.mxu0 0.0
    %3048 = vmatpush2.msra.mxu0 0.0
    %3049 = vmatprep.subr.mxu0 0.0
    %3050 = vmatpush2.msra.mxu0 0.0
    %3051 = vmatprep.subr.mxu0 0.0
    %3052 = vmatpush2.msra.mxu0 0.0
    %3053 = vmatprep.subr.mxu0 0.0
    %3054 = vmatpush2.msra.mxu0 0.0
    %3055 = vmatprep.subr.mxu0 0.0
    %3056 = vmatpush2.msra.mxu0 0.0
    %3057 = vmatprep.subr.mxu0 0.0
    %3058 = vmatpush2.msra.mxu0 0.0
    %3059 = vmatprep.subr.mxu0 0.0
    %3060 = vmatpush2.msra.mxu0 0.0
    %3061 = vmatprep.subr.mxu0 0.0
    %3062 = vmatpush2.msra.mxu0 0.0
    %3063 = vmatprep.mubr.f32.mxu0 0.0
    %v3064 = vand.u32 %v2640, 4294901760
    %3065 = vmatmul.mubr.f32.gmra.mxu0 %v3064
    %v3066 = vpop.f32.mrf.mxu0
    %v3067 = vadd.f32 %v2766, %v3066
    %v3068 = vpop.f32.mrf.mxu0
    %3069 = vmatprep.mubr.f32.mxu0 0.0
    %v3070 = vand.u32 %v2641, 4294901760
    %3071 = vmatmul.mubr.f32.gmra.mxu0 %v3070
    %v3072 = vpop.f32.mrf.mxu0
    %v3073 = vadd.f32 %v2776, %v3072
    %v3074 = vpop.f32.mrf.mxu0
    %3075 = vmatprep.mubr.f32.mxu0 0.0
    %v3076 = vand.u32 %v2642, 4294901760
    %3077 = vmatmul.mubr.f32.gmra.mxu0 %v3076
    %v3078 = vpop.f32.mrf.mxu0
    %v3079 = vadd.f32 %v2786, %v3078
    %v3080 = vpop.f32.mrf.mxu0
    %3081 = vmatprep.mubr.f32.mxu0 0.0
    %v3082 = vand.u32 %v2643, 4294901760
    %3083 = vmatmul.mubr.f32.gmra.mxu0 %v3082
    %v3084 = vpop.f32.mrf.mxu0
    %v3085 = vadd.f32 %v2796, %v3084
    %v3086 = vpop.f32.mrf.mxu0
    %3087 = vmatprep.mubr.f32.mxu0 0.0
    %v3088 = vand.u32 %v2644, 4294901760
    %3089 = vmatmul.mubr.f32.gmra.mxu0 %v3088
    %v3090 = vpop.f32.mrf.mxu0
    %v3091 = vadd.f32 %v2806, %v3090
    %v3092 = vpop.f32.mrf.mxu0
    %3093 = vmatprep.mubr.f32.mxu0 0.0
    %v3094 = vand.u32 %v2645, 4294901760
    %3095 = vmatmul.mubr.f32.gmra.mxu0 %v3094
    %v3096 = vpop.f32.mrf.mxu0
    %v3097 = vadd.f32 %v2816, %v3096
    %v3098 = vpop.f32.mrf.mxu0
    %3099 = vmatprep.mubr.f32.mxu0 0.0
    %v3100 = vand.u32 %v2646, 4294901760
    %3101 = vmatmul.mubr.f32.gmra.mxu0 %v3100
    %v3102 = vpop.f32.mrf.mxu0
    %v3103 = vadd.f32 %v2826, %v3102
    %v3104 = vpop.f32.mrf.mxu0
    %3105 = vmatprep.mubr.f32.mxu0 0.0
    %v3106 = vand.u32 %v2647, 4294901760
    %3107 = vmatmul.mubr.f32.gmra.mxu0 %v3106
    %v3108 = vpop.f32.mrf.mxu0
    %v3109 = vadd.f32 %v2836, %v3108
    %v3110 = vpop.f32.mrf.mxu0
    %3111 = vmatprep.mubr.f32.mxu0 0.0
    %v3112 = vand.u32 %v2648, 4294901760
    %3113 = vmatmul.mubr.f32.gmra.mxu0 %v3112
    %v3114 = vpop.f32.mrf.mxu0
    %v3115 = vadd.f32 %v2846, %v3114
    %v3116 = vpop.f32.mrf.mxu0
    %3117 = vmatprep.mubr.f32.mxu0 0.0
    %v3118 = vand.u32 %v2649, 4294901760
    %3119 = vmatmul.mubr.f32.gmra.mxu0 %v3118
    %v3120 = vpop.f32.mrf.mxu0
    %v3121 = vadd.f32 %v2856, %v3120
    %v3122 = vpop.f32.mrf.mxu0
    %3123 = vmatprep.mubr.f32.mxu0 0.0
    %v3124 = vand.u32 %v2650, 4294901760
    %3125 = vmatmul.mubr.f32.gmra.mxu0 %v3124
    %v3126 = vpop.f32.mrf.mxu0
    %v3127 = vadd.f32 %v2866, %v3126
    %v3128 = vpop.f32.mrf.mxu0
    %3129 = vmatprep.mubr.f32.mxu0 0.0
    %v3130 = vand.u32 %v2651, 4294901760
    %3131 = vmatmul.mubr.f32.gmra.mxu0 %v3130
    %v3132 = vpop.f32.mrf.mxu0
    %v3133 = vadd.f32 %v2876, %v3132
    %v3134 = vpop.f32.mrf.mxu0
    %3135 = vmatprep.mubr.f32.mxu0 0.0
    %v3136 = vand.u32 %v2652, 4294901760
    %3137 = vmatmul.mubr.f32.gmra.mxu0 %v3136
    %v3138 = vpop.f32.mrf.mxu0
    %v3139 = vadd.f32 %v2886, %v3138
    %v3140 = vpop.f32.mrf.mxu0
    %3141 = vmatprep.mubr.f32.mxu0 0.0
    %v3142 = vand.u32 %v2653, 4294901760
    %3143 = vmatmul.mubr.f32.gmra.mxu0 %v3142
    %v3144 = vpop.f32.mrf.mxu0
    %v3145 = vadd.f32 %v2896, %v3144
    %v3146 = vpop.f32.mrf.mxu0
    %3147 = vmatprep.mubr.f32.mxu0 0.0
    %v3148 = vand.u32 %v2654, 4294901760
    %3149 = vmatmul.mubr.f32.gmra.mxu0 %v3148
    %v3150 = vpop.f32.mrf.mxu0
    %v3151 = vadd.f32 %v2906, %v3150
    %v3152 = vpop.f32.mrf.mxu0
    %3153 = vmatprep.mubr.f32.mxu0 0.0
    %v3154 = vand.u32 %v2655, 4294901760
    %3155 = vmatmul.mubr.f32.gmra.mxu0 %v3154
    %v3156 = vpop.f32.mrf.mxu0
    %v3157 = vadd.f32 %v2916, %v3156
    %v3158 = vpop.f32.mrf.mxu0
    %3159 = vdwg.mxu0
    %3160 = vmatprep.subr.mxu0 0.0
    %v3161 = vand.u32 %v2672, 4294901760
    %v3162 = vsub.f32 %v2672, %v3161
    %3163 = vmatpush1.msra.mxu0 %v3162
    %3164 = vmatprep.subr.mxu0 0.0
    %v3165 = vand.u32 %v2671, 4294901760
    %v3166 = vsub.f32 %v2671, %v3165
    %3167 = vmatpush1.msra.mxu0 %v3166
    %3168 = vmatprep.subr.mxu0 0.0
    %v3169 = vand.u32 %v2670, 4294901760
    %v3170 = vsub.f32 %v2670, %v3169
    %3171 = vmatpush1.msra.mxu0 %v3170
    %3172 = vmatprep.subr.mxu0 0.0
    %v3173 = vand.u32 %v2669, 4294901760
    %v3174 = vsub.f32 %v2669, %v3173
    %3175 = vmatpush1.msra.mxu0 %v3174
    %3176 = vmatprep.subr.mxu0 0.0
    %v3177 = vand.u32 %v2668, 4294901760
    %v3178 = vsub.f32 %v2668, %v3177
    %3179 = vmatpush1.msra.mxu0 %v3178
    %3180 = vmatprep.subr.mxu0 0.0
    %v3181 = vand.u32 %v2667, 4294901760
    %v3182 = vsub.f32 %v2667, %v3181
    %3183 = vmatpush1.msra.mxu0 %v3182
    %3184 = vmatprep.subr.mxu0 0.0
    %v3185 = vand.u32 %v2666, 4294901760
    %v3186 = vsub.f32 %v2666, %v3185
    %3187 = vmatpush1.msra.mxu0 %v3186
    %3188 = vmatprep.subr.mxu0 0.0
    %v3189 = vand.u32 %v2665, 4294901760
    %v3190 = vsub.f32 %v2665, %v3189
    %3191 = vmatpush1.msra.mxu0 %v3190
    %3192 = vmatprep.subr.mxu0 0.0
    %v3193 = vand.u32 %v2664, 4294901760
    %v3194 = vsub.f32 %v2664, %v3193
    %3195 = vmatpush1.msra.mxu0 %v3194
    %3196 = vmatprep.subr.mxu0 0.0
    %v3197 = vand.u32 %v2663, 4294901760
    %v3198 = vsub.f32 %v2663, %v3197
    %3199 = vmatpush1.msra.mxu0 %v3198
    %3200 = vmatprep.subr.mxu0 0.0
    %v3201 = vand.u32 %v2662, 4294901760
    %v3202 = vsub.f32 %v2662, %v3201
    %3203 = vmatpush1.msra.mxu0 %v3202
    %3204 = vmatprep.subr.mxu0 0.0
    %v3205 = vand.u32 %v2661, 4294901760
    %v3206 = vsub.f32 %v2661, %v3205
    %3207 = vmatpush1.msra.mxu0 %v3206
    %3208 = vmatprep.subr.mxu0 0.0
    %v3209 = vand.u32 %v2660, 4294901760
    %v3210 = vsub.f32 %v2660, %v3209
    %3211 = vmatpush1.msra.mxu0 %v3210
    %3212 = vmatprep.subr.mxu0 0.0
    %v3213 = vand.u32 %v2659, 4294901760
    %v3214 = vsub.f32 %v2659, %v3213
    %3215 = vmatpush1.msra.mxu0 %v3214
    %3216 = vmatprep.subr.mxu0 0.0
    %v3217 = vand.u32 %v2658, 4294901760
    %v3218 = vsub.f32 %v2658, %v3217
    %3219 = vmatpush1.msra.mxu0 %v3218
    %3220 = vmatprep.subr.mxu0 0.0
    %v3221 = vand.u32 %v2657, 4294901760
    %v3222 = vsub.f32 %v2657, %v3221
    %3223 = vmatpush1.msra.mxu0 %v3222
    %3224 = vmatprep.subr.mxu0 0.0
    %3225 = vmatpush2.msra.mxu0 0.0
    %3226 = vmatprep.subr.mxu0 0.0
    %3227 = vmatpush2.msra.mxu0 0.0
    %3228 = vmatprep.subr.mxu0 0.0
    %3229 = vmatpush2.msra.mxu0 0.0
    %3230 = vmatprep.subr.mxu0 0.0
    %3231 = vmatpush2.msra.mxu0 0.0
    %3232 = vmatprep.subr.mxu0 0.0
    %3233 = vmatpush2.msra.mxu0 0.0
    %3234 = vmatprep.subr.mxu0 0.0
    %3235 = vmatpush2.msra.mxu0 0.0
    %3236 = vmatprep.subr.mxu0 0.0
    %3237 = vmatpush2.msra.mxu0 0.0
    %3238 = vmatprep.subr.mxu0 0.0
    %3239 = vmatpush2.msra.mxu0 0.0
    %3240 = vmatprep.subr.mxu0 0.0
    %3241 = vmatpush2.msra.mxu0 0.0
    %3242 = vmatprep.subr.mxu0 0.0
    %3243 = vmatpush2.msra.mxu0 0.0
    %3244 = vmatprep.subr.mxu0 0.0
    %3245 = vmatpush2.msra.mxu0 0.0
    %3246 = vmatprep.subr.mxu0 0.0
    %3247 = vmatpush2.msra.mxu0 0.0
    %3248 = vmatprep.subr.mxu0 0.0
    %3249 = vmatpush2.msra.mxu0 0.0
    %3250 = vmatprep.subr.mxu0 0.0
    %3251 = vmatpush2.msra.mxu0 0.0
    %3252 = vmatprep.subr.mxu0 0.0
    %3253 = vmatpush2.msra.mxu0 0.0
    %3254 = vmatprep.subr.mxu0 0.0
    %3255 = vmatpush2.msra.mxu0 0.0
    %3256 = vmatprep.mubr.f32.mxu0 0.0
    %v3257 = vand.u32 %v2640, 4294901760
    %v3258 = vsub.f32 %v2640, %v3257
    %3259 = vmatmul.mubr.f32.gmra.mxu0 %v3258
    %v3260 = vpop.f32.mrf.mxu0
    %v3261 = vadd.f32 %v3067, %v3260
    %v3262 = vpop.f32.mrf.mxu0
    %3263 = vmatprep.mubr.f32.mxu0 0.0
    %v3264 = vand.u32 %v2641, 4294901760
    %v3265 = vsub.f32 %v2641, %v3264
    %3266 = vmatmul.mubr.f32.gmra.mxu0 %v3265
    %v3267 = vpop.f32.mrf.mxu0
    %v3268 = vadd.f32 %v3073, %v3267
    %v3269 = vpop.f32.mrf.mxu0
    %3270 = vmatprep.mubr.f32.mxu0 0.0
    %v3271 = vand.u32 %v2642, 4294901760
    %v3272 = vsub.f32 %v2642, %v3271
    %3273 = vmatmul.mubr.f32.gmra.mxu0 %v3272
    %v3274 = vpop.f32.mrf.mxu0
    %v3275 = vadd.f32 %v3079, %v3274
    %v3276 = vpop.f32.mrf.mxu0
    %3277 = vmatprep.mubr.f32.mxu0 0.0
    %v3278 = vand.u32 %v2643, 4294901760
    %v3279 = vsub.f32 %v2643, %v3278
    %3280 = vmatmul.mubr.f32.gmra.mxu0 %v3279
    %v3281 = vpop.f32.mrf.mxu0
    %v3282 = vadd.f32 %v3085, %v3281
    %v3283 = vpop.f32.mrf.mxu0
    %3284 = vmatprep.mubr.f32.mxu0 0.0
    %v3285 = vand.u32 %v2644, 4294901760
    %v3286 = vsub.f32 %v2644, %v3285
    %3287 = vmatmul.mubr.f32.gmra.mxu0 %v3286
    %v3288 = vpop.f32.mrf.mxu0
    %v3289 = vadd.f32 %v3091, %v3288
    %v3290 = vpop.f32.mrf.mxu0
    %3291 = vmatprep.mubr.f32.mxu0 0.0
    %v3292 = vand.u32 %v2645, 4294901760
    %v3293 = vsub.f32 %v2645, %v3292
    %3294 = vmatmul.mubr.f32.gmra.mxu0 %v3293
    %v3295 = vpop.f32.mrf.mxu0
    %v3296 = vadd.f32 %v3097, %v3295
    %v3297 = vpop.f32.mrf.mxu0
    %3298 = vmatprep.mubr.f32.mxu0 0.0
    %v3299 = vand.u32 %v2646, 4294901760
    %v3300 = vsub.f32 %v2646, %v3299
    %3301 = vmatmul.mubr.f32.gmra.mxu0 %v3300
    %v3302 = vpop.f32.mrf.mxu0
    %v3303 = vadd.f32 %v3103, %v3302
    %v3304 = vpop.f32.mrf.mxu0
    %3305 = vmatprep.mubr.f32.mxu0 0.0
    %v3306 = vand.u32 %v2647, 4294901760
    %v3307 = vsub.f32 %v2647, %v3306
    %3308 = vmatmul.mubr.f32.gmra.mxu0 %v3307
    %v3309 = vpop.f32.mrf.mxu0
    %v3310 = vadd.f32 %v3109, %v3309
    %v3311 = vpop.f32.mrf.mxu0
    %3312 = vmatprep.mubr.f32.mxu0 0.0
    %v3313 = vand.u32 %v2648, 4294901760
    %v3314 = vsub.f32 %v2648, %v3313
    %3315 = vmatmul.mubr.f32.gmra.mxu0 %v3314
    %v3316 = vpop.f32.mrf.mxu0
    %v3317 = vadd.f32 %v3115, %v3316
    %v3318 = vpop.f32.mrf.mxu0
    %3319 = vmatprep.mubr.f32.mxu0 0.0
    %v3320 = vand.u32 %v2649, 4294901760
    %v3321 = vsub.f32 %v2649, %v3320
    %3322 = vmatmul.mubr.f32.gmra.mxu0 %v3321
    %v3323 = vpop.f32.mrf.mxu0
    %v3324 = vadd.f32 %v3121, %v3323
    %v3325 = vpop.f32.mrf.mxu0
    %3326 = vmatprep.mubr.f32.mxu0 0.0
    %v3327 = vand.u32 %v2650, 4294901760
    %v3328 = vsub.f32 %v2650, %v3327
    %3329 = vmatmul.mubr.f32.gmra.mxu0 %v3328
    %v3330 = vpop.f32.mrf.mxu0
    %v3331 = vadd.f32 %v3127, %v3330
    %v3332 = vpop.f32.mrf.mxu0
    %3333 = vmatprep.mubr.f32.mxu0 0.0
    %v3334 = vand.u32 %v2651, 4294901760
    %v3335 = vsub.f32 %v2651, %v3334
    %3336 = vmatmul.mubr.f32.gmra.mxu0 %v3335
    %v3337 = vpop.f32.mrf.mxu0
    %v3338 = vadd.f32 %v3133, %v3337
    %v3339 = vpop.f32.mrf.mxu0
    %3340 = vmatprep.mubr.f32.mxu0 0.0
    %v3341 = vand.u32 %v2652, 4294901760
    %v3342 = vsub.f32 %v2652, %v3341
    %3343 = vmatmul.mubr.f32.gmra.mxu0 %v3342
    %v3344 = vpop.f32.mrf.mxu0
    %v3345 = vadd.f32 %v3139, %v3344
    %v3346 = vpop.f32.mrf.mxu0
    %3347 = vmatprep.mubr.f32.mxu0 0.0
    %v3348 = vand.u32 %v2653, 4294901760
    %v3349 = vsub.f32 %v2653, %v3348
    %3350 = vmatmul.mubr.f32.gmra.mxu0 %v3349
    %v3351 = vpop.f32.mrf.mxu0
    %v3352 = vadd.f32 %v3145, %v3351
    %v3353 = vpop.f32.mrf.mxu0
    %3354 = vmatprep.mubr.f32.mxu0 0.0
    %v3355 = vand.u32 %v2654, 4294901760
    %v3356 = vsub.f32 %v2654, %v3355
    %3357 = vmatmul.mubr.f32.gmra.mxu0 %v3356
    %v3358 = vpop.f32.mrf.mxu0
    %v3359 = vadd.f32 %v3151, %v3358
    %v3360 = vpop.f32.mrf.mxu0
    %3361 = vmatprep.mubr.f32.mxu0 0.0
    %v3362 = vand.u32 %v2655, 4294901760
    %v3363 = vsub.f32 %v2655, %v3362
    %3364 = vmatmul.mubr.f32.gmra.mxu0 %v3363
    %v3365 = vpop.f32.mrf.mxu0
    %v3366 = vadd.f32 %v3157, %v3365
    %v3367 = vpop.f32.mrf.mxu0
    %3368 = vdwg.mxu0
    %3369 = vmatprep.subr.mxu0 0.0
    %v3370 = vand.u32 %v2672, 4294901760
    %3371 = vmatpush1.msra.mxu0 %v3370
    %3372 = vmatprep.subr.mxu0 0.0
    %v3373 = vand.u32 %v2671, 4294901760
    %3374 = vmatpush1.msra.mxu0 %v3373
    %3375 = vmatprep.subr.mxu0 0.0
    %v3376 = vand.u32 %v2670, 4294901760
    %3377 = vmatpush1.msra.mxu0 %v3376
    %3378 = vmatprep.subr.mxu0 0.0
    %v3379 = vand.u32 %v2669, 4294901760
    %3380 = vmatpush1.msra.mxu0 %v3379
    %3381 = vmatprep.subr.mxu0 0.0
    %v3382 = vand.u32 %v2668, 4294901760
    %3383 = vmatpush1.msra.mxu0 %v3382
    %3384 = vmatprep.subr.mxu0 0.0
    %v3385 = vand.u32 %v2667, 4294901760
    %3386 = vmatpush1.msra.mxu0 %v3385
    %3387 = vmatprep.subr.mxu0 0.0
    %v3388 = vand.u32 %v2666, 4294901760
    %3389 = vmatpush1.msra.mxu0 %v3388
    %3390 = vmatprep.subr.mxu0 0.0
    %v3391 = vand.u32 %v2665, 4294901760
    %3392 = vmatpush1.msra.mxu0 %v3391
    %3393 = vmatprep.subr.mxu0 0.0
    %v3394 = vand.u32 %v2664, 4294901760
    %3395 = vmatpush1.msra.mxu0 %v3394
    %3396 = vmatprep.subr.mxu0 0.0
    %v3397 = vand.u32 %v2663, 4294901760
    %3398 = vmatpush1.msra.mxu0 %v3397
    %3399 = vmatprep.subr.mxu0 0.0
    %v3400 = vand.u32 %v2662, 4294901760
    %3401 = vmatpush1.msra.mxu0 %v3400
    %3402 = vmatprep.subr.mxu0 0.0
    %v3403 = vand.u32 %v2661, 4294901760
    %3404 = vmatpush1.msra.mxu0 %v3403
    %3405 = vmatprep.subr.mxu0 0.0
    %v3406 = vand.u32 %v2660, 4294901760
    %3407 = vmatpush1.msra.mxu0 %v3406
    %3408 = vmatprep.subr.mxu0 0.0
    %v3409 = vand.u32 %v2659, 4294901760
    %3410 = vmatpush1.msra.mxu0 %v3409
    %3411 = vmatprep.subr.mxu0 0.0
    %v3412 = vand.u32 %v2658, 4294901760
    %3413 = vmatpush1.msra.mxu0 %v3412
    %3414 = vmatprep.subr.mxu0 0.0
    %v3415 = vand.u32 %v2657, 4294901760
    %3416 = vmatpush1.msra.mxu0 %v3415
    %3417 = vmatprep.subr.mxu0 0.0
    %3418 = vmatpush2.msra.mxu0 0.0
    %3419 = vmatprep.subr.mxu0 0.0
    %3420 = vmatpush2.msra.mxu0 0.0
    %3421 = vmatprep.subr.mxu0 0.0
    %3422 = vmatpush2.msra.mxu0 0.0
    %3423 = vmatprep.subr.mxu0 0.0
    %3424 = vmatpush2.msra.mxu0 0.0
    %3425 = vmatprep.subr.mxu0 0.0
    %3426 = vmatpush2.msra.mxu0 0.0
    %3427 = vmatprep.subr.mxu0 0.0
    %3428 = vmatpush2.msra.mxu0 0.0
    %3429 = vmatprep.subr.mxu0 0.0
    %3430 = vmatpush2.msra.mxu0 0.0
    %3431 = vmatprep.subr.mxu0 0.0
    %3432 = vmatpush2.msra.mxu0 0.0
    %3433 = vmatprep.subr.mxu0 0.0
    %3434 = vmatpush2.msra.mxu0 0.0
    %3435 = vmatprep.subr.mxu0 0.0
    %3436 = vmatpush2.msra.mxu0 0.0
    %3437 = vmatprep.subr.mxu0 0.0
    %3438 = vmatpush2.msra.mxu0 0.0
    %3439 = vmatprep.subr.mxu0 0.0
    %3440 = vmatpush2.msra.mxu0 0.0
    %3441 = vmatprep.subr.mxu0 0.0
    %3442 = vmatpush2.msra.mxu0 0.0
    %3443 = vmatprep.subr.mxu0 0.0
    %3444 = vmatpush2.msra.mxu0 0.0
    %3445 = vmatprep.subr.mxu0 0.0
    %3446 = vmatpush2.msra.mxu0 0.0
    %3447 = vmatprep.subr.mxu0 0.0
    %3448 = vmatpush2.msra.mxu0 0.0
    %3449 = vmatprep.mubr.f32.mxu0 0.0
    %v3450 = vand.u32 %v2640, 4294901760
    %v3451 = vsub.f32 %v2640, %v3450
    %v3452 = vand.u32 %v3451, 4294901760
    %3453 = vmatmul.mubr.f32.gmra.mxu0 %v3452
    %v3454 = vpop.f32.mrf.mxu0
    %v3455 = vadd.f32 %v3261, %v3454
    %v3456 = vpop.f32.mrf.mxu0
    %3457 = vmatprep.mubr.f32.mxu0 0.0
    %v3458 = vand.u32 %v2641, 4294901760
    %v3459 = vsub.f32 %v2641, %v3458
    %v3460 = vand.u32 %v3459, 4294901760
    %3461 = vmatmul.mubr.f32.gmra.mxu0 %v3460
    %v3462 = vpop.f32.mrf.mxu0
    %v3463 = vadd.f32 %v3268, %v3462
    %v3464 = vpop.f32.mrf.mxu0
    %3465 = vmatprep.mubr.f32.mxu0 0.0
    %v3466 = vand.u32 %v2642, 4294901760
    %v3467 = vsub.f32 %v2642, %v3466
    %v3468 = vand.u32 %v3467, 4294901760
    %3469 = vmatmul.mubr.f32.gmra.mxu0 %v3468
    %v3470 = vpop.f32.mrf.mxu0
    %v3471 = vadd.f32 %v3275, %v3470
    %v3472 = vpop.f32.mrf.mxu0
    %3473 = vmatprep.mubr.f32.mxu0 0.0
    %v3474 = vand.u32 %v2643, 4294901760
    %v3475 = vsub.f32 %v2643, %v3474
    %v3476 = vand.u32 %v3475, 4294901760
    %3477 = vmatmul.mubr.f32.gmra.mxu0 %v3476
    %v3478 = vpop.f32.mrf.mxu0
    %v3479 = vadd.f32 %v3282, %v3478
    %v3480 = vpop.f32.mrf.mxu0
    %3481 = vmatprep.mubr.f32.mxu0 0.0
    %v3482 = vand.u32 %v2644, 4294901760
    %v3483 = vsub.f32 %v2644, %v3482
    %v3484 = vand.u32 %v3483, 4294901760
    %3485 = vmatmul.mubr.f32.gmra.mxu0 %v3484
    %v3486 = vpop.f32.mrf.mxu0
    %v3487 = vadd.f32 %v3289, %v3486
    %v3488 = vpop.f32.mrf.mxu0
    %3489 = vmatprep.mubr.f32.mxu0 0.0
    %v3490 = vand.u32 %v2645, 4294901760
    %v3491 = vsub.f32 %v2645, %v3490
    %v3492 = vand.u32 %v3491, 4294901760
    %3493 = vmatmul.mubr.f32.gmra.mxu0 %v3492
    %v3494 = vpop.f32.mrf.mxu0
    %v3495 = vadd.f32 %v3296, %v3494
    %v3496 = vpop.f32.mrf.mxu0
    %3497 = vmatprep.mubr.f32.mxu0 0.0
    %v3498 = vand.u32 %v2646, 4294901760
    %v3499 = vsub.f32 %v2646, %v3498
    %v3500 = vand.u32 %v3499, 4294901760
    %3501 = vmatmul.mubr.f32.gmra.mxu0 %v3500
    %v3502 = vpop.f32.mrf.mxu0
    %v3503 = vadd.f32 %v3303, %v3502
    %v3504 = vpop.f32.mrf.mxu0
    %3505 = vmatprep.mubr.f32.mxu0 0.0
    %v3506 = vand.u32 %v2647, 4294901760
    %v3507 = vsub.f32 %v2647, %v3506
    %v3508 = vand.u32 %v3507, 4294901760
    %3509 = vmatmul.mubr.f32.gmra.mxu0 %v3508
    %v3510 = vpop.f32.mrf.mxu0
    %v3511 = vadd.f32 %v3310, %v3510
    %v3512 = vpop.f32.mrf.mxu0
    %3513 = vmatprep.mubr.f32.mxu0 0.0
    %v3514 = vand.u32 %v2648, 4294901760
    %v3515 = vsub.f32 %v2648, %v3514
    %v3516 = vand.u32 %v3515, 4294901760
    %3517 = vmatmul.mubr.f32.gmra.mxu0 %v3516
    %v3518 = vpop.f32.mrf.mxu0
    %v3519 = vadd.f32 %v3317, %v3518
    %v3520 = vpop.f32.mrf.mxu0
    %3521 = vmatprep.mubr.f32.mxu0 0.0
    %v3522 = vand.u32 %v2649, 4294901760
    %v3523 = vsub.f32 %v2649, %v3522
    %v3524 = vand.u32 %v3523, 4294901760
    %3525 = vmatmul.mubr.f32.gmra.mxu0 %v3524
    %v3526 = vpop.f32.mrf.mxu0
    %v3527 = vadd.f32 %v3324, %v3526
    %v3528 = vpop.f32.mrf.mxu0
    %3529 = vmatprep.mubr.f32.mxu0 0.0
    %v3530 = vand.u32 %v2650, 4294901760
    %v3531 = vsub.f32 %v2650, %v3530
    %v3532 = vand.u32 %v3531, 4294901760
    %3533 = vmatmul.mubr.f32.gmra.mxu0 %v3532
    %v3534 = vpop.f32.mrf.mxu0
    %v3535 = vadd.f32 %v3331, %v3534
    %v3536 = vpop.f32.mrf.mxu0
    %3537 = vmatprep.mubr.f32.mxu0 0.0
    %v3538 = vand.u32 %v2651, 4294901760
    %v3539 = vsub.f32 %v2651, %v3538
    %v3540 = vand.u32 %v3539, 4294901760
    %3541 = vmatmul.mubr.f32.gmra.mxu0 %v3540
    %v3542 = vpop.f32.mrf.mxu0
    %v3543 = vadd.f32 %v3338, %v3542
    %v3544 = vpop.f32.mrf.mxu0
    %3545 = vmatprep.mubr.f32.mxu0 0.0
    %v3546 = vand.u32 %v2652, 4294901760
    %v3547 = vsub.f32 %v2652, %v3546
    %v3548 = vand.u32 %v3547, 4294901760
    %3549 = vmatmul.mubr.f32.gmra.mxu0 %v3548
    %v3550 = vpop.f32.mrf.mxu0
    %v3551 = vadd.f32 %v3345, %v3550
    %v3552 = vpop.f32.mrf.mxu0
    %3553 = vmatprep.mubr.f32.mxu0 0.0
    %v3554 = vand.u32 %v2653, 4294901760
    %v3555 = vsub.f32 %v2653, %v3554
    %v3556 = vand.u32 %v3555, 4294901760
    %3557 = vmatmul.mubr.f32.gmra.mxu0 %v3556
    %v3558 = vpop.f32.mrf.mxu0
    %v3559 = vadd.f32 %v3352, %v3558
    %v3560 = vpop.f32.mrf.mxu0
    %3561 = vmatprep.mubr.f32.mxu0 0.0
    %v3562 = vand.u32 %v2654, 4294901760
    %v3563 = vsub.f32 %v2654, %v3562
    %v3564 = vand.u32 %v3563, 4294901760
    %3565 = vmatmul.mubr.f32.gmra.mxu0 %v3564
    %v3566 = vpop.f32.mrf.mxu0
    %v3567 = vadd.f32 %v3359, %v3566
    %v3568 = vpop.f32.mrf.mxu0
    %3569 = vmatprep.mubr.f32.mxu0 0.0
    %v3570 = vand.u32 %v2655, 4294901760
    %v3571 = vsub.f32 %v2655, %v3570
    %v3572 = vand.u32 %v3571, 4294901760
    %3573 = vmatmul.mubr.f32.gmra.mxu0 %v3572
    %v3574 = vpop.f32.mrf.mxu0
    %v3575 = vadd.f32 %v3366, %v3574
    %v3576 = vpop.f32.mrf.mxu0
    %3577 = vdwg.mxu0
    %3578 = vmatprep.subr.mxu0 0.0
    %v3579 = vand.u32 %v2672, 4294901760
    %v3580 = vsub.f32 %v2672, %v3579
    %v3581 = vand.u32 %v3580, 4294901760
    %3582 = vmatpush1.msra.mxu0 %v3581
    %3583 = vmatprep.subr.mxu0 0.0
    %v3584 = vand.u32 %v2671, 4294901760
    %v3585 = vsub.f32 %v2671, %v3584
    %v3586 = vand.u32 %v3585, 4294901760
    %3587 = vmatpush1.msra.mxu0 %v3586
    %3588 = vmatprep.subr.mxu0 0.0
    %v3589 = vand.u32 %v2670, 4294901760
    %v3590 = vsub.f32 %v2670, %v3589
    %v3591 = vand.u32 %v3590, 4294901760
    %3592 = vmatpush1.msra.mxu0 %v3591
    %3593 = vmatprep.subr.mxu0 0.0
    %v3594 = vand.u32 %v2669, 4294901760
    %v3595 = vsub.f32 %v2669, %v3594
    %v3596 = vand.u32 %v3595, 4294901760
    %3597 = vmatpush1.msra.mxu0 %v3596
    %3598 = vmatprep.subr.mxu0 0.0
    %v3599 = vand.u32 %v2668, 4294901760
    %v3600 = vsub.f32 %v2668, %v3599
    %v3601 = vand.u32 %v3600, 4294901760
    %3602 = vmatpush1.msra.mxu0 %v3601
    %3603 = vmatprep.subr.mxu0 0.0
    %v3604 = vand.u32 %v2667, 4294901760
    %v3605 = vsub.f32 %v2667, %v3604
    %v3606 = vand.u32 %v3605, 4294901760
    %3607 = vmatpush1.msra.mxu0 %v3606
    %3608 = vmatprep.subr.mxu0 0.0
    %v3609 = vand.u32 %v2666, 4294901760
    %v3610 = vsub.f32 %v2666, %v3609
    %v3611 = vand.u32 %v3610, 4294901760
    %3612 = vmatpush1.msra.mxu0 %v3611
    %3613 = vmatprep.subr.mxu0 0.0
    %v3614 = vand.u32 %v2665, 4294901760
    %v3615 = vsub.f32 %v2665, %v3614
    %v3616 = vand.u32 %v3615, 4294901760
    %3617 = vmatpush1.msra.mxu0 %v3616
    %3618 = vmatprep.subr.mxu0 0.0
    %v3619 = vand.u32 %v2664, 4294901760
    %v3620 = vsub.f32 %v2664, %v3619
    %v3621 = vand.u32 %v3620, 4294901760
    %3622 = vmatpush1.msra.mxu0 %v3621
    %3623 = vmatprep.subr.mxu0 0.0
    %v3624 = vand.u32 %v2663, 4294901760
    %v3625 = vsub.f32 %v2663, %v3624
    %v3626 = vand.u32 %v3625, 4294901760
    %3627 = vmatpush1.msra.mxu0 %v3626
    %3628 = vmatprep.subr.mxu0 0.0
    %v3629 = vand.u32 %v2662, 4294901760
    %v3630 = vsub.f32 %v2662, %v3629
    %v3631 = vand.u32 %v3630, 4294901760
    %3632 = vmatpush1.msra.mxu0 %v3631
    %3633 = vmatprep.subr.mxu0 0.0
    %v3634 = vand.u32 %v2661, 4294901760
    %v3635 = vsub.f32 %v2661, %v3634
    %v3636 = vand.u32 %v3635, 4294901760
    %3637 = vmatpush1.msra.mxu0 %v3636
    %3638 = vmatprep.subr.mxu0 0.0
    %v3639 = vand.u32 %v2660, 4294901760
    %v3640 = vsub.f32 %v2660, %v3639
    %v3641 = vand.u32 %v3640, 4294901760
    %3642 = vmatpush1.msra.mxu0 %v3641
    %3643 = vmatprep.subr.mxu0 0.0
    %v3644 = vand.u32 %v2659, 4294901760
    %v3645 = vsub.f32 %v2659, %v3644
    %v3646 = vand.u32 %v3645, 4294901760
    %3647 = vmatpush1.msra.mxu0 %v3646
    %3648 = vmatprep.subr.mxu0 0.0
    %v3649 = vand.u32 %v2658, 4294901760
    %v3650 = vsub.f32 %v2658, %v3649
    %v3651 = vand.u32 %v3650, 4294901760
    %3652 = vmatpush1.msra.mxu0 %v3651
    %3653 = vmatprep.subr.mxu0 0.0
    %v3654 = vand.u32 %v2657, 4294901760
    %v3655 = vsub.f32 %v2657, %v3654
    %v3656 = vand.u32 %v3655, 4294901760
    %3657 = vmatpush1.msra.mxu0 %v3656
    %3658 = vmatprep.subr.mxu0 0.0
    %3659 = vmatpush2.msra.mxu0 0.0
    %3660 = vmatprep.subr.mxu0 0.0
    %3661 = vmatpush2.msra.mxu0 0.0
    %3662 = vmatprep.subr.mxu0 0.0
    %3663 = vmatpush2.msra.mxu0 0.0
    %3664 = vmatprep.subr.mxu0 0.0
    %3665 = vmatpush2.msra.mxu0 0.0
    %3666 = vmatprep.subr.mxu0 0.0
    %3667 = vmatpush2.msra.mxu0 0.0
    %3668 = vmatprep.subr.mxu0 0.0
    %3669 = vmatpush2.msra.mxu0 0.0
    %3670 = vmatprep.subr.mxu0 0.0
    %3671 = vmatpush2.msra.mxu0 0.0
    %3672 = vmatprep.subr.mxu0 0.0
    %3673 = vmatpush2.msra.mxu0 0.0
    %3674 = vmatprep.subr.mxu0 0.0
    %3675 = vmatpush2.msra.mxu0 0.0
    %3676 = vmatprep.subr.mxu0 0.0
    %3677 = vmatpush2.msra.mxu0 0.0
    %3678 = vmatprep.subr.mxu0 0.0
    %3679 = vmatpush2.msra.mxu0 0.0
    %3680 = vmatprep.subr.mxu0 0.0
    %3681 = vmatpush2.msra.mxu0 0.0
    %3682 = vmatprep.subr.mxu0 0.0
    %3683 = vmatpush2.msra.mxu0 0.0
    %3684 = vmatprep.subr.mxu0 0.0
    %3685 = vmatpush2.msra.mxu0 0.0
    %3686 = vmatprep.subr.mxu0 0.0
    %3687 = vmatpush2.msra.mxu0 0.0
    %3688 = vmatprep.subr.mxu0 0.0
    %3689 = vmatpush2.msra.mxu0 0.0
    %3690 = vmatprep.mubr.f32.mxu0 0.0
    %v3691 = vand.u32 %v2640, 4294901760
    %3692 = vmatmul.mubr.f32.gmra.mxu0 %v3691
    %v3693 = vpop.f32.mrf.mxu0
    %v3694 = vadd.f32 %v3455, %v3693
    %v3695 = vpop.f32.mrf.mxu0
    %3696 = vmatprep.mubr.f32.mxu0 0.0
    %v3697 = vand.u32 %v2641, 4294901760
    %3698 = vmatmul.mubr.f32.gmra.mxu0 %v3697
    %v3699 = vpop.f32.mrf.mxu0
    %v3700 = vadd.f32 %v3463, %v3699
    %v3701 = vpop.f32.mrf.mxu0
    %3702 = vmatprep.mubr.f32.mxu0 0.0
    %v3703 = vand.u32 %v2642, 4294901760
    %3704 = vmatmul.mubr.f32.gmra.mxu0 %v3703
    %v3705 = vpop.f32.mrf.mxu0
    %v3706 = vadd.f32 %v3471, %v3705
    %v3707 = vpop.f32.mrf.mxu0
    %3708 = vmatprep.mubr.f32.mxu0 0.0
    %v3709 = vand.u32 %v2643, 4294901760
    %3710 = vmatmul.mubr.f32.gmra.mxu0 %v3709
    %v3711 = vpop.f32.mrf.mxu0
    %v3712 = vadd.f32 %v3479, %v3711
    %v3713 = vpop.f32.mrf.mxu0
    %3714 = vmatprep.mubr.f32.mxu0 0.0
    %v3715 = vand.u32 %v2644, 4294901760
    %3716 = vmatmul.mubr.f32.gmra.mxu0 %v3715
    %v3717 = vpop.f32.mrf.mxu0
    %v3718 = vadd.f32 %v3487, %v3717
    %v3719 = vpop.f32.mrf.mxu0
    %3720 = vmatprep.mubr.f32.mxu0 0.0
    %v3721 = vand.u32 %v2645, 4294901760
    %3722 = vmatmul.mubr.f32.gmra.mxu0 %v3721
    %v3723 = vpop.f32.mrf.mxu0
    %v3724 = vadd.f32 %v3495, %v3723
    %v3725 = vpop.f32.mrf.mxu0
    %3726 = vmatprep.mubr.f32.mxu0 0.0
    %v3727 = vand.u32 %v2646, 4294901760
    %3728 = vmatmul.mubr.f32.gmra.mxu0 %v3727
    %v3729 = vpop.f32.mrf.mxu0
    %v3730 = vadd.f32 %v3503, %v3729
    %v3731 = vpop.f32.mrf.mxu0
    %3732 = vmatprep.mubr.f32.mxu0 0.0
    %v3733 = vand.u32 %v2647, 4294901760
    %3734 = vmatmul.mubr.f32.gmra.mxu0 %v3733
    %v3735 = vpop.f32.mrf.mxu0
    %v3736 = vadd.f32 %v3511, %v3735
    %v3737 = vpop.f32.mrf.mxu0
    %3738 = vmatprep.mubr.f32.mxu0 0.0
    %v3739 = vand.u32 %v2648, 4294901760
    %3740 = vmatmul.mubr.f32.gmra.mxu0 %v3739
    %v3741 = vpop.f32.mrf.mxu0
    %v3742 = vadd.f32 %v3519, %v3741
    %v3743 = vpop.f32.mrf.mxu0
    %3744 = vmatprep.mubr.f32.mxu0 0.0
    %v3745 = vand.u32 %v2649, 4294901760
    %3746 = vmatmul.mubr.f32.gmra.mxu0 %v3745
    %v3747 = vpop.f32.mrf.mxu0
    %v3748 = vadd.f32 %v3527, %v3747
    %v3749 = vpop.f32.mrf.mxu0
    %3750 = vmatprep.mubr.f32.mxu0 0.0
    %v3751 = vand.u32 %v2650, 4294901760
    %3752 = vmatmul.mubr.f32.gmra.mxu0 %v3751
    %v3753 = vpop.f32.mrf.mxu0
    %v3754 = vadd.f32 %v3535, %v3753
    %v3755 = vpop.f32.mrf.mxu0
    %3756 = vmatprep.mubr.f32.mxu0 0.0
    %v3757 = vand.u32 %v2651, 4294901760
    %3758 = vmatmul.mubr.f32.gmra.mxu0 %v3757
    %v3759 = vpop.f32.mrf.mxu0
    %v3760 = vadd.f32 %v3543, %v3759
    %v3761 = vpop.f32.mrf.mxu0
    %3762 = vmatprep.mubr.f32.mxu0 0.0
    %v3763 = vand.u32 %v2652, 4294901760
    %3764 = vmatmul.mubr.f32.gmra.mxu0 %v3763
    %v3765 = vpop.f32.mrf.mxu0
    %v3766 = vadd.f32 %v3551, %v3765
    %v3767 = vpop.f32.mrf.mxu0
    %3768 = vmatprep.mubr.f32.mxu0 0.0
    %v3769 = vand.u32 %v2653, 4294901760
    %3770 = vmatmul.mubr.f32.gmra.mxu0 %v3769
    %v3771 = vpop.f32.mrf.mxu0
    %v3772 = vadd.f32 %v3559, %v3771
    %v3773 = vpop.f32.mrf.mxu0
    %3774 = vmatprep.mubr.f32.mxu0 0.0
    %v3775 = vand.u32 %v2654, 4294901760
    %3776 = vmatmul.mubr.f32.gmra.mxu0 %v3775
    %v3777 = vpop.f32.mrf.mxu0
    %v3778 = vadd.f32 %v3567, %v3777
    %v3779 = vpop.f32.mrf.mxu0
    %3780 = vmatprep.mubr.f32.mxu0 0.0
    %v3781 = vand.u32 %v2655, 4294901760
    %3782 = vmatmul.mubr.f32.gmra.mxu0 %v3781
    %v3783 = vpop.f32.mrf.mxu0
    %v3784 = vadd.f32 %v3575, %v3783
    %v3785 = vpop.f32.mrf.mxu0
    %3786 = vdwg.mxu0
    %3787 = vmatprep.subr.mxu0 0.0
    %v3788 = vand.u32 %v2672, 4294901760
    %3789 = vmatpush1.msra.mxu0 %v3788
    %3790 = vmatprep.subr.mxu0 0.0
    %v3791 = vand.u32 %v2671, 4294901760
    %3792 = vmatpush1.msra.mxu0 %v3791
    %3793 = vmatprep.subr.mxu0 0.0
    %v3794 = vand.u32 %v2670, 4294901760
    %3795 = vmatpush1.msra.mxu0 %v3794
    %3796 = vmatprep.subr.mxu0 0.0
    %v3797 = vand.u32 %v2669, 4294901760
    %3798 = vmatpush1.msra.mxu0 %v3797
    %3799 = vmatprep.subr.mxu0 0.0
    %v3800 = vand.u32 %v2668, 4294901760
    %3801 = vmatpush1.msra.mxu0 %v3800
    %3802 = vmatprep.subr.mxu0 0.0
    %v3803 = vand.u32 %v2667, 4294901760
    %3804 = vmatpush1.msra.mxu0 %v3803
    %3805 = vmatprep.subr.mxu0 0.0
    %v3806 = vand.u32 %v2666, 4294901760
    %3807 = vmatpush1.msra.mxu0 %v3806
    %3808 = vmatprep.subr.mxu0 0.0
    %v3809 = vand.u32 %v2665, 4294901760
    %3810 = vmatpush1.msra.mxu0 %v3809
    %3811 = vmatprep.subr.mxu0 0.0
    %v3812 = vand.u32 %v2664, 4294901760
    %3813 = vmatpush1.msra.mxu0 %v3812
    %3814 = vmatprep.subr.mxu0 0.0
    %v3815 = vand.u32 %v2663, 4294901760
    %3816 = vmatpush1.msra.mxu0 %v3815
    %3817 = vmatprep.subr.mxu0 0.0
    %v3818 = vand.u32 %v2662, 4294901760
    %3819 = vmatpush1.msra.mxu0 %v3818
    %3820 = vmatprep.subr.mxu0 0.0
    %v3821 = vand.u32 %v2661, 4294901760
    %3822 = vmatpush1.msra.mxu0 %v3821
    %3823 = vmatprep.subr.mxu0 0.0
    %v3824 = vand.u32 %v2660, 4294901760
    %3825 = vmatpush1.msra.mxu0 %v3824
    %3826 = vmatprep.subr.mxu0 0.0
    %v3827 = vand.u32 %v2659, 4294901760
    %3828 = vmatpush1.msra.mxu0 %v3827
    %3829 = vmatprep.subr.mxu0 0.0
    %v3830 = vand.u32 %v2658, 4294901760
    %3831 = vmatpush1.msra.mxu0 %v3830
    %3832 = vmatprep.subr.mxu0 0.0
    %v3833 = vand.u32 %v2657, 4294901760
    %3834 = vmatpush1.msra.mxu0 %v3833
    %3835 = vmatprep.subr.mxu0 0.0
    %3836 = vmatpush2.msra.mxu0 0.0
    %3837 = vmatprep.subr.mxu0 0.0
    %3838 = vmatpush2.msra.mxu0 0.0
    %3839 = vmatprep.subr.mxu0 0.0
    %3840 = vmatpush2.msra.mxu0 0.0
    %3841 = vmatprep.subr.mxu0 0.0
    %3842 = vmatpush2.msra.mxu0 0.0
    %3843 = vmatprep.subr.mxu0 0.0
    %3844 = vmatpush2.msra.mxu0 0.0
    %3845 = vmatprep.subr.mxu0 0.0
    %3846 = vmatpush2.msra.mxu0 0.0
    %3847 = vmatprep.subr.mxu0 0.0
    %3848 = vmatpush2.msra.mxu0 0.0
    %3849 = vmatprep.subr.mxu0 0.0
    %3850 = vmatpush2.msra.mxu0 0.0
    %3851 = vmatprep.subr.mxu0 0.0
    %3852 = vmatpush2.msra.mxu0 0.0
    %3853 = vmatprep.subr.mxu0 0.0
    %3854 = vmatpush2.msra.mxu0 0.0
    %3855 = vmatprep.subr.mxu0 0.0
    %3856 = vmatpush2.msra.mxu0 0.0
    %3857 = vmatprep.subr.mxu0 0.0
    %3858 = vmatpush2.msra.mxu0 0.0
    %3859 = vmatprep.subr.mxu0 0.0
    %3860 = vmatpush2.msra.mxu0 0.0
    %3861 = vmatprep.subr.mxu0 0.0
    %3862 = vmatpush2.msra.mxu0 0.0
    %3863 = vmatprep.subr.mxu0 0.0
    %3864 = vmatpush2.msra.mxu0 0.0
    %3865 = vmatprep.subr.mxu0 0.0
    %3866 = vmatpush2.msra.mxu0 0.0
    %3867 = vmatprep.mubr.f32.mxu0 0.0
    %v3868 = vand.u32 %v2640, 4294901760
    %3869 = vmatmul.mubr.f32.gmra.mxu0 %v3868
    %v3870 = vpop.f32.mrf.mxu0
    %v3871 = vadd.f32 %v3694, %v3870
    %v3872 = vpop.f32.mrf.mxu0
    %3873 = vmatprep.mubr.f32.mxu0 0.0
    %v3874 = vand.u32 %v2641, 4294901760
    %3875 = vmatmul.mubr.f32.gmra.mxu0 %v3874
    %v3876 = vpop.f32.mrf.mxu0
    %v3877 = vadd.f32 %v3700, %v3876
    %v3878 = vpop.f32.mrf.mxu0
    %3879 = vmatprep.mubr.f32.mxu0 0.0
    %v3880 = vand.u32 %v2642, 4294901760
    %3881 = vmatmul.mubr.f32.gmra.mxu0 %v3880
    %v3882 = vpop.f32.mrf.mxu0
    %v3883 = vadd.f32 %v3706, %v3882
    %v3884 = vpop.f32.mrf.mxu0
    %3885 = vmatprep.mubr.f32.mxu0 0.0
    %v3886 = vand.u32 %v2643, 4294901760
    %3887 = vmatmul.mubr.f32.gmra.mxu0 %v3886
    %v3888 = vpop.f32.mrf.mxu0
    %v3889 = vadd.f32 %v3712, %v3888
    %v3890 = vpop.f32.mrf.mxu0
    %3891 = vmatprep.mubr.f32.mxu0 0.0
    %v3892 = vand.u32 %v2644, 4294901760
    %3893 = vmatmul.mubr.f32.gmra.mxu0 %v3892
    %v3894 = vpop.f32.mrf.mxu0
    %v3895 = vadd.f32 %v3718, %v3894
    %v3896 = vpop.f32.mrf.mxu0
    %3897 = vmatprep.mubr.f32.mxu0 0.0
    %v3898 = vand.u32 %v2645, 4294901760
    %3899 = vmatmul.mubr.f32.gmra.mxu0 %v3898
    %v3900 = vpop.f32.mrf.mxu0
    %v3901 = vadd.f32 %v3724, %v3900
    %v3902 = vpop.f32.mrf.mxu0
    %3903 = vmatprep.mubr.f32.mxu0 0.0
    %v3904 = vand.u32 %v2646, 4294901760
    %3905 = vmatmul.mubr.f32.gmra.mxu0 %v3904
    %v3906 = vpop.f32.mrf.mxu0
    %v3907 = vadd.f32 %v3730, %v3906
    %v3908 = vpop.f32.mrf.mxu0
    %3909 = vmatprep.mubr.f32.mxu0 0.0
    %v3910 = vand.u32 %v2647, 4294901760
    %3911 = vmatmul.mubr.f32.gmra.mxu0 %v3910
    %v3912 = vpop.f32.mrf.mxu0
    %v3913 = vadd.f32 %v3736, %v3912
    %v3914 = vpop.f32.mrf.mxu0
    %3915 = vmatprep.mubr.f32.mxu0 0.0
    %v3916 = vand.u32 %v2648, 4294901760
    %3917 = vmatmul.mubr.f32.gmra.mxu0 %v3916
    %v3918 = vpop.f32.mrf.mxu0
    %v3919 = vadd.f32 %v3742, %v3918
    %v3920 = vpop.f32.mrf.mxu0
    %3921 = vmatprep.mubr.f32.mxu0 0.0
    %v3922 = vand.u32 %v2649, 4294901760
    %3923 = vmatmul.mubr.f32.gmra.mxu0 %v3922
    %v3924 = vpop.f32.mrf.mxu0
    %v3925 = vadd.f32 %v3748, %v3924
    %v3926 = vpop.f32.mrf.mxu0
    %3927 = vmatprep.mubr.f32.mxu0 0.0
    %v3928 = vand.u32 %v2650, 4294901760
    %3929 = vmatmul.mubr.f32.gmra.mxu0 %v3928
    %v3930 = vpop.f32.mrf.mxu0
    %v3931 = vadd.f32 %v3754, %v3930
    %v3932 = vpop.f32.mrf.mxu0
    %3933 = vmatprep.mubr.f32.mxu0 0.0
    %v3934 = vand.u32 %v2651, 4294901760
    %3935 = vmatmul.mubr.f32.gmra.mxu0 %v3934
    %v3936 = vpop.f32.mrf.mxu0
    %v3937 = vadd.f32 %v3760, %v3936
    %v3938 = vpop.f32.mrf.mxu0
    %3939 = vmatprep.mubr.f32.mxu0 0.0
    %v3940 = vand.u32 %v2652, 4294901760
    %3941 = vmatmul.mubr.f32.gmra.mxu0 %v3940
    %v3942 = vpop.f32.mrf.mxu0
    %v3943 = vadd.f32 %v3766, %v3942
    %v3944 = vpop.f32.mrf.mxu0
    %3945 = vmatprep.mubr.f32.mxu0 0.0
    %v3946 = vand.u32 %v2653, 4294901760
    %3947 = vmatmul.mubr.f32.gmra.mxu0 %v3946
    %v3948 = vpop.f32.mrf.mxu0
    %v3949 = vadd.f32 %v3772, %v3948
    %v3950 = vpop.f32.mrf.mxu0
    %3951 = vmatprep.mubr.f32.mxu0 0.0
    %v3952 = vand.u32 %v2654, 4294901760
    %3953 = vmatmul.mubr.f32.gmra.mxu0 %v3952
    %v3954 = vpop.f32.mrf.mxu0
    %v3955 = vadd.f32 %v3778, %v3954
    %v3956 = vpop.f32.mrf.mxu0
    %3957 = vmatprep.mubr.f32.mxu0 0.0
    %v3958 = vand.u32 %v2655, 4294901760
    %3959 = vmatmul.mubr.f32.gmra.mxu0 %v3958
    %v3960 = vpop.f32.mrf.mxu0
    %v3961 = vadd.f32 %v3784, %v3960
    %v3962 = vpop.f32.mrf.mxu0
    %3963 = vdwg.mxu0
    %v3964 = vadd.f32 %v1224, %v3871
    %v3965 = vadd.f32 %v1230, %v3877
    %v3966 = vadd.f32 %v1236, %v3883
    %v3967 = vadd.f32 %v1242, %v3889
    %v3968 = vadd.f32 %v1248, %v3895
    %v3969 = vadd.f32 %v1254, %v3901
    %v3970 = vadd.f32 %v1260, %v3907
    %v3971 = vadd.f32 %v1266, %v3913
    %v3972 = vadd.f32 %v1272, %v3919
    %v3973 = vadd.f32 %v1278, %v3925
    %v3974 = vadd.f32 %v1284, %v3931
    %v3975 = vadd.f32 %v1290, %v3937
    %v3976 = vadd.f32 %v1296, %v3943
    %v3977 = vadd.f32 %v1302, %v3949
    %v3978 = vadd.f32 %v1308, %v3955
    %v3979 = vadd.f32 %v1314, %v3961
    %v3980 = vmax.f32 %v3964, 0.0
    %v3981 = vmax.f32 %v3965, 0.0
    %v3982 = vmax.f32 %v3966, 0.0
    %v3983 = vmax.f32 %v3967, 0.0
    %v3984 = vmax.f32 %v3968, 0.0
    %v3985 = vmax.f32 %v3969, 0.0
    %v3986 = vmax.f32 %v3970, 0.0
    %v3987 = vmax.f32 %v3971, 0.0
    %v3988 = vmax.f32 %v3972, 0.0
    %v3989 = vmax.f32 %v3973, 0.0
    %v3990 = vmax.f32 %v3974, 0.0
    %v3991 = vmax.f32 %v3975, 0.0
    %v3992 = vmax.f32 %v3976, 0.0
    %v3993 = vmax.f32 %v3977, 0.0
    %v3994 = vmax.f32 %v3978, 0.0
    %v3995 = vmax.f32 %v3979, 0.0
    %s3996 = scalar_lea.vmem [#allocation2], 256
    %v3997 = vld [vmem:[%s3996] sm:$0xff]
    %v3998 = vld [vmem:[%s3996 + $0x8] sm:$0xff]
    %v3999 = vld [vmem:[%s3996 + $0x10] sm:$0xff]
    %v4000 = vld [vmem:[%s3996 + $0x18] sm:$0xff]
    %v4001 = vld [vmem:[%s3996 + $0x20] sm:$0xff]
    %v4002 = vld [vmem:[%s3996 + $0x28] sm:$0xff]
    %v4003 = vld [vmem:[%s3996 + $0x30] sm:$0xff]
    %v4004 = vld [vmem:[%s3996 + $0x38] sm:$0xff]
    %v4005 = vld [vmem:[%s3996 + $0x40] sm:$0xff]
    %v4006 = vld [vmem:[%s3996 + $0x48] sm:$0xff]
    %v4007 = vld [vmem:[%s3996 + $0x50] sm:$0xff]
    %v4008 = vld [vmem:[%s3996 + $0x58] sm:$0xff]
    %v4009 = vld [vmem:[%s3996 + $0x60] sm:$0xff]
    %v4010 = vld [vmem:[%s3996 + $0x68] sm:$0xff]
    %v4011 = vld [vmem:[%s3996 + $0x70] sm:$0xff]
    %v4012 = vld [vmem:[%s3996 + $0x78] sm:$0xff]
    %v4013 = vld [vmem:[%s2 + $0x3] sm:$0x1]
    %v4014 = vlaneseq
    %v4015 = vshrl.u32 %v4014, 7
    %v4016 = vsub.s32 0, %v4015
    %v4017 = vrot.slane %v4013, %v4016
    %4018 = vmatprep.subr.mxu0 0.0
    %v4019 = vand.u32 %v4012, 4294901760
    %4020 = vmatpush1.msra.mxu0 %v4019
    %4021 = vmatprep.subr.mxu0 0.0
    %v4022 = vand.u32 %v4011, 4294901760
    %4023 = vmatpush1.msra.mxu0 %v4022
    %4024 = vmatprep.subr.mxu0 0.0
    %v4025 = vand.u32 %v4010, 4294901760
    %4026 = vmatpush1.msra.mxu0 %v4025
    %4027 = vmatprep.subr.mxu0 0.0
    %v4028 = vand.u32 %v4009, 4294901760
    %4029 = vmatpush1.msra.mxu0 %v4028
    %4030 = vmatprep.subr.mxu0 0.0
    %v4031 = vand.u32 %v4008, 4294901760
    %4032 = vmatpush1.msra.mxu0 %v4031
    %4033 = vmatprep.subr.mxu0 0.0
    %v4034 = vand.u32 %v4007, 4294901760
    %4035 = vmatpush1.msra.mxu0 %v4034
    %4036 = vmatprep.subr.mxu0 0.0
    %v4037 = vand.u32 %v4006, 4294901760
    %4038 = vmatpush1.msra.mxu0 %v4037
    %4039 = vmatprep.subr.mxu0 0.0
    %v4040 = vand.u32 %v4005, 4294901760
    %4041 = vmatpush1.msra.mxu0 %v4040
    %4042 = vmatprep.subr.mxu0 0.0
    %v4043 = vand.u32 %v4004, 4294901760
    %4044 = vmatpush1.msra.mxu0 %v4043
    %4045 = vmatprep.subr.mxu0 0.0
    %v4046 = vand.u32 %v4003, 4294901760
    %4047 = vmatpush1.msra.mxu0 %v4046
    %4048 = vmatprep.subr.mxu0 0.0
    %v4049 = vand.u32 %v4002, 4294901760
    %4050 = vmatpush1.msra.mxu0 %v4049
    %4051 = vmatprep.subr.mxu0 0.0
    %v4052 = vand.u32 %v4001, 4294901760
    %4053 = vmatpush1.msra.mxu0 %v4052
    %4054 = vmatprep.subr.mxu0 0.0
    %v4055 = vand.u32 %v4000, 4294901760
    %4056 = vmatpush1.msra.mxu0 %v4055
    %4057 = vmatprep.subr.mxu0 0.0
    %v4058 = vand.u32 %v3999, 4294901760
    %4059 = vmatpush1.msra.mxu0 %v4058
    %4060 = vmatprep.subr.mxu0 0.0
    %v4061 = vand.u32 %v3998, 4294901760
    %4062 = vmatpush1.msra.mxu0 %v4061
    %4063 = vmatprep.subr.mxu0 0.0
    %v4064 = vand.u32 %v3997, 4294901760
    %4065 = vmatpush1.msra.mxu0 %v4064
    %4066 = vmatprep.subr.mxu0 0.0
    %4067 = vmatpush2.msra.mxu0 0.0
    %4068 = vmatprep.subr.mxu0 0.0
    %4069 = vmatpush2.msra.mxu0 0.0
    %4070 = vmatprep.subr.mxu0 0.0
    %4071 = vmatpush2.msra.mxu0 0.0
    %4072 = vmatprep.subr.mxu0 0.0
    %4073 = vmatpush2.msra.mxu0 0.0
    %4074 = vmatprep.subr.mxu0 0.0
    %4075 = vmatpush2.msra.mxu0 0.0
    %4076 = vmatprep.subr.mxu0 0.0
    %4077 = vmatpush2.msra.mxu0 0.0
    %4078 = vmatprep.subr.mxu0 0.0
    %4079 = vmatpush2.msra.mxu0 0.0
    %4080 = vmatprep.subr.mxu0 0.0
    %4081 = vmatpush2.msra.mxu0 0.0
    %4082 = vmatprep.subr.mxu0 0.0
    %4083 = vmatpush2.msra.mxu0 0.0
    %4084 = vmatprep.subr.mxu0 0.0
    %4085 = vmatpush2.msra.mxu0 0.0
    %4086 = vmatprep.subr.mxu0 0.0
    %4087 = vmatpush2.msra.mxu0 0.0
    %4088 = vmatprep.subr.mxu0 0.0
    %4089 = vmatpush2.msra.mxu0 0.0
    %4090 = vmatprep.subr.mxu0 0.0
    %4091 = vmatpush2.msra.mxu0 0.0
    %4092 = vmatprep.subr.mxu0 0.0
    %4093 = vmatpush2.msra.mxu0 0.0
    %4094 = vmatprep.subr.mxu0 0.0
    %4095 = vmatpush2.msra.mxu0 0.0
    %4096 = vmatprep.subr.mxu0 0.0
    %4097 = vmatpush2.msra.mxu0 0.0
    %4098 = vmatprep.mubr.f32.mxu0 0.0
    %v4099 = vand.u32 %v3980, 4294901760
    %v4100 = vsub.f32 %v3980, %v4099
    %v4101 = vand.u32 %v4100, 4294901760
    %v4102 = vsub.f32 %v4100, %v4101
    %v4103 = vand.u32 %v4102, 4294901760
    %4104 = vmatmul.mubr.f32.gmra.mxu0 %v4103
    %v4105 = vpop.f32.mrf.mxu0
    %v4106 = vadd.f32 %v4017, %v4105
    %v4107 = vpop.f32.mrf.mxu0
    %4108 = vmatprep.mubr.f32.mxu0 0.0
    %v4109 = vand.u32 %v3981, 4294901760
    %v4110 = vsub.f32 %v3981, %v4109
    %v4111 = vand.u32 %v4110, 4294901760
    %v4112 = vsub.f32 %v4110, %v4111
    %v4113 = vand.u32 %v4112, 4294901760
    %4114 = vmatmul.mubr.f32.gmra.mxu0 %v4113
    %v4115 = vpop.f32.mrf.mxu0
    %v4116 = vadd.f32 %v4017, %v4115
    %v4117 = vpop.f32.mrf.mxu0
    %4118 = vmatprep.mubr.f32.mxu0 0.0
    %v4119 = vand.u32 %v3982, 4294901760
    %v4120 = vsub.f32 %v3982, %v4119
    %v4121 = vand.u32 %v4120, 4294901760
    %v4122 = vsub.f32 %v4120, %v4121
    %v4123 = vand.u32 %v4122, 4294901760
    %4124 = vmatmul.mubr.f32.gmra.mxu0 %v4123
    %v4125 = vpop.f32.mrf.mxu0
    %v4126 = vadd.f32 %v4017, %v4125
    %v4127 = vpop.f32.mrf.mxu0
    %4128 = vmatprep.mubr.f32.mxu0 0.0
    %v4129 = vand.u32 %v3983, 4294901760
    %v4130 = vsub.f32 %v3983, %v4129
    %v4131 = vand.u32 %v4130, 4294901760
    %v4132 = vsub.f32 %v4130, %v4131
    %v4133 = vand.u32 %v4132, 4294901760
    %4134 = vmatmul.mubr.f32.gmra.mxu0 %v4133
    %v4135 = vpop.f32.mrf.mxu0
    %v4136 = vadd.f32 %v4017, %v4135
    %v4137 = vpop.f32.mrf.mxu0
    %4138 = vmatprep.mubr.f32.mxu0 0.0
    %v4139 = vand.u32 %v3984, 4294901760
    %v4140 = vsub.f32 %v3984, %v4139
    %v4141 = vand.u32 %v4140, 4294901760
    %v4142 = vsub.f32 %v4140, %v4141
    %v4143 = vand.u32 %v4142, 4294901760
    %4144 = vmatmul.mubr.f32.gmra.mxu0 %v4143
    %v4145 = vpop.f32.mrf.mxu0
    %v4146 = vadd.f32 %v4017, %v4145
    %v4147 = vpop.f32.mrf.mxu0
    %4148 = vmatprep.mubr.f32.mxu0 0.0
    %v4149 = vand.u32 %v3985, 4294901760
    %v4150 = vsub.f32 %v3985, %v4149
    %v4151 = vand.u32 %v4150, 4294901760
    %v4152 = vsub.f32 %v4150, %v4151
    %v4153 = vand.u32 %v4152, 4294901760
    %4154 = vmatmul.mubr.f32.gmra.mxu0 %v4153
    %v4155 = vpop.f32.mrf.mxu0
    %v4156 = vadd.f32 %v4017, %v4155
    %v4157 = vpop.f32.mrf.mxu0
    %4158 = vmatprep.mubr.f32.mxu0 0.0
    %v4159 = vand.u32 %v3986, 4294901760
    %v4160 = vsub.f32 %v3986, %v4159
    %v4161 = vand.u32 %v4160, 4294901760
    %v4162 = vsub.f32 %v4160, %v4161
    %v4163 = vand.u32 %v4162, 4294901760
    %4164 = vmatmul.mubr.f32.gmra.mxu0 %v4163
    %v4165 = vpop.f32.mrf.mxu0
    %v4166 = vadd.f32 %v4017, %v4165
    %v4167 = vpop.f32.mrf.mxu0
    %4168 = vmatprep.mubr.f32.mxu0 0.0
    %v4169 = vand.u32 %v3987, 4294901760
    %v4170 = vsub.f32 %v3987, %v4169
    %v4171 = vand.u32 %v4170, 4294901760
    %v4172 = vsub.f32 %v4170, %v4171
    %v4173 = vand.u32 %v4172, 4294901760
    %4174 = vmatmul.mubr.f32.gmra.mxu0 %v4173
    %v4175 = vpop.f32.mrf.mxu0
    %v4176 = vadd.f32 %v4017, %v4175
    %v4177 = vpop.f32.mrf.mxu0
    %4178 = vmatprep.mubr.f32.mxu0 0.0
    %v4179 = vand.u32 %v3988, 4294901760
    %v4180 = vsub.f32 %v3988, %v4179
    %v4181 = vand.u32 %v4180, 4294901760
    %v4182 = vsub.f32 %v4180, %v4181
    %v4183 = vand.u32 %v4182, 4294901760
    %4184 = vmatmul.mubr.f32.gmra.mxu0 %v4183
    %v4185 = vpop.f32.mrf.mxu0
    %v4186 = vadd.f32 %v4017, %v4185
    %v4187 = vpop.f32.mrf.mxu0
    %4188 = vmatprep.mubr.f32.mxu0 0.0
    %v4189 = vand.u32 %v3989, 4294901760
    %v4190 = vsub.f32 %v3989, %v4189
    %v4191 = vand.u32 %v4190, 4294901760
    %v4192 = vsub.f32 %v4190, %v4191
    %v4193 = vand.u32 %v4192, 4294901760
    %4194 = vmatmul.mubr.f32.gmra.mxu0 %v4193
    %v4195 = vpop.f32.mrf.mxu0
    %v4196 = vadd.f32 %v4017, %v4195
    %v4197 = vpop.f32.mrf.mxu0
    %4198 = vmatprep.mubr.f32.mxu0 0.0
    %v4199 = vand.u32 %v3990, 4294901760
    %v4200 = vsub.f32 %v3990, %v4199
    %v4201 = vand.u32 %v4200, 4294901760
    %v4202 = vsub.f32 %v4200, %v4201
    %v4203 = vand.u32 %v4202, 4294901760
    %4204 = vmatmul.mubr.f32.gmra.mxu0 %v4203
    %v4205 = vpop.f32.mrf.mxu0
    %v4206 = vadd.f32 %v4017, %v4205
    %v4207 = vpop.f32.mrf.mxu0
    %4208 = vmatprep.mubr.f32.mxu0 0.0
    %v4209 = vand.u32 %v3991, 4294901760
    %v4210 = vsub.f32 %v3991, %v4209
    %v4211 = vand.u32 %v4210, 4294901760
    %v4212 = vsub.f32 %v4210, %v4211
    %v4213 = vand.u32 %v4212, 4294901760
    %4214 = vmatmul.mubr.f32.gmra.mxu0 %v4213
    %v4215 = vpop.f32.mrf.mxu0
    %v4216 = vadd.f32 %v4017, %v4215
    %v4217 = vpop.f32.mrf.mxu0
    %4218 = vmatprep.mubr.f32.mxu0 0.0
    %v4219 = vand.u32 %v3992, 4294901760
    %v4220 = vsub.f32 %v3992, %v4219
    %v4221 = vand.u32 %v4220, 4294901760
    %v4222 = vsub.f32 %v4220, %v4221
    %v4223 = vand.u32 %v4222, 4294901760
    %4224 = vmatmul.mubr.f32.gmra.mxu0 %v4223
    %v4225 = vpop.f32.mrf.mxu0
    %v4226 = vadd.f32 %v4017, %v4225
    %v4227 = vpop.f32.mrf.mxu0
    %4228 = vmatprep.mubr.f32.mxu0 0.0
    %v4229 = vand.u32 %v3993, 4294901760
    %v4230 = vsub.f32 %v3993, %v4229
    %v4231 = vand.u32 %v4230, 4294901760
    %v4232 = vsub.f32 %v4230, %v4231
    %v4233 = vand.u32 %v4232, 4294901760
    %4234 = vmatmul.mubr.f32.gmra.mxu0 %v4233
    %v4235 = vpop.f32.mrf.mxu0
    %v4236 = vadd.f32 %v4017, %v4235
    %v4237 = vpop.f32.mrf.mxu0
    %4238 = vmatprep.mubr.f32.mxu0 0.0
    %v4239 = vand.u32 %v3994, 4294901760
    %v4240 = vsub.f32 %v3994, %v4239
    %v4241 = vand.u32 %v4240, 4294901760
    %v4242 = vsub.f32 %v4240, %v4241
    %v4243 = vand.u32 %v4242, 4294901760
    %4244 = vmatmul.mubr.f32.gmra.mxu0 %v4243
    %v4245 = vpop.f32.mrf.mxu0
    %v4246 = vadd.f32 %v4017, %v4245
    %v4247 = vpop.f32.mrf.mxu0
    %4248 = vmatprep.mubr.f32.mxu0 0.0
    %v4249 = vand.u32 %v3995, 4294901760
    %v4250 = vsub.f32 %v3995, %v4249
    %v4251 = vand.u32 %v4250, 4294901760
    %v4252 = vsub.f32 %v4250, %v4251
    %v4253 = vand.u32 %v4252, 4294901760
    %4254 = vmatmul.mubr.f32.gmra.mxu0 %v4253
    %v4255 = vpop.f32.mrf.mxu0
    %v4256 = vadd.f32 %v4017, %v4255
    %v4257 = vpop.f32.mrf.mxu0
    %4258 = vdwg.mxu0
    %4259 = vmatprep.subr.mxu0 0.0
    %v4260 = vand.u32 %v4012, 4294901760
    %v4261 = vsub.f32 %v4012, %v4260
    %v4262 = vand.u32 %v4261, 4294901760
    %v4263 = vsub.f32 %v4261, %v4262
    %v4264 = vand.u32 %v4263, 4294901760
    %4265 = vmatpush1.msra.mxu0 %v4264
    %4266 = vmatprep.subr.mxu0 0.0
    %v4267 = vand.u32 %v4011, 4294901760
    %v4268 = vsub.f32 %v4011, %v4267
    %v4269 = vand.u32 %v4268, 4294901760
    %v4270 = vsub.f32 %v4268, %v4269
    %v4271 = vand.u32 %v4270, 4294901760
    %4272 = vmatpush1.msra.mxu0 %v4271
    %4273 = vmatprep.subr.mxu0 0.0
    %v4274 = vand.u32 %v4010, 4294901760
    %v4275 = vsub.f32 %v4010, %v4274
    %v4276 = vand.u32 %v4275, 4294901760
    %v4277 = vsub.f32 %v4275, %v4276
    %v4278 = vand.u32 %v4277, 4294901760
    %4279 = vmatpush1.msra.mxu0 %v4278
    %4280 = vmatprep.subr.mxu0 0.0
    %v4281 = vand.u32 %v4009, 4294901760
    %v4282 = vsub.f32 %v4009, %v4281
    %v4283 = vand.u32 %v4282, 4294901760
    %v4284 = vsub.f32 %v4282, %v4283
    %v4285 = vand.u32 %v4284, 4294901760
    %4286 = vmatpush1.msra.mxu0 %v4285
    %4287 = vmatprep.subr.mxu0 0.0
    %v4288 = vand.u32 %v4008, 4294901760
    %v4289 = vsub.f32 %v4008, %v4288
    %v4290 = vand.u32 %v4289, 4294901760
    %v4291 = vsub.f32 %v4289, %v4290
    %v4292 = vand.u32 %v4291, 4294901760
    %4293 = vmatpush1.msra.mxu0 %v4292
    %4294 = vmatprep.subr.mxu0 0.0
    %v4295 = vand.u32 %v4007, 4294901760
    %v4296 = vsub.f32 %v4007, %v4295
    %v4297 = vand.u32 %v4296, 4294901760
    %v4298 = vsub.f32 %v4296, %v4297
    %v4299 = vand.u32 %v4298, 4294901760
    %4300 = vmatpush1.msra.mxu0 %v4299
    %4301 = vmatprep.subr.mxu0 0.0
    %v4302 = vand.u32 %v4006, 4294901760
    %v4303 = vsub.f32 %v4006, %v4302
    %v4304 = vand.u32 %v4303, 4294901760
    %v4305 = vsub.f32 %v4303, %v4304
    %v4306 = vand.u32 %v4305, 4294901760
    %4307 = vmatpush1.msra.mxu0 %v4306
    %4308 = vmatprep.subr.mxu0 0.0
    %v4309 = vand.u32 %v4005, 4294901760
    %v4310 = vsub.f32 %v4005, %v4309
    %v4311 = vand.u32 %v4310, 4294901760
    %v4312 = vsub.f32 %v4310, %v4311
    %v4313 = vand.u32 %v4312, 4294901760
    %4314 = vmatpush1.msra.mxu0 %v4313
    %4315 = vmatprep.subr.mxu0 0.0
    %v4316 = vand.u32 %v4004, 4294901760
    %v4317 = vsub.f32 %v4004, %v4316
    %v4318 = vand.u32 %v4317, 4294901760
    %v4319 = vsub.f32 %v4317, %v4318
    %v4320 = vand.u32 %v4319, 4294901760
    %4321 = vmatpush1.msra.mxu0 %v4320
    %4322 = vmatprep.subr.mxu0 0.0
    %v4323 = vand.u32 %v4003, 4294901760
    %v4324 = vsub.f32 %v4003, %v4323
    %v4325 = vand.u32 %v4324, 4294901760
    %v4326 = vsub.f32 %v4324, %v4325
    %v4327 = vand.u32 %v4326, 4294901760
    %4328 = vmatpush1.msra.mxu0 %v4327
    %4329 = vmatprep.subr.mxu0 0.0
    %v4330 = vand.u32 %v4002, 4294901760
    %v4331 = vsub.f32 %v4002, %v4330
    %v4332 = vand.u32 %v4331, 4294901760
    %v4333 = vsub.f32 %v4331, %v4332
    %v4334 = vand.u32 %v4333, 4294901760
    %4335 = vmatpush1.msra.mxu0 %v4334
    %4336 = vmatprep.subr.mxu0 0.0
    %v4337 = vand.u32 %v4001, 4294901760
    %v4338 = vsub.f32 %v4001, %v4337
    %v4339 = vand.u32 %v4338, 4294901760
    %v4340 = vsub.f32 %v4338, %v4339
    %v4341 = vand.u32 %v4340, 4294901760
    %4342 = vmatpush1.msra.mxu0 %v4341
    %4343 = vmatprep.subr.mxu0 0.0
    %v4344 = vand.u32 %v4000, 4294901760
    %v4345 = vsub.f32 %v4000, %v4344
    %v4346 = vand.u32 %v4345, 4294901760
    %v4347 = vsub.f32 %v4345, %v4346
    %v4348 = vand.u32 %v4347, 4294901760
    %4349 = vmatpush1.msra.mxu0 %v4348
    %4350 = vmatprep.subr.mxu0 0.0
    %v4351 = vand.u32 %v3999, 4294901760
    %v4352 = vsub.f32 %v3999, %v4351
    %v4353 = vand.u32 %v4352, 4294901760
    %v4354 = vsub.f32 %v4352, %v4353
    %v4355 = vand.u32 %v4354, 4294901760
    %4356 = vmatpush1.msra.mxu0 %v4355
    %4357 = vmatprep.subr.mxu0 0.0
    %v4358 = vand.u32 %v3998, 4294901760
    %v4359 = vsub.f32 %v3998, %v4358
    %v4360 = vand.u32 %v4359, 4294901760
    %v4361 = vsub.f32 %v4359, %v4360
    %v4362 = vand.u32 %v4361, 4294901760
    %4363 = vmatpush1.msra.mxu0 %v4362
    %4364 = vmatprep.subr.mxu0 0.0
    %v4365 = vand.u32 %v3997, 4294901760
    %v4366 = vsub.f32 %v3997, %v4365
    %v4367 = vand.u32 %v4366, 4294901760
    %v4368 = vsub.f32 %v4366, %v4367
    %v4369 = vand.u32 %v4368, 4294901760
    %4370 = vmatpush1.msra.mxu0 %v4369
    %4371 = vmatprep.subr.mxu0 0.0
    %4372 = vmatpush2.msra.mxu0 0.0
    %4373 = vmatprep.subr.mxu0 0.0
    %4374 = vmatpush2.msra.mxu0 0.0
    %4375 = vmatprep.subr.mxu0 0.0
    %4376 = vmatpush2.msra.mxu0 0.0
    %4377 = vmatprep.subr.mxu0 0.0
    %4378 = vmatpush2.msra.mxu0 0.0
    %4379 = vmatprep.subr.mxu0 0.0
    %4380 = vmatpush2.msra.mxu0 0.0
    %4381 = vmatprep.subr.mxu0 0.0
    %4382 = vmatpush2.msra.mxu0 0.0
    %4383 = vmatprep.subr.mxu0 0.0
    %4384 = vmatpush2.msra.mxu0 0.0
    %4385 = vmatprep.subr.mxu0 0.0
    %4386 = vmatpush2.msra.mxu0 0.0
    %4387 = vmatprep.subr.mxu0 0.0
    %4388 = vmatpush2.msra.mxu0 0.0
    %4389 = vmatprep.subr.mxu0 0.0
    %4390 = vmatpush2.msra.mxu0 0.0
    %4391 = vmatprep.subr.mxu0 0.0
    %4392 = vmatpush2.msra.mxu0 0.0
    %4393 = vmatprep.subr.mxu0 0.0
    %4394 = vmatpush2.msra.mxu0 0.0
    %4395 = vmatprep.subr.mxu0 0.0
    %4396 = vmatpush2.msra.mxu0 0.0
    %4397 = vmatprep.subr.mxu0 0.0
    %4398 = vmatpush2.msra.mxu0 0.0
    %4399 = vmatprep.subr.mxu0 0.0
    %4400 = vmatpush2.msra.mxu0 0.0
    %4401 = vmatprep.subr.mxu0 0.0
    %4402 = vmatpush2.msra.mxu0 0.0
    %4403 = vmatprep.mubr.f32.mxu0 0.0
    %v4404 = vand.u32 %v3980, 4294901760
    %4405 = vmatmul.mubr.f32.gmra.mxu0 %v4404
    %v4406 = vpop.f32.mrf.mxu0
    %v4407 = vadd.f32 %v4106, %v4406
    %v4408 = vpop.f32.mrf.mxu0
    %4409 = vmatprep.mubr.f32.mxu0 0.0
    %v4410 = vand.u32 %v3981, 4294901760
    %4411 = vmatmul.mubr.f32.gmra.mxu0 %v4410
    %v4412 = vpop.f32.mrf.mxu0
    %v4413 = vadd.f32 %v4116, %v4412
    %v4414 = vpop.f32.mrf.mxu0
    %4415 = vmatprep.mubr.f32.mxu0 0.0
    %v4416 = vand.u32 %v3982, 4294901760
    %4417 = vmatmul.mubr.f32.gmra.mxu0 %v4416
    %v4418 = vpop.f32.mrf.mxu0
    %v4419 = vadd.f32 %v4126, %v4418
    %v4420 = vpop.f32.mrf.mxu0
    %4421 = vmatprep.mubr.f32.mxu0 0.0
    %v4422 = vand.u32 %v3983, 4294901760
    %4423 = vmatmul.mubr.f32.gmra.mxu0 %v4422
    %v4424 = vpop.f32.mrf.mxu0
    %v4425 = vadd.f32 %v4136, %v4424
    %v4426 = vpop.f32.mrf.mxu0
    %4427 = vmatprep.mubr.f32.mxu0 0.0
    %v4428 = vand.u32 %v3984, 4294901760
    %4429 = vmatmul.mubr.f32.gmra.mxu0 %v4428
    %v4430 = vpop.f32.mrf.mxu0
    %v4431 = vadd.f32 %v4146, %v4430
    %v4432 = vpop.f32.mrf.mxu0
    %4433 = vmatprep.mubr.f32.mxu0 0.0
    %v4434 = vand.u32 %v3985, 4294901760
    %4435 = vmatmul.mubr.f32.gmra.mxu0 %v4434
    %v4436 = vpop.f32.mrf.mxu0
    %v4437 = vadd.f32 %v4156, %v4436
    %v4438 = vpop.f32.mrf.mxu0
    %4439 = vmatprep.mubr.f32.mxu0 0.0
    %v4440 = vand.u32 %v3986, 4294901760
    %4441 = vmatmul.mubr.f32.gmra.mxu0 %v4440
    %v4442 = vpop.f32.mrf.mxu0
    %v4443 = vadd.f32 %v4166, %v4442
    %v4444 = vpop.f32.mrf.mxu0
    %4445 = vmatprep.mubr.f32.mxu0 0.0
    %v4446 = vand.u32 %v3987, 4294901760
    %4447 = vmatmul.mubr.f32.gmra.mxu0 %v4446
    %v4448 = vpop.f32.mrf.mxu0
    %v4449 = vadd.f32 %v4176, %v4448
    %v4450 = vpop.f32.mrf.mxu0
    %4451 = vmatprep.mubr.f32.mxu0 0.0
    %v4452 = vand.u32 %v3988, 4294901760
    %4453 = vmatmul.mubr.f32.gmra.mxu0 %v4452
    %v4454 = vpop.f32.mrf.mxu0
    %v4455 = vadd.f32 %v4186, %v4454
    %v4456 = vpop.f32.mrf.mxu0
    %4457 = vmatprep.mubr.f32.mxu0 0.0
    %v4458 = vand.u32 %v3989, 4294901760
    %4459 = vmatmul.mubr.f32.gmra.mxu0 %v4458
    %v4460 = vpop.f32.mrf.mxu0
    %v4461 = vadd.f32 %v4196, %v4460
    %v4462 = vpop.f32.mrf.mxu0
    %4463 = vmatprep.mubr.f32.mxu0 0.0
    %v4464 = vand.u32 %v3990, 4294901760
    %4465 = vmatmul.mubr.f32.gmra.mxu0 %v4464
    %v4466 = vpop.f32.mrf.mxu0
    %v4467 = vadd.f32 %v4206, %v4466
    %v4468 = vpop.f32.mrf.mxu0
    %4469 = vmatprep.mubr.f32.mxu0 0.0
    %v4470 = vand.u32 %v3991, 4294901760
    %4471 = vmatmul.mubr.f32.gmra.mxu0 %v4470
    %v4472 = vpop.f32.mrf.mxu0
    %v4473 = vadd.f32 %v4216, %v4472
    %v4474 = vpop.f32.mrf.mxu0
    %4475 = vmatprep.mubr.f32.mxu0 0.0
    %v4476 = vand.u32 %v3992, 4294901760
    %4477 = vmatmul.mubr.f32.gmra.mxu0 %v4476
    %v4478 = vpop.f32.mrf.mxu0
    %v4479 = vadd.f32 %v4226, %v4478
    %v4480 = vpop.f32.mrf.mxu0
    %4481 = vmatprep.mubr.f32.mxu0 0.0
    %v4482 = vand.u32 %v3993, 4294901760
    %4483 = vmatmul.mubr.f32.gmra.mxu0 %v4482
    %v4484 = vpop.f32.mrf.mxu0
    %v4485 = vadd.f32 %v4236, %v4484
    %v4486 = vpop.f32.mrf.mxu0
    %4487 = vmatprep.mubr.f32.mxu0 0.0
    %v4488 = vand.u32 %v3994, 4294901760
    %4489 = vmatmul.mubr.f32.gmra.mxu0 %v4488
    %v4490 = vpop.f32.mrf.mxu0
    %v4491 = vadd.f32 %v4246, %v4490
    %v4492 = vpop.f32.mrf.mxu0
    %4493 = vmatprep.mubr.f32.mxu0 0.0
    %v4494 = vand.u32 %v3995, 4294901760
    %4495 = vmatmul.mubr.f32.gmra.mxu0 %v4494
    %v4496 = vpop.f32.mrf.mxu0
    %v4497 = vadd.f32 %v4256, %v4496
    %v4498 = vpop.f32.mrf.mxu0
    %4499 = vdwg.mxu0
    %4500 = vmatprep.subr.mxu0 0.0
    %v4501 = vand.u32 %v4012, 4294901760
    %v4502 = vsub.f32 %v4012, %v4501
    %4503 = vmatpush1.msra.mxu0 %v4502
    %4504 = vmatprep.subr.mxu0 0.0
    %v4505 = vand.u32 %v4011, 4294901760
    %v4506 = vsub.f32 %v4011, %v4505
    %4507 = vmatpush1.msra.mxu0 %v4506
    %4508 = vmatprep.subr.mxu0 0.0
    %v4509 = vand.u32 %v4010, 4294901760
    %v4510 = vsub.f32 %v4010, %v4509
    %4511 = vmatpush1.msra.mxu0 %v4510
    %4512 = vmatprep.subr.mxu0 0.0
    %v4513 = vand.u32 %v4009, 4294901760
    %v4514 = vsub.f32 %v4009, %v4513
    %4515 = vmatpush1.msra.mxu0 %v4514
    %4516 = vmatprep.subr.mxu0 0.0
    %v4517 = vand.u32 %v4008, 4294901760
    %v4518 = vsub.f32 %v4008, %v4517
    %4519 = vmatpush1.msra.mxu0 %v4518
    %4520 = vmatprep.subr.mxu0 0.0
    %v4521 = vand.u32 %v4007, 4294901760
    %v4522 = vsub.f32 %v4007, %v4521
    %4523 = vmatpush1.msra.mxu0 %v4522
    %4524 = vmatprep.subr.mxu0 0.0
    %v4525 = vand.u32 %v4006, 4294901760
    %v4526 = vsub.f32 %v4006, %v4525
    %4527 = vmatpush1.msra.mxu0 %v4526
    %4528 = vmatprep.subr.mxu0 0.0
    %v4529 = vand.u32 %v4005, 4294901760
    %v4530 = vsub.f32 %v4005, %v4529
    %4531 = vmatpush1.msra.mxu0 %v4530
    %4532 = vmatprep.subr.mxu0 0.0
    %v4533 = vand.u32 %v4004, 4294901760
    %v4534 = vsub.f32 %v4004, %v4533
    %4535 = vmatpush1.msra.mxu0 %v4534
    %4536 = vmatprep.subr.mxu0 0.0
    %v4537 = vand.u32 %v4003, 4294901760
    %v4538 = vsub.f32 %v4003, %v4537
    %4539 = vmatpush1.msra.mxu0 %v4538
    %4540 = vmatprep.subr.mxu0 0.0
    %v4541 = vand.u32 %v4002, 4294901760
    %v4542 = vsub.f32 %v4002, %v4541
    %4543 = vmatpush1.msra.mxu0 %v4542
    %4544 = vmatprep.subr.mxu0 0.0
    %v4545 = vand.u32 %v4001, 4294901760
    %v4546 = vsub.f32 %v4001, %v4545
    %4547 = vmatpush1.msra.mxu0 %v4546
    %4548 = vmatprep.subr.mxu0 0.0
    %v4549 = vand.u32 %v4000, 4294901760
    %v4550 = vsub.f32 %v4000, %v4549
    %4551 = vmatpush1.msra.mxu0 %v4550
    %4552 = vmatprep.subr.mxu0 0.0
    %v4553 = vand.u32 %v3999, 4294901760
    %v4554 = vsub.f32 %v3999, %v4553
    %4555 = vmatpush1.msra.mxu0 %v4554
    %4556 = vmatprep.subr.mxu0 0.0
    %v4557 = vand.u32 %v3998, 4294901760
    %v4558 = vsub.f32 %v3998, %v4557
    %4559 = vmatpush1.msra.mxu0 %v4558
    %4560 = vmatprep.subr.mxu0 0.0
    %v4561 = vand.u32 %v3997, 4294901760
    %v4562 = vsub.f32 %v3997, %v4561
    %4563 = vmatpush1.msra.mxu0 %v4562
    %4564 = vmatprep.subr.mxu0 0.0
    %4565 = vmatpush2.msra.mxu0 0.0
    %4566 = vmatprep.subr.mxu0 0.0
    %4567 = vmatpush2.msra.mxu0 0.0
    %4568 = vmatprep.subr.mxu0 0.0
    %4569 = vmatpush2.msra.mxu0 0.0
    %4570 = vmatprep.subr.mxu0 0.0
    %4571 = vmatpush2.msra.mxu0 0.0
    %4572 = vmatprep.subr.mxu0 0.0
    %4573 = vmatpush2.msra.mxu0 0.0
    %4574 = vmatprep.subr.mxu0 0.0
    %4575 = vmatpush2.msra.mxu0 0.0
    %4576 = vmatprep.subr.mxu0 0.0
    %4577 = vmatpush2.msra.mxu0 0.0
    %4578 = vmatprep.subr.mxu0 0.0
    %4579 = vmatpush2.msra.mxu0 0.0
    %4580 = vmatprep.subr.mxu0 0.0
    %4581 = vmatpush2.msra.mxu0 0.0
    %4582 = vmatprep.subr.mxu0 0.0
    %4583 = vmatpush2.msra.mxu0 0.0
    %4584 = vmatprep.subr.mxu0 0.0
    %4585 = vmatpush2.msra.mxu0 0.0
    %4586 = vmatprep.subr.mxu0 0.0
    %4587 = vmatpush2.msra.mxu0 0.0
    %4588 = vmatprep.subr.mxu0 0.0
    %4589 = vmatpush2.msra.mxu0 0.0
    %4590 = vmatprep.subr.mxu0 0.0
    %4591 = vmatpush2.msra.mxu0 0.0
    %4592 = vmatprep.subr.mxu0 0.0
    %4593 = vmatpush2.msra.mxu0 0.0
    %4594 = vmatprep.subr.mxu0 0.0
    %4595 = vmatpush2.msra.mxu0 0.0
    %4596 = vmatprep.mubr.f32.mxu0 0.0
    %v4597 = vand.u32 %v3980, 4294901760
    %v4598 = vsub.f32 %v3980, %v4597
    %4599 = vmatmul.mubr.f32.gmra.mxu0 %v4598
    %v4600 = vpop.f32.mrf.mxu0
    %v4601 = vadd.f32 %v4407, %v4600
    %v4602 = vpop.f32.mrf.mxu0
    %4603 = vmatprep.mubr.f32.mxu0 0.0
    %v4604 = vand.u32 %v3981, 4294901760
    %v4605 = vsub.f32 %v3981, %v4604
    %4606 = vmatmul.mubr.f32.gmra.mxu0 %v4605
    %v4607 = vpop.f32.mrf.mxu0
    %v4608 = vadd.f32 %v4413, %v4607
    %v4609 = vpop.f32.mrf.mxu0
    %4610 = vmatprep.mubr.f32.mxu0 0.0
    %v4611 = vand.u32 %v3982, 4294901760
    %v4612 = vsub.f32 %v3982, %v4611
    %4613 = vmatmul.mubr.f32.gmra.mxu0 %v4612
    %v4614 = vpop.f32.mrf.mxu0
    %v4615 = vadd.f32 %v4419, %v4614
    %v4616 = vpop.f32.mrf.mxu0
    %4617 = vmatprep.mubr.f32.mxu0 0.0
    %v4618 = vand.u32 %v3983, 4294901760
    %v4619 = vsub.f32 %v3983, %v4618
    %4620 = vmatmul.mubr.f32.gmra.mxu0 %v4619
    %v4621 = vpop.f32.mrf.mxu0
    %v4622 = vadd.f32 %v4425, %v4621
    %v4623 = vpop.f32.mrf.mxu0
    %4624 = vmatprep.mubr.f32.mxu0 0.0
    %v4625 = vand.u32 %v3984, 4294901760
    %v4626 = vsub.f32 %v3984, %v4625
    %4627 = vmatmul.mubr.f32.gmra.mxu0 %v4626
    %v4628 = vpop.f32.mrf.mxu0
    %v4629 = vadd.f32 %v4431, %v4628
    %v4630 = vpop.f32.mrf.mxu0
    %4631 = vmatprep.mubr.f32.mxu0 0.0
    %v4632 = vand.u32 %v3985, 4294901760
    %v4633 = vsub.f32 %v3985, %v4632
    %4634 = vmatmul.mubr.f32.gmra.mxu0 %v4633
    %v4635 = vpop.f32.mrf.mxu0
    %v4636 = vadd.f32 %v4437, %v4635
    %v4637 = vpop.f32.mrf.mxu0
    %4638 = vmatprep.mubr.f32.mxu0 0.0
    %v4639 = vand.u32 %v3986, 4294901760
    %v4640 = vsub.f32 %v3986, %v4639
    %4641 = vmatmul.mubr.f32.gmra.mxu0 %v4640
    %v4642 = vpop.f32.mrf.mxu0
    %v4643 = vadd.f32 %v4443, %v4642
    %v4644 = vpop.f32.mrf.mxu0
    %4645 = vmatprep.mubr.f32.mxu0 0.0
    %v4646 = vand.u32 %v3987, 4294901760
    %v4647 = vsub.f32 %v3987, %v4646
    %4648 = vmatmul.mubr.f32.gmra.mxu0 %v4647
    %v4649 = vpop.f32.mrf.mxu0
    %v4650 = vadd.f32 %v4449, %v4649
    %v4651 = vpop.f32.mrf.mxu0
    %4652 = vmatprep.mubr.f32.mxu0 0.0
    %v4653 = vand.u32 %v3988, 4294901760
    %v4654 = vsub.f32 %v3988, %v4653
    %4655 = vmatmul.mubr.f32.gmra.mxu0 %v4654
    %v4656 = vpop.f32.mrf.mxu0
    %v4657 = vadd.f32 %v4455, %v4656
    %v4658 = vpop.f32.mrf.mxu0
    %4659 = vmatprep.mubr.f32.mxu0 0.0
    %v4660 = vand.u32 %v3989, 4294901760
    %v4661 = vsub.f32 %v3989, %v4660
    %4662 = vmatmul.mubr.f32.gmra.mxu0 %v4661
    %v4663 = vpop.f32.mrf.mxu0
    %v4664 = vadd.f32 %v4461, %v4663
    %v4665 = vpop.f32.mrf.mxu0
    %4666 = vmatprep.mubr.f32.mxu0 0.0
    %v4667 = vand.u32 %v3990, 4294901760
    %v4668 = vsub.f32 %v3990, %v4667
    %4669 = vmatmul.mubr.f32.gmra.mxu0 %v4668
    %v4670 = vpop.f32.mrf.mxu0
    %v4671 = vadd.f32 %v4467, %v4670
    %v4672 = vpop.f32.mrf.mxu0
    %4673 = vmatprep.mubr.f32.mxu0 0.0
    %v4674 = vand.u32 %v3991, 4294901760
    %v4675 = vsub.f32 %v3991, %v4674
    %4676 = vmatmul.mubr.f32.gmra.mxu0 %v4675
    %v4677 = vpop.f32.mrf.mxu0
    %v4678 = vadd.f32 %v4473, %v4677
    %v4679 = vpop.f32.mrf.mxu0
    %4680 = vmatprep.mubr.f32.mxu0 0.0
    %v4681 = vand.u32 %v3992, 4294901760
    %v4682 = vsub.f32 %v3992, %v4681
    %4683 = vmatmul.mubr.f32.gmra.mxu0 %v4682
    %v4684 = vpop.f32.mrf.mxu0
    %v4685 = vadd.f32 %v4479, %v4684
    %v4686 = vpop.f32.mrf.mxu0
    %4687 = vmatprep.mubr.f32.mxu0 0.0
    %v4688 = vand.u32 %v3993, 4294901760
    %v4689 = vsub.f32 %v3993, %v4688
    %4690 = vmatmul.mubr.f32.gmra.mxu0 %v4689
    %v4691 = vpop.f32.mrf.mxu0
    %v4692 = vadd.f32 %v4485, %v4691
    %v4693 = vpop.f32.mrf.mxu0
    %4694 = vmatprep.mubr.f32.mxu0 0.0
    %v4695 = vand.u32 %v3994, 4294901760
    %v4696 = vsub.f32 %v3994, %v4695
    %4697 = vmatmul.mubr.f32.gmra.mxu0 %v4696
    %v4698 = vpop.f32.mrf.mxu0
    %v4699 = vadd.f32 %v4491, %v4698
    %v4700 = vpop.f32.mrf.mxu0
    %4701 = vmatprep.mubr.f32.mxu0 0.0
    %v4702 = vand.u32 %v3995, 4294901760
    %v4703 = vsub.f32 %v3995, %v4702
    %4704 = vmatmul.mubr.f32.gmra.mxu0 %v4703
    %v4705 = vpop.f32.mrf.mxu0
    %v4706 = vadd.f32 %v4497, %v4705
    %v4707 = vpop.f32.mrf.mxu0
    %4708 = vdwg.mxu0
    %4709 = vmatprep.subr.mxu0 0.0
    %v4710 = vand.u32 %v4012, 4294901760
    %4711 = vmatpush1.msra.mxu0 %v4710
    %4712 = vmatprep.subr.mxu0 0.0
    %v4713 = vand.u32 %v4011, 4294901760
    %4714 = vmatpush1.msra.mxu0 %v4713
    %4715 = vmatprep.subr.mxu0 0.0
    %v4716 = vand.u32 %v4010, 4294901760
    %4717 = vmatpush1.msra.mxu0 %v4716
    %4718 = vmatprep.subr.mxu0 0.0
    %v4719 = vand.u32 %v4009, 4294901760
    %4720 = vmatpush1.msra.mxu0 %v4719
    %4721 = vmatprep.subr.mxu0 0.0
    %v4722 = vand.u32 %v4008, 4294901760
    %4723 = vmatpush1.msra.mxu0 %v4722
    %4724 = vmatprep.subr.mxu0 0.0
    %v4725 = vand.u32 %v4007, 4294901760
    %4726 = vmatpush1.msra.mxu0 %v4725
    %4727 = vmatprep.subr.mxu0 0.0
    %v4728 = vand.u32 %v4006, 4294901760
    %4729 = vmatpush1.msra.mxu0 %v4728
    %4730 = vmatprep.subr.mxu0 0.0
    %v4731 = vand.u32 %v4005, 4294901760
    %4732 = vmatpush1.msra.mxu0 %v4731
    %4733 = vmatprep.subr.mxu0 0.0
    %v4734 = vand.u32 %v4004, 4294901760
    %4735 = vmatpush1.msra.mxu0 %v4734
    %4736 = vmatprep.subr.mxu0 0.0
    %v4737 = vand.u32 %v4003, 4294901760
    %4738 = vmatpush1.msra.mxu0 %v4737
    %4739 = vmatprep.subr.mxu0 0.0
    %v4740 = vand.u32 %v4002, 4294901760
    %4741 = vmatpush1.msra.mxu0 %v4740
    %4742 = vmatprep.subr.mxu0 0.0
    %v4743 = vand.u32 %v4001, 4294901760
    %4744 = vmatpush1.msra.mxu0 %v4743
    %4745 = vmatprep.subr.mxu0 0.0
    %v4746 = vand.u32 %v4000, 4294901760
    %4747 = vmatpush1.msra.mxu0 %v4746
    %4748 = vmatprep.subr.mxu0 0.0
    %v4749 = vand.u32 %v3999, 4294901760
    %4750 = vmatpush1.msra.mxu0 %v4749
    %4751 = vmatprep.subr.mxu0 0.0
    %v4752 = vand.u32 %v3998, 4294901760
    %4753 = vmatpush1.msra.mxu0 %v4752
    %4754 = vmatprep.subr.mxu0 0.0
    %v4755 = vand.u32 %v3997, 4294901760
    %4756 = vmatpush1.msra.mxu0 %v4755
    %4757 = vmatprep.subr.mxu0 0.0
    %4758 = vmatpush2.msra.mxu0 0.0
    %4759 = vmatprep.subr.mxu0 0.0
    %4760 = vmatpush2.msra.mxu0 0.0
    %4761 = vmatprep.subr.mxu0 0.0
    %4762 = vmatpush2.msra.mxu0 0.0
    %4763 = vmatprep.subr.mxu0 0.0
    %4764 = vmatpush2.msra.mxu0 0.0
    %4765 = vmatprep.subr.mxu0 0.0
    %4766 = vmatpush2.msra.mxu0 0.0
    %4767 = vmatprep.subr.mxu0 0.0
    %4768 = vmatpush2.msra.mxu0 0.0
    %4769 = vmatprep.subr.mxu0 0.0
    %4770 = vmatpush2.msra.mxu0 0.0
    %4771 = vmatprep.subr.mxu0 0.0
    %4772 = vmatpush2.msra.mxu0 0.0
    %4773 = vmatprep.subr.mxu0 0.0
    %4774 = vmatpush2.msra.mxu0 0.0
    %4775 = vmatprep.subr.mxu0 0.0
    %4776 = vmatpush2.msra.mxu0 0.0
    %4777 = vmatprep.subr.mxu0 0.0
    %4778 = vmatpush2.msra.mxu0 0.0
    %4779 = vmatprep.subr.mxu0 0.0
    %4780 = vmatpush2.msra.mxu0 0.0
    %4781 = vmatprep.subr.mxu0 0.0
    %4782 = vmatpush2.msra.mxu0 0.0
    %4783 = vmatprep.subr.mxu0 0.0
    %4784 = vmatpush2.msra.mxu0 0.0
    %4785 = vmatprep.subr.mxu0 0.0
    %4786 = vmatpush2.msra.mxu0 0.0
    %4787 = vmatprep.subr.mxu0 0.0
    %4788 = vmatpush2.msra.mxu0 0.0
    %4789 = vmatprep.mubr.f32.mxu0 0.0
    %v4790 = vand.u32 %v3980, 4294901760
    %v4791 = vsub.f32 %v3980, %v4790
    %v4792 = vand.u32 %v4791, 4294901760
    %4793 = vmatmul.mubr.f32.gmra.mxu0 %v4792
    %v4794 = vpop.f32.mrf.mxu0
    %v4795 = vadd.f32 %v4601, %v4794
    %v4796 = vpop.f32.mrf.mxu0
    %4797 = vmatprep.mubr.f32.mxu0 0.0
    %v4798 = vand.u32 %v3981, 4294901760
    %v4799 = vsub.f32 %v3981, %v4798
    %v4800 = vand.u32 %v4799, 4294901760
    %4801 = vmatmul.mubr.f32.gmra.mxu0 %v4800
    %v4802 = vpop.f32.mrf.mxu0
    %v4803 = vadd.f32 %v4608, %v4802
    %v4804 = vpop.f32.mrf.mxu0
    %4805 = vmatprep.mubr.f32.mxu0 0.0
    %v4806 = vand.u32 %v3982, 4294901760
    %v4807 = vsub.f32 %v3982, %v4806
    %v4808 = vand.u32 %v4807, 4294901760
    %4809 = vmatmul.mubr.f32.gmra.mxu0 %v4808
    %v4810 = vpop.f32.mrf.mxu0
    %v4811 = vadd.f32 %v4615, %v4810
    %v4812 = vpop.f32.mrf.mxu0
    %4813 = vmatprep.mubr.f32.mxu0 0.0
    %v4814 = vand.u32 %v3983, 4294901760
    %v4815 = vsub.f32 %v3983, %v4814
    %v4816 = vand.u32 %v4815, 4294901760
    %4817 = vmatmul.mubr.f32.gmra.mxu0 %v4816
    %v4818 = vpop.f32.mrf.mxu0
    %v4819 = vadd.f32 %v4622, %v4818
    %v4820 = vpop.f32.mrf.mxu0
    %4821 = vmatprep.mubr.f32.mxu0 0.0
    %v4822 = vand.u32 %v3984, 4294901760
    %v4823 = vsub.f32 %v3984, %v4822
    %v4824 = vand.u32 %v4823, 4294901760
    %4825 = vmatmul.mubr.f32.gmra.mxu0 %v4824
    %v4826 = vpop.f32.mrf.mxu0
    %v4827 = vadd.f32 %v4629, %v4826
    %v4828 = vpop.f32.mrf.mxu0
    %4829 = vmatprep.mubr.f32.mxu0 0.0
    %v4830 = vand.u32 %v3985, 4294901760
    %v4831 = vsub.f32 %v3985, %v4830
    %v4832 = vand.u32 %v4831, 4294901760
    %4833 = vmatmul.mubr.f32.gmra.mxu0 %v4832
    %v4834 = vpop.f32.mrf.mxu0
    %v4835 = vadd.f32 %v4636, %v4834
    %v4836 = vpop.f32.mrf.mxu0
    %4837 = vmatprep.mubr.f32.mxu0 0.0
    %v4838 = vand.u32 %v3986, 4294901760
    %v4839 = vsub.f32 %v3986, %v4838
    %v4840 = vand.u32 %v4839, 4294901760
    %4841 = vmatmul.mubr.f32.gmra.mxu0 %v4840
    %v4842 = vpop.f32.mrf.mxu0
    %v4843 = vadd.f32 %v4643, %v4842
    %v4844 = vpop.f32.mrf.mxu0
    %4845 = vmatprep.mubr.f32.mxu0 0.0
    %v4846 = vand.u32 %v3987, 4294901760
    %v4847 = vsub.f32 %v3987, %v4846
    %v4848 = vand.u32 %v4847, 4294901760
    %4849 = vmatmul.mubr.f32.gmra.mxu0 %v4848
    %v4850 = vpop.f32.mrf.mxu0
    %v4851 = vadd.f32 %v4650, %v4850
    %v4852 = vpop.f32.mrf.mxu0
    %4853 = vmatprep.mubr.f32.mxu0 0.0
    %v4854 = vand.u32 %v3988, 4294901760
    %v4855 = vsub.f32 %v3988, %v4854
    %v4856 = vand.u32 %v4855, 4294901760
    %4857 = vmatmul.mubr.f32.gmra.mxu0 %v4856
    %v4858 = vpop.f32.mrf.mxu0
    %v4859 = vadd.f32 %v4657, %v4858
    %v4860 = vpop.f32.mrf.mxu0
    %4861 = vmatprep.mubr.f32.mxu0 0.0
    %v4862 = vand.u32 %v3989, 4294901760
    %v4863 = vsub.f32 %v3989, %v4862
    %v4864 = vand.u32 %v4863, 4294901760
    %4865 = vmatmul.mubr.f32.gmra.mxu0 %v4864
    %v4866 = vpop.f32.mrf.mxu0
    %v4867 = vadd.f32 %v4664, %v4866
    %v4868 = vpop.f32.mrf.mxu0
    %4869 = vmatprep.mubr.f32.mxu0 0.0
    %v4870 = vand.u32 %v3990, 4294901760
    %v4871 = vsub.f32 %v3990, %v4870
    %v4872 = vand.u32 %v4871, 4294901760
    %4873 = vmatmul.mubr.f32.gmra.mxu0 %v4872
    %v4874 = vpop.f32.mrf.mxu0
    %v4875 = vadd.f32 %v4671, %v4874
    %v4876 = vpop.f32.mrf.mxu0
    %4877 = vmatprep.mubr.f32.mxu0 0.0
    %v4878 = vand.u32 %v3991, 4294901760
    %v4879 = vsub.f32 %v3991, %v4878
    %v4880 = vand.u32 %v4879, 4294901760
    %4881 = vmatmul.mubr.f32.gmra.mxu0 %v4880
    %v4882 = vpop.f32.mrf.mxu0
    %v4883 = vadd.f32 %v4678, %v4882
    %v4884 = vpop.f32.mrf.mxu0
    %4885 = vmatprep.mubr.f32.mxu0 0.0
    %v4886 = vand.u32 %v3992, 4294901760
    %v4887 = vsub.f32 %v3992, %v4886
    %v4888 = vand.u32 %v4887, 4294901760
    %4889 = vmatmul.mubr.f32.gmra.mxu0 %v4888
    %v4890 = vpop.f32.mrf.mxu0
    %v4891 = vadd.f32 %v4685, %v4890
    %v4892 = vpop.f32.mrf.mxu0
    %4893 = vmatprep.mubr.f32.mxu0 0.0
    %v4894 = vand.u32 %v3993, 4294901760
    %v4895 = vsub.f32 %v3993, %v4894
    %v4896 = vand.u32 %v4895, 4294901760
    %4897 = vmatmul.mubr.f32.gmra.mxu0 %v4896
    %v4898 = vpop.f32.mrf.mxu0
    %v4899 = vadd.f32 %v4692, %v4898
    %v4900 = vpop.f32.mrf.mxu0
    %4901 = vmatprep.mubr.f32.mxu0 0.0
    %v4902 = vand.u32 %v3994, 4294901760
    %v4903 = vsub.f32 %v3994, %v4902
    %v4904 = vand.u32 %v4903, 4294901760
    %4905 = vmatmul.mubr.f32.gmra.mxu0 %v4904
    %v4906 = vpop.f32.mrf.mxu0
    %v4907 = vadd.f32 %v4699, %v4906
    %v4908 = vpop.f32.mrf.mxu0
    %4909 = vmatprep.mubr.f32.mxu0 0.0
    %v4910 = vand.u32 %v3995, 4294901760
    %v4911 = vsub.f32 %v3995, %v4910
    %v4912 = vand.u32 %v4911, 4294901760
    %4913 = vmatmul.mubr.f32.gmra.mxu0 %v4912
    %v4914 = vpop.f32.mrf.mxu0
    %v4915 = vadd.f32 %v4706, %v4914
    %v4916 = vpop.f32.mrf.mxu0
    %4917 = vdwg.mxu0
    %4918 = vmatprep.subr.mxu0 0.0
    %v4919 = vand.u32 %v4012, 4294901760
    %v4920 = vsub.f32 %v4012, %v4919
    %v4921 = vand.u32 %v4920, 4294901760
    %4922 = vmatpush1.msra.mxu0 %v4921
    %4923 = vmatprep.subr.mxu0 0.0
    %v4924 = vand.u32 %v4011, 4294901760
    %v4925 = vsub.f32 %v4011, %v4924
    %v4926 = vand.u32 %v4925, 4294901760
    %4927 = vmatpush1.msra.mxu0 %v4926
    %4928 = vmatprep.subr.mxu0 0.0
    %v4929 = vand.u32 %v4010, 4294901760
    %v4930 = vsub.f32 %v4010, %v4929
    %v4931 = vand.u32 %v4930, 4294901760
    %4932 = vmatpush1.msra.mxu0 %v4931
    %4933 = vmatprep.subr.mxu0 0.0
    %v4934 = vand.u32 %v4009, 4294901760
    %v4935 = vsub.f32 %v4009, %v4934
    %v4936 = vand.u32 %v4935, 4294901760
    %4937 = vmatpush1.msra.mxu0 %v4936
    %4938 = vmatprep.subr.mxu0 0.0
    %v4939 = vand.u32 %v4008, 4294901760
    %v4940 = vsub.f32 %v4008, %v4939
    %v4941 = vand.u32 %v4940, 4294901760
    %4942 = vmatpush1.msra.mxu0 %v4941
    %4943 = vmatprep.subr.mxu0 0.0
    %v4944 = vand.u32 %v4007, 4294901760
    %v4945 = vsub.f32 %v4007, %v4944
    %v4946 = vand.u32 %v4945, 4294901760
    %4947 = vmatpush1.msra.mxu0 %v4946
    %4948 = vmatprep.subr.mxu0 0.0
    %v4949 = vand.u32 %v4006, 4294901760
    %v4950 = vsub.f32 %v4006, %v4949
    %v4951 = vand.u32 %v4950, 4294901760
    %4952 = vmatpush1.msra.mxu0 %v4951
    %4953 = vmatprep.subr.mxu0 0.0
    %v4954 = vand.u32 %v4005, 4294901760
    %v4955 = vsub.f32 %v4005, %v4954
    %v4956 = vand.u32 %v4955, 4294901760
    %4957 = vmatpush1.msra.mxu0 %v4956
    %4958 = vmatprep.subr.mxu0 0.0
    %v4959 = vand.u32 %v4004, 4294901760
    %v4960 = vsub.f32 %v4004, %v4959
    %v4961 = vand.u32 %v4960, 4294901760
    %4962 = vmatpush1.msra.mxu0 %v4961
    %4963 = vmatprep.subr.mxu0 0.0
    %v4964 = vand.u32 %v4003, 4294901760
    %v4965 = vsub.f32 %v4003, %v4964
    %v4966 = vand.u32 %v4965, 4294901760
    %4967 = vmatpush1.msra.mxu0 %v4966
    %4968 = vmatprep.subr.mxu0 0.0
    %v4969 = vand.u32 %v4002, 4294901760
    %v4970 = vsub.f32 %v4002, %v4969
    %v4971 = vand.u32 %v4970, 4294901760
    %4972 = vmatpush1.msra.mxu0 %v4971
    %4973 = vmatprep.subr.mxu0 0.0
    %v4974 = vand.u32 %v4001, 4294901760
    %v4975 = vsub.f32 %v4001, %v4974
    %v4976 = vand.u32 %v4975, 4294901760
    %4977 = vmatpush1.msra.mxu0 %v4976
    %4978 = vmatprep.subr.mxu0 0.0
    %v4979 = vand.u32 %v4000, 4294901760
    %v4980 = vsub.f32 %v4000, %v4979
    %v4981 = vand.u32 %v4980, 4294901760
    %4982 = vmatpush1.msra.mxu0 %v4981
    %4983 = vmatprep.subr.mxu0 0.0
    %v4984 = vand.u32 %v3999, 4294901760
    %v4985 = vsub.f32 %v3999, %v4984
    %v4986 = vand.u32 %v4985, 4294901760
    %4987 = vmatpush1.msra.mxu0 %v4986
    %4988 = vmatprep.subr.mxu0 0.0
    %v4989 = vand.u32 %v3998, 4294901760
    %v4990 = vsub.f32 %v3998, %v4989
    %v4991 = vand.u32 %v4990, 4294901760
    %4992 = vmatpush1.msra.mxu0 %v4991
    %4993 = vmatprep.subr.mxu0 0.0
    %v4994 = vand.u32 %v3997, 4294901760
    %v4995 = vsub.f32 %v3997, %v4994
    %v4996 = vand.u32 %v4995, 4294901760
    %4997 = vmatpush1.msra.mxu0 %v4996
    %4998 = vmatprep.subr.mxu0 0.0
    %4999 = vmatpush2.msra.mxu0 0.0
    %5000 = vmatprep.subr.mxu0 0.0
    %5001 = vmatpush2.msra.mxu0 0.0
    %5002 = vmatprep.subr.mxu0 0.0
    %5003 = vmatpush2.msra.mxu0 0.0
    %5004 = vmatprep.subr.mxu0 0.0
    %5005 = vmatpush2.msra.mxu0 0.0
    %5006 = vmatprep.subr.mxu0 0.0
    %5007 = vmatpush2.msra.mxu0 0.0
    %5008 = vmatprep.subr.mxu0 0.0
    %5009 = vmatpush2.msra.mxu0 0.0
    %5010 = vmatprep.subr.mxu0 0.0
    %5011 = vmatpush2.msra.mxu0 0.0
    %5012 = vmatprep.subr.mxu0 0.0
    %5013 = vmatpush2.msra.mxu0 0.0
    %5014 = vmatprep.subr.mxu0 0.0
    %5015 = vmatpush2.msra.mxu0 0.0
    %5016 = vmatprep.subr.mxu0 0.0
    %5017 = vmatpush2.msra.mxu0 0.0
    %5018 = vmatprep.subr.mxu0 0.0
    %5019 = vmatpush2.msra.mxu0 0.0
    %5020 = vmatprep.subr.mxu0 0.0
    %5021 = vmatpush2.msra.mxu0 0.0
    %5022 = vmatprep.subr.mxu0 0.0
    %5023 = vmatpush2.msra.mxu0 0.0
    %5024 = vmatprep.subr.mxu0 0.0
    %5025 = vmatpush2.msra.mxu0 0.0
    %5026 = vmatprep.subr.mxu0 0.0
    %5027 = vmatpush2.msra.mxu0 0.0
    %5028 = vmatprep.subr.mxu0 0.0
    %5029 = vmatpush2.msra.mxu0 0.0
    %5030 = vmatprep.mubr.f32.mxu0 0.0
    %v5031 = vand.u32 %v3980, 4294901760
    %5032 = vmatmul.mubr.f32.gmra.mxu0 %v5031
    %v5033 = vpop.f32.mrf.mxu0
    %v5034 = vadd.f32 %v4795, %v5033
    %v5035 = vpop.f32.mrf.mxu0
    %5036 = vmatprep.mubr.f32.mxu0 0.0
    %v5037 = vand.u32 %v3981, 4294901760
    %5038 = vmatmul.mubr.f32.gmra.mxu0 %v5037
    %v5039 = vpop.f32.mrf.mxu0
    %v5040 = vadd.f32 %v4803, %v5039
    %v5041 = vpop.f32.mrf.mxu0
    %5042 = vmatprep.mubr.f32.mxu0 0.0
    %v5043 = vand.u32 %v3982, 4294901760
    %5044 = vmatmul.mubr.f32.gmra.mxu0 %v5043
    %v5045 = vpop.f32.mrf.mxu0
    %v5046 = vadd.f32 %v4811, %v5045
    %v5047 = vpop.f32.mrf.mxu0
    %5048 = vmatprep.mubr.f32.mxu0 0.0
    %v5049 = vand.u32 %v3983, 4294901760
    %5050 = vmatmul.mubr.f32.gmra.mxu0 %v5049
    %v5051 = vpop.f32.mrf.mxu0
    %v5052 = vadd.f32 %v4819, %v5051
    %v5053 = vpop.f32.mrf.mxu0
    %5054 = vmatprep.mubr.f32.mxu0 0.0
    %v5055 = vand.u32 %v3984, 4294901760
    %5056 = vmatmul.mubr.f32.gmra.mxu0 %v5055
    %v5057 = vpop.f32.mrf.mxu0
    %v5058 = vadd.f32 %v4827, %v5057
    %v5059 = vpop.f32.mrf.mxu0
    %5060 = vmatprep.mubr.f32.mxu0 0.0
    %v5061 = vand.u32 %v3985, 4294901760
    %5062 = vmatmul.mubr.f32.gmra.mxu0 %v5061
    %v5063 = vpop.f32.mrf.mxu0
    %v5064 = vadd.f32 %v4835, %v5063
    %v5065 = vpop.f32.mrf.mxu0
    %5066 = vmatprep.mubr.f32.mxu0 0.0
    %v5067 = vand.u32 %v3986, 4294901760
    %5068 = vmatmul.mubr.f32.gmra.mxu0 %v5067
    %v5069 = vpop.f32.mrf.mxu0
    %v5070 = vadd.f32 %v4843, %v5069
    %v5071 = vpop.f32.mrf.mxu0
    %5072 = vmatprep.mubr.f32.mxu0 0.0
    %v5073 = vand.u32 %v3987, 4294901760
    %5074 = vmatmul.mubr.f32.gmra.mxu0 %v5073
    %v5075 = vpop.f32.mrf.mxu0
    %v5076 = vadd.f32 %v4851, %v5075
    %v5077 = vpop.f32.mrf.mxu0
    %5078 = vmatprep.mubr.f32.mxu0 0.0
    %v5079 = vand.u32 %v3988, 4294901760
    %5080 = vmatmul.mubr.f32.gmra.mxu0 %v5079
    %v5081 = vpop.f32.mrf.mxu0
    %v5082 = vadd.f32 %v4859, %v5081
    %v5083 = vpop.f32.mrf.mxu0
    %5084 = vmatprep.mubr.f32.mxu0 0.0
    %v5085 = vand.u32 %v3989, 4294901760
    %5086 = vmatmul.mubr.f32.gmra.mxu0 %v5085
    %v5087 = vpop.f32.mrf.mxu0
    %v5088 = vadd.f32 %v4867, %v5087
    %v5089 = vpop.f32.mrf.mxu0
    %5090 = vmatprep.mubr.f32.mxu0 0.0
    %v5091 = vand.u32 %v3990, 4294901760
    %5092 = vmatmul.mubr.f32.gmra.mxu0 %v5091
    %v5093 = vpop.f32.mrf.mxu0
    %v5094 = vadd.f32 %v4875, %v5093
    %v5095 = vpop.f32.mrf.mxu0
    %5096 = vmatprep.mubr.f32.mxu0 0.0
    %v5097 = vand.u32 %v3991, 4294901760
    %5098 = vmatmul.mubr.f32.gmra.mxu0 %v5097
    %v5099 = vpop.f32.mrf.mxu0
    %v5100 = vadd.f32 %v4883, %v5099
    %v5101 = vpop.f32.mrf.mxu0
    %5102 = vmatprep.mubr.f32.mxu0 0.0
    %v5103 = vand.u32 %v3992, 4294901760
    %5104 = vmatmul.mubr.f32.gmra.mxu0 %v5103
    %v5105 = vpop.f32.mrf.mxu0
    %v5106 = vadd.f32 %v4891, %v5105
    %v5107 = vpop.f32.mrf.mxu0
    %5108 = vmatprep.mubr.f32.mxu0 0.0
    %v5109 = vand.u32 %v3993, 4294901760
    %5110 = vmatmul.mubr.f32.gmra.mxu0 %v5109
    %v5111 = vpop.f32.mrf.mxu0
    %v5112 = vadd.f32 %v4899, %v5111
    %v5113 = vpop.f32.mrf.mxu0
    %5114 = vmatprep.mubr.f32.mxu0 0.0
    %v5115 = vand.u32 %v3994, 4294901760
    %5116 = vmatmul.mubr.f32.gmra.mxu0 %v5115
    %v5117 = vpop.f32.mrf.mxu0
    %v5118 = vadd.f32 %v4907, %v5117
    %v5119 = vpop.f32.mrf.mxu0
    %5120 = vmatprep.mubr.f32.mxu0 0.0
    %v5121 = vand.u32 %v3995, 4294901760
    %5122 = vmatmul.mubr.f32.gmra.mxu0 %v5121
    %v5123 = vpop.f32.mrf.mxu0
    %v5124 = vadd.f32 %v4915, %v5123
    %v5125 = vpop.f32.mrf.mxu0
    %5126 = vdwg.mxu0
    %5127 = vmatprep.subr.mxu0 0.0
    %v5128 = vand.u32 %v4012, 4294901760
    %5129 = vmatpush1.msra.mxu0 %v5128
    %5130 = vmatprep.subr.mxu0 0.0
    %v5131 = vand.u32 %v4011, 4294901760
    %5132 = vmatpush1.msra.mxu0 %v5131
    %5133 = vmatprep.subr.mxu0 0.0
    %v5134 = vand.u32 %v4010, 4294901760
    %5135 = vmatpush1.msra.mxu0 %v5134
    %5136 = vmatprep.subr.mxu0 0.0
    %v5137 = vand.u32 %v4009, 4294901760
    %5138 = vmatpush1.msra.mxu0 %v5137
    %5139 = vmatprep.subr.mxu0 0.0
    %v5140 = vand.u32 %v4008, 4294901760
    %5141 = vmatpush1.msra.mxu0 %v5140
    %5142 = vmatprep.subr.mxu0 0.0
    %v5143 = vand.u32 %v4007, 4294901760
    %5144 = vmatpush1.msra.mxu0 %v5143
    %5145 = vmatprep.subr.mxu0 0.0
    %v5146 = vand.u32 %v4006, 4294901760
    %5147 = vmatpush1.msra.mxu0 %v5146
    %5148 = vmatprep.subr.mxu0 0.0
    %v5149 = vand.u32 %v4005, 4294901760
    %5150 = vmatpush1.msra.mxu0 %v5149
    %5151 = vmatprep.subr.mxu0 0.0
    %v5152 = vand.u32 %v4004, 4294901760
    %5153 = vmatpush1.msra.mxu0 %v5152
    %5154 = vmatprep.subr.mxu0 0.0
    %v5155 = vand.u32 %v4003, 4294901760
    %5156 = vmatpush1.msra.mxu0 %v5155
    %5157 = vmatprep.subr.mxu0 0.0
    %v5158 = vand.u32 %v4002, 4294901760
    %5159 = vmatpush1.msra.mxu0 %v5158
    %5160 = vmatprep.subr.mxu0 0.0
    %v5161 = vand.u32 %v4001, 4294901760
    %5162 = vmatpush1.msra.mxu0 %v5161
    %5163 = vmatprep.subr.mxu0 0.0
    %v5164 = vand.u32 %v4000, 4294901760
    %5165 = vmatpush1.msra.mxu0 %v5164
    %5166 = vmatprep.subr.mxu0 0.0
    %v5167 = vand.u32 %v3999, 4294901760
    %5168 = vmatpush1.msra.mxu0 %v5167
    %5169 = vmatprep.subr.mxu0 0.0
    %v5170 = vand.u32 %v3998, 4294901760
    %5171 = vmatpush1.msra.mxu0 %v5170
    %5172 = vmatprep.subr.mxu0 0.0
    %v5173 = vand.u32 %v3997, 4294901760
    %5174 = vmatpush1.msra.mxu0 %v5173
    %5175 = vmatprep.subr.mxu0 0.0
    %5176 = vmatpush2.msra.mxu0 0.0
    %5177 = vmatprep.subr.mxu0 0.0
    %5178 = vmatpush2.msra.mxu0 0.0
    %5179 = vmatprep.subr.mxu0 0.0
    %5180 = vmatpush2.msra.mxu0 0.0
    %5181 = vmatprep.subr.mxu0 0.0
    %5182 = vmatpush2.msra.mxu0 0.0
    %5183 = vmatprep.subr.mxu0 0.0
    %5184 = vmatpush2.msra.mxu0 0.0
    %5185 = vmatprep.subr.mxu0 0.0
    %5186 = vmatpush2.msra.mxu0 0.0
    %5187 = vmatprep.subr.mxu0 0.0
    %5188 = vmatpush2.msra.mxu0 0.0
    %5189 = vmatprep.subr.mxu0 0.0
    %5190 = vmatpush2.msra.mxu0 0.0
    %5191 = vmatprep.subr.mxu0 0.0
    %5192 = vmatpush2.msra.mxu0 0.0
    %5193 = vmatprep.subr.mxu0 0.0
    %5194 = vmatpush2.msra.mxu0 0.0
    %5195 = vmatprep.subr.mxu0 0.0
    %5196 = vmatpush2.msra.mxu0 0.0
    %5197 = vmatprep.subr.mxu0 0.0
    %5198 = vmatpush2.msra.mxu0 0.0
    %5199 = vmatprep.subr.mxu0 0.0
    %5200 = vmatpush2.msra.mxu0 0.0
    %5201 = vmatprep.subr.mxu0 0.0
    %5202 = vmatpush2.msra.mxu0 0.0
    %5203 = vmatprep.subr.mxu0 0.0
    %5204 = vmatpush2.msra.mxu0 0.0
    %5205 = vmatprep.subr.mxu0 0.0
    %5206 = vmatpush2.msra.mxu0 0.0
    %5207 = vmatprep.mubr.f32.mxu0 0.0
    %v5208 = vand.u32 %v3980, 4294901760
    %5209 = vmatmul.mubr.f32.gmra.mxu0 %v5208
    %v5210 = vpop.f32.mrf.mxu0
    %v5211 = vadd.f32 %v5034, %v5210
    %v5212 = vpop.f32.mrf.mxu0
    %5213 = vmatprep.mubr.f32.mxu0 0.0
    %v5214 = vand.u32 %v3981, 4294901760
    %5215 = vmatmul.mubr.f32.gmra.mxu0 %v5214
    %v5216 = vpop.f32.mrf.mxu0
    %v5217 = vadd.f32 %v5040, %v5216
    %v5218 = vpop.f32.mrf.mxu0
    %5219 = vmatprep.mubr.f32.mxu0 0.0
    %v5220 = vand.u32 %v3982, 4294901760
    %5221 = vmatmul.mubr.f32.gmra.mxu0 %v5220
    %v5222 = vpop.f32.mrf.mxu0
    %v5223 = vadd.f32 %v5046, %v5222
    %v5224 = vpop.f32.mrf.mxu0
    %5225 = vmatprep.mubr.f32.mxu0 0.0
    %v5226 = vand.u32 %v3983, 4294901760
    %5227 = vmatmul.mubr.f32.gmra.mxu0 %v5226
    %v5228 = vpop.f32.mrf.mxu0
    %v5229 = vadd.f32 %v5052, %v5228
    %v5230 = vpop.f32.mrf.mxu0
    %5231 = vmatprep.mubr.f32.mxu0 0.0
    %v5232 = vand.u32 %v3984, 4294901760
    %5233 = vmatmul.mubr.f32.gmra.mxu0 %v5232
    %v5234 = vpop.f32.mrf.mxu0
    %v5235 = vadd.f32 %v5058, %v5234
    %v5236 = vpop.f32.mrf.mxu0
    %5237 = vmatprep.mubr.f32.mxu0 0.0
    %v5238 = vand.u32 %v3985, 4294901760
    %5239 = vmatmul.mubr.f32.gmra.mxu0 %v5238
    %v5240 = vpop.f32.mrf.mxu0
    %v5241 = vadd.f32 %v5064, %v5240
    %v5242 = vpop.f32.mrf.mxu0
    %5243 = vmatprep.mubr.f32.mxu0 0.0
    %v5244 = vand.u32 %v3986, 4294901760
    %5245 = vmatmul.mubr.f32.gmra.mxu0 %v5244
    %v5246 = vpop.f32.mrf.mxu0
    %v5247 = vadd.f32 %v5070, %v5246
    %v5248 = vpop.f32.mrf.mxu0
    %5249 = vmatprep.mubr.f32.mxu0 0.0
    %v5250 = vand.u32 %v3987, 4294901760
    %5251 = vmatmul.mubr.f32.gmra.mxu0 %v5250
    %v5252 = vpop.f32.mrf.mxu0
    %v5253 = vadd.f32 %v5076, %v5252
    %v5254 = vpop.f32.mrf.mxu0
    %5255 = vmatprep.mubr.f32.mxu0 0.0
    %v5256 = vand.u32 %v3988, 4294901760
    %5257 = vmatmul.mubr.f32.gmra.mxu0 %v5256
    %v5258 = vpop.f32.mrf.mxu0
    %v5259 = vadd.f32 %v5082, %v5258
    %v5260 = vpop.f32.mrf.mxu0
    %5261 = vmatprep.mubr.f32.mxu0 0.0
    %v5262 = vand.u32 %v3989, 4294901760
    %5263 = vmatmul.mubr.f32.gmra.mxu0 %v5262
    %v5264 = vpop.f32.mrf.mxu0
    %v5265 = vadd.f32 %v5088, %v5264
    %v5266 = vpop.f32.mrf.mxu0
    %5267 = vmatprep.mubr.f32.mxu0 0.0
    %v5268 = vand.u32 %v3990, 4294901760
    %5269 = vmatmul.mubr.f32.gmra.mxu0 %v5268
    %v5270 = vpop.f32.mrf.mxu0
    %v5271 = vadd.f32 %v5094, %v5270
    %v5272 = vpop.f32.mrf.mxu0
    %5273 = vmatprep.mubr.f32.mxu0 0.0
    %v5274 = vand.u32 %v3991, 4294901760
    %5275 = vmatmul.mubr.f32.gmra.mxu0 %v5274
    %v5276 = vpop.f32.mrf.mxu0
    %v5277 = vadd.f32 %v5100, %v5276
    %v5278 = vpop.f32.mrf.mxu0
    %5279 = vmatprep.mubr.f32.mxu0 0.0
    %v5280 = vand.u32 %v3992, 4294901760
    %5281 = vmatmul.mubr.f32.gmra.mxu0 %v5280
    %v5282 = vpop.f32.mrf.mxu0
    %v5283 = vadd.f32 %v5106, %v5282
    %v5284 = vpop.f32.mrf.mxu0
    %5285 = vmatprep.mubr.f32.mxu0 0.0
    %v5286 = vand.u32 %v3993, 4294901760
    %5287 = vmatmul.mubr.f32.gmra.mxu0 %v5286
    %v5288 = vpop.f32.mrf.mxu0
    %v5289 = vadd.f32 %v5112, %v5288
    %v5290 = vpop.f32.mrf.mxu0
    %5291 = vmatprep.mubr.f32.mxu0 0.0
    %v5292 = vand.u32 %v3994, 4294901760
    %5293 = vmatmul.mubr.f32.gmra.mxu0 %v5292
    %v5294 = vpop.f32.mrf.mxu0
    %v5295 = vadd.f32 %v5118, %v5294
    %v5296 = vpop.f32.mrf.mxu0
    %5297 = vmatprep.mubr.f32.mxu0 0.0
    %v5298 = vand.u32 %v3995, 4294901760
    %5299 = vmatmul.mubr.f32.gmra.mxu0 %v5298
    %v5300 = vpop.f32.mrf.mxu0
    %v5301 = vadd.f32 %v5124, %v5300
    %v5302 = vpop.f32.mrf.mxu0
    %5303 = vdwg.mxu0
    %v5304 = vmax.f32 %v5211, 0.0
    %v5305 = vmax.f32 %v5217, 0.0
    %v5306 = vmax.f32 %v5223, 0.0
    %v5307 = vmax.f32 %v5229, 0.0
    %v5308 = vmax.f32 %v5235, 0.0
    %v5309 = vmax.f32 %v5241, 0.0
    %v5310 = vmax.f32 %v5247, 0.0
    %v5311 = vmax.f32 %v5253, 0.0
    %v5312 = vmax.f32 %v5259, 0.0
    %v5313 = vmax.f32 %v5265, 0.0
    %v5314 = vmax.f32 %v5271, 0.0
    %v5315 = vmax.f32 %v5277, 0.0
    %v5316 = vmax.f32 %v5283, 0.0
    %v5317 = vmax.f32 %v5289, 0.0
    %v5318 = vmax.f32 %v5295, 0.0
    %v5319 = vmax.f32 %v5301, 0.0
    %s5320 = scalar_lea.vmem [#allocation2], 384
    %v5321 = vld [vmem:[%s5320] sm:$0xff]
    %v5322 = vld [vmem:[%s5320 + $0x8] sm:$0xff]
    %v5323 = vld [vmem:[%s5320 + $0x10] sm:$0xff]
    %v5324 = vld [vmem:[%s5320 + $0x18] sm:$0xff]
    %v5325 = vld [vmem:[%s5320 + $0x20] sm:$0xff]
    %v5326 = vld [vmem:[%s5320 + $0x28] sm:$0xff]
    %v5327 = vld [vmem:[%s5320 + $0x30] sm:$0xff]
    %v5328 = vld [vmem:[%s5320 + $0x38] sm:$0xff]
    %v5329 = vld [vmem:[%s5320 + $0x40] sm:$0xff]
    %v5330 = vld [vmem:[%s5320 + $0x48] sm:$0xff]
    %v5331 = vld [vmem:[%s5320 + $0x50] sm:$0xff]
    %v5332 = vld [vmem:[%s5320 + $0x58] sm:$0xff]
    %v5333 = vld [vmem:[%s5320 + $0x60] sm:$0xff]
    %v5334 = vld [vmem:[%s5320 + $0x68] sm:$0xff]
    %v5335 = vld [vmem:[%s5320 + $0x70] sm:$0xff]
    %v5336 = vld [vmem:[%s5320 + $0x78] sm:$0xff]
    %v5337 = vld [vmem:[%s2 + $0x4] sm:$0x1]
    %v5338 = vlaneseq
    %v5339 = vshrl.u32 %v5338, 7
    %v5340 = vsub.s32 0, %v5339
    %v5341 = vrot.slane %v5337, %v5340
    %5342 = vmatprep.subr.mxu0 0.0
    %v5343 = vand.u32 %v5336, 4294901760
    %5344 = vmatpush1.msra.mxu0 %v5343
    %5345 = vmatprep.subr.mxu0 0.0
    %v5346 = vand.u32 %v5335, 4294901760
    %5347 = vmatpush1.msra.mxu0 %v5346
    %5348 = vmatprep.subr.mxu0 0.0
    %v5349 = vand.u32 %v5334, 4294901760
    %5350 = vmatpush1.msra.mxu0 %v5349
    %5351 = vmatprep.subr.mxu0 0.0
    %v5352 = vand.u32 %v5333, 4294901760
    %5353 = vmatpush1.msra.mxu0 %v5352
    %5354 = vmatprep.subr.mxu0 0.0
    %v5355 = vand.u32 %v5332, 4294901760
    %5356 = vmatpush1.msra.mxu0 %v5355
    %5357 = vmatprep.subr.mxu0 0.0
    %v5358 = vand.u32 %v5331, 4294901760
    %5359 = vmatpush1.msra.mxu0 %v5358
    %5360 = vmatprep.subr.mxu0 0.0
    %v5361 = vand.u32 %v5330, 4294901760
    %5362 = vmatpush1.msra.mxu0 %v5361
    %5363 = vmatprep.subr.mxu0 0.0
    %v5364 = vand.u32 %v5329, 4294901760
    %5365 = vmatpush1.msra.mxu0 %v5364
    %5366 = vmatprep.subr.mxu0 0.0
    %v5367 = vand.u32 %v5328, 4294901760
    %5368 = vmatpush1.msra.mxu0 %v5367
    %5369 = vmatprep.subr.mxu0 0.0
    %v5370 = vand.u32 %v5327, 4294901760
    %5371 = vmatpush1.msra.mxu0 %v5370
    %5372 = vmatprep.subr.mxu0 0.0
    %v5373 = vand.u32 %v5326, 4294901760
    %5374 = vmatpush1.msra.mxu0 %v5373
    %5375 = vmatprep.subr.mxu0 0.0
    %v5376 = vand.u32 %v5325, 4294901760
    %5377 = vmatpush1.msra.mxu0 %v5376
    %5378 = vmatprep.subr.mxu0 0.0
    %v5379 = vand.u32 %v5324, 4294901760
    %5380 = vmatpush1.msra.mxu0 %v5379
    %5381 = vmatprep.subr.mxu0 0.0
    %v5382 = vand.u32 %v5323, 4294901760
    %5383 = vmatpush1.msra.mxu0 %v5382
    %5384 = vmatprep.subr.mxu0 0.0
    %v5385 = vand.u32 %v5322, 4294901760
    %5386 = vmatpush1.msra.mxu0 %v5385
    %5387 = vmatprep.subr.mxu0 0.0
    %v5388 = vand.u32 %v5321, 4294901760
    %5389 = vmatpush1.msra.mxu0 %v5388
    %5390 = vmatprep.subr.mxu0 0.0
    %5391 = vmatpush2.msra.mxu0 0.0
    %5392 = vmatprep.subr.mxu0 0.0
    %5393 = vmatpush2.msra.mxu0 0.0
    %5394 = vmatprep.subr.mxu0 0.0
    %5395 = vmatpush2.msra.mxu0 0.0
    %5396 = vmatprep.subr.mxu0 0.0
    %5397 = vmatpush2.msra.mxu0 0.0
    %5398 = vmatprep.subr.mxu0 0.0
    %5399 = vmatpush2.msra.mxu0 0.0
    %5400 = vmatprep.subr.mxu0 0.0
    %5401 = vmatpush2.msra.mxu0 0.0
    %5402 = vmatprep.subr.mxu0 0.0
    %5403 = vmatpush2.msra.mxu0 0.0
    %5404 = vmatprep.subr.mxu0 0.0
    %5405 = vmatpush2.msra.mxu0 0.0
    %5406 = vmatprep.subr.mxu0 0.0
    %5407 = vmatpush2.msra.mxu0 0.0
    %5408 = vmatprep.subr.mxu0 0.0
    %5409 = vmatpush2.msra.mxu0 0.0
    %5410 = vmatprep.subr.mxu0 0.0
    %5411 = vmatpush2.msra.mxu0 0.0
    %5412 = vmatprep.subr.mxu0 0.0
    %5413 = vmatpush2.msra.mxu0 0.0
    %5414 = vmatprep.subr.mxu0 0.0
    %5415 = vmatpush2.msra.mxu0 0.0
    %5416 = vmatprep.subr.mxu0 0.0
    %5417 = vmatpush2.msra.mxu0 0.0
    %5418 = vmatprep.subr.mxu0 0.0
    %5419 = vmatpush2.msra.mxu0 0.0
    %5420 = vmatprep.subr.mxu0 0.0
    %5421 = vmatpush2.msra.mxu0 0.0
    %5422 = vmatprep.mubr.f32.mxu0 0.0
    %v5423 = vand.u32 %v5304, 4294901760
    %v5424 = vsub.f32 %v5304, %v5423
    %v5425 = vand.u32 %v5424, 4294901760
    %v5426 = vsub.f32 %v5424, %v5425
    %v5427 = vand.u32 %v5426, 4294901760
    %5428 = vmatmul.mubr.f32.gmra.mxu0 %v5427
    %v5429 = vpop.f32.mrf.mxu0
    %v5430 = vadd.f32 %v5341, %v5429
    %v5431 = vpop.f32.mrf.mxu0
    %5432 = vmatprep.mubr.f32.mxu0 0.0
    %v5433 = vand.u32 %v5305, 4294901760
    %v5434 = vsub.f32 %v5305, %v5433
    %v5435 = vand.u32 %v5434, 4294901760
    %v5436 = vsub.f32 %v5434, %v5435
    %v5437 = vand.u32 %v5436, 4294901760
    %5438 = vmatmul.mubr.f32.gmra.mxu0 %v5437
    %v5439 = vpop.f32.mrf.mxu0
    %v5440 = vadd.f32 %v5341, %v5439
    %v5441 = vpop.f32.mrf.mxu0
    %5442 = vmatprep.mubr.f32.mxu0 0.0
    %v5443 = vand.u32 %v5306, 4294901760
    %v5444 = vsub.f32 %v5306, %v5443
    %v5445 = vand.u32 %v5444, 4294901760
    %v5446 = vsub.f32 %v5444, %v5445
    %v5447 = vand.u32 %v5446, 4294901760
    %5448 = vmatmul.mubr.f32.gmra.mxu0 %v5447
    %v5449 = vpop.f32.mrf.mxu0
    %v5450 = vadd.f32 %v5341, %v5449
    %v5451 = vpop.f32.mrf.mxu0
    %5452 = vmatprep.mubr.f32.mxu0 0.0
    %v5453 = vand.u32 %v5307, 4294901760
    %v5454 = vsub.f32 %v5307, %v5453
    %v5455 = vand.u32 %v5454, 4294901760
    %v5456 = vsub.f32 %v5454, %v5455
    %v5457 = vand.u32 %v5456, 4294901760
    %5458 = vmatmul.mubr.f32.gmra.mxu0 %v5457
    %v5459 = vpop.f32.mrf.mxu0
    %v5460 = vadd.f32 %v5341, %v5459
    %v5461 = vpop.f32.mrf.mxu0
    %5462 = vmatprep.mubr.f32.mxu0 0.0
    %v5463 = vand.u32 %v5308, 4294901760
    %v5464 = vsub.f32 %v5308, %v5463
    %v5465 = vand.u32 %v5464, 4294901760
    %v5466 = vsub.f32 %v5464, %v5465
    %v5467 = vand.u32 %v5466, 4294901760
    %5468 = vmatmul.mubr.f32.gmra.mxu0 %v5467
    %v5469 = vpop.f32.mrf.mxu0
    %v5470 = vadd.f32 %v5341, %v5469
    %v5471 = vpop.f32.mrf.mxu0
    %5472 = vmatprep.mubr.f32.mxu0 0.0
    %v5473 = vand.u32 %v5309, 4294901760
    %v5474 = vsub.f32 %v5309, %v5473
    %v5475 = vand.u32 %v5474, 4294901760
    %v5476 = vsub.f32 %v5474, %v5475
    %v5477 = vand.u32 %v5476, 4294901760
    %5478 = vmatmul.mubr.f32.gmra.mxu0 %v5477
    %v5479 = vpop.f32.mrf.mxu0
    %v5480 = vadd.f32 %v5341, %v5479
    %v5481 = vpop.f32.mrf.mxu0
    %5482 = vmatprep.mubr.f32.mxu0 0.0
    %v5483 = vand.u32 %v5310, 4294901760
    %v5484 = vsub.f32 %v5310, %v5483
    %v5485 = vand.u32 %v5484, 4294901760
    %v5486 = vsub.f32 %v5484, %v5485
    %v5487 = vand.u32 %v5486, 4294901760
    %5488 = vmatmul.mubr.f32.gmra.mxu0 %v5487
    %v5489 = vpop.f32.mrf.mxu0
    %v5490 = vadd.f32 %v5341, %v5489
    %v5491 = vpop.f32.mrf.mxu0
    %5492 = vmatprep.mubr.f32.mxu0 0.0
    %v5493 = vand.u32 %v5311, 4294901760
    %v5494 = vsub.f32 %v5311, %v5493
    %v5495 = vand.u32 %v5494, 4294901760
    %v5496 = vsub.f32 %v5494, %v5495
    %v5497 = vand.u32 %v5496, 4294901760
    %5498 = vmatmul.mubr.f32.gmra.mxu0 %v5497
    %v5499 = vpop.f32.mrf.mxu0
    %v5500 = vadd.f32 %v5341, %v5499
    %v5501 = vpop.f32.mrf.mxu0
    %5502 = vmatprep.mubr.f32.mxu0 0.0
    %v5503 = vand.u32 %v5312, 4294901760
    %v5504 = vsub.f32 %v5312, %v5503
    %v5505 = vand.u32 %v5504, 4294901760
    %v5506 = vsub.f32 %v5504, %v5505
    %v5507 = vand.u32 %v5506, 4294901760
    %5508 = vmatmul.mubr.f32.gmra.mxu0 %v5507
    %v5509 = vpop.f32.mrf.mxu0
    %v5510 = vadd.f32 %v5341, %v5509
    %v5511 = vpop.f32.mrf.mxu0
    %5512 = vmatprep.mubr.f32.mxu0 0.0
    %v5513 = vand.u32 %v5313, 4294901760
    %v5514 = vsub.f32 %v5313, %v5513
    %v5515 = vand.u32 %v5514, 4294901760
    %v5516 = vsub.f32 %v5514, %v5515
    %v5517 = vand.u32 %v5516, 4294901760
    %5518 = vmatmul.mubr.f32.gmra.mxu0 %v5517
    %v5519 = vpop.f32.mrf.mxu0
    %v5520 = vadd.f32 %v5341, %v5519
    %v5521 = vpop.f32.mrf.mxu0
    %5522 = vmatprep.mubr.f32.mxu0 0.0
    %v5523 = vand.u32 %v5314, 4294901760
    %v5524 = vsub.f32 %v5314, %v5523
    %v5525 = vand.u32 %v5524, 4294901760
    %v5526 = vsub.f32 %v5524, %v5525
    %v5527 = vand.u32 %v5526, 4294901760
    %5528 = vmatmul.mubr.f32.gmra.mxu0 %v5527
    %v5529 = vpop.f32.mrf.mxu0
    %v5530 = vadd.f32 %v5341, %v5529
    %v5531 = vpop.f32.mrf.mxu0
    %5532 = vmatprep.mubr.f32.mxu0 0.0
    %v5533 = vand.u32 %v5315, 4294901760
    %v5534 = vsub.f32 %v5315, %v5533
    %v5535 = vand.u32 %v5534, 4294901760
    %v5536 = vsub.f32 %v5534, %v5535
    %v5537 = vand.u32 %v5536, 4294901760
    %5538 = vmatmul.mubr.f32.gmra.mxu0 %v5537
    %v5539 = vpop.f32.mrf.mxu0
    %v5540 = vadd.f32 %v5341, %v5539
    %v5541 = vpop.f32.mrf.mxu0
    %5542 = vmatprep.mubr.f32.mxu0 0.0
    %v5543 = vand.u32 %v5316, 4294901760
    %v5544 = vsub.f32 %v5316, %v5543
    %v5545 = vand.u32 %v5544, 4294901760
    %v5546 = vsub.f32 %v5544, %v5545
    %v5547 = vand.u32 %v5546, 4294901760
    %5548 = vmatmul.mubr.f32.gmra.mxu0 %v5547
    %v5549 = vpop.f32.mrf.mxu0
    %v5550 = vadd.f32 %v5341, %v5549
    %v5551 = vpop.f32.mrf.mxu0
    %5552 = vmatprep.mubr.f32.mxu0 0.0
    %v5553 = vand.u32 %v5317, 4294901760
    %v5554 = vsub.f32 %v5317, %v5553
    %v5555 = vand.u32 %v5554, 4294901760
    %v5556 = vsub.f32 %v5554, %v5555
    %v5557 = vand.u32 %v5556, 4294901760
    %5558 = vmatmul.mubr.f32.gmra.mxu0 %v5557
    %v5559 = vpop.f32.mrf.mxu0
    %v5560 = vadd.f32 %v5341, %v5559
    %v5561 = vpop.f32.mrf.mxu0
    %5562 = vmatprep.mubr.f32.mxu0 0.0
    %v5563 = vand.u32 %v5318, 4294901760
    %v5564 = vsub.f32 %v5318, %v5563
    %v5565 = vand.u32 %v5564, 4294901760
    %v5566 = vsub.f32 %v5564, %v5565
    %v5567 = vand.u32 %v5566, 4294901760
    %5568 = vmatmul.mubr.f32.gmra.mxu0 %v5567
    %v5569 = vpop.f32.mrf.mxu0
    %v5570 = vadd.f32 %v5341, %v5569
    %v5571 = vpop.f32.mrf.mxu0
    %5572 = vmatprep.mubr.f32.mxu0 0.0
    %v5573 = vand.u32 %v5319, 4294901760
    %v5574 = vsub.f32 %v5319, %v5573
    %v5575 = vand.u32 %v5574, 4294901760
    %v5576 = vsub.f32 %v5574, %v5575
    %v5577 = vand.u32 %v5576, 4294901760
    %5578 = vmatmul.mubr.f32.gmra.mxu0 %v5577
    %v5579 = vpop.f32.mrf.mxu0
    %v5580 = vadd.f32 %v5341, %v5579
    %v5581 = vpop.f32.mrf.mxu0
    %5582 = vdwg.mxu0
    %5583 = vmatprep.subr.mxu0 0.0
    %v5584 = vand.u32 %v5336, 4294901760
    %v5585 = vsub.f32 %v5336, %v5584
    %v5586 = vand.u32 %v5585, 4294901760
    %v5587 = vsub.f32 %v5585, %v5586
    %v5588 = vand.u32 %v5587, 4294901760
    %5589 = vmatpush1.msra.mxu0 %v5588
    %5590 = vmatprep.subr.mxu0 0.0
    %v5591 = vand.u32 %v5335, 4294901760
    %v5592 = vsub.f32 %v5335, %v5591
    %v5593 = vand.u32 %v5592, 4294901760
    %v5594 = vsub.f32 %v5592, %v5593
    %v5595 = vand.u32 %v5594, 4294901760
    %5596 = vmatpush1.msra.mxu0 %v5595
    %5597 = vmatprep.subr.mxu0 0.0
    %v5598 = vand.u32 %v5334, 4294901760
    %v5599 = vsub.f32 %v5334, %v5598
    %v5600 = vand.u32 %v5599, 4294901760
    %v5601 = vsub.f32 %v5599, %v5600
    %v5602 = vand.u32 %v5601, 4294901760
    %5603 = vmatpush1.msra.mxu0 %v5602
    %5604 = vmatprep.subr.mxu0 0.0
    %v5605 = vand.u32 %v5333, 4294901760
    %v5606 = vsub.f32 %v5333, %v5605
    %v5607 = vand.u32 %v5606, 4294901760
    %v5608 = vsub.f32 %v5606, %v5607
    %v5609 = vand.u32 %v5608, 4294901760
    %5610 = vmatpush1.msra.mxu0 %v5609
    %5611 = vmatprep.subr.mxu0 0.0
    %v5612 = vand.u32 %v5332, 4294901760
    %v5613 = vsub.f32 %v5332, %v5612
    %v5614 = vand.u32 %v5613, 4294901760
    %v5615 = vsub.f32 %v5613, %v5614
    %v5616 = vand.u32 %v5615, 4294901760
    %5617 = vmatpush1.msra.mxu0 %v5616
    %5618 = vmatprep.subr.mxu0 0.0
    %v5619 = vand.u32 %v5331, 4294901760
    %v5620 = vsub.f32 %v5331, %v5619
    %v5621 = vand.u32 %v5620, 4294901760
    %v5622 = vsub.f32 %v5620, %v5621
    %v5623 = vand.u32 %v5622, 4294901760
    %5624 = vmatpush1.msra.mxu0 %v5623
    %5625 = vmatprep.subr.mxu0 0.0
    %v5626 = vand.u32 %v5330, 4294901760
    %v5627 = vsub.f32 %v5330, %v5626
    %v5628 = vand.u32 %v5627, 4294901760
    %v5629 = vsub.f32 %v5627, %v5628
    %v5630 = vand.u32 %v5629, 4294901760
    %5631 = vmatpush1.msra.mxu0 %v5630
    %5632 = vmatprep.subr.mxu0 0.0
    %v5633 = vand.u32 %v5329, 4294901760
    %v5634 = vsub.f32 %v5329, %v5633
    %v5635 = vand.u32 %v5634, 4294901760
    %v5636 = vsub.f32 %v5634, %v5635
    %v5637 = vand.u32 %v5636, 4294901760
    %5638 = vmatpush1.msra.mxu0 %v5637
    %5639 = vmatprep.subr.mxu0 0.0
    %v5640 = vand.u32 %v5328, 4294901760
    %v5641 = vsub.f32 %v5328, %v5640
    %v5642 = vand.u32 %v5641, 4294901760
    %v5643 = vsub.f32 %v5641, %v5642
    %v5644 = vand.u32 %v5643, 4294901760
    %5645 = vmatpush1.msra.mxu0 %v5644
    %5646 = vmatprep.subr.mxu0 0.0
    %v5647 = vand.u32 %v5327, 4294901760
    %v5648 = vsub.f32 %v5327, %v5647
    %v5649 = vand.u32 %v5648, 4294901760
    %v5650 = vsub.f32 %v5648, %v5649
    %v5651 = vand.u32 %v5650, 4294901760
    %5652 = vmatpush1.msra.mxu0 %v5651
    %5653 = vmatprep.subr.mxu0 0.0
    %v5654 = vand.u32 %v5326, 4294901760
    %v5655 = vsub.f32 %v5326, %v5654
    %v5656 = vand.u32 %v5655, 4294901760
    %v5657 = vsub.f32 %v5655, %v5656
    %v5658 = vand.u32 %v5657, 4294901760
    %5659 = vmatpush1.msra.mxu0 %v5658
    %5660 = vmatprep.subr.mxu0 0.0
    %v5661 = vand.u32 %v5325, 4294901760
    %v5662 = vsub.f32 %v5325, %v5661
    %v5663 = vand.u32 %v5662, 4294901760
    %v5664 = vsub.f32 %v5662, %v5663
    %v5665 = vand.u32 %v5664, 4294901760
    %5666 = vmatpush1.msra.mxu0 %v5665
    %5667 = vmatprep.subr.mxu0 0.0
    %v5668 = vand.u32 %v5324, 4294901760
    %v5669 = vsub.f32 %v5324, %v5668
    %v5670 = vand.u32 %v5669, 4294901760
    %v5671 = vsub.f32 %v5669, %v5670
    %v5672 = vand.u32 %v5671, 4294901760
    %5673 = vmatpush1.msra.mxu0 %v5672
    %5674 = vmatprep.subr.mxu0 0.0
    %v5675 = vand.u32 %v5323, 4294901760
    %v5676 = vsub.f32 %v5323, %v5675
    %v5677 = vand.u32 %v5676, 4294901760
    %v5678 = vsub.f32 %v5676, %v5677
    %v5679 = vand.u32 %v5678, 4294901760
    %5680 = vmatpush1.msra.mxu0 %v5679
    %5681 = vmatprep.subr.mxu0 0.0
    %v5682 = vand.u32 %v5322, 4294901760
    %v5683 = vsub.f32 %v5322, %v5682
    %v5684 = vand.u32 %v5683, 4294901760
    %v5685 = vsub.f32 %v5683, %v5684
    %v5686 = vand.u32 %v5685, 4294901760
    %5687 = vmatpush1.msra.mxu0 %v5686
    %5688 = vmatprep.subr.mxu0 0.0
    %v5689 = vand.u32 %v5321, 4294901760
    %v5690 = vsub.f32 %v5321, %v5689
    %v5691 = vand.u32 %v5690, 4294901760
    %v5692 = vsub.f32 %v5690, %v5691
    %v5693 = vand.u32 %v5692, 4294901760
    %5694 = vmatpush1.msra.mxu0 %v5693
    %5695 = vmatprep.subr.mxu0 0.0
    %5696 = vmatpush2.msra.mxu0 0.0
    %5697 = vmatprep.subr.mxu0 0.0
    %5698 = vmatpush2.msra.mxu0 0.0
    %5699 = vmatprep.subr.mxu0 0.0
    %5700 = vmatpush2.msra.mxu0 0.0
    %5701 = vmatprep.subr.mxu0 0.0
    %5702 = vmatpush2.msra.mxu0 0.0
    %5703 = vmatprep.subr.mxu0 0.0
    %5704 = vmatpush2.msra.mxu0 0.0
    %5705 = vmatprep.subr.mxu0 0.0
    %5706 = vmatpush2.msra.mxu0 0.0
    %5707 = vmatprep.subr.mxu0 0.0
    %5708 = vmatpush2.msra.mxu0 0.0
    %5709 = vmatprep.subr.mxu0 0.0
    %5710 = vmatpush2.msra.mxu0 0.0
    %5711 = vmatprep.subr.mxu0 0.0
    %5712 = vmatpush2.msra.mxu0 0.0
    %5713 = vmatprep.subr.mxu0 0.0
    %5714 = vmatpush2.msra.mxu0 0.0
    %5715 = vmatprep.subr.mxu0 0.0
    %5716 = vmatpush2.msra.mxu0 0.0
    %5717 = vmatprep.subr.mxu0 0.0
    %5718 = vmatpush2.msra.mxu0 0.0
    %5719 = vmatprep.subr.mxu0 0.0
    %5720 = vmatpush2.msra.mxu0 0.0
    %5721 = vmatprep.subr.mxu0 0.0
    %5722 = vmatpush2.msra.mxu0 0.0
    %5723 = vmatprep.subr.mxu0 0.0
    %5724 = vmatpush2.msra.mxu0 0.0
    %5725 = vmatprep.subr.mxu0 0.0
    %5726 = vmatpush2.msra.mxu0 0.0
    %5727 = vmatprep.mubr.f32.mxu0 0.0
    %v5728 = vand.u32 %v5304, 4294901760
    %5729 = vmatmul.mubr.f32.gmra.mxu0 %v5728
    %v5730 = vpop.f32.mrf.mxu0
    %v5731 = vadd.f32 %v5430, %v5730
    %v5732 = vpop.f32.mrf.mxu0
    %5733 = vmatprep.mubr.f32.mxu0 0.0
    %v5734 = vand.u32 %v5305, 4294901760
    %5735 = vmatmul.mubr.f32.gmra.mxu0 %v5734
    %v5736 = vpop.f32.mrf.mxu0
    %v5737 = vadd.f32 %v5440, %v5736
    %v5738 = vpop.f32.mrf.mxu0
    %5739 = vmatprep.mubr.f32.mxu0 0.0
    %v5740 = vand.u32 %v5306, 4294901760
    %5741 = vmatmul.mubr.f32.gmra.mxu0 %v5740
    %v5742 = vpop.f32.mrf.mxu0
    %v5743 = vadd.f32 %v5450, %v5742
    %v5744 = vpop.f32.mrf.mxu0
    %5745 = vmatprep.mubr.f32.mxu0 0.0
    %v5746 = vand.u32 %v5307, 4294901760
    %5747 = vmatmul.mubr.f32.gmra.mxu0 %v5746
    %v5748 = vpop.f32.mrf.mxu0
    %v5749 = vadd.f32 %v5460, %v5748
    %v5750 = vpop.f32.mrf.mxu0
    %5751 = vmatprep.mubr.f32.mxu0 0.0
    %v5752 = vand.u32 %v5308, 4294901760
    %5753 = vmatmul.mubr.f32.gmra.mxu0 %v5752
    %v5754 = vpop.f32.mrf.mxu0
    %v5755 = vadd.f32 %v5470, %v5754
    %v5756 = vpop.f32.mrf.mxu0
    %5757 = vmatprep.mubr.f32.mxu0 0.0
    %v5758 = vand.u32 %v5309, 4294901760
    %5759 = vmatmul.mubr.f32.gmra.mxu0 %v5758
    %v5760 = vpop.f32.mrf.mxu0
    %v5761 = vadd.f32 %v5480, %v5760
    %v5762 = vpop.f32.mrf.mxu0
    %5763 = vmatprep.mubr.f32.mxu0 0.0
    %v5764 = vand.u32 %v5310, 4294901760
    %5765 = vmatmul.mubr.f32.gmra.mxu0 %v5764
    %v5766 = vpop.f32.mrf.mxu0
    %v5767 = vadd.f32 %v5490, %v5766
    %v5768 = vpop.f32.mrf.mxu0
    %5769 = vmatprep.mubr.f32.mxu0 0.0
    %v5770 = vand.u32 %v5311, 4294901760
    %5771 = vmatmul.mubr.f32.gmra.mxu0 %v5770
    %v5772 = vpop.f32.mrf.mxu0
    %v5773 = vadd.f32 %v5500, %v5772
    %v5774 = vpop.f32.mrf.mxu0
    %5775 = vmatprep.mubr.f32.mxu0 0.0
    %v5776 = vand.u32 %v5312, 4294901760
    %5777 = vmatmul.mubr.f32.gmra.mxu0 %v5776
    %v5778 = vpop.f32.mrf.mxu0
    %v5779 = vadd.f32 %v5510, %v5778
    %v5780 = vpop.f32.mrf.mxu0
    %5781 = vmatprep.mubr.f32.mxu0 0.0
    %v5782 = vand.u32 %v5313, 4294901760
    %5783 = vmatmul.mubr.f32.gmra.mxu0 %v5782
    %v5784 = vpop.f32.mrf.mxu0
    %v5785 = vadd.f32 %v5520, %v5784
    %v5786 = vpop.f32.mrf.mxu0
    %5787 = vmatprep.mubr.f32.mxu0 0.0
    %v5788 = vand.u32 %v5314, 4294901760
    %5789 = vmatmul.mubr.f32.gmra.mxu0 %v5788
    %v5790 = vpop.f32.mrf.mxu0
    %v5791 = vadd.f32 %v5530, %v5790
    %v5792 = vpop.f32.mrf.mxu0
    %5793 = vmatprep.mubr.f32.mxu0 0.0
    %v5794 = vand.u32 %v5315, 4294901760
    %5795 = vmatmul.mubr.f32.gmra.mxu0 %v5794
    %v5796 = vpop.f32.mrf.mxu0
    %v5797 = vadd.f32 %v5540, %v5796
    %v5798 = vpop.f32.mrf.mxu0
    %5799 = vmatprep.mubr.f32.mxu0 0.0
    %v5800 = vand.u32 %v5316, 4294901760
    %5801 = vmatmul.mubr.f32.gmra.mxu0 %v5800
    %v5802 = vpop.f32.mrf.mxu0
    %v5803 = vadd.f32 %v5550, %v5802
    %v5804 = vpop.f32.mrf.mxu0
    %5805 = vmatprep.mubr.f32.mxu0 0.0
    %v5806 = vand.u32 %v5317, 4294901760
    %5807 = vmatmul.mubr.f32.gmra.mxu0 %v5806
    %v5808 = vpop.f32.mrf.mxu0
    %v5809 = vadd.f32 %v5560, %v5808
    %v5810 = vpop.f32.mrf.mxu0
    %5811 = vmatprep.mubr.f32.mxu0 0.0
    %v5812 = vand.u32 %v5318, 4294901760
    %5813 = vmatmul.mubr.f32.gmra.mxu0 %v5812
    %v5814 = vpop.f32.mrf.mxu0
    %v5815 = vadd.f32 %v5570, %v5814
    %v5816 = vpop.f32.mrf.mxu0
    %5817 = vmatprep.mubr.f32.mxu0 0.0
    %v5818 = vand.u32 %v5319, 4294901760
    %5819 = vmatmul.mubr.f32.gmra.mxu0 %v5818
    %v5820 = vpop.f32.mrf.mxu0
    %v5821 = vadd.f32 %v5580, %v5820
    %v5822 = vpop.f32.mrf.mxu0
    %5823 = vdwg.mxu0
    %5824 = vmatprep.subr.mxu0 0.0
    %v5825 = vand.u32 %v5336, 4294901760
    %v5826 = vsub.f32 %v5336, %v5825
    %5827 = vmatpush1.msra.mxu0 %v5826
    %5828 = vmatprep.subr.mxu0 0.0
    %v5829 = vand.u32 %v5335, 4294901760
    %v5830 = vsub.f32 %v5335, %v5829
    %5831 = vmatpush1.msra.mxu0 %v5830
    %5832 = vmatprep.subr.mxu0 0.0
    %v5833 = vand.u32 %v5334, 4294901760
    %v5834 = vsub.f32 %v5334, %v5833
    %5835 = vmatpush1.msra.mxu0 %v5834
    %5836 = vmatprep.subr.mxu0 0.0
    %v5837 = vand.u32 %v5333, 4294901760
    %v5838 = vsub.f32 %v5333, %v5837
    %5839 = vmatpush1.msra.mxu0 %v5838
    %5840 = vmatprep.subr.mxu0 0.0
    %v5841 = vand.u32 %v5332, 4294901760
    %v5842 = vsub.f32 %v5332, %v5841
    %5843 = vmatpush1.msra.mxu0 %v5842
    %5844 = vmatprep.subr.mxu0 0.0
    %v5845 = vand.u32 %v5331, 4294901760
    %v5846 = vsub.f32 %v5331, %v5845
    %5847 = vmatpush1.msra.mxu0 %v5846
    %5848 = vmatprep.subr.mxu0 0.0
    %v5849 = vand.u32 %v5330, 4294901760
    %v5850 = vsub.f32 %v5330, %v5849
    %5851 = vmatpush1.msra.mxu0 %v5850
    %5852 = vmatprep.subr.mxu0 0.0
    %v5853 = vand.u32 %v5329, 4294901760
    %v5854 = vsub.f32 %v5329, %v5853
    %5855 = vmatpush1.msra.mxu0 %v5854
    %5856 = vmatprep.subr.mxu0 0.0
    %v5857 = vand.u32 %v5328, 4294901760
    %v5858 = vsub.f32 %v5328, %v5857
    %5859 = vmatpush1.msra.mxu0 %v5858
    %5860 = vmatprep.subr.mxu0 0.0
    %v5861 = vand.u32 %v5327, 4294901760
    %v5862 = vsub.f32 %v5327, %v5861
    %5863 = vmatpush1.msra.mxu0 %v5862
    %5864 = vmatprep.subr.mxu0 0.0
    %v5865 = vand.u32 %v5326, 4294901760
    %v5866 = vsub.f32 %v5326, %v5865
    %5867 = vmatpush1.msra.mxu0 %v5866
    %5868 = vmatprep.subr.mxu0 0.0
    %v5869 = vand.u32 %v5325, 4294901760
    %v5870 = vsub.f32 %v5325, %v5869
    %5871 = vmatpush1.msra.mxu0 %v5870
    %5872 = vmatprep.subr.mxu0 0.0
    %v5873 = vand.u32 %v5324, 4294901760
    %v5874 = vsub.f32 %v5324, %v5873
    %5875 = vmatpush1.msra.mxu0 %v5874
    %5876 = vmatprep.subr.mxu0 0.0
    %v5877 = vand.u32 %v5323, 4294901760
    %v5878 = vsub.f32 %v5323, %v5877
    %5879 = vmatpush1.msra.mxu0 %v5878
    %5880 = vmatprep.subr.mxu0 0.0
    %v5881 = vand.u32 %v5322, 4294901760
    %v5882 = vsub.f32 %v5322, %v5881
    %5883 = vmatpush1.msra.mxu0 %v5882
    %5884 = vmatprep.subr.mxu0 0.0
    %v5885 = vand.u32 %v5321, 4294901760
    %v5886 = vsub.f32 %v5321, %v5885
    %5887 = vmatpush1.msra.mxu0 %v5886
    %5888 = vmatprep.subr.mxu0 0.0
    %5889 = vmatpush2.msra.mxu0 0.0
    %5890 = vmatprep.subr.mxu0 0.0
    %5891 = vmatpush2.msra.mxu0 0.0
    %5892 = vmatprep.subr.mxu0 0.0
    %5893 = vmatpush2.msra.mxu0 0.0
    %5894 = vmatprep.subr.mxu0 0.0
    %5895 = vmatpush2.msra.mxu0 0.0
    %5896 = vmatprep.subr.mxu0 0.0
    %5897 = vmatpush2.msra.mxu0 0.0
    %5898 = vmatprep.subr.mxu0 0.0
    %5899 = vmatpush2.msra.mxu0 0.0
    %5900 = vmatprep.subr.mxu0 0.0
    %5901 = vmatpush2.msra.mxu0 0.0
    %5902 = vmatprep.subr.mxu0 0.0
    %5903 = vmatpush2.msra.mxu0 0.0
    %5904 = vmatprep.subr.mxu0 0.0
    %5905 = vmatpush2.msra.mxu0 0.0
    %5906 = vmatprep.subr.mxu0 0.0
    %5907 = vmatpush2.msra.mxu0 0.0
    %5908 = vmatprep.subr.mxu0 0.0
    %5909 = vmatpush2.msra.mxu0 0.0
    %5910 = vmatprep.subr.mxu0 0.0
    %5911 = vmatpush2.msra.mxu0 0.0
    %5912 = vmatprep.subr.mxu0 0.0
    %5913 = vmatpush2.msra.mxu0 0.0
    %5914 = vmatprep.subr.mxu0 0.0
    %5915 = vmatpush2.msra.mxu0 0.0
    %5916 = vmatprep.subr.mxu0 0.0
    %5917 = vmatpush2.msra.mxu0 0.0
    %5918 = vmatprep.subr.mxu0 0.0
    %5919 = vmatpush2.msra.mxu0 0.0
    %5920 = vmatprep.mubr.f32.mxu0 0.0
    %v5921 = vand.u32 %v5304, 4294901760
    %v5922 = vsub.f32 %v5304, %v5921
    %5923 = vmatmul.mubr.f32.gmra.mxu0 %v5922
    %v5924 = vpop.f32.mrf.mxu0
    %v5925 = vadd.f32 %v5731, %v5924
    %v5926 = vpop.f32.mrf.mxu0
    %5927 = vmatprep.mubr.f32.mxu0 0.0
    %v5928 = vand.u32 %v5305, 4294901760
    %v5929 = vsub.f32 %v5305, %v5928
    %5930 = vmatmul.mubr.f32.gmra.mxu0 %v5929
    %v5931 = vpop.f32.mrf.mxu0
    %v5932 = vadd.f32 %v5737, %v5931
    %v5933 = vpop.f32.mrf.mxu0
    %5934 = vmatprep.mubr.f32.mxu0 0.0
    %v5935 = vand.u32 %v5306, 4294901760
    %v5936 = vsub.f32 %v5306, %v5935
    %5937 = vmatmul.mubr.f32.gmra.mxu0 %v5936
    %v5938 = vpop.f32.mrf.mxu0
    %v5939 = vadd.f32 %v5743, %v5938
    %v5940 = vpop.f32.mrf.mxu0
    %5941 = vmatprep.mubr.f32.mxu0 0.0
    %v5942 = vand.u32 %v5307, 4294901760
    %v5943 = vsub.f32 %v5307, %v5942
    %5944 = vmatmul.mubr.f32.gmra.mxu0 %v5943
    %v5945 = vpop.f32.mrf.mxu0
    %v5946 = vadd.f32 %v5749, %v5945
    %v5947 = vpop.f32.mrf.mxu0
    %5948 = vmatprep.mubr.f32.mxu0 0.0
    %v5949 = vand.u32 %v5308, 4294901760
    %v5950 = vsub.f32 %v5308, %v5949
    %5951 = vmatmul.mubr.f32.gmra.mxu0 %v5950
    %v5952 = vpop.f32.mrf.mxu0
    %v5953 = vadd.f32 %v5755, %v5952
    %v5954 = vpop.f32.mrf.mxu0
    %5955 = vmatprep.mubr.f32.mxu0 0.0
    %v5956 = vand.u32 %v5309, 4294901760
    %v5957 = vsub.f32 %v5309, %v5956
    %5958 = vmatmul.mubr.f32.gmra.mxu0 %v5957
    %v5959 = vpop.f32.mrf.mxu0
    %v5960 = vadd.f32 %v5761, %v5959
    %v5961 = vpop.f32.mrf.mxu0
    %5962 = vmatprep.mubr.f32.mxu0 0.0
    %v5963 = vand.u32 %v5310, 4294901760
    %v5964 = vsub.f32 %v5310, %v5963
    %5965 = vmatmul.mubr.f32.gmra.mxu0 %v5964
    %v5966 = vpop.f32.mrf.mxu0
    %v5967 = vadd.f32 %v5767, %v5966
    %v5968 = vpop.f32.mrf.mxu0
    %5969 = vmatprep.mubr.f32.mxu0 0.0
    %v5970 = vand.u32 %v5311, 4294901760
    %v5971 = vsub.f32 %v5311, %v5970
    %5972 = vmatmul.mubr.f32.gmra.mxu0 %v5971
    %v5973 = vpop.f32.mrf.mxu0
    %v5974 = vadd.f32 %v5773, %v5973
    %v5975 = vpop.f32.mrf.mxu0
    %5976 = vmatprep.mubr.f32.mxu0 0.0
    %v5977 = vand.u32 %v5312, 4294901760
    %v5978 = vsub.f32 %v5312, %v5977
    %5979 = vmatmul.mubr.f32.gmra.mxu0 %v5978
    %v5980 = vpop.f32.mrf.mxu0
    %v5981 = vadd.f32 %v5779, %v5980
    %v5982 = vpop.f32.mrf.mxu0
    %5983 = vmatprep.mubr.f32.mxu0 0.0
    %v5984 = vand.u32 %v5313, 4294901760
    %v5985 = vsub.f32 %v5313, %v5984
    %5986 = vmatmul.mubr.f32.gmra.mxu0 %v5985
    %v5987 = vpop.f32.mrf.mxu0
    %v5988 = vadd.f32 %v5785, %v5987
    %v5989 = vpop.f32.mrf.mxu0
    %5990 = vmatprep.mubr.f32.mxu0 0.0
    %v5991 = vand.u32 %v5314, 4294901760
    %v5992 = vsub.f32 %v5314, %v5991
    %5993 = vmatmul.mubr.f32.gmra.mxu0 %v5992
    %v5994 = vpop.f32.mrf.mxu0
    %v5995 = vadd.f32 %v5791, %v5994
    %v5996 = vpop.f32.mrf.mxu0
    %5997 = vmatprep.mubr.f32.mxu0 0.0
    %v5998 = vand.u32 %v5315, 4294901760
    %v5999 = vsub.f32 %v5315, %v5998
    %6000 = vmatmul.mubr.f32.gmra.mxu0 %v5999
    %v6001 = vpop.f32.mrf.mxu0
    %v6002 = vadd.f32 %v5797, %v6001
    %v6003 = vpop.f32.mrf.mxu0
    %6004 = vmatprep.mubr.f32.mxu0 0.0
    %v6005 = vand.u32 %v5316, 4294901760
    %v6006 = vsub.f32 %v5316, %v6005
    %6007 = vmatmul.mubr.f32.gmra.mxu0 %v6006
    %v6008 = vpop.f32.mrf.mxu0
    %v6009 = vadd.f32 %v5803, %v6008
    %v6010 = vpop.f32.mrf.mxu0
    %6011 = vmatprep.mubr.f32.mxu0 0.0
    %v6012 = vand.u32 %v5317, 4294901760
    %v6013 = vsub.f32 %v5317, %v6012
    %6014 = vmatmul.mubr.f32.gmra.mxu0 %v6013
    %v6015 = vpop.f32.mrf.mxu0
    %v6016 = vadd.f32 %v5809, %v6015
    %v6017 = vpop.f32.mrf.mxu0
    %6018 = vmatprep.mubr.f32.mxu0 0.0
    %v6019 = vand.u32 %v5318, 4294901760
    %v6020 = vsub.f32 %v5318, %v6019
    %6021 = vmatmul.mubr.f32.gmra.mxu0 %v6020
    %v6022 = vpop.f32.mrf.mxu0
    %v6023 = vadd.f32 %v5815, %v6022
    %v6024 = vpop.f32.mrf.mxu0
    %6025 = vmatprep.mubr.f32.mxu0 0.0
    %v6026 = vand.u32 %v5319, 4294901760
    %v6027 = vsub.f32 %v5319, %v6026
    %6028 = vmatmul.mubr.f32.gmra.mxu0 %v6027
    %v6029 = vpop.f32.mrf.mxu0
    %v6030 = vadd.f32 %v5821, %v6029
    %v6031 = vpop.f32.mrf.mxu0
    %6032 = vdwg.mxu0
    %6033 = vmatprep.subr.mxu0 0.0
    %v6034 = vand.u32 %v5336, 4294901760
    %6035 = vmatpush1.msra.mxu0 %v6034
    %6036 = vmatprep.subr.mxu0 0.0
    %v6037 = vand.u32 %v5335, 4294901760
    %6038 = vmatpush1.msra.mxu0 %v6037
    %6039 = vmatprep.subr.mxu0 0.0
    %v6040 = vand.u32 %v5334, 4294901760
    %6041 = vmatpush1.msra.mxu0 %v6040
    %6042 = vmatprep.subr.mxu0 0.0
    %v6043 = vand.u32 %v5333, 4294901760
    %6044 = vmatpush1.msra.mxu0 %v6043
    %6045 = vmatprep.subr.mxu0 0.0
    %v6046 = vand.u32 %v5332, 4294901760
    %6047 = vmatpush1.msra.mxu0 %v6046
    %6048 = vmatprep.subr.mxu0 0.0
    %v6049 = vand.u32 %v5331, 4294901760
    %6050 = vmatpush1.msra.mxu0 %v6049
    %6051 = vmatprep.subr.mxu0 0.0
    %v6052 = vand.u32 %v5330, 4294901760
    %6053 = vmatpush1.msra.mxu0 %v6052
    %6054 = vmatprep.subr.mxu0 0.0
    %v6055 = vand.u32 %v5329, 4294901760
    %6056 = vmatpush1.msra.mxu0 %v6055
    %6057 = vmatprep.subr.mxu0 0.0
    %v6058 = vand.u32 %v5328, 4294901760
    %6059 = vmatpush1.msra.mxu0 %v6058
    %6060 = vmatprep.subr.mxu0 0.0
    %v6061 = vand.u32 %v5327, 4294901760
    %6062 = vmatpush1.msra.mxu0 %v6061
    %6063 = vmatprep.subr.mxu0 0.0
    %v6064 = vand.u32 %v5326, 4294901760
    %6065 = vmatpush1.msra.mxu0 %v6064
    %6066 = vmatprep.subr.mxu0 0.0
    %v6067 = vand.u32 %v5325, 4294901760
    %6068 = vmatpush1.msra.mxu0 %v6067
    %6069 = vmatprep.subr.mxu0 0.0
    %v6070 = vand.u32 %v5324, 4294901760
    %6071 = vmatpush1.msra.mxu0 %v6070
    %6072 = vmatprep.subr.mxu0 0.0
    %v6073 = vand.u32 %v5323, 4294901760
    %6074 = vmatpush1.msra.mxu0 %v6073
    %6075 = vmatprep.subr.mxu0 0.0
    %v6076 = vand.u32 %v5322, 4294901760
    %6077 = vmatpush1.msra.mxu0 %v6076
    %6078 = vmatprep.subr.mxu0 0.0
    %v6079 = vand.u32 %v5321, 4294901760
    %6080 = vmatpush1.msra.mxu0 %v6079
    %6081 = vmatprep.subr.mxu0 0.0
    %6082 = vmatpush2.msra.mxu0 0.0
    %6083 = vmatprep.subr.mxu0 0.0
    %6084 = vmatpush2.msra.mxu0 0.0
    %6085 = vmatprep.subr.mxu0 0.0
    %6086 = vmatpush2.msra.mxu0 0.0
    %6087 = vmatprep.subr.mxu0 0.0
    %6088 = vmatpush2.msra.mxu0 0.0
    %6089 = vmatprep.subr.mxu0 0.0
    %6090 = vmatpush2.msra.mxu0 0.0
    %6091 = vmatprep.subr.mxu0 0.0
    %6092 = vmatpush2.msra.mxu0 0.0
    %6093 = vmatprep.subr.mxu0 0.0
    %6094 = vmatpush2.msra.mxu0 0.0
    %6095 = vmatprep.subr.mxu0 0.0
    %6096 = vmatpush2.msra.mxu0 0.0
    %6097 = vmatprep.subr.mxu0 0.0
    %6098 = vmatpush2.msra.mxu0 0.0
    %6099 = vmatprep.subr.mxu0 0.0
    %6100 = vmatpush2.msra.mxu0 0.0
    %6101 = vmatprep.subr.mxu0 0.0
    %6102 = vmatpush2.msra.mxu0 0.0
    %6103 = vmatprep.subr.mxu0 0.0
    %6104 = vmatpush2.msra.mxu0 0.0
    %6105 = vmatprep.subr.mxu0 0.0
    %6106 = vmatpush2.msra.mxu0 0.0
    %6107 = vmatprep.subr.mxu0 0.0
    %6108 = vmatpush2.msra.mxu0 0.0
    %6109 = vmatprep.subr.mxu0 0.0
    %6110 = vmatpush2.msra.mxu0 0.0
    %6111 = vmatprep.subr.mxu0 0.0
    %6112 = vmatpush2.msra.mxu0 0.0
    %6113 = vmatprep.mubr.f32.mxu0 0.0
    %v6114 = vand.u32 %v5304, 4294901760
    %v6115 = vsub.f32 %v5304, %v6114
    %v6116 = vand.u32 %v6115, 4294901760
    %6117 = vmatmul.mubr.f32.gmra.mxu0 %v6116
    %v6118 = vpop.f32.mrf.mxu0
    %v6119 = vadd.f32 %v5925, %v6118
    %v6120 = vpop.f32.mrf.mxu0
    %6121 = vmatprep.mubr.f32.mxu0 0.0
    %v6122 = vand.u32 %v5305, 4294901760
    %v6123 = vsub.f32 %v5305, %v6122
    %v6124 = vand.u32 %v6123, 4294901760
    %6125 = vmatmul.mubr.f32.gmra.mxu0 %v6124
    %v6126 = vpop.f32.mrf.mxu0
    %v6127 = vadd.f32 %v5932, %v6126
    %v6128 = vpop.f32.mrf.mxu0
    %6129 = vmatprep.mubr.f32.mxu0 0.0
    %v6130 = vand.u32 %v5306, 4294901760
    %v6131 = vsub.f32 %v5306, %v6130
    %v6132 = vand.u32 %v6131, 4294901760
    %6133 = vmatmul.mubr.f32.gmra.mxu0 %v6132
    %v6134 = vpop.f32.mrf.mxu0
    %v6135 = vadd.f32 %v5939, %v6134
    %v6136 = vpop.f32.mrf.mxu0
    %6137 = vmatprep.mubr.f32.mxu0 0.0
    %v6138 = vand.u32 %v5307, 4294901760
    %v6139 = vsub.f32 %v5307, %v6138
    %v6140 = vand.u32 %v6139, 4294901760
    %6141 = vmatmul.mubr.f32.gmra.mxu0 %v6140
    %v6142 = vpop.f32.mrf.mxu0
    %v6143 = vadd.f32 %v5946, %v6142
    %v6144 = vpop.f32.mrf.mxu0
    %6145 = vmatprep.mubr.f32.mxu0 0.0
    %v6146 = vand.u32 %v5308, 4294901760
    %v6147 = vsub.f32 %v5308, %v6146
    %v6148 = vand.u32 %v6147, 4294901760
    %6149 = vmatmul.mubr.f32.gmra.mxu0 %v6148
    %v6150 = vpop.f32.mrf.mxu0
    %v6151 = vadd.f32 %v5953, %v6150
    %v6152 = vpop.f32.mrf.mxu0
    %6153 = vmatprep.mubr.f32.mxu0 0.0
    %v6154 = vand.u32 %v5309, 4294901760
    %v6155 = vsub.f32 %v5309, %v6154
    %v6156 = vand.u32 %v6155, 4294901760
    %6157 = vmatmul.mubr.f32.gmra.mxu0 %v6156
    %v6158 = vpop.f32.mrf.mxu0
    %v6159 = vadd.f32 %v5960, %v6158
    %v6160 = vpop.f32.mrf.mxu0
    %6161 = vmatprep.mubr.f32.mxu0 0.0
    %v6162 = vand.u32 %v5310, 4294901760
    %v6163 = vsub.f32 %v5310, %v6162
    %v6164 = vand.u32 %v6163, 4294901760
    %6165 = vmatmul.mubr.f32.gmra.mxu0 %v6164
    %v6166 = vpop.f32.mrf.mxu0
    %v6167 = vadd.f32 %v5967, %v6166
    %v6168 = vpop.f32.mrf.mxu0
    %6169 = vmatprep.mubr.f32.mxu0 0.0
    %v6170 = vand.u32 %v5311, 4294901760
    %v6171 = vsub.f32 %v5311, %v6170
    %v6172 = vand.u32 %v6171, 4294901760
    %6173 = vmatmul.mubr.f32.gmra.mxu0 %v6172
    %v6174 = vpop.f32.mrf.mxu0
    %v6175 = vadd.f32 %v5974, %v6174
    %v6176 = vpop.f32.mrf.mxu0
    %6177 = vmatprep.mubr.f32.mxu0 0.0
    %v6178 = vand.u32 %v5312, 4294901760
    %v6179 = vsub.f32 %v5312, %v6178
    %v6180 = vand.u32 %v6179, 4294901760
    %6181 = vmatmul.mubr.f32.gmra.mxu0 %v6180
    %v6182 = vpop.f32.mrf.mxu0
    %v6183 = vadd.f32 %v5981, %v6182
    %v6184 = vpop.f32.mrf.mxu0
    %6185 = vmatprep.mubr.f32.mxu0 0.0
    %v6186 = vand.u32 %v5313, 4294901760
    %v6187 = vsub.f32 %v5313, %v6186
    %v6188 = vand.u32 %v6187, 4294901760
    %6189 = vmatmul.mubr.f32.gmra.mxu0 %v6188
    %v6190 = vpop.f32.mrf.mxu0
    %v6191 = vadd.f32 %v5988, %v6190
    %v6192 = vpop.f32.mrf.mxu0
    %6193 = vmatprep.mubr.f32.mxu0 0.0
    %v6194 = vand.u32 %v5314, 4294901760
    %v6195 = vsub.f32 %v5314, %v6194
    %v6196 = vand.u32 %v6195, 4294901760
    %6197 = vmatmul.mubr.f32.gmra.mxu0 %v6196
    %v6198 = vpop.f32.mrf.mxu0
    %v6199 = vadd.f32 %v5995, %v6198
    %v6200 = vpop.f32.mrf.mxu0
    %6201 = vmatprep.mubr.f32.mxu0 0.0
    %v6202 = vand.u32 %v5315, 4294901760
    %v6203 = vsub.f32 %v5315, %v6202
    %v6204 = vand.u32 %v6203, 4294901760
    %6205 = vmatmul.mubr.f32.gmra.mxu0 %v6204
    %v6206 = vpop.f32.mrf.mxu0
    %v6207 = vadd.f32 %v6002, %v6206
    %v6208 = vpop.f32.mrf.mxu0
    %6209 = vmatprep.mubr.f32.mxu0 0.0
    %v6210 = vand.u32 %v5316, 4294901760
    %v6211 = vsub.f32 %v5316, %v6210
    %v6212 = vand.u32 %v6211, 4294901760
    %6213 = vmatmul.mubr.f32.gmra.mxu0 %v6212
    %v6214 = vpop.f32.mrf.mxu0
    %v6215 = vadd.f32 %v6009, %v6214
    %v6216 = vpop.f32.mrf.mxu0
    %6217 = vmatprep.mubr.f32.mxu0 0.0
    %v6218 = vand.u32 %v5317, 4294901760
    %v6219 = vsub.f32 %v5317, %v6218
    %v6220 = vand.u32 %v6219, 4294901760
    %6221 = vmatmul.mubr.f32.gmra.mxu0 %v6220
    %v6222 = vpop.f32.mrf.mxu0
    %v6223 = vadd.f32 %v6016, %v6222
    %v6224 = vpop.f32.mrf.mxu0
    %6225 = vmatprep.mubr.f32.mxu0 0.0
    %v6226 = vand.u32 %v5318, 4294901760
    %v6227 = vsub.f32 %v5318, %v6226
    %v6228 = vand.u32 %v6227, 4294901760
    %6229 = vmatmul.mubr.f32.gmra.mxu0 %v6228
    %v6230 = vpop.f32.mrf.mxu0
    %v6231 = vadd.f32 %v6023, %v6230
    %v6232 = vpop.f32.mrf.mxu0
    %6233 = vmatprep.mubr.f32.mxu0 0.0
    %v6234 = vand.u32 %v5319, 4294901760
    %v6235 = vsub.f32 %v5319, %v6234
    %v6236 = vand.u32 %v6235, 4294901760
    %6237 = vmatmul.mubr.f32.gmra.mxu0 %v6236
    %v6238 = vpop.f32.mrf.mxu0
    %v6239 = vadd.f32 %v6030, %v6238
    %v6240 = vpop.f32.mrf.mxu0
    %6241 = vdwg.mxu0
    %6242 = vmatprep.subr.mxu0 0.0
    %v6243 = vand.u32 %v5336, 4294901760
    %v6244 = vsub.f32 %v5336, %v6243
    %v6245 = vand.u32 %v6244, 4294901760
    %6246 = vmatpush1.msra.mxu0 %v6245
    %6247 = vmatprep.subr.mxu0 0.0
    %v6248 = vand.u32 %v5335, 4294901760
    %v6249 = vsub.f32 %v5335, %v6248
    %v6250 = vand.u32 %v6249, 4294901760
    %6251 = vmatpush1.msra.mxu0 %v6250
    %6252 = vmatprep.subr.mxu0 0.0
    %v6253 = vand.u32 %v5334, 4294901760
    %v6254 = vsub.f32 %v5334, %v6253
    %v6255 = vand.u32 %v6254, 4294901760
    %6256 = vmatpush1.msra.mxu0 %v6255
    %6257 = vmatprep.subr.mxu0 0.0
    %v6258 = vand.u32 %v5333, 4294901760
    %v6259 = vsub.f32 %v5333, %v6258
    %v6260 = vand.u32 %v6259, 4294901760
    %6261 = vmatpush1.msra.mxu0 %v6260
    %6262 = vmatprep.subr.mxu0 0.0
    %v6263 = vand.u32 %v5332, 4294901760
    %v6264 = vsub.f32 %v5332, %v6263
    %v6265 = vand.u32 %v6264, 4294901760
    %6266 = vmatpush1.msra.mxu0 %v6265
    %6267 = vmatprep.subr.mxu0 0.0
    %v6268 = vand.u32 %v5331, 4294901760
    %v6269 = vsub.f32 %v5331, %v6268
    %v6270 = vand.u32 %v6269, 4294901760
    %6271 = vmatpush1.msra.mxu0 %v6270
    %6272 = vmatprep.subr.mxu0 0.0
    %v6273 = vand.u32 %v5330, 4294901760
    %v6274 = vsub.f32 %v5330, %v6273
    %v6275 = vand.u32 %v6274, 4294901760
    %6276 = vmatpush1.msra.mxu0 %v6275
    %6277 = vmatprep.subr.mxu0 0.0
    %v6278 = vand.u32 %v5329, 4294901760
    %v6279 = vsub.f32 %v5329, %v6278
    %v6280 = vand.u32 %v6279, 4294901760
    %6281 = vmatpush1.msra.mxu0 %v6280
    %6282 = vmatprep.subr.mxu0 0.0
    %v6283 = vand.u32 %v5328, 4294901760
    %v6284 = vsub.f32 %v5328, %v6283
    %v6285 = vand.u32 %v6284, 4294901760
    %6286 = vmatpush1.msra.mxu0 %v6285
    %6287 = vmatprep.subr.mxu0 0.0
    %v6288 = vand.u32 %v5327, 4294901760
    %v6289 = vsub.f32 %v5327, %v6288
    %v6290 = vand.u32 %v6289, 4294901760
    %6291 = vmatpush1.msra.mxu0 %v6290
    %6292 = vmatprep.subr.mxu0 0.0
    %v6293 = vand.u32 %v5326, 4294901760
    %v6294 = vsub.f32 %v5326, %v6293
    %v6295 = vand.u32 %v6294, 4294901760
    %6296 = vmatpush1.msra.mxu0 %v6295
    %6297 = vmatprep.subr.mxu0 0.0
    %v6298 = vand.u32 %v5325, 4294901760
    %v6299 = vsub.f32 %v5325, %v6298
    %v6300 = vand.u32 %v6299, 4294901760
    %6301 = vmatpush1.msra.mxu0 %v6300
    %6302 = vmatprep.subr.mxu0 0.0
    %v6303 = vand.u32 %v5324, 4294901760
    %v6304 = vsub.f32 %v5324, %v6303
    %v6305 = vand.u32 %v6304, 4294901760
    %6306 = vmatpush1.msra.mxu0 %v6305
    %6307 = vmatprep.subr.mxu0 0.0
    %v6308 = vand.u32 %v5323, 4294901760
    %v6309 = vsub.f32 %v5323, %v6308
    %v6310 = vand.u32 %v6309, 4294901760
    %6311 = vmatpush1.msra.mxu0 %v6310
    %6312 = vmatprep.subr.mxu0 0.0
    %v6313 = vand.u32 %v5322, 4294901760
    %v6314 = vsub.f32 %v5322, %v6313
    %v6315 = vand.u32 %v6314, 4294901760
    %6316 = vmatpush1.msra.mxu0 %v6315
    %6317 = vmatprep.subr.mxu0 0.0
    %v6318 = vand.u32 %v5321, 4294901760
    %v6319 = vsub.f32 %v5321, %v6318
    %v6320 = vand.u32 %v6319, 4294901760
    %6321 = vmatpush1.msra.mxu0 %v6320
    %6322 = vmatprep.subr.mxu0 0.0
    %6323 = vmatpush2.msra.mxu0 0.0
    %6324 = vmatprep.subr.mxu0 0.0
    %6325 = vmatpush2.msra.mxu0 0.0
    %6326 = vmatprep.subr.mxu0 0.0
    %6327 = vmatpush2.msra.mxu0 0.0
    %6328 = vmatprep.subr.mxu0 0.0
    %6329 = vmatpush2.msra.mxu0 0.0
    %6330 = vmatprep.subr.mxu0 0.0
    %6331 = vmatpush2.msra.mxu0 0.0
    %6332 = vmatprep.subr.mxu0 0.0
    %6333 = vmatpush2.msra.mxu0 0.0
    %6334 = vmatprep.subr.mxu0 0.0
    %6335 = vmatpush2.msra.mxu0 0.0
    %6336 = vmatprep.subr.mxu0 0.0
    %6337 = vmatpush2.msra.mxu0 0.0
    %6338 = vmatprep.subr.mxu0 0.0
    %6339 = vmatpush2.msra.mxu0 0.0
    %6340 = vmatprep.subr.mxu0 0.0
    %6341 = vmatpush2.msra.mxu0 0.0
    %6342 = vmatprep.subr.mxu0 0.0
    %6343 = vmatpush2.msra.mxu0 0.0
    %6344 = vmatprep.subr.mxu0 0.0
    %6345 = vmatpush2.msra.mxu0 0.0
    %6346 = vmatprep.subr.mxu0 0.0
    %6347 = vmatpush2.msra.mxu0 0.0
    %6348 = vmatprep.subr.mxu0 0.0
    %6349 = vmatpush2.msra.mxu0 0.0
    %6350 = vmatprep.subr.mxu0 0.0
    %6351 = vmatpush2.msra.mxu0 0.0
    %6352 = vmatprep.subr.mxu0 0.0
    %6353 = vmatpush2.msra.mxu0 0.0
    %6354 = vmatprep.mubr.f32.mxu0 0.0
    %v6355 = vand.u32 %v5304, 4294901760
    %6356 = vmatmul.mubr.f32.gmra.mxu0 %v6355
    %v6357 = vpop.f32.mrf.mxu0
    %v6358 = vadd.f32 %v6119, %v6357
    %v6359 = vpop.f32.mrf.mxu0
    %6360 = vmatprep.mubr.f32.mxu0 0.0
    %v6361 = vand.u32 %v5305, 4294901760
    %6362 = vmatmul.mubr.f32.gmra.mxu0 %v6361
    %v6363 = vpop.f32.mrf.mxu0
    %v6364 = vadd.f32 %v6127, %v6363
    %v6365 = vpop.f32.mrf.mxu0
    %6366 = vmatprep.mubr.f32.mxu0 0.0
    %v6367 = vand.u32 %v5306, 4294901760
    %6368 = vmatmul.mubr.f32.gmra.mxu0 %v6367
    %v6369 = vpop.f32.mrf.mxu0
    %v6370 = vadd.f32 %v6135, %v6369
    %v6371 = vpop.f32.mrf.mxu0
    %6372 = vmatprep.mubr.f32.mxu0 0.0
    %v6373 = vand.u32 %v5307, 4294901760
    %6374 = vmatmul.mubr.f32.gmra.mxu0 %v6373
    %v6375 = vpop.f32.mrf.mxu0
    %v6376 = vadd.f32 %v6143, %v6375
    %v6377 = vpop.f32.mrf.mxu0
    %6378 = vmatprep.mubr.f32.mxu0 0.0
    %v6379 = vand.u32 %v5308, 4294901760
    %6380 = vmatmul.mubr.f32.gmra.mxu0 %v6379
    %v6381 = vpop.f32.mrf.mxu0
    %v6382 = vadd.f32 %v6151, %v6381
    %v6383 = vpop.f32.mrf.mxu0
    %6384 = vmatprep.mubr.f32.mxu0 0.0
    %v6385 = vand.u32 %v5309, 4294901760
    %6386 = vmatmul.mubr.f32.gmra.mxu0 %v6385
    %v6387 = vpop.f32.mrf.mxu0
    %v6388 = vadd.f32 %v6159, %v6387
    %v6389 = vpop.f32.mrf.mxu0
    %6390 = vmatprep.mubr.f32.mxu0 0.0
    %v6391 = vand.u32 %v5310, 4294901760
    %6392 = vmatmul.mubr.f32.gmra.mxu0 %v6391
    %v6393 = vpop.f32.mrf.mxu0
    %v6394 = vadd.f32 %v6167, %v6393
    %v6395 = vpop.f32.mrf.mxu0
    %6396 = vmatprep.mubr.f32.mxu0 0.0
    %v6397 = vand.u32 %v5311, 4294901760
    %6398 = vmatmul.mubr.f32.gmra.mxu0 %v6397
    %v6399 = vpop.f32.mrf.mxu0
    %v6400 = vadd.f32 %v6175, %v6399
    %v6401 = vpop.f32.mrf.mxu0
    %6402 = vmatprep.mubr.f32.mxu0 0.0
    %v6403 = vand.u32 %v5312, 4294901760
    %6404 = vmatmul.mubr.f32.gmra.mxu0 %v6403
    %v6405 = vpop.f32.mrf.mxu0
    %v6406 = vadd.f32 %v6183, %v6405
    %v6407 = vpop.f32.mrf.mxu0
    %6408 = vmatprep.mubr.f32.mxu0 0.0
    %v6409 = vand.u32 %v5313, 4294901760
    %6410 = vmatmul.mubr.f32.gmra.mxu0 %v6409
    %v6411 = vpop.f32.mrf.mxu0
    %v6412 = vadd.f32 %v6191, %v6411
    %v6413 = vpop.f32.mrf.mxu0
    %6414 = vmatprep.mubr.f32.mxu0 0.0
    %v6415 = vand.u32 %v5314, 4294901760
    %6416 = vmatmul.mubr.f32.gmra.mxu0 %v6415
    %v6417 = vpop.f32.mrf.mxu0
    %v6418 = vadd.f32 %v6199, %v6417
    %v6419 = vpop.f32.mrf.mxu0
    %6420 = vmatprep.mubr.f32.mxu0 0.0
    %v6421 = vand.u32 %v5315, 4294901760
    %6422 = vmatmul.mubr.f32.gmra.mxu0 %v6421
    %v6423 = vpop.f32.mrf.mxu0
    %v6424 = vadd.f32 %v6207, %v6423
    %v6425 = vpop.f32.mrf.mxu0
    %6426 = vmatprep.mubr.f32.mxu0 0.0
    %v6427 = vand.u32 %v5316, 4294901760
    %6428 = vmatmul.mubr.f32.gmra.mxu0 %v6427
    %v6429 = vpop.f32.mrf.mxu0
    %v6430 = vadd.f32 %v6215, %v6429
    %v6431 = vpop.f32.mrf.mxu0
    %6432 = vmatprep.mubr.f32.mxu0 0.0
    %v6433 = vand.u32 %v5317, 4294901760
    %6434 = vmatmul.mubr.f32.gmra.mxu0 %v6433
    %v6435 = vpop.f32.mrf.mxu0
    %v6436 = vadd.f32 %v6223, %v6435
    %v6437 = vpop.f32.mrf.mxu0
    %6438 = vmatprep.mubr.f32.mxu0 0.0
    %v6439 = vand.u32 %v5318, 4294901760
    %6440 = vmatmul.mubr.f32.gmra.mxu0 %v6439
    %v6441 = vpop.f32.mrf.mxu0
    %v6442 = vadd.f32 %v6231, %v6441
    %v6443 = vpop.f32.mrf.mxu0
    %6444 = vmatprep.mubr.f32.mxu0 0.0
    %v6445 = vand.u32 %v5319, 4294901760
    %6446 = vmatmul.mubr.f32.gmra.mxu0 %v6445
    %v6447 = vpop.f32.mrf.mxu0
    %v6448 = vadd.f32 %v6239, %v6447
    %v6449 = vpop.f32.mrf.mxu0
    %6450 = vdwg.mxu0
    %6451 = vmatprep.subr.mxu0 0.0
    %v6452 = vand.u32 %v5336, 4294901760
    %6453 = vmatpush1.msra.mxu0 %v6452
    %6454 = vmatprep.subr.mxu0 0.0
    %v6455 = vand.u32 %v5335, 4294901760
    %6456 = vmatpush1.msra.mxu0 %v6455
    %6457 = vmatprep.subr.mxu0 0.0
    %v6458 = vand.u32 %v5334, 4294901760
    %6459 = vmatpush1.msra.mxu0 %v6458
    %6460 = vmatprep.subr.mxu0 0.0
    %v6461 = vand.u32 %v5333, 4294901760
    %6462 = vmatpush1.msra.mxu0 %v6461
    %6463 = vmatprep.subr.mxu0 0.0
    %v6464 = vand.u32 %v5332, 4294901760
    %6465 = vmatpush1.msra.mxu0 %v6464
    %6466 = vmatprep.subr.mxu0 0.0
    %v6467 = vand.u32 %v5331, 4294901760
    %6468 = vmatpush1.msra.mxu0 %v6467
    %6469 = vmatprep.subr.mxu0 0.0
    %v6470 = vand.u32 %v5330, 4294901760
    %6471 = vmatpush1.msra.mxu0 %v6470
    %6472 = vmatprep.subr.mxu0 0.0
    %v6473 = vand.u32 %v5329, 4294901760
    %6474 = vmatpush1.msra.mxu0 %v6473
    %6475 = vmatprep.subr.mxu0 0.0
    %v6476 = vand.u32 %v5328, 4294901760
    %6477 = vmatpush1.msra.mxu0 %v6476
    %6478 = vmatprep.subr.mxu0 0.0
    %v6479 = vand.u32 %v5327, 4294901760
    %6480 = vmatpush1.msra.mxu0 %v6479
    %6481 = vmatprep.subr.mxu0 0.0
    %v6482 = vand.u32 %v5326, 4294901760
    %6483 = vmatpush1.msra.mxu0 %v6482
    %6484 = vmatprep.subr.mxu0 0.0
    %v6485 = vand.u32 %v5325, 4294901760
    %6486 = vmatpush1.msra.mxu0 %v6485
    %6487 = vmatprep.subr.mxu0 0.0
    %v6488 = vand.u32 %v5324, 4294901760
    %6489 = vmatpush1.msra.mxu0 %v6488
    %6490 = vmatprep.subr.mxu0 0.0
    %v6491 = vand.u32 %v5323, 4294901760
    %6492 = vmatpush1.msra.mxu0 %v6491
    %6493 = vmatprep.subr.mxu0 0.0
    %v6494 = vand.u32 %v5322, 4294901760
    %6495 = vmatpush1.msra.mxu0 %v6494
    %6496 = vmatprep.subr.mxu0 0.0
    %v6497 = vand.u32 %v5321, 4294901760
    %6498 = vmatpush1.msra.mxu0 %v6497
    %6499 = vmatprep.subr.mxu0 0.0
    %6500 = vmatpush2.msra.mxu0 0.0
    %6501 = vmatprep.subr.mxu0 0.0
    %6502 = vmatpush2.msra.mxu0 0.0
    %6503 = vmatprep.subr.mxu0 0.0
    %6504 = vmatpush2.msra.mxu0 0.0
    %6505 = vmatprep.subr.mxu0 0.0
    %6506 = vmatpush2.msra.mxu0 0.0
    %6507 = vmatprep.subr.mxu0 0.0
    %6508 = vmatpush2.msra.mxu0 0.0
    %6509 = vmatprep.subr.mxu0 0.0
    %6510 = vmatpush2.msra.mxu0 0.0
    %6511 = vmatprep.subr.mxu0 0.0
    %6512 = vmatpush2.msra.mxu0 0.0
    %6513 = vmatprep.subr.mxu0 0.0
    %6514 = vmatpush2.msra.mxu0 0.0
    %6515 = vmatprep.subr.mxu0 0.0
    %6516 = vmatpush2.msra.mxu0 0.0
    %6517 = vmatprep.subr.mxu0 0.0
    %6518 = vmatpush2.msra.mxu0 0.0
    %6519 = vmatprep.subr.mxu0 0.0
    %6520 = vmatpush2.msra.mxu0 0.0
    %6521 = vmatprep.subr.mxu0 0.0
    %6522 = vmatpush2.msra.mxu0 0.0
    %6523 = vmatprep.subr.mxu0 0.0
    %6524 = vmatpush2.msra.mxu0 0.0
    %6525 = vmatprep.subr.mxu0 0.0
    %6526 = vmatpush2.msra.mxu0 0.0
    %6527 = vmatprep.subr.mxu0 0.0
    %6528 = vmatpush2.msra.mxu0 0.0
    %6529 = vmatprep.subr.mxu0 0.0
    %6530 = vmatpush2.msra.mxu0 0.0
    %6531 = vmatprep.mubr.f32.mxu0 0.0
    %v6532 = vand.u32 %v5304, 4294901760
    %6533 = vmatmul.mubr.f32.gmra.mxu0 %v6532
    %v6534 = vpop.f32.mrf.mxu0
    %v6535 = vadd.f32 %v6358, %v6534
    %v6536 = vpop.f32.mrf.mxu0
    %6537 = vmatprep.mubr.f32.mxu0 0.0
    %v6538 = vand.u32 %v5305, 4294901760
    %6539 = vmatmul.mubr.f32.gmra.mxu0 %v6538
    %v6540 = vpop.f32.mrf.mxu0
    %v6541 = vadd.f32 %v6364, %v6540
    %v6542 = vpop.f32.mrf.mxu0
    %6543 = vmatprep.mubr.f32.mxu0 0.0
    %v6544 = vand.u32 %v5306, 4294901760
    %6545 = vmatmul.mubr.f32.gmra.mxu0 %v6544
    %v6546 = vpop.f32.mrf.mxu0
    %v6547 = vadd.f32 %v6370, %v6546
    %v6548 = vpop.f32.mrf.mxu0
    %6549 = vmatprep.mubr.f32.mxu0 0.0
    %v6550 = vand.u32 %v5307, 4294901760
    %6551 = vmatmul.mubr.f32.gmra.mxu0 %v6550
    %v6552 = vpop.f32.mrf.mxu0
    %v6553 = vadd.f32 %v6376, %v6552
    %v6554 = vpop.f32.mrf.mxu0
    %6555 = vmatprep.mubr.f32.mxu0 0.0
    %v6556 = vand.u32 %v5308, 4294901760
    %6557 = vmatmul.mubr.f32.gmra.mxu0 %v6556
    %v6558 = vpop.f32.mrf.mxu0
    %v6559 = vadd.f32 %v6382, %v6558
    %v6560 = vpop.f32.mrf.mxu0
    %6561 = vmatprep.mubr.f32.mxu0 0.0
    %v6562 = vand.u32 %v5309, 4294901760
    %6563 = vmatmul.mubr.f32.gmra.mxu0 %v6562
    %v6564 = vpop.f32.mrf.mxu0
    %v6565 = vadd.f32 %v6388, %v6564
    %v6566 = vpop.f32.mrf.mxu0
    %6567 = vmatprep.mubr.f32.mxu0 0.0
    %v6568 = vand.u32 %v5310, 4294901760
    %6569 = vmatmul.mubr.f32.gmra.mxu0 %v6568
    %v6570 = vpop.f32.mrf.mxu0
    %v6571 = vadd.f32 %v6394, %v6570
    %v6572 = vpop.f32.mrf.mxu0
    %6573 = vmatprep.mubr.f32.mxu0 0.0
    %v6574 = vand.u32 %v5311, 4294901760
    %6575 = vmatmul.mubr.f32.gmra.mxu0 %v6574
    %v6576 = vpop.f32.mrf.mxu0
    %v6577 = vadd.f32 %v6400, %v6576
    %v6578 = vpop.f32.mrf.mxu0
    %6579 = vmatprep.mubr.f32.mxu0 0.0
    %v6580 = vand.u32 %v5312, 4294901760
    %6581 = vmatmul.mubr.f32.gmra.mxu0 %v6580
    %v6582 = vpop.f32.mrf.mxu0
    %v6583 = vadd.f32 %v6406, %v6582
    %v6584 = vpop.f32.mrf.mxu0
    %6585 = vmatprep.mubr.f32.mxu0 0.0
    %v6586 = vand.u32 %v5313, 4294901760
    %6587 = vmatmul.mubr.f32.gmra.mxu0 %v6586
    %v6588 = vpop.f32.mrf.mxu0
    %v6589 = vadd.f32 %v6412, %v6588
    %v6590 = vpop.f32.mrf.mxu0
    %6591 = vmatprep.mubr.f32.mxu0 0.0
    %v6592 = vand.u32 %v5314, 4294901760
    %6593 = vmatmul.mubr.f32.gmra.mxu0 %v6592
    %v6594 = vpop.f32.mrf.mxu0
    %v6595 = vadd.f32 %v6418, %v6594
    %v6596 = vpop.f32.mrf.mxu0
    %6597 = vmatprep.mubr.f32.mxu0 0.0
    %v6598 = vand.u32 %v5315, 4294901760
    %6599 = vmatmul.mubr.f32.gmra.mxu0 %v6598
    %v6600 = vpop.f32.mrf.mxu0
    %v6601 = vadd.f32 %v6424, %v6600
    %v6602 = vpop.f32.mrf.mxu0
    %6603 = vmatprep.mubr.f32.mxu0 0.0
    %v6604 = vand.u32 %v5316, 4294901760
    %6605 = vmatmul.mubr.f32.gmra.mxu0 %v6604
    %v6606 = vpop.f32.mrf.mxu0
    %v6607 = vadd.f32 %v6430, %v6606
    %v6608 = vpop.f32.mrf.mxu0
    %6609 = vmatprep.mubr.f32.mxu0 0.0
    %v6610 = vand.u32 %v5317, 4294901760
    %6611 = vmatmul.mubr.f32.gmra.mxu0 %v6610
    %v6612 = vpop.f32.mrf.mxu0
    %v6613 = vadd.f32 %v6436, %v6612
    %v6614 = vpop.f32.mrf.mxu0
    %6615 = vmatprep.mubr.f32.mxu0 0.0
    %v6616 = vand.u32 %v5318, 4294901760
    %6617 = vmatmul.mubr.f32.gmra.mxu0 %v6616
    %v6618 = vpop.f32.mrf.mxu0
    %v6619 = vadd.f32 %v6442, %v6618
    %v6620 = vpop.f32.mrf.mxu0
    %6621 = vmatprep.mubr.f32.mxu0 0.0
    %v6622 = vand.u32 %v5319, 4294901760
    %6623 = vmatmul.mubr.f32.gmra.mxu0 %v6622
    %v6624 = vpop.f32.mrf.mxu0
    %v6625 = vadd.f32 %v6448, %v6624
    %v6626 = vpop.f32.mrf.mxu0
    %6627 = vdwg.mxu0
    %v6628 = vadd.f32 %v3964, %v6535
    %v6629 = vadd.f32 %v3965, %v6541
    %v6630 = vadd.f32 %v3966, %v6547
    %v6631 = vadd.f32 %v3967, %v6553
    %v6632 = vadd.f32 %v3968, %v6559
    %v6633 = vadd.f32 %v3969, %v6565
    %v6634 = vadd.f32 %v3970, %v6571
    %v6635 = vadd.f32 %v3971, %v6577
    %v6636 = vadd.f32 %v3972, %v6583
    %v6637 = vadd.f32 %v3973, %v6589
    %v6638 = vadd.f32 %v3974, %v6595
    %v6639 = vadd.f32 %v3975, %v6601
    %v6640 = vadd.f32 %v3976, %v6607
    %v6641 = vadd.f32 %v3977, %v6613
    %v6642 = vadd.f32 %v3978, %v6619
    %v6643 = vadd.f32 %v3979, %v6625
    %v6644 = vmax.f32 %v6628, 0.0
    %v6645 = vmax.f32 %v6629, 0.0
    %v6646 = vmax.f32 %v6630, 0.0
    %v6647 = vmax.f32 %v6631, 0.0
    %v6648 = vmax.f32 %v6632, 0.0
    %v6649 = vmax.f32 %v6633, 0.0
    %v6650 = vmax.f32 %v6634, 0.0
    %v6651 = vmax.f32 %v6635, 0.0
    %v6652 = vmax.f32 %v6636, 0.0
    %v6653 = vmax.f32 %v6637, 0.0
    %v6654 = vmax.f32 %v6638, 0.0
    %v6655 = vmax.f32 %v6639, 0.0
    %v6656 = vmax.f32 %v6640, 0.0
    %v6657 = vmax.f32 %v6641, 0.0
    %v6658 = vmax.f32 %v6642, 0.0
    %v6659 = vmax.f32 %v6643, 0.0
    %v6660 = vld [vmem:[%s4] sm:$0xff]
    %v6661 = vld [vmem:[%s4 + $0x8] sm:$0x3f]
    %v6662 = vld [vmem:[%s5] sm:$0xff]
    %v6663 = vld [vmem:[%s5 + $0x8] sm:$0x3f]
    %6665 = vset.pattern.permute.xlu0 0
    %6666 = vperm.xlu0 %6665, %v6662
    %v6667 = vpop.permute.xlu0 %6666
    %6670 = vset.pattern.permute.xlu0 0
    %6671 = vperm.xlu0 %6670, %v6663
    %v6672 = vpop.permute.xlu0 %6671
    %6674 = vmatprep.subr.mxu0 0.0
    %v6675 = vand.u32 %v6659, 4294901760
    %6676 = vmatpush1.xpose.msra.mxu0 %v6675
    %6677 = vmatprep.subr.mxu0 0.0
    %v6678 = vand.u32 %v6658, 4294901760
    %6679 = vmatpush1.xpose.msra.mxu0 %v6678
    %6680 = vmatprep.subr.mxu0 0.0
    %v6681 = vand.u32 %v6657, 4294901760
    %6682 = vmatpush1.xpose.msra.mxu0 %v6681
    %6683 = vmatprep.subr.mxu0 0.0
    %v6684 = vand.u32 %v6656, 4294901760
    %6685 = vmatpush1.xpose.msra.mxu0 %v6684
    %6686 = vmatprep.subr.mxu0 0.0
    %v6687 = vand.u32 %v6655, 4294901760
    %6688 = vmatpush1.xpose.msra.mxu0 %v6687
    %6689 = vmatprep.subr.mxu0 0.0
    %v6690 = vand.u32 %v6654, 4294901760
    %6691 = vmatpush1.xpose.msra.mxu0 %v6690
    %6692 = vmatprep.subr.mxu0 0.0
    %v6693 = vand.u32 %v6653, 4294901760
    %6694 = vmatpush1.xpose.msra.mxu0 %v6693
    %6695 = vmatprep.subr.mxu0 0.0
    %v6696 = vand.u32 %v6652, 4294901760
    %6697 = vmatpush1.xpose.msra.mxu0 %v6696
    %6698 = vmatprep.subr.mxu0 0.0
    %v6699 = vand.u32 %v6651, 4294901760
    %6700 = vmatpush1.xpose.msra.mxu0 %v6699
    %6701 = vmatprep.subr.mxu0 0.0
    %v6702 = vand.u32 %v6650, 4294901760
    %6703 = vmatpush1.xpose.msra.mxu0 %v6702
    %6704 = vmatprep.subr.mxu0 0.0
    %v6705 = vand.u32 %v6649, 4294901760
    %6706 = vmatpush1.xpose.msra.mxu0 %v6705
    %6707 = vmatprep.subr.mxu0 0.0
    %v6708 = vand.u32 %v6648, 4294901760
    %6709 = vmatpush1.xpose.msra.mxu0 %v6708
    %6710 = vmatprep.subr.mxu0 0.0
    %v6711 = vand.u32 %v6647, 4294901760
    %6712 = vmatpush1.xpose.msra.mxu0 %v6711
    %6713 = vmatprep.subr.mxu0 0.0
    %v6714 = vand.u32 %v6646, 4294901760
    %6715 = vmatpush1.xpose.msra.mxu0 %v6714
    %6716 = vmatprep.subr.mxu0 0.0
    %v6717 = vand.u32 %v6645, 4294901760
    %6718 = vmatpush1.xpose.msra.mxu0 %v6717
    %6719 = vmatprep.subr.mxu0 0.0
    %v6720 = vand.u32 %v6644, 4294901760
    %6721 = vmatpush1.xpose.msra.mxu0 %v6720
    %6722 = vmatprep.subr.mxu0 0.0
    %6723 = vmatpush2.xpose.msra.mxu0 0.0
    %6724 = vmatprep.subr.mxu0 0.0
    %6725 = vmatpush2.xpose.msra.mxu0 0.0
    %6726 = vmatprep.subr.mxu0 0.0
    %6727 = vmatpush2.xpose.msra.mxu0 0.0
    %6728 = vmatprep.subr.mxu0 0.0
    %6729 = vmatpush2.xpose.msra.mxu0 0.0
    %6730 = vmatprep.subr.mxu0 0.0
    %6731 = vmatpush2.xpose.msra.mxu0 0.0
    %6732 = vmatprep.subr.mxu0 0.0
    %6733 = vmatpush2.xpose.msra.mxu0 0.0
    %6734 = vmatprep.subr.mxu0 0.0
    %6735 = vmatpush2.xpose.msra.mxu0 0.0
    %6736 = vmatprep.subr.mxu0 0.0
    %6737 = vmatpush2.xpose.msra.mxu0 0.0
    %6738 = vmatprep.subr.mxu0 0.0
    %6739 = vmatpush2.xpose.msra.mxu0 0.0
    %6740 = vmatprep.subr.mxu0 0.0
    %6741 = vmatpush2.xpose.msra.mxu0 0.0
    %6742 = vmatprep.subr.mxu0 0.0
    %6743 = vmatpush2.xpose.msra.mxu0 0.0
    %6744 = vmatprep.subr.mxu0 0.0
    %6745 = vmatpush2.xpose.msra.mxu0 0.0
    %6746 = vmatprep.subr.mxu0 0.0
    %6747 = vmatpush2.xpose.msra.mxu0 0.0
    %6748 = vmatprep.subr.mxu0 0.0
    %6749 = vmatpush2.xpose.msra.mxu0 0.0
    %6750 = vmatprep.subr.mxu0 0.0
    %6751 = vmatpush2.xpose.msra.mxu0 0.0
    %6752 = vmatprep.subr.mxu0 0.0
    %6753 = vmatpush2.xpose.msra.mxu0 0.0
    %6754 = vmatprep.mubr.f32.mxu0 0.0
    %v6755 = vand.u32 %v6660, 4294901760
    %v6756 = vsub.f32 %v6660, %v6755
    %v6757 = vand.u32 %v6756, 4294901760
    %v6758 = vsub.f32 %v6756, %v6757
    %v6759 = vand.u32 %v6758, 4294901760
    %6760 = vmatmul.mubr.f32.gmra.mxu0 %v6759
    %v6761 = vpop.f32.mrf.mxu0
    %v6762 = vadd.f32 %v6667, %v6761
    %v6763 = vpop.f32.mrf.mxu0
    %6764 = vmatprep.mubr.f32.mxu0 0.0
    %v6765 = vand.u32 %v6661, 4294901760
    %v6766 = vsub.f32 %v6661, %v6765
    %v6767 = vand.u32 %v6766, 4294901760
    %v6768 = vsub.f32 %v6766, %v6767
    %v6769 = vand.u32 %v6768, 4294901760
    %6770 = vmatmul.mubr.f32.gmra.mxu0 %v6769
    %v6771 = vpop.f32.mrf.mxu0
    %v6772 = vadd.f32 %v6672, %v6771
    %v6773 = vpop.f32.mrf.mxu0
    %6774 = vdwg.mxu0
    %6775 = vmatprep.subr.mxu0 0.0
    %v6776 = vand.u32 %v6659, 4294901760
    %v6777 = vsub.f32 %v6659, %v6776
    %v6778 = vand.u32 %v6777, 4294901760
    %v6779 = vsub.f32 %v6777, %v6778
    %v6780 = vand.u32 %v6779, 4294901760
    %6781 = vmatpush1.xpose.msra.mxu0 %v6780
    %6782 = vmatprep.subr.mxu0 0.0
    %v6783 = vand.u32 %v6658, 4294901760
    %v6784 = vsub.f32 %v6658, %v6783
    %v6785 = vand.u32 %v6784, 4294901760
    %v6786 = vsub.f32 %v6784, %v6785
    %v6787 = vand.u32 %v6786, 4294901760
    %6788 = vmatpush1.xpose.msra.mxu0 %v6787
    %6789 = vmatprep.subr.mxu0 0.0
    %v6790 = vand.u32 %v6657, 4294901760
    %v6791 = vsub.f32 %v6657, %v6790
    %v6792 = vand.u32 %v6791, 4294901760
    %v6793 = vsub.f32 %v6791, %v6792
    %v6794 = vand.u32 %v6793, 4294901760
    %6795 = vmatpush1.xpose.msra.mxu0 %v6794
    %6796 = vmatprep.subr.mxu0 0.0
    %v6797 = vand.u32 %v6656, 4294901760
    %v6798 = vsub.f32 %v6656, %v6797
    %v6799 = vand.u32 %v6798, 4294901760
    %v6800 = vsub.f32 %v6798, %v6799
    %v6801 = vand.u32 %v6800, 4294901760
    %6802 = vmatpush1.xpose.msra.mxu0 %v6801
    %6803 = vmatprep.subr.mxu0 0.0
    %v6804 = vand.u32 %v6655, 4294901760
    %v6805 = vsub.f32 %v6655, %v6804
    %v6806 = vand.u32 %v6805, 4294901760
    %v6807 = vsub.f32 %v6805, %v6806
    %v6808 = vand.u32 %v6807, 4294901760
    %6809 = vmatpush1.xpose.msra.mxu0 %v6808
    %6810 = vmatprep.subr.mxu0 0.0
    %v6811 = vand.u32 %v6654, 4294901760
    %v6812 = vsub.f32 %v6654, %v6811
    %v6813 = vand.u32 %v6812, 4294901760
    %v6814 = vsub.f32 %v6812, %v6813
    %v6815 = vand.u32 %v6814, 4294901760
    %6816 = vmatpush1.xpose.msra.mxu0 %v6815
    %6817 = vmatprep.subr.mxu0 0.0
    %v6818 = vand.u32 %v6653, 4294901760
    %v6819 = vsub.f32 %v6653, %v6818
    %v6820 = vand.u32 %v6819, 4294901760
    %v6821 = vsub.f32 %v6819, %v6820
    %v6822 = vand.u32 %v6821, 4294901760
    %6823 = vmatpush1.xpose.msra.mxu0 %v6822
    %6824 = vmatprep.subr.mxu0 0.0
    %v6825 = vand.u32 %v6652, 4294901760
    %v6826 = vsub.f32 %v6652, %v6825
    %v6827 = vand.u32 %v6826, 4294901760
    %v6828 = vsub.f32 %v6826, %v6827
    %v6829 = vand.u32 %v6828, 4294901760
    %6830 = vmatpush1.xpose.msra.mxu0 %v6829
    %6831 = vmatprep.subr.mxu0 0.0
    %v6832 = vand.u32 %v6651, 4294901760
    %v6833 = vsub.f32 %v6651, %v6832
    %v6834 = vand.u32 %v6833, 4294901760
    %v6835 = vsub.f32 %v6833, %v6834
    %v6836 = vand.u32 %v6835, 4294901760
    %6837 = vmatpush1.xpose.msra.mxu0 %v6836
    %6838 = vmatprep.subr.mxu0 0.0
    %v6839 = vand.u32 %v6650, 4294901760
    %v6840 = vsub.f32 %v6650, %v6839
    %v6841 = vand.u32 %v6840, 4294901760
    %v6842 = vsub.f32 %v6840, %v6841
    %v6843 = vand.u32 %v6842, 4294901760
    %6844 = vmatpush1.xpose.msra.mxu0 %v6843
    %6845 = vmatprep.subr.mxu0 0.0
    %v6846 = vand.u32 %v6649, 4294901760
    %v6847 = vsub.f32 %v6649, %v6846
    %v6848 = vand.u32 %v6847, 4294901760
    %v6849 = vsub.f32 %v6847, %v6848
    %v6850 = vand.u32 %v6849, 4294901760
    %6851 = vmatpush1.xpose.msra.mxu0 %v6850
    %6852 = vmatprep.subr.mxu0 0.0
    %v6853 = vand.u32 %v6648, 4294901760
    %v6854 = vsub.f32 %v6648, %v6853
    %v6855 = vand.u32 %v6854, 4294901760
    %v6856 = vsub.f32 %v6854, %v6855
    %v6857 = vand.u32 %v6856, 4294901760
    %6858 = vmatpush1.xpose.msra.mxu0 %v6857
    %6859 = vmatprep.subr.mxu0 0.0
    %v6860 = vand.u32 %v6647, 4294901760
    %v6861 = vsub.f32 %v6647, %v6860
    %v6862 = vand.u32 %v6861, 4294901760
    %v6863 = vsub.f32 %v6861, %v6862
    %v6864 = vand.u32 %v6863, 4294901760
    %6865 = vmatpush1.xpose.msra.mxu0 %v6864
    %6866 = vmatprep.subr.mxu0 0.0
    %v6867 = vand.u32 %v6646, 4294901760
    %v6868 = vsub.f32 %v6646, %v6867
    %v6869 = vand.u32 %v6868, 4294901760
    %v6870 = vsub.f32 %v6868, %v6869
    %v6871 = vand.u32 %v6870, 4294901760
    %6872 = vmatpush1.xpose.msra.mxu0 %v6871
    %6873 = vmatprep.subr.mxu0 0.0
    %v6874 = vand.u32 %v6645, 4294901760
    %v6875 = vsub.f32 %v6645, %v6874
    %v6876 = vand.u32 %v6875, 4294901760
    %v6877 = vsub.f32 %v6875, %v6876
    %v6878 = vand.u32 %v6877, 4294901760
    %6879 = vmatpush1.xpose.msra.mxu0 %v6878
    %6880 = vmatprep.subr.mxu0 0.0
    %v6881 = vand.u32 %v6644, 4294901760
    %v6882 = vsub.f32 %v6644, %v6881
    %v6883 = vand.u32 %v6882, 4294901760
    %v6884 = vsub.f32 %v6882, %v6883
    %v6885 = vand.u32 %v6884, 4294901760
    %6886 = vmatpush1.xpose.msra.mxu0 %v6885
    %6887 = vmatprep.subr.mxu0 0.0
    %6888 = vmatpush2.xpose.msra.mxu0 0.0
    %6889 = vmatprep.subr.mxu0 0.0
    %6890 = vmatpush2.xpose.msra.mxu0 0.0
    %6891 = vmatprep.subr.mxu0 0.0
    %6892 = vmatpush2.xpose.msra.mxu0 0.0
    %6893 = vmatprep.subr.mxu0 0.0
    %6894 = vmatpush2.xpose.msra.mxu0 0.0
    %6895 = vmatprep.subr.mxu0 0.0
    %6896 = vmatpush2.xpose.msra.mxu0 0.0
    %6897 = vmatprep.subr.mxu0 0.0
    %6898 = vmatpush2.xpose.msra.mxu0 0.0
    %6899 = vmatprep.subr.mxu0 0.0
    %6900 = vmatpush2.xpose.msra.mxu0 0.0
    %6901 = vmatprep.subr.mxu0 0.0
    %6902 = vmatpush2.xpose.msra.mxu0 0.0
    %6903 = vmatprep.subr.mxu0 0.0
    %6904 = vmatpush2.xpose.msra.mxu0 0.0
    %6905 = vmatprep.subr.mxu0 0.0
    %6906 = vmatpush2.xpose.msra.mxu0 0.0
    %6907 = vmatprep.subr.mxu0 0.0
    %6908 = vmatpush2.xpose.msra.mxu0 0.0
    %6909 = vmatprep.subr.mxu0 0.0
    %6910 = vmatpush2.xpose.msra.mxu0 0.0
    %6911 = vmatprep.subr.mxu0 0.0
    %6912 = vmatpush2.xpose.msra.mxu0 0.0
    %6913 = vmatprep.subr.mxu0 0.0
    %6914 = vmatpush2.xpose.msra.mxu0 0.0
    %6915 = vmatprep.subr.mxu0 0.0
    %6916 = vmatpush2.xpose.msra.mxu0 0.0
    %6917 = vmatprep.subr.mxu0 0.0
    %6918 = vmatpush2.xpose.msra.mxu0 0.0
    %6919 = vmatprep.mubr.f32.mxu0 0.0
    %v6920 = vand.u32 %v6660, 4294901760
    %6921 = vmatmul.mubr.f32.gmra.mxu0 %v6920
    %v6922 = vpop.f32.mrf.mxu0
    %v6923 = vadd.f32 %v6762, %v6922
    %v6924 = vpop.f32.mrf.mxu0
    %6925 = vmatprep.mubr.f32.mxu0 0.0
    %v6926 = vand.u32 %v6661, 4294901760
    %6927 = vmatmul.mubr.f32.gmra.mxu0 %v6926
    %v6928 = vpop.f32.mrf.mxu0
    %v6929 = vadd.f32 %v6772, %v6928
    %v6930 = vpop.f32.mrf.mxu0
    %6931 = vdwg.mxu0
    %6932 = vmatprep.subr.mxu0 0.0
    %v6933 = vand.u32 %v6659, 4294901760
    %v6934 = vsub.f32 %v6659, %v6933
    %6935 = vmatpush1.xpose.msra.mxu0 %v6934
    %6936 = vmatprep.subr.mxu0 0.0
    %v6937 = vand.u32 %v6658, 4294901760
    %v6938 = vsub.f32 %v6658, %v6937
    %6939 = vmatpush1.xpose.msra.mxu0 %v6938
    %6940 = vmatprep.subr.mxu0 0.0
    %v6941 = vand.u32 %v6657, 4294901760
    %v6942 = vsub.f32 %v6657, %v6941
    %6943 = vmatpush1.xpose.msra.mxu0 %v6942
    %6944 = vmatprep.subr.mxu0 0.0
    %v6945 = vand.u32 %v6656, 4294901760
    %v6946 = vsub.f32 %v6656, %v6945
    %6947 = vmatpush1.xpose.msra.mxu0 %v6946
    %6948 = vmatprep.subr.mxu0 0.0
    %v6949 = vand.u32 %v6655, 4294901760
    %v6950 = vsub.f32 %v6655, %v6949
    %6951 = vmatpush1.xpose.msra.mxu0 %v6950
    %6952 = vmatprep.subr.mxu0 0.0
    %v6953 = vand.u32 %v6654, 4294901760
    %v6954 = vsub.f32 %v6654, %v6953
    %6955 = vmatpush1.xpose.msra.mxu0 %v6954
    %6956 = vmatprep.subr.mxu0 0.0
    %v6957 = vand.u32 %v6653, 4294901760
    %v6958 = vsub.f32 %v6653, %v6957
    %6959 = vmatpush1.xpose.msra.mxu0 %v6958
    %6960 = vmatprep.subr.mxu0 0.0
    %v6961 = vand.u32 %v6652, 4294901760
    %v6962 = vsub.f32 %v6652, %v6961
    %6963 = vmatpush1.xpose.msra.mxu0 %v6962
    %6964 = vmatprep.subr.mxu0 0.0
    %v6965 = vand.u32 %v6651, 4294901760
    %v6966 = vsub.f32 %v6651, %v6965
    %6967 = vmatpush1.xpose.msra.mxu0 %v6966
    %6968 = vmatprep.subr.mxu0 0.0
    %v6969 = vand.u32 %v6650, 4294901760
    %v6970 = vsub.f32 %v6650, %v6969
    %6971 = vmatpush1.xpose.msra.mxu0 %v6970
    %6972 = vmatprep.subr.mxu0 0.0
    %v6973 = vand.u32 %v6649, 4294901760
    %v6974 = vsub.f32 %v6649, %v6973
    %6975 = vmatpush1.xpose.msra.mxu0 %v6974
    %6976 = vmatprep.subr.mxu0 0.0
    %v6977 = vand.u32 %v6648, 4294901760
    %v6978 = vsub.f32 %v6648, %v6977
    %6979 = vmatpush1.xpose.msra.mxu0 %v6978
    %6980 = vmatprep.subr.mxu0 0.0
    %v6981 = vand.u32 %v6647, 4294901760
    %v6982 = vsub.f32 %v6647, %v6981
    %6983 = vmatpush1.xpose.msra.mxu0 %v6982
    %6984 = vmatprep.subr.mxu0 0.0
    %v6985 = vand.u32 %v6646, 4294901760
    %v6986 = vsub.f32 %v6646, %v6985
    %6987 = vmatpush1.xpose.msra.mxu0 %v6986
    %6988 = vmatprep.subr.mxu0 0.0
    %v6989 = vand.u32 %v6645, 4294901760
    %v6990 = vsub.f32 %v6645, %v6989
    %6991 = vmatpush1.xpose.msra.mxu0 %v6990
    %6992 = vmatprep.subr.mxu0 0.0
    %v6993 = vand.u32 %v6644, 4294901760
    %v6994 = vsub.f32 %v6644, %v6993
    %6995 = vmatpush1.xpose.msra.mxu0 %v6994
    %6996 = vmatprep.subr.mxu0 0.0
    %6997 = vmatpush2.xpose.msra.mxu0 0.0
    %6998 = vmatprep.subr.mxu0 0.0
    %6999 = vmatpush2.xpose.msra.mxu0 0.0
    %7000 = vmatprep.subr.mxu0 0.0
    %7001 = vmatpush2.xpose.msra.mxu0 0.0
    %7002 = vmatprep.subr.mxu0 0.0
    %7003 = vmatpush2.xpose.msra.mxu0 0.0
    %7004 = vmatprep.subr.mxu0 0.0
    %7005 = vmatpush2.xpose.msra.mxu0 0.0
    %7006 = vmatprep.subr.mxu0 0.0
    %7007 = vmatpush2.xpose.msra.mxu0 0.0
    %7008 = vmatprep.subr.mxu0 0.0
    %7009 = vmatpush2.xpose.msra.mxu0 0.0
    %7010 = vmatprep.subr.mxu0 0.0
    %7011 = vmatpush2.xpose.msra.mxu0 0.0
    %7012 = vmatprep.subr.mxu0 0.0
    %7013 = vmatpush2.xpose.msra.mxu0 0.0
    %7014 = vmatprep.subr.mxu0 0.0
    %7015 = vmatpush2.xpose.msra.mxu0 0.0
    %7016 = vmatprep.subr.mxu0 0.0
    %7017 = vmatpush2.xpose.msra.mxu0 0.0
    %7018 = vmatprep.subr.mxu0 0.0
    %7019 = vmatpush2.xpose.msra.mxu0 0.0
    %7020 = vmatprep.subr.mxu0 0.0
    %7021 = vmatpush2.xpose.msra.mxu0 0.0
    %7022 = vmatprep.subr.mxu0 0.0
    %7023 = vmatpush2.xpose.msra.mxu0 0.0
    %7024 = vmatprep.subr.mxu0 0.0
    %7025 = vmatpush2.xpose.msra.mxu0 0.0
    %7026 = vmatprep.subr.mxu0 0.0
    %7027 = vmatpush2.xpose.msra.mxu0 0.0
    %7028 = vmatprep.mubr.f32.mxu0 0.0
    %v7029 = vand.u32 %v6660, 4294901760
    %v7030 = vsub.f32 %v6660, %v7029
    %7031 = vmatmul.mubr.f32.gmra.mxu0 %v7030
    %v7032 = vpop.f32.mrf.mxu0
    %v7033 = vadd.f32 %v6923, %v7032
    %v7034 = vpop.f32.mrf.mxu0
    %7035 = vmatprep.mubr.f32.mxu0 0.0
    %v7036 = vand.u32 %v6661, 4294901760
    %v7037 = vsub.f32 %v6661, %v7036
    %7038 = vmatmul.mubr.f32.gmra.mxu0 %v7037
    %v7039 = vpop.f32.mrf.mxu0
    %v7040 = vadd.f32 %v6929, %v7039
    %v7041 = vpop.f32.mrf.mxu0
    %7042 = vdwg.mxu0
    %7043 = vmatprep.subr.mxu0 0.0
    %v7044 = vand.u32 %v6659, 4294901760
    %7045 = vmatpush1.xpose.msra.mxu0 %v7044
    %7046 = vmatprep.subr.mxu0 0.0
    %v7047 = vand.u32 %v6658, 4294901760
    %7048 = vmatpush1.xpose.msra.mxu0 %v7047
    %7049 = vmatprep.subr.mxu0 0.0
    %v7050 = vand.u32 %v6657, 4294901760
    %7051 = vmatpush1.xpose.msra.mxu0 %v7050
    %7052 = vmatprep.subr.mxu0 0.0
    %v7053 = vand.u32 %v6656, 4294901760
    %7054 = vmatpush1.xpose.msra.mxu0 %v7053
    %7055 = vmatprep.subr.mxu0 0.0
    %v7056 = vand.u32 %v6655, 4294901760
    %7057 = vmatpush1.xpose.msra.mxu0 %v7056
    %7058 = vmatprep.subr.mxu0 0.0
    %v7059 = vand.u32 %v6654, 4294901760
    %7060 = vmatpush1.xpose.msra.mxu0 %v7059
    %7061 = vmatprep.subr.mxu0 0.0
    %v7062 = vand.u32 %v6653, 4294901760
    %7063 = vmatpush1.xpose.msra.mxu0 %v7062
    %7064 = vmatprep.subr.mxu0 0.0
    %v7065 = vand.u32 %v6652, 4294901760
    %7066 = vmatpush1.xpose.msra.mxu0 %v7065
    %7067 = vmatprep.subr.mxu0 0.0
    %v7068 = vand.u32 %v6651, 4294901760
    %7069 = vmatpush1.xpose.msra.mxu0 %v7068
    %7070 = vmatprep.subr.mxu0 0.0
    %v7071 = vand.u32 %v6650, 4294901760
    %7072 = vmatpush1.xpose.msra.mxu0 %v7071
    %7073 = vmatprep.subr.mxu0 0.0
    %v7074 = vand.u32 %v6649, 4294901760
    %7075 = vmatpush1.xpose.msra.mxu0 %v7074
    %7076 = vmatprep.subr.mxu0 0.0
    %v7077 = vand.u32 %v6648, 4294901760
    %7078 = vmatpush1.xpose.msra.mxu0 %v7077
    %7079 = vmatprep.subr.mxu0 0.0
    %v7080 = vand.u32 %v6647, 4294901760
    %7081 = vmatpush1.xpose.msra.mxu0 %v7080
    %7082 = vmatprep.subr.mxu0 0.0
    %v7083 = vand.u32 %v6646, 4294901760
    %7084 = vmatpush1.xpose.msra.mxu0 %v7083
    %7085 = vmatprep.subr.mxu0 0.0
    %v7086 = vand.u32 %v6645, 4294901760
    %7087 = vmatpush1.xpose.msra.mxu0 %v7086
    %7088 = vmatprep.subr.mxu0 0.0
    %v7089 = vand.u32 %v6644, 4294901760
    %7090 = vmatpush1.xpose.msra.mxu0 %v7089
    %7091 = vmatprep.subr.mxu0 0.0
    %7092 = vmatpush2.xpose.msra.mxu0 0.0
    %7093 = vmatprep.subr.mxu0 0.0
    %7094 = vmatpush2.xpose.msra.mxu0 0.0
    %7095 = vmatprep.subr.mxu0 0.0
    %7096 = vmatpush2.xpose.msra.mxu0 0.0
    %7097 = vmatprep.subr.mxu0 0.0
    %7098 = vmatpush2.xpose.msra.mxu0 0.0
    %7099 = vmatprep.subr.mxu0 0.0
    %7100 = vmatpush2.xpose.msra.mxu0 0.0
    %7101 = vmatprep.subr.mxu0 0.0
    %7102 = vmatpush2.xpose.msra.mxu0 0.0
    %7103 = vmatprep.subr.mxu0 0.0
    %7104 = vmatpush2.xpose.msra.mxu0 0.0
    %7105 = vmatprep.subr.mxu0 0.0
    %7106 = vmatpush2.xpose.msra.mxu0 0.0
    %7107 = vmatprep.subr.mxu0 0.0
    %7108 = vmatpush2.xpose.msra.mxu0 0.0
    %7109 = vmatprep.subr.mxu0 0.0
    %7110 = vmatpush2.xpose.msra.mxu0 0.0
    %7111 = vmatprep.subr.mxu0 0.0
    %7112 = vmatpush2.xpose.msra.mxu0 0.0
    %7113 = vmatprep.subr.mxu0 0.0
    %7114 = vmatpush2.xpose.msra.mxu0 0.0
    %7115 = vmatprep.subr.mxu0 0.0
    %7116 = vmatpush2.xpose.msra.mxu0 0.0
    %7117 = vmatprep.subr.mxu0 0.0
    %7118 = vmatpush2.xpose.msra.mxu0 0.0
    %7119 = vmatprep.subr.mxu0 0.0
    %7120 = vmatpush2.xpose.msra.mxu0 0.0
    %7121 = vmatprep.subr.mxu0 0.0
    %7122 = vmatpush2.xpose.msra.mxu0 0.0
    %7123 = vmatprep.mubr.f32.mxu0 0.0
    %v7124 = vand.u32 %v6660, 4294901760
    %v7125 = vsub.f32 %v6660, %v7124
    %v7126 = vand.u32 %v7125, 4294901760
    %7127 = vmatmul.mubr.f32.gmra.mxu0 %v7126
    %v7128 = vpop.f32.mrf.mxu0
    %v7129 = vadd.f32 %v7033, %v7128
    %v7130 = vpop.f32.mrf.mxu0
    %7131 = vmatprep.mubr.f32.mxu0 0.0
    %v7132 = vand.u32 %v6661, 4294901760
    %v7133 = vsub.f32 %v6661, %v7132
    %v7134 = vand.u32 %v7133, 4294901760
    %7135 = vmatmul.mubr.f32.gmra.mxu0 %v7134
    %v7136 = vpop.f32.mrf.mxu0
    %v7137 = vadd.f32 %v7040, %v7136
    %v7138 = vpop.f32.mrf.mxu0
    %7139 = vdwg.mxu0
    %7140 = vmatprep.subr.mxu0 0.0
    %v7141 = vand.u32 %v6659, 4294901760
    %v7142 = vsub.f32 %v6659, %v7141
    %v7143 = vand.u32 %v7142, 4294901760
    %7144 = vmatpush1.xpose.msra.mxu0 %v7143
    %7145 = vmatprep.subr.mxu0 0.0
    %v7146 = vand.u32 %v6658, 4294901760
    %v7147 = vsub.f32 %v6658, %v7146
    %v7148 = vand.u32 %v7147, 4294901760
    %7149 = vmatpush1.xpose.msra.mxu0 %v7148
    %7150 = vmatprep.subr.mxu0 0.0
    %v7151 = vand.u32 %v6657, 4294901760
    %v7152 = vsub.f32 %v6657, %v7151
    %v7153 = vand.u32 %v7152, 4294901760
    %7154 = vmatpush1.xpose.msra.mxu0 %v7153
    %7155 = vmatprep.subr.mxu0 0.0
    %v7156 = vand.u32 %v6656, 4294901760
    %v7157 = vsub.f32 %v6656, %v7156
    %v7158 = vand.u32 %v7157, 4294901760
    %7159 = vmatpush1.xpose.msra.mxu0 %v7158
    %7160 = vmatprep.subr.mxu0 0.0
    %v7161 = vand.u32 %v6655, 4294901760
    %v7162 = vsub.f32 %v6655, %v7161
    %v7163 = vand.u32 %v7162, 4294901760
    %7164 = vmatpush1.xpose.msra.mxu0 %v7163
    %7165 = vmatprep.subr.mxu0 0.0
    %v7166 = vand.u32 %v6654, 4294901760
    %v7167 = vsub.f32 %v6654, %v7166
    %v7168 = vand.u32 %v7167, 4294901760
    %7169 = vmatpush1.xpose.msra.mxu0 %v7168
    %7170 = vmatprep.subr.mxu0 0.0
    %v7171 = vand.u32 %v6653, 4294901760
    %v7172 = vsub.f32 %v6653, %v7171
    %v7173 = vand.u32 %v7172, 4294901760
    %7174 = vmatpush1.xpose.msra.mxu0 %v7173
    %7175 = vmatprep.subr.mxu0 0.0
    %v7176 = vand.u32 %v6652, 4294901760
    %v7177 = vsub.f32 %v6652, %v7176
    %v7178 = vand.u32 %v7177, 4294901760
    %7179 = vmatpush1.xpose.msra.mxu0 %v7178
    %7180 = vmatprep.subr.mxu0 0.0
    %v7181 = vand.u32 %v6651, 4294901760
    %v7182 = vsub.f32 %v6651, %v7181
    %v7183 = vand.u32 %v7182, 4294901760
    %7184 = vmatpush1.xpose.msra.mxu0 %v7183
    %7185 = vmatprep.subr.mxu0 0.0
    %v7186 = vand.u32 %v6650, 4294901760
    %v7187 = vsub.f32 %v6650, %v7186
    %v7188 = vand.u32 %v7187, 4294901760
    %7189 = vmatpush1.xpose.msra.mxu0 %v7188
    %7190 = vmatprep.subr.mxu0 0.0
    %v7191 = vand.u32 %v6649, 4294901760
    %v7192 = vsub.f32 %v6649, %v7191
    %v7193 = vand.u32 %v7192, 4294901760
    %7194 = vmatpush1.xpose.msra.mxu0 %v7193
    %7195 = vmatprep.subr.mxu0 0.0
    %v7196 = vand.u32 %v6648, 4294901760
    %v7197 = vsub.f32 %v6648, %v7196
    %v7198 = vand.u32 %v7197, 4294901760
    %7199 = vmatpush1.xpose.msra.mxu0 %v7198
    %7200 = vmatprep.subr.mxu0 0.0
    %v7201 = vand.u32 %v6647, 4294901760
    %v7202 = vsub.f32 %v6647, %v7201
    %v7203 = vand.u32 %v7202, 4294901760
    %7204 = vmatpush1.xpose.msra.mxu0 %v7203
    %7205 = vmatprep.subr.mxu0 0.0
    %v7206 = vand.u32 %v6646, 4294901760
    %v7207 = vsub.f32 %v6646, %v7206
    %v7208 = vand.u32 %v7207, 4294901760
    %7209 = vmatpush1.xpose.msra.mxu0 %v7208
    %7210 = vmatprep.subr.mxu0 0.0
    %v7211 = vand.u32 %v6645, 4294901760
    %v7212 = vsub.f32 %v6645, %v7211
    %v7213 = vand.u32 %v7212, 4294901760
    %7214 = vmatpush1.xpose.msra.mxu0 %v7213
    %7215 = vmatprep.subr.mxu0 0.0
    %v7216 = vand.u32 %v6644, 4294901760
    %v7217 = vsub.f32 %v6644, %v7216
    %v7218 = vand.u32 %v7217, 4294901760
    %7219 = vmatpush1.xpose.msra.mxu0 %v7218
    %7220 = vmatprep.subr.mxu0 0.0
    %7221 = vmatpush2.xpose.msra.mxu0 0.0
    %7222 = vmatprep.subr.mxu0 0.0
    %7223 = vmatpush2.xpose.msra.mxu0 0.0
    %7224 = vmatprep.subr.mxu0 0.0
    %7225 = vmatpush2.xpose.msra.mxu0 0.0
    %7226 = vmatprep.subr.mxu0 0.0
    %7227 = vmatpush2.xpose.msra.mxu0 0.0
    %7228 = vmatprep.subr.mxu0 0.0
    %7229 = vmatpush2.xpose.msra.mxu0 0.0
    %7230 = vmatprep.subr.mxu0 0.0
    %7231 = vmatpush2.xpose.msra.mxu0 0.0
    %7232 = vmatprep.subr.mxu0 0.0
    %7233 = vmatpush2.xpose.msra.mxu0 0.0
    %7234 = vmatprep.subr.mxu0 0.0
    %7235 = vmatpush2.xpose.msra.mxu0 0.0
    %7236 = vmatprep.subr.mxu0 0.0
    %7237 = vmatpush2.xpose.msra.mxu0 0.0
    %7238 = vmatprep.subr.mxu0 0.0
    %7239 = vmatpush2.xpose.msra.mxu0 0.0
    %7240 = vmatprep.subr.mxu0 0.0
    %7241 = vmatpush2.xpose.msra.mxu0 0.0
    %7242 = vmatprep.subr.mxu0 0.0
    %7243 = vmatpush2.xpose.msra.mxu0 0.0
    %7244 = vmatprep.subr.mxu0 0.0
    %7245 = vmatpush2.xpose.msra.mxu0 0.0
    %7246 = vmatprep.subr.mxu0 0.0
    %7247 = vmatpush2.xpose.msra.mxu0 0.0
    %7248 = vmatprep.subr.mxu0 0.0
    %7249 = vmatpush2.xpose.msra.mxu0 0.0
    %7250 = vmatprep.subr.mxu0 0.0
    %7251 = vmatpush2.xpose.msra.mxu0 0.0
    %7252 = vmatprep.mubr.f32.mxu0 0.0
    %v7253 = vand.u32 %v6660, 4294901760
    %7254 = vmatmul.mubr.f32.gmra.mxu0 %v7253
    %v7255 = vpop.f32.mrf.mxu0
    %v7256 = vadd.f32 %v7129, %v7255
    %v7257 = vpop.f32.mrf.mxu0
    %7258 = vmatprep.mubr.f32.mxu0 0.0
    %v7259 = vand.u32 %v6661, 4294901760
    %7260 = vmatmul.mubr.f32.gmra.mxu0 %v7259
    %v7261 = vpop.f32.mrf.mxu0
    %v7262 = vadd.f32 %v7137, %v7261
    %v7263 = vpop.f32.mrf.mxu0
    %7264 = vdwg.mxu0
    %7265 = vmatprep.subr.mxu0 0.0
    %v7266 = vand.u32 %v6659, 4294901760
    %7267 = vmatpush1.xpose.msra.mxu0 %v7266
    %7268 = vmatprep.subr.mxu0 0.0
    %v7269 = vand.u32 %v6658, 4294901760
    %7270 = vmatpush1.xpose.msra.mxu0 %v7269
    %7271 = vmatprep.subr.mxu0 0.0
    %v7272 = vand.u32 %v6657, 4294901760
    %7273 = vmatpush1.xpose.msra.mxu0 %v7272
    %7274 = vmatprep.subr.mxu0 0.0
    %v7275 = vand.u32 %v6656, 4294901760
    %7276 = vmatpush1.xpose.msra.mxu0 %v7275
    %7277 = vmatprep.subr.mxu0 0.0
    %v7278 = vand.u32 %v6655, 4294901760
    %7279 = vmatpush1.xpose.msra.mxu0 %v7278
    %7280 = vmatprep.subr.mxu0 0.0
    %v7281 = vand.u32 %v6654, 4294901760
    %7282 = vmatpush1.xpose.msra.mxu0 %v7281
    %7283 = vmatprep.subr.mxu0 0.0
    %v7284 = vand.u32 %v6653, 4294901760
    %7285 = vmatpush1.xpose.msra.mxu0 %v7284
    %7286 = vmatprep.subr.mxu0 0.0
    %v7287 = vand.u32 %v6652, 4294901760
    %7288 = vmatpush1.xpose.msra.mxu0 %v7287
    %7289 = vmatprep.subr.mxu0 0.0
    %v7290 = vand.u32 %v6651, 4294901760
    %7291 = vmatpush1.xpose.msra.mxu0 %v7290
    %7292 = vmatprep.subr.mxu0 0.0
    %v7293 = vand.u32 %v6650, 4294901760
    %7294 = vmatpush1.xpose.msra.mxu0 %v7293
    %7295 = vmatprep.subr.mxu0 0.0
    %v7296 = vand.u32 %v6649, 4294901760
    %7297 = vmatpush1.xpose.msra.mxu0 %v7296
    %7298 = vmatprep.subr.mxu0 0.0
    %v7299 = vand.u32 %v6648, 4294901760
    %7300 = vmatpush1.xpose.msra.mxu0 %v7299
    %7301 = vmatprep.subr.mxu0 0.0
    %v7302 = vand.u32 %v6647, 4294901760
    %7303 = vmatpush1.xpose.msra.mxu0 %v7302
    %7304 = vmatprep.subr.mxu0 0.0
    %v7305 = vand.u32 %v6646, 4294901760
    %7306 = vmatpush1.xpose.msra.mxu0 %v7305
    %7307 = vmatprep.subr.mxu0 0.0
    %v7308 = vand.u32 %v6645, 4294901760
    %7309 = vmatpush1.xpose.msra.mxu0 %v7308
    %7310 = vmatprep.subr.mxu0 0.0
    %v7311 = vand.u32 %v6644, 4294901760
    %7312 = vmatpush1.xpose.msra.mxu0 %v7311
    %7313 = vmatprep.subr.mxu0 0.0
    %7314 = vmatpush2.xpose.msra.mxu0 0.0
    %7315 = vmatprep.subr.mxu0 0.0
    %7316 = vmatpush2.xpose.msra.mxu0 0.0
    %7317 = vmatprep.subr.mxu0 0.0
    %7318 = vmatpush2.xpose.msra.mxu0 0.0
    %7319 = vmatprep.subr.mxu0 0.0
    %7320 = vmatpush2.xpose.msra.mxu0 0.0
    %7321 = vmatprep.subr.mxu0 0.0
    %7322 = vmatpush2.xpose.msra.mxu0 0.0
    %7323 = vmatprep.subr.mxu0 0.0
    %7324 = vmatpush2.xpose.msra.mxu0 0.0
    %7325 = vmatprep.subr.mxu0 0.0
    %7326 = vmatpush2.xpose.msra.mxu0 0.0
    %7327 = vmatprep.subr.mxu0 0.0
    %7328 = vmatpush2.xpose.msra.mxu0 0.0
    %7329 = vmatprep.subr.mxu0 0.0
    %7330 = vmatpush2.xpose.msra.mxu0 0.0
    %7331 = vmatprep.subr.mxu0 0.0
    %7332 = vmatpush2.xpose.msra.mxu0 0.0
    %7333 = vmatprep.subr.mxu0 0.0
    %7334 = vmatpush2.xpose.msra.mxu0 0.0
    %7335 = vmatprep.subr.mxu0 0.0
    %7336 = vmatpush2.xpose.msra.mxu0 0.0
    %7337 = vmatprep.subr.mxu0 0.0
    %7338 = vmatpush2.xpose.msra.mxu0 0.0
    %7339 = vmatprep.subr.mxu0 0.0
    %7340 = vmatpush2.xpose.msra.mxu0 0.0
    %7341 = vmatprep.subr.mxu0 0.0
    %7342 = vmatpush2.xpose.msra.mxu0 0.0
    %7343 = vmatprep.subr.mxu0 0.0
    %7344 = vmatpush2.xpose.msra.mxu0 0.0
    %7345 = vmatprep.mubr.f32.mxu0 0.0
    %v7346 = vand.u32 %v6660, 4294901760
    %7347 = vmatmul.mubr.f32.gmra.mxu0 %v7346
    %v7348 = vpop.f32.mrf.mxu0
    %v7349 = vadd.f32 %v7256, %v7348
    %v7350 = vpop.f32.mrf.mxu0
    %7351 = vmatprep.mubr.f32.mxu0 0.0
    %v7352 = vand.u32 %v6661, 4294901760
    %7353 = vmatmul.mubr.f32.gmra.mxu0 %v7352
    %v7354 = vpop.f32.mrf.mxu0
    %v7355 = vadd.f32 %v7262, %v7354
    %v7356 = vpop.f32.mrf.mxu0
    %7357 = vdwg.mxu0
    %v7358 = vmul.f32 %v7349, %v7349
    %v7359 = vmul.f32 %v7355, %v7355
    %v7360 = vld [vmem:[%s6] sm:$0xff]
    %v7361 = vld [vmem:[%s6 + $0x8] sm:$0x3f]
    %vm7362 = vcmask 113664
    %v7364 = vsel %vm7362, %v7360, 0
    %v7367 = vsel %vm7362, %v7361, 0
    %vm7369 = vcmask 1045504
    %v7371 = vsel %vm7369, %v7359, 0
    %7373 = vmatprep.subr.mxu0 0.0
    %7374 = vmatpush1.msra.mxu0 0.0
    %7375 = vmatprep.subr.mxu0 0.0
    %7376 = vmatpush1.msra.mxu0 0.0
    %7377 = vmatprep.subr.mxu0 0.0
    %7378 = vmatpush1.msra.mxu0 0.0
    %7379 = vmatprep.subr.mxu0 0.0
    %7380 = vmatpush1.msra.mxu0 0.0
    %7381 = vmatprep.subr.mxu0 0.0
    %7382 = vmatpush1.msra.mxu0 0.0
    %7383 = vmatprep.subr.mxu0 0.0
    %7384 = vmatpush1.msra.mxu0 0.0
    %7385 = vmatprep.subr.mxu0 0.0
    %7386 = vmatpush1.msra.mxu0 0.0
    %7387 = vmatprep.subr.mxu0 0.0
    %7388 = vmatpush1.msra.mxu0 0.0
    %7389 = vmatprep.subr.mxu0 0.0
    %7390 = vmatpush1.msra.mxu0 0.0
    %7391 = vmatprep.subr.mxu0 0.0
    %7392 = vmatpush1.msra.mxu0 0.0
    %7393 = vmatprep.subr.mxu0 0.0
    %7394 = vmatpush1.msra.mxu0 0.0
    %7395 = vmatprep.subr.mxu0 0.0
    %7396 = vmatpush1.msra.mxu0 0.0
    %7397 = vmatprep.subr.mxu0 0.0
    %7398 = vmatpush1.msra.mxu0 0.0
    %7399 = vmatprep.subr.mxu0 0.0
    %7400 = vmatpush1.msra.mxu0 0.0
    %7401 = vmatprep.subr.mxu0 0.0
    %v7402 = vand.u32 %v7371, 4294901760
    %7403 = vmatpush1.msra.mxu0 %v7402
    %7404 = vmatprep.subr.mxu0 0.0
    %v7405 = vand.u32 %v7358, 4294901760
    %7406 = vmatpush1.msra.mxu0 %v7405
    %7407 = vmatprep.subr.mxu0 0.0
    %7408 = vmatpush2.msra.mxu0 0.0
    %7409 = vmatprep.subr.mxu0 0.0
    %7410 = vmatpush2.msra.mxu0 0.0
    %7411 = vmatprep.subr.mxu0 0.0
    %7412 = vmatpush2.msra.mxu0 0.0
    %7413 = vmatprep.subr.mxu0 0.0
    %7414 = vmatpush2.msra.mxu0 0.0
    %7415 = vmatprep.subr.mxu0 0.0
    %7416 = vmatpush2.msra.mxu0 0.0
    %7417 = vmatprep.subr.mxu0 0.0
    %7418 = vmatpush2.msra.mxu0 0.0
    %7419 = vmatprep.subr.mxu0 0.0
    %7420 = vmatpush2.msra.mxu0 0.0
    %7421 = vmatprep.subr.mxu0 0.0
    %7422 = vmatpush2.msra.mxu0 0.0
    %7423 = vmatprep.subr.mxu0 0.0
    %7424 = vmatpush2.msra.mxu0 0.0
    %7425 = vmatprep.subr.mxu0 0.0
    %7426 = vmatpush2.msra.mxu0 0.0
    %7427 = vmatprep.subr.mxu0 0.0
    %7428 = vmatpush2.msra.mxu0 0.0
    %7429 = vmatprep.subr.mxu0 0.0
    %7430 = vmatpush2.msra.mxu0 0.0
    %7431 = vmatprep.subr.mxu0 0.0
    %7432 = vmatpush2.msra.mxu0 0.0
    %7433 = vmatprep.subr.mxu0 0.0
    %7434 = vmatpush2.msra.mxu0 0.0
    %7435 = vmatprep.subr.mxu0 0.0
    %7436 = vmatpush2.msra.mxu0 0.0
    %7437 = vmatprep.subr.mxu0 0.0
    %7438 = vmatpush2.msra.mxu0 0.0
    %7439 = vmatprep.mubr.f32.mxu0 0.0
    %v7440 = vand.u32 %v7364, 4294901760
    %v7441 = vsub.f32 %v7364, %v7440
    %v7442 = vand.u32 %v7441, 4294901760
    %v7443 = vsub.f32 %v7441, %v7442
    %v7444 = vand.u32 %v7443, 4294901760
    %7445 = vmatmul.mubr.f32.gmra.mxu0 %v7444
    %v7446 = vpop.f32.mrf.mxu0
    %v7447 = vadd.f32 0.0, %v7446
    %v7448 = vpop.f32.mrf.mxu0
    %7449 = vmatprep.mubr.f32.mxu0 0.0
    %v7450 = vand.u32 %v7367, 4294901760
    %v7451 = vsub.f32 %v7367, %v7450
    %v7452 = vand.u32 %v7451, 4294901760
    %v7453 = vsub.f32 %v7451, %v7452
    %v7454 = vand.u32 %v7453, 4294901760
    %7455 = vmatmul.mubr.f32.gmra.mxu0 %v7454
    %v7456 = vpop.f32.mrf.mxu0
    %v7457 = vadd.f32 0.0, %v7456
    %v7458 = vpop.f32.mrf.mxu0
    %7459 = vdwg.mxu0
    %7460 = vmatprep.subr.mxu0 0.0
    %7461 = vmatpush1.msra.mxu0 0.0
    %7462 = vmatprep.subr.mxu0 0.0
    %7463 = vmatpush1.msra.mxu0 0.0
    %7464 = vmatprep.subr.mxu0 0.0
    %7465 = vmatpush1.msra.mxu0 0.0
    %7466 = vmatprep.subr.mxu0 0.0
    %7467 = vmatpush1.msra.mxu0 0.0
    %7468 = vmatprep.subr.mxu0 0.0
    %7469 = vmatpush1.msra.mxu0 0.0
    %7470 = vmatprep.subr.mxu0 0.0
    %7471 = vmatpush1.msra.mxu0 0.0
    %7472 = vmatprep.subr.mxu0 0.0
    %7473 = vmatpush1.msra.mxu0 0.0
    %7474 = vmatprep.subr.mxu0 0.0
    %7475 = vmatpush1.msra.mxu0 0.0
    %7476 = vmatprep.subr.mxu0 0.0
    %7477 = vmatpush1.msra.mxu0 0.0
    %7478 = vmatprep.subr.mxu0 0.0
    %7479 = vmatpush1.msra.mxu0 0.0
    %7480 = vmatprep.subr.mxu0 0.0
    %7481 = vmatpush1.msra.mxu0 0.0
    %7482 = vmatprep.subr.mxu0 0.0
    %7483 = vmatpush1.msra.mxu0 0.0
    %7484 = vmatprep.subr.mxu0 0.0
    %7485 = vmatpush1.msra.mxu0 0.0
    %7486 = vmatprep.subr.mxu0 0.0
    %7487 = vmatpush1.msra.mxu0 0.0
    %7488 = vmatprep.subr.mxu0 0.0
    %v7489 = vand.u32 %v7371, 4294901760
    %v7490 = vsub.f32 %v7371, %v7489
    %v7491 = vand.u32 %v7490, 4294901760
    %v7492 = vsub.f32 %v7490, %v7491
    %v7493 = vand.u32 %v7492, 4294901760
    %7494 = vmatpush1.msra.mxu0 %v7493
    %7495 = vmatprep.subr.mxu0 0.0
    %v7496 = vand.u32 %v7358, 4294901760
    %v7497 = vsub.f32 %v7358, %v7496
    %v7498 = vand.u32 %v7497, 4294901760
    %v7499 = vsub.f32 %v7497, %v7498
    %v7500 = vand.u32 %v7499, 4294901760
    %7501 = vmatpush1.msra.mxu0 %v7500
    %7502 = vmatprep.subr.mxu0 0.0
    %7503 = vmatpush2.msra.mxu0 0.0
    %7504 = vmatprep.subr.mxu0 0.0
    %7505 = vmatpush2.msra.mxu0 0.0
    %7506 = vmatprep.subr.mxu0 0.0
    %7507 = vmatpush2.msra.mxu0 0.0
    %7508 = vmatprep.subr.mxu0 0.0
    %7509 = vmatpush2.msra.mxu0 0.0
    %7510 = vmatprep.subr.mxu0 0.0
    %7511 = vmatpush2.msra.mxu0 0.0
    %7512 = vmatprep.subr.mxu0 0.0
    %7513 = vmatpush2.msra.mxu0 0.0
    %7514 = vmatprep.subr.mxu0 0.0
    %7515 = vmatpush2.msra.mxu0 0.0
    %7516 = vmatprep.subr.mxu0 0.0
    %7517 = vmatpush2.msra.mxu0 0.0
    %7518 = vmatprep.subr.mxu0 0.0
    %7519 = vmatpush2.msra.mxu0 0.0
    %7520 = vmatprep.subr.mxu0 0.0
    %7521 = vmatpush2.msra.mxu0 0.0
    %7522 = vmatprep.subr.mxu0 0.0
    %7523 = vmatpush2.msra.mxu0 0.0
    %7524 = vmatprep.subr.mxu0 0.0
    %7525 = vmatpush2.msra.mxu0 0.0
    %7526 = vmatprep.subr.mxu0 0.0
    %7527 = vmatpush2.msra.mxu0 0.0
    %7528 = vmatprep.subr.mxu0 0.0
    %7529 = vmatpush2.msra.mxu0 0.0
    %7530 = vmatprep.subr.mxu0 0.0
    %7531 = vmatpush2.msra.mxu0 0.0
    %7532 = vmatprep.subr.mxu0 0.0
    %7533 = vmatpush2.msra.mxu0 0.0
    %7534 = vmatprep.mubr.f32.mxu0 0.0
    %v7535 = vand.u32 %v7364, 4294901760
    %7536 = vmatmul.mubr.f32.gmra.mxu0 %v7535
    %v7537 = vpop.f32.mrf.mxu0
    %v7538 = vadd.f32 %v7447, %v7537
    %v7539 = vpop.f32.mrf.mxu0
    %7540 = vmatprep.mubr.f32.mxu0 0.0
    %v7541 = vand.u32 %v7367, 4294901760
    %7542 = vmatmul.mubr.f32.gmra.mxu0 %v7541
    %v7543 = vpop.f32.mrf.mxu0
    %v7544 = vadd.f32 %v7457, %v7543
    %v7545 = vpop.f32.mrf.mxu0
    %7546 = vdwg.mxu0
    %7547 = vmatprep.subr.mxu0 0.0
    %7548 = vmatpush1.msra.mxu0 0.0
    %7549 = vmatprep.subr.mxu0 0.0
    %7550 = vmatpush1.msra.mxu0 0.0
    %7551 = vmatprep.subr.mxu0 0.0
    %7552 = vmatpush1.msra.mxu0 0.0
    %7553 = vmatprep.subr.mxu0 0.0
    %7554 = vmatpush1.msra.mxu0 0.0
    %7555 = vmatprep.subr.mxu0 0.0
    %7556 = vmatpush1.msra.mxu0 0.0
    %7557 = vmatprep.subr.mxu0 0.0
    %7558 = vmatpush1.msra.mxu0 0.0
    %7559 = vmatprep.subr.mxu0 0.0
    %7560 = vmatpush1.msra.mxu0 0.0
    %7561 = vmatprep.subr.mxu0 0.0
    %7562 = vmatpush1.msra.mxu0 0.0
    %7563 = vmatprep.subr.mxu0 0.0
    %7564 = vmatpush1.msra.mxu0 0.0
    %7565 = vmatprep.subr.mxu0 0.0
    %7566 = vmatpush1.msra.mxu0 0.0
    %7567 = vmatprep.subr.mxu0 0.0
    %7568 = vmatpush1.msra.mxu0 0.0
    %7569 = vmatprep.subr.mxu0 0.0
    %7570 = vmatpush1.msra.mxu0 0.0
    %7571 = vmatprep.subr.mxu0 0.0
    %7572 = vmatpush1.msra.mxu0 0.0
    %7573 = vmatprep.subr.mxu0 0.0
    %7574 = vmatpush1.msra.mxu0 0.0
    %7575 = vmatprep.subr.mxu0 0.0
    %v7576 = vand.u32 %v7371, 4294901760
    %v7577 = vsub.f32 %v7371, %v7576
    %7578 = vmatpush1.msra.mxu0 %v7577
    %7579 = vmatprep.subr.mxu0 0.0
    %v7580 = vand.u32 %v7358, 4294901760
    %v7581 = vsub.f32 %v7358, %v7580
    %7582 = vmatpush1.msra.mxu0 %v7581
    %7583 = vmatprep.subr.mxu0 0.0
    %7584 = vmatpush2.msra.mxu0 0.0
    %7585 = vmatprep.subr.mxu0 0.0
    %7586 = vmatpush2.msra.mxu0 0.0
    %7587 = vmatprep.subr.mxu0 0.0
    %7588 = vmatpush2.msra.mxu0 0.0
    %7589 = vmatprep.subr.mxu0 0.0
    %7590 = vmatpush2.msra.mxu0 0.0
    %7591 = vmatprep.subr.mxu0 0.0
    %7592 = vmatpush2.msra.mxu0 0.0
    %7593 = vmatprep.subr.mxu0 0.0
    %7594 = vmatpush2.msra.mxu0 0.0
    %7595 = vmatprep.subr.mxu0 0.0
    %7596 = vmatpush2.msra.mxu0 0.0
    %7597 = vmatprep.subr.mxu0 0.0
    %7598 = vmatpush2.msra.mxu0 0.0
    %7599 = vmatprep.subr.mxu0 0.0
    %7600 = vmatpush2.msra.mxu0 0.0
    %7601 = vmatprep.subr.mxu0 0.0
    %7602 = vmatpush2.msra.mxu0 0.0
    %7603 = vmatprep.subr.mxu0 0.0
    %7604 = vmatpush2.msra.mxu0 0.0
    %7605 = vmatprep.subr.mxu0 0.0
    %7606 = vmatpush2.msra.mxu0 0.0
    %7607 = vmatprep.subr.mxu0 0.0
    %7608 = vmatpush2.msra.mxu0 0.0
    %7609 = vmatprep.subr.mxu0 0.0
    %7610 = vmatpush2.msra.mxu0 0.0
    %7611 = vmatprep.subr.mxu0 0.0
    %7612 = vmatpush2.msra.mxu0 0.0
    %7613 = vmatprep.subr.mxu0 0.0
    %7614 = vmatpush2.msra.mxu0 0.0
    %7615 = vmatprep.mubr.f32.mxu0 0.0
    %v7616 = vand.u32 %v7364, 4294901760
    %v7617 = vsub.f32 %v7364, %v7616
    %7618 = vmatmul.mubr.f32.gmra.mxu0 %v7617
    %v7619 = vpop.f32.mrf.mxu0
    %v7620 = vadd.f32 %v7538, %v7619
    %v7621 = vpop.f32.mrf.mxu0
    %7622 = vmatprep.mubr.f32.mxu0 0.0
    %v7623 = vand.u32 %v7367, 4294901760
    %v7624 = vsub.f32 %v7367, %v7623
    %7625 = vmatmul.mubr.f32.gmra.mxu0 %v7624
    %v7626 = vpop.f32.mrf.mxu0
    %v7627 = vadd.f32 %v7544, %v7626
    %v7628 = vpop.f32.mrf.mxu0
    %7629 = vdwg.mxu0
    %7630 = vmatprep.subr.mxu0 0.0
    %7631 = vmatpush1.msra.mxu0 0.0
    %7632 = vmatprep.subr.mxu0 0.0
    %7633 = vmatpush1.msra.mxu0 0.0
    %7634 = vmatprep.subr.mxu0 0.0
    %7635 = vmatpush1.msra.mxu0 0.0
    %7636 = vmatprep.subr.mxu0 0.0
    %7637 = vmatpush1.msra.mxu0 0.0
    %7638 = vmatprep.subr.mxu0 0.0
    %7639 = vmatpush1.msra.mxu0 0.0
    %7640 = vmatprep.subr.mxu0 0.0
    %7641 = vmatpush1.msra.mxu0 0.0
    %7642 = vmatprep.subr.mxu0 0.0
    %7643 = vmatpush1.msra.mxu0 0.0
    %7644 = vmatprep.subr.mxu0 0.0
    %7645 = vmatpush1.msra.mxu0 0.0
    %7646 = vmatprep.subr.mxu0 0.0
    %7647 = vmatpush1.msra.mxu0 0.0
    %7648 = vmatprep.subr.mxu0 0.0
    %7649 = vmatpush1.msra.mxu0 0.0
    %7650 = vmatprep.subr.mxu0 0.0
    %7651 = vmatpush1.msra.mxu0 0.0
    %7652 = vmatprep.subr.mxu0 0.0
    %7653 = vmatpush1.msra.mxu0 0.0
    %7654 = vmatprep.subr.mxu0 0.0
    %7655 = vmatpush1.msra.mxu0 0.0
    %7656 = vmatprep.subr.mxu0 0.0
    %7657 = vmatpush1.msra.mxu0 0.0
    %7658 = vmatprep.subr.mxu0 0.0
    %v7659 = vand.u32 %v7371, 4294901760
    %7660 = vmatpush1.msra.mxu0 %v7659
    %7661 = vmatprep.subr.mxu0 0.0
    %v7662 = vand.u32 %v7358, 4294901760
    %7663 = vmatpush1.msra.mxu0 %v7662
    %7664 = vmatprep.subr.mxu0 0.0
    %7665 = vmatpush2.msra.mxu0 0.0
    %7666 = vmatprep.subr.mxu0 0.0
    %7667 = vmatpush2.msra.mxu0 0.0
    %7668 = vmatprep.subr.mxu0 0.0
    %7669 = vmatpush2.msra.mxu0 0.0
    %7670 = vmatprep.subr.mxu0 0.0
    %7671 = vmatpush2.msra.mxu0 0.0
    %7672 = vmatprep.subr.mxu0 0.0
    %7673 = vmatpush2.msra.mxu0 0.0
    %7674 = vmatprep.subr.mxu0 0.0
    %7675 = vmatpush2.msra.mxu0 0.0
    %7676 = vmatprep.subr.mxu0 0.0
    %7677 = vmatpush2.msra.mxu0 0.0
    %7678 = vmatprep.subr.mxu0 0.0
    %7679 = vmatpush2.msra.mxu0 0.0
    %7680 = vmatprep.subr.mxu0 0.0
    %7681 = vmatpush2.msra.mxu0 0.0
    %7682 = vmatprep.subr.mxu0 0.0
    %7683 = vmatpush2.msra.mxu0 0.0
    %7684 = vmatprep.subr.mxu0 0.0
    %7685 = vmatpush2.msra.mxu0 0.0
    %7686 = vmatprep.subr.mxu0 0.0
    %7687 = vmatpush2.msra.mxu0 0.0
    %7688 = vmatprep.subr.mxu0 0.0
    %7689 = vmatpush2.msra.mxu0 0.0
    %7690 = vmatprep.subr.mxu0 0.0
    %7691 = vmatpush2.msra.mxu0 0.0
    %7692 = vmatprep.subr.mxu0 0.0
    %7693 = vmatpush2.msra.mxu0 0.0
    %7694 = vmatprep.subr.mxu0 0.0
    %7695 = vmatpush2.msra.mxu0 0.0
    %7696 = vmatprep.mubr.f32.mxu0 0.0
    %v7697 = vand.u32 %v7364, 4294901760
    %v7698 = vsub.f32 %v7364, %v7697
    %v7699 = vand.u32 %v7698, 4294901760
    %7700 = vmatmul.mubr.f32.gmra.mxu0 %v7699
    %v7701 = vpop.f32.mrf.mxu0
    %v7702 = vadd.f32 %v7620, %v7701
    %v7703 = vpop.f32.mrf.mxu0
    %7704 = vmatprep.mubr.f32.mxu0 0.0
    %v7705 = vand.u32 %v7367, 4294901760
    %v7706 = vsub.f32 %v7367, %v7705
    %v7707 = vand.u32 %v7706, 4294901760
    %7708 = vmatmul.mubr.f32.gmra.mxu0 %v7707
    %v7709 = vpop.f32.mrf.mxu0
    %v7710 = vadd.f32 %v7627, %v7709
    %v7711 = vpop.f32.mrf.mxu0
    %7712 = vdwg.mxu0
    %7713 = vmatprep.subr.mxu0 0.0
    %7714 = vmatpush1.msra.mxu0 0.0
    %7715 = vmatprep.subr.mxu0 0.0
    %7716 = vmatpush1.msra.mxu0 0.0
    %7717 = vmatprep.subr.mxu0 0.0
    %7718 = vmatpush1.msra.mxu0 0.0
    %7719 = vmatprep.subr.mxu0 0.0
    %7720 = vmatpush1.msra.mxu0 0.0
    %7721 = vmatprep.subr.mxu0 0.0
    %7722 = vmatpush1.msra.mxu0 0.0
    %7723 = vmatprep.subr.mxu0 0.0
    %7724 = vmatpush1.msra.mxu0 0.0
    %7725 = vmatprep.subr.mxu0 0.0
    %7726 = vmatpush1.msra.mxu0 0.0
    %7727 = vmatprep.subr.mxu0 0.0
    %7728 = vmatpush1.msra.mxu0 0.0
    %7729 = vmatprep.subr.mxu0 0.0
    %7730 = vmatpush1.msra.mxu0 0.0
    %7731 = vmatprep.subr.mxu0 0.0
    %7732 = vmatpush1.msra.mxu0 0.0
    %7733 = vmatprep.subr.mxu0 0.0
    %7734 = vmatpush1.msra.mxu0 0.0
    %7735 = vmatprep.subr.mxu0 0.0
    %7736 = vmatpush1.msra.mxu0 0.0
    %7737 = vmatprep.subr.mxu0 0.0
    %7738 = vmatpush1.msra.mxu0 0.0
    %7739 = vmatprep.subr.mxu0 0.0
    %7740 = vmatpush1.msra.mxu0 0.0
    %7741 = vmatprep.subr.mxu0 0.0
    %v7742 = vand.u32 %v7371, 4294901760
    %v7743 = vsub.f32 %v7371, %v7742
    %v7744 = vand.u32 %v7743, 4294901760
    %7745 = vmatpush1.msra.mxu0 %v7744
    %7746 = vmatprep.subr.mxu0 0.0
    %v7747 = vand.u32 %v7358, 4294901760
    %v7748 = vsub.f32 %v7358, %v7747
    %v7749 = vand.u32 %v7748, 4294901760
    %7750 = vmatpush1.msra.mxu0 %v7749
    %7751 = vmatprep.subr.mxu0 0.0
    %7752 = vmatpush2.msra.mxu0 0.0
    %7753 = vmatprep.subr.mxu0 0.0
    %7754 = vmatpush2.msra.mxu0 0.0
    %7755 = vmatprep.subr.mxu0 0.0
    %7756 = vmatpush2.msra.mxu0 0.0
    %7757 = vmatprep.subr.mxu0 0.0
    %7758 = vmatpush2.msra.mxu0 0.0
    %7759 = vmatprep.subr.mxu0 0.0
    %7760 = vmatpush2.msra.mxu0 0.0
    %7761 = vmatprep.subr.mxu0 0.0
    %7762 = vmatpush2.msra.mxu0 0.0
    %7763 = vmatprep.subr.mxu0 0.0
    %7764 = vmatpush2.msra.mxu0 0.0
    %7765 = vmatprep.subr.mxu0 0.0
    %7766 = vmatpush2.msra.mxu0 0.0
    %7767 = vmatprep.subr.mxu0 0.0
    %7768 = vmatpush2.msra.mxu0 0.0
    %7769 = vmatprep.subr.mxu0 0.0
    %7770 = vmatpush2.msra.mxu0 0.0
    %7771 = vmatprep.subr.mxu0 0.0
    %7772 = vmatpush2.msra.mxu0 0.0
    %7773 = vmatprep.subr.mxu0 0.0
    %7774 = vmatpush2.msra.mxu0 0.0
    %7775 = vmatprep.subr.mxu0 0.0
    %7776 = vmatpush2.msra.mxu0 0.0
    %7777 = vmatprep.subr.mxu0 0.0
    %7778 = vmatpush2.msra.mxu0 0.0
    %7779 = vmatprep.subr.mxu0 0.0
    %7780 = vmatpush2.msra.mxu0 0.0
    %7781 = vmatprep.subr.mxu0 0.0
    %7782 = vmatpush2.msra.mxu0 0.0
    %7783 = vmatprep.mubr.f32.mxu0 0.0
    %v7784 = vand.u32 %v7364, 4294901760
    %7785 = vmatmul.mubr.f32.gmra.mxu0 %v7784
    %v7786 = vpop.f32.mrf.mxu0
    %v7787 = vadd.f32 %v7702, %v7786
    %v7788 = vpop.f32.mrf.mxu0
    %7789 = vmatprep.mubr.f32.mxu0 0.0
    %v7790 = vand.u32 %v7367, 4294901760
    %7791 = vmatmul.mubr.f32.gmra.mxu0 %v7790
    %v7792 = vpop.f32.mrf.mxu0
    %v7793 = vadd.f32 %v7710, %v7792
    %v7794 = vpop.f32.mrf.mxu0
    %7795 = vdwg.mxu0
    %7796 = vmatprep.subr.mxu0 0.0
    %7797 = vmatpush1.msra.mxu0 0.0
    %7798 = vmatprep.subr.mxu0 0.0
    %7799 = vmatpush1.msra.mxu0 0.0
    %7800 = vmatprep.subr.mxu0 0.0
    %7801 = vmatpush1.msra.mxu0 0.0
    %7802 = vmatprep.subr.mxu0 0.0
    %7803 = vmatpush1.msra.mxu0 0.0
    %7804 = vmatprep.subr.mxu0 0.0
    %7805 = vmatpush1.msra.mxu0 0.0
    %7806 = vmatprep.subr.mxu0 0.0
    %7807 = vmatpush1.msra.mxu0 0.0
    %7808 = vmatprep.subr.mxu0 0.0
    %7809 = vmatpush1.msra.mxu0 0.0
    %7810 = vmatprep.subr.mxu0 0.0
    %7811 = vmatpush1.msra.mxu0 0.0
    %7812 = vmatprep.subr.mxu0 0.0
    %7813 = vmatpush1.msra.mxu0 0.0
    %7814 = vmatprep.subr.mxu0 0.0
    %7815 = vmatpush1.msra.mxu0 0.0
    %7816 = vmatprep.subr.mxu0 0.0
    %7817 = vmatpush1.msra.mxu0 0.0
    %7818 = vmatprep.subr.mxu0 0.0
    %7819 = vmatpush1.msra.mxu0 0.0
    %7820 = vmatprep.subr.mxu0 0.0
    %7821 = vmatpush1.msra.mxu0 0.0
    %7822 = vmatprep.subr.mxu0 0.0
    %7823 = vmatpush1.msra.mxu0 0.0
    %7824 = vmatprep.subr.mxu0 0.0
    %v7825 = vand.u32 %v7371, 4294901760
    %7826 = vmatpush1.msra.mxu0 %v7825
    %7827 = vmatprep.subr.mxu0 0.0
    %v7828 = vand.u32 %v7358, 4294901760
    %7829 = vmatpush1.msra.mxu0 %v7828
    %7830 = vmatprep.subr.mxu0 0.0
    %7831 = vmatpush2.msra.mxu0 0.0
    %7832 = vmatprep.subr.mxu0 0.0
    %7833 = vmatpush2.msra.mxu0 0.0
    %7834 = vmatprep.subr.mxu0 0.0
    %7835 = vmatpush2.msra.mxu0 0.0
    %7836 = vmatprep.subr.mxu0 0.0
    %7837 = vmatpush2.msra.mxu0 0.0
    %7838 = vmatprep.subr.mxu0 0.0
    %7839 = vmatpush2.msra.mxu0 0.0
    %7840 = vmatprep.subr.mxu0 0.0
    %7841 = vmatpush2.msra.mxu0 0.0
    %7842 = vmatprep.subr.mxu0 0.0
    %7843 = vmatpush2.msra.mxu0 0.0
    %7844 = vmatprep.subr.mxu0 0.0
    %7845 = vmatpush2.msra.mxu0 0.0
    %7846 = vmatprep.subr.mxu0 0.0
    %7847 = vmatpush2.msra.mxu0 0.0
    %7848 = vmatprep.subr.mxu0 0.0
    %7849 = vmatpush2.msra.mxu0 0.0
    %7850 = vmatprep.subr.mxu0 0.0
    %7851 = vmatpush2.msra.mxu0 0.0
    %7852 = vmatprep.subr.mxu0 0.0
    %7853 = vmatpush2.msra.mxu0 0.0
    %7854 = vmatprep.subr.mxu0 0.0
    %7855 = vmatpush2.msra.mxu0 0.0
    %7856 = vmatprep.subr.mxu0 0.0
    %7857 = vmatpush2.msra.mxu0 0.0
    %7858 = vmatprep.subr.mxu0 0.0
    %7859 = vmatpush2.msra.mxu0 0.0
    %7860 = vmatprep.subr.mxu0 0.0
    %7861 = vmatpush2.msra.mxu0 0.0
    %7862 = vmatprep.mubr.f32.mxu0 0.0
    %v7863 = vand.u32 %v7364, 4294901760
    %7864 = vmatmul.mubr.f32.gmra.mxu0 %v7863
    %v7865 = vpop.f32.mrf.mxu0
    %v7866 = vadd.f32 %v7787, %v7865
    %v7867 = vpop.f32.mrf.mxu0
    %7868 = vmatprep.mubr.f32.mxu0 0.0
    %v7869 = vand.u32 %v7367, 4294901760
    %7870 = vmatmul.mubr.f32.gmra.mxu0 %v7869
    %v7871 = vpop.f32.mrf.mxu0
    %v7872 = vadd.f32 %v7793, %v7871
    %v7873 = vpop.f32.mrf.mxu0
    %7874 = vdwg.mxu0
    %v7875 = vmax.f32 %v7866, 1e-12
    %v7876 = vmax.f32 %v7872, 1e-12
    %v7877 = vrsqrt.pop %v7875
    %v7878 = vrsqrt.pop %v7876
    %v7879 = vmul.f32 %v7349, %v7877
    %v7880 = vmul.f32 %v7355, %v7878
    %7881 = vst [vmem:[#allocation5] sm:$0xff] %v7349
    %7882 = vst [vmem:[#allocation5 + $0x8] sm:$0x3f] %v7355
    %7883 = vst [vmem:[#allocation5 + $0xe] sm:$0xff] %v7879
    %7884 = vst [vmem:[#allocation5 + $0x16] sm:$0x3f] %v7880
    // Predicated region
    $region34: #{tpu_custom_call.1} parent=1 // pred_check
      _
    $region35: #{tpu_custom_call.1} parent=1 // pred_check_branch
      %7886 = sbr.rel (0) target = $region37
    $region36: #{tpu_custom_call.1} parent=1 // pred_region
      %s7888 = ssub.s32 512, 512
      %7889 = vsyncadd [#allocation4], %s7888
      %s7890 = sshll.u32 [#allocation5], 4
      %s7891 = int_to_ptr.vmem [resolvable:$true] %s7890
      %7896 = dma.vmem_to_hbm [thread:$0]  %s7891, 512, %s7, [#allocation4], 128, 128, 8
    $region37: #{tpu_custom_call.1} parent=1 // pred_fallthru
      _
    // Predicated region
    $region38: #{tpu_custom_call.1} parent=1 // pred_check
      _
    $region39: #{tpu_custom_call.1} parent=1 // pred_check_branch
      %7898 = sbr.rel (0) target = $region41
    $region40: #{tpu_custom_call.1} parent=1 // pred_region
      %7899 = dma.done [#allocation4], 512
    $region41: #{tpu_custom_call.1} parent=1 // pred_fallthru
      _
    %7900 = vsyncpa [#allocation3], 1
    %7901 = vsyncpa [#allocation4], 1

</llo_original>
